<compile_context>
chip_gen: v5e
topology: v5e:2x2
jax: 0.10.0
libtpu: 0.0.40
codegen_flags: <defaults>
</compile_context>

<pallas_src>
import jax
import jax.numpy as jnp
from jax import lax
from jax.experimental import pallas as pl
from jax.experimental.pallas import tpu as pltpu

WGAN = False  # stands in for loc.cvae_params['wgan']

HIDDEN = 2048
VMEM_LIMIT = 32 * 1024 * 1024  # safe on v5e/v6e (128 MiB phys) and v7x (64 MiB phys)


def _fc1_kernel(x_ref, w_ref, b_ref, o_ref):
    """y1 tile = x @ W1[:, j] + b1[j]  (full-K tile, bf16 weight stream)."""
    a = x_ref[...].astype(jnp.bfloat16)                      # dropout = identity
    y = jnp.dot(a, w_ref[...], preferred_element_type=jnp.float32)
    o_ref[...] = (y + b_ref[...]).astype(o_ref.dtype)


def _fc2_fc3_kernel(y1_ref, w2_ref, b2_ref, w3_ref, y2_ref, z_ref):
    """y2 tile = relu(y1) @ W2[:, j] + b2[j];  z tile = per-tile fc3 partial.

    relu(fc1 output) is fused into the input read (bf16 cast for the MXU);
    fc3's matvec is fused as an elementwise product + lane-axis reduction
    (XLU), emitted as a (B, 1) partial placed in lane 0 of a lane-dense
    (B, 128) block so the grid axis stays "parallel".
    """
    a = jnp.maximum(y1_ref[...], 0.0).astype(jnp.bfloat16)   # dropout = identity
    y2 = jnp.dot(a, w2_ref[...], preferred_element_type=jnp.float32) + b2_ref[...]
    y2_ref[...] = y2.astype(y2_ref.dtype)

    p = jnp.sum(jnp.maximum(y2, 0.0) * w3_ref[...], axis=1, keepdims=True)  # (B, 1)
    lane = lax.broadcasted_iota(jnp.int32, z_ref.shape, 1)
    z_ref[...] = jnp.where(lane == 0, p, 0.0).astype(z_ref.dtype)


def fc1_pallas(x, w, b, *, tn=512):
    """x: (B, K) f32, w: (K, N) bf16, b: (N,) f32 -> y1 (B, N) f32."""
    B, K = x.shape
    Kw, N = w.shape
    assert K == Kw
    tn = min(tn, N)
    assert N % tn == 0 and tn % 128 == 0 and B % 8 == 0

    b2d = b.reshape(1, N)

    return pl.pallas_call(
        _fc1_kernel,
        out_shape=jax.ShapeDtypeStruct((B, N), jnp.float32),
        grid_spec=pltpu.PrefetchScalarGridSpec(
            num_scalar_prefetch=0,
            grid=(N // tn,),
            in_specs=[
                pl.BlockSpec((B, K), lambda j: (0, 0)),    # x (full, resident)
                pl.BlockSpec((K, tn), lambda j: (0, j)),   # W1 column block (bf16)
                pl.BlockSpec((1, tn), lambda j: (0, j)),   # b1
            ],
            out_specs=pl.BlockSpec((B, tn), lambda j: (0, j)),
        ),
        compiler_params=pltpu.CompilerParams(
            dimension_semantics=("parallel",),
            vmem_limit_bytes=VMEM_LIMIT),
    )(x, w, b2d)


def fc2_fc3_pallas(y1, w2, b2, w3_row, *, tn=512):
    """y1: (B, K) f32, w2: (K, N) bf16, b2: (N,) f32, w3_row: (1, N) f32.

    Returns (y2, z) with y2: (B, N) f32 and z: (B, (N//tn)*128) f32, where
    each 128-lane group of z holds one fc3 partial sum in lane 0.
    """
    B, K = y1.shape
    Kw, N = w2.shape
    assert K == Kw
    tn = min(tn, N)
    assert N % tn == 0 and tn % 128 == 0 and B % 8 == 0
    n_blk = N // tn

    b2_2d = b2.reshape(1, N)

    return pl.pallas_call(
        _fc2_fc3_kernel,
        out_shape=(jax.ShapeDtypeStruct((B, N), jnp.float32),
                   jax.ShapeDtypeStruct((B, n_blk * 128), jnp.float32)),
        grid_spec=pltpu.PrefetchScalarGridSpec(
            num_scalar_prefetch=0,
            grid=(n_blk,),
            in_specs=[
                pl.BlockSpec((B, K), lambda j: (0, 0)),    # y1 (full, resident)
                pl.BlockSpec((K, tn), lambda j: (0, j)),   # W2 column block (bf16)
                pl.BlockSpec((1, tn), lambda j: (0, j)),   # b2
                pl.BlockSpec((1, tn), lambda j: (0, j)),   # w3 row slice
            ],
            out_specs=[pl.BlockSpec((B, tn), lambda j: (0, j)),    # y2
                       pl.BlockSpec((B, 128), lambda j: (0, j))],  # fc3 partials
        ),
        compiler_params=pltpu.CompilerParams(
            dimension_semantics=("parallel",),
            vmem_limit_bytes=VMEM_LIMIT),
    )(y1, w2, b2_2d, w3_row)


def init_params(key):
    """Deterministic nn.Linear-style init.

    Weights stored as (in, out); W1/W2 cast to bf16 ONCE here (outside jit)
    so the kernels stream half the HBM bytes.  fc3 weight stored directly as
    a lane-dense (1, HIDDEN) f32 row (no per-forward relayout).
    """
    def linear_init(k, fan_in, fan_out):
        k1, k2 = jax.random.split(k)
        bound = 1.0 / jnp.sqrt(fan_in)
        w = jax.random.uniform(k1, (fan_in, fan_out), jnp.float32, -bound, bound)
        b = jax.random.uniform(k2, (fan_out,), jnp.float32, -bound, bound)
        return w, b

    k1, k2, k3 = jax.random.split(key, 3)
    w1, b1 = linear_init(k1, HIDDEN, HIDDEN)
    w2, b2 = linear_init(k2, HIDDEN, HIDDEN)
    w3, b3 = linear_init(k3, HIDDEN, 1)
    return dict(w1=w1.astype(jnp.bfloat16), b1=b1,
                w2=w2.astype(jnp.bfloat16), b2=b2,
                w3=w3.reshape(1, HIDDEN), b3=b3)


@jax.jit
def discriminator_forward(params, x):
    # dropout -> identity (eval mode)
    y1 = fc1_pallas(x, params["w1"], params["b1"])
    # relu(y1) fused into fc2's input; fc3's matvec fused into fc2's epilogue.
    y2, z = fc2_fc3_pallas(y1, params["w2"], params["b2"], params["w3"])
    # Tiny tail: sum the per-tile fc3 partials (zeros elsewhere), bias, sigmoid.
    out = jnp.sum(z, axis=1, keepdims=True) + params["b3"]
    if not WGAN:
        out = (jax.nn.sigmoid(out) + 1.0) / 2.0
    return y1, y2, out


def discriminator_reference(params, x):
    """f32 math using the same (bf16-stored) weights, upcast once."""
    w1 = params["w1"].astype(jnp.float32)
    w2 = params["w2"].astype(jnp.float32)
    y1 = x @ w1 + params["b1"]
    h = jnp.maximum(y1, 0.0)
    y2 = h @ w2 + params["b2"]
    h = jnp.maximum(y2, 0.0)
    out = jnp.sum(h * params["w3"], axis=1, keepdims=True) + params["b3"]
    if not WGAN:
        out = (jax.nn.sigmoid(out) + 1.0) / 2.0
    return y1, y2, out


if __name__ == "__main__":
    key = jax.random.PRNGKey(0)
    kp, kx = jax.random.split(key)
    params = init_params(kp)

    B = 8
    x = jax.random.normal(kx, (B, HIDDEN), jnp.float32)

    y1, y2, out = discriminator_forward(params, x)
    jax.block_until_ready((y1, y2, out))

    r1, r2, rout = discriminator_reference(params, x)
    assert y1.shape == (B, HIDDEN) and y2.shape == (B, HIDDEN) and out.shape == (B, 1)
    # bf16 activation casts inside the kernels -> allow ~1e-2 drift.
    assert jnp.allclose(y1, r1, atol=2e-2, rtol=2e-2)
    assert jnp.allclose(y2, r2, atol=2e-2, rtol=2e-2)
    assert jnp.allclose(out, rout, atol=1e-2, rtol=1e-2)

    print("KERNEL_OK")
</pallas_src>

<mosaic_0001>
module attributes {stable_mosaic.version = 11 : i64} {
  func.func @_fc2_fc3_kernel(%arg0: i32, %arg1: memref<8x2048xf32, #tpu.memory_space<vmem>>, %arg2: memref<2048x512xbf16, #tpu.memory_space<vmem>>, %arg3: memref<1x512xf32, #tpu.memory_space<vmem>>, %arg4: memref<1x512xf32, #tpu.memory_space<vmem>>, %arg5: memref<8x512xf32, #tpu.memory_space<vmem>>, %arg6: memref<8x128xf32, #tpu.memory_space<vmem>>) attributes {dimension_semantics = [#tpu.dimension_semantics<parallel>], iteration_bounds = array<i64: 4>, scalar_prefetch = 0 : i64, scratch_operands = 0 : i64, tpu.core_type = #tpu.core_type<tc>, window_params = [{pipeline_mode = #tpu.pipeline_mode<synchronous>, transform_indices = @transform_0, window_bounds = array<i64: 8, 2048>}, {transform_indices = @transform_1, window_bounds = array<i64: 2048, 512>}, {transform_indices = @transform_2, window_bounds = array<i64: 1, 512>}, {transform_indices = @transform_3, window_bounds = array<i64: 1, 512>}, {transform_indices = @transform_4, window_bounds = array<i64: 8, 512>}, {transform_indices = @transform_5, window_bounds = array<i64: 8, 128>}]} {
    %c0 = arith.constant 0 : index
    %c0_0 = arith.constant 0 : index
    %0 = vector.load %arg1[%c0, %c0_0] : memref<8x2048xf32, #tpu.memory_space<vmem>>, vector<8x2048xf32>
    %cst = arith.constant 0.000000e+00 : f32
    %1 = vector.broadcast %cst : f32 to vector<8x2048xf32>
    %2 = arith.maximumf %0, %1 : vector<8x2048xf32>
    %3 = arith.truncf %2 : vector<8x2048xf32> to vector<8x2048xbf16>
    %c0_1 = arith.constant 0 : index
    %c0_2 = arith.constant 0 : index
    %4 = vector.load %arg2[%c0_1, %c0_2] : memref<2048x512xbf16, #tpu.memory_space<vmem>>, vector<2048x512xbf16>
    %cst_3 = arith.constant dense<0.000000e+00> : vector<8x512xf32>
    %5 = tpu.matmul %3, %4, %cst_3 {dimension_numbers = #tpu.dot_dimension_numbers<[1], [0], [0], [1], [0, 0, 1, 1], [], []>} : vector<8x2048xbf16>, vector<2048x512xbf16>, vector<8x512xf32> -> vector<8x512xf32>
    %c0_4 = arith.constant 0 : index
    %c0_5 = arith.constant 0 : index
    %6 = vector.load %arg3[%c0_4, %c0_5] : memref<1x512xf32, #tpu.memory_space<vmem>>, vector<1x512xf32>
    %7 = vector.broadcast %6 : vector<1x512xf32> to vector<8x512xf32>
    %8 = arith.addf %5, %7 : vector<8x512xf32>
    %c0_6 = arith.constant 0 : index
    %c0_7 = arith.constant 0 : index
    %9 = vector.load %arg5[%c0_6, %c0_7] : memref<8x512xf32, #tpu.memory_space<vmem>>, vector<8x512xf32>
    tpu.vector_store %arg5[%c0_6, %c0_7], %8 {strides = array<i32>} : memref<8x512xf32, #tpu.memory_space<vmem>>, vector<8x512xf32>,
    %cst_8 = arith.constant 0.000000e+00 : f32
    %10 = vector.broadcast %cst_8 : f32 to vector<8x512xf32>
    %11 = arith.maximumf %8, %10 : vector<8x512xf32>
    %c0_9 = arith.constant 0 : index
    %c0_10 = arith.constant 0 : index
    %12 = vector.load %arg4[%c0_9, %c0_10] : memref<1x512xf32, #tpu.memory_space<vmem>>, vector<1x512xf32>
    %13 = vector.broadcast %12 : vector<1x512xf32> to vector<8x512xf32>
    %14 = arith.mulf %11, %13 : vector<8x512xf32>
    %cst_11 = arith.constant dense<0.000000e+00> : vector<8xf32>
    %15 = vector.multi_reduction <add>, %14, %cst_11 [1] : vector<8x512xf32> to vector<8xf32>
    %16 = vector.shape_cast %15 : vector<8xf32> to vector<8x1xf32>
    %17 = tpu.iota {dimensions = array<i32: 1>} : vector<8x128xi32>
    %c0_i32 = arith.constant 0 : i32
    %18 = vector.broadcast %c0_i32 : i32 to vector<8x128xi32>
    %19 = arith.cmpi eq, %17, %18 : vector<8x128xi32>
    %cst_12 = arith.constant 0.000000e+00 : f32
    %20 = vector.shape_cast %16 : vector<8x1xf32> to vector<8x1xf32>
    %21 = vector.broadcast %20 : vector<8x1xf32> to vector<8x128xf32>
    %22 = vector.broadcast %cst_12 : f32 to vector<8x128xf32>
    %23 = arith.select %19, %21, %22 : vector<8x128xi1>, vector<8x128xf32>
    %c0_13 = arith.constant 0 : index
    %c0_14 = arith.constant 0 : index
    %24 = vector.load %arg6[%c0_13, %c0_14] : memref<8x128xf32, #tpu.memory_space<vmem>>, vector<8x128xf32>
    tpu.vector_store %arg6[%c0_13, %c0_14], %23 {strides = array<i32>} : memref<8x128xf32, #tpu.memory_space<vmem>>, vector<8x128xf32>,
    return
  }
  func.func @transform_0(%arg0: i32) -> (i32, i32) {
    %c0_i32 = arith.constant 0 : i32
    %c0_i32_0 = arith.constant 0 : i32
    %c0_i32_1 = arith.constant 0 : i32
    return %c0_i32, %c0_i32_0 : i32, i32
  }
  func.func @transform_1(%arg0: i32) -> (i32, i32) {
    %c0_i32 = arith.constant 0 : i32
    %c0_i32_0 = arith.constant 0 : i32
    return %c0_i32, %arg0 : i32, i32
  }
  func.func @transform_2(%arg0: i32) -> (i32, i32) {
    %c0_i32 = arith.constant 0 : i32
    %c0_i32_0 = arith.constant 0 : i32
    return %c0_i32, %arg0 : i32, i32
  }
  func.func @transform_3(%arg0: i32) -> (i32, i32) {
    %c0_i32 = arith.constant 0 : i32
    %c0_i32_0 = arith.constant 0 : i32
    return %c0_i32, %arg0 : i32, i32
  }
  func.func @transform_4(%arg0: i32) -> (i32, i32) {
    %c0_i32 = arith.constant 0 : i32
    %c0_i32_0 = arith.constant 0 : i32
    return %c0_i32, %arg0 : i32, i32
  }
  func.func @transform_5(%arg0: i32) -> (i32, i32) {
    %c0_i32 = arith.constant 0 : i32
    %c0_i32_0 = arith.constant 0 : i32
    return %c0_i32, %arg0 : i32, i32
  }
}

module attributes {stable_mosaic.version = 11 : i64} {
  func.func @_fc1_kernel(%arg0: i32, %arg1: memref<8x2048xf32, #tpu.memory_space<vmem>>, %arg2: memref<2048x512xbf16, #tpu.memory_space<vmem>>, %arg3: memref<1x512xf32, #tpu.memory_space<vmem>>, %arg4: memref<8x512xf32, #tpu.memory_space<vmem>>) attributes {dimension_semantics = [#tpu.dimension_semantics<parallel>], iteration_bounds = array<i64: 4>, scalar_prefetch = 0 : i64, scratch_operands = 0 : i64, tpu.core_type = #tpu.core_type<tc>, window_params = [{pipeline_mode = #tpu.pipeline_mode<synchronous>, transform_indices = @transform_0, window_bounds = array<i64: 8, 2048>}, {transform_indices = @transform_1, window_bounds = array<i64: 2048, 512>}, {transform_indices = @transform_2, window_bounds = array<i64: 1, 512>}, {transform_indices = @transform_3, window_bounds = array<i64: 8, 512>}]} {
    %c0 = arith.constant 0 : index
    %c0_0 = arith.constant 0 : index
    %0 = vector.load %arg1[%c0, %c0_0] : memref<8x2048xf32, #tpu.memory_space<vmem>>, vector<8x2048xf32>
    %1 = arith.truncf %0 : vector<8x2048xf32> to vector<8x2048xbf16>
    %c0_1 = arith.constant 0 : index
    %c0_2 = arith.constant 0 : index
    %2 = vector.load %arg2[%c0_1, %c0_2] : memref<2048x512xbf16, #tpu.memory_space<vmem>>, vector<2048x512xbf16>
    %cst = arith.constant dense<0.000000e+00> : vector<8x512xf32>
    %3 = tpu.matmul %1, %2, %cst {dimension_numbers = #tpu.dot_dimension_numbers<[1], [0], [0], [1], [0, 0, 1, 1], [], []>} : vector<8x2048xbf16>, vector<2048x512xbf16>, vector<8x512xf32> -> vector<8x512xf32>
    %c0_3 = arith.constant 0 : index
    %c0_4 = arith.constant 0 : index
    %4 = vector.load %arg3[%c0_3, %c0_4] : memref<1x512xf32, #tpu.memory_space<vmem>>, vector<1x512xf32>
    %5 = vector.broadcast %4 : vector<1x512xf32> to vector<8x512xf32>
    %6 = arith.addf %3, %5 : vector<8x512xf32>
    %c0_5 = arith.constant 0 : index
    %c0_6 = arith.constant 0 : index
    %7 = vector.load %arg4[%c0_5, %c0_6] : memref<8x512xf32, #tpu.memory_space<vmem>>, vector<8x512xf32>
    tpu.vector_store %arg4[%c0_5, %c0_6], %6 {strides = array<i32>} : memref<8x512xf32, #tpu.memory_space<vmem>>, vector<8x512xf32>,
    return
  }
  func.func @transform_0(%arg0: i32) -> (i32, i32) {
    %c0_i32 = arith.constant 0 : i32
    %c0_i32_0 = arith.constant 0 : i32
    %c0_i32_1 = arith.constant 0 : i32
    return %c0_i32, %c0_i32_0 : i32, i32
  }
  func.func @transform_1(%arg0: i32) -> (i32, i32) {
    %c0_i32 = arith.constant 0 : i32
    %c0_i32_0 = arith.constant 0 : i32
    return %c0_i32, %arg0 : i32, i32
  }
  func.func @transform_2(%arg0: i32) -> (i32, i32) {
    %c0_i32 = arith.constant 0 : i32
    %c0_i32_0 = arith.constant 0 : i32
    return %c0_i32, %arg0 : i32, i32
  }
  func.func @transform_3(%arg0: i32) -> (i32, i32) {
    %c0_i32 = arith.constant 0 : i32
    %c0_i32_0 = arith.constant 0 : i32
    return %c0_i32, %arg0 : i32, i32
  }
}

</mosaic_0001>

<llo_original>
// kernel: discriminator_forward.2
$region0: #{discriminator_forward.2}
  #allocation0 [shape = 'u32[]', space=smem, size = 0x4, offset = 0x4, fixed_abs, tag = 'smem constant byte address 0x4 - core index']
  #allocation1 [shape = 'u32[72,128]{1,0:T(1,128)}', space=vmem, size = 0x9000, scoped, tag = 'internal scratch']
  %s0 = inlined_call_operand.hbm [shape: f32[8,2048], index: 0, kind: input, shape index: {}]
  %s1 = inlined_call_operand.hbm [shape: bf16[2048,2048], index: 1, kind: input, shape index: {}]
  %s2 = inlined_call_operand.hbm [shape: f32[1,2048], index: 2, kind: input, shape index: {}]
  %s3 = inlined_call_operand.vmem [shape: f32[8,2048], index: 3, kind: output, shape index: {}]
  %s4 = sld [smem:[#allocation0]]
  $region57: #{discriminator_forward.2} parent=0
    _
  %s6 = ssub.s32 1, %s4
  %s7 = scalar_select 0, %s6, %s4
  $region1: #{discriminator_forward.2} parent=0
    #allocation2 [shape = 'u8[65536]{0}', space=vmem, size = 0x10000, scoped, tag = 'input window, operand 0, single buffered']
    #allocation3 [shape = 's32[2]{0}', space=sflag, size = 0x8, scoped, tag = 'scoped memory for discriminator_forward.2']
    #allocation4 [shape = 'u8[4194304]{0}', space=vmem, size = 0x400000, scoped, tag = 'input window, operand 1']
    #allocation5 [shape = 's32[2]{0}', space=sflag, size = 0x8, scoped, tag = 'scoped memory for discriminator_forward.2']
    #allocation6 [shape = 'u8[4096]{0}', space=vmem, size = 0x1000, scoped, tag = 'input window, operand 2']
    %8 = vsyncpa [#allocation3], 0
    %9 = vsyncpa [#allocation5], 0
    %s10 = scalar_lea.sflag [#allocation5], 1
    %11 = vsyncpa %s10, 0
    loop: start=0, step=1, limit=6
    $region2: #{discriminator_forward.2} parent=1 // loop_pre_header
      _
    $region3: #{discriminator_forward.2} parent=1 // loop_header
      %s13 = sphi 0, %s17
      %p14 = scmp.ge.s32.totalorder %s13, 6
      %s21 = sphi 0, %s21
      %s23 = sphi 0, %s21
      %s24 = sphi 0, %s23
      %s38 = sphi 0, %s24
      %s44 = sphi 0, %s46
      %s47 = sphi 0, %s44
      %s48 = sphi 0, %s47
      %s64 = sphi 0, %s48
      %s70 = sphi 0, %s72
      %s73 = sphi 0, %s70
      %s74 = sphi 0, %s73
      %s90 = sphi 0, %s74
      %s96 = sphi 0, %s98
      %s99 = sphi 0, %s96
      %s100 = sphi 0, %s99
      %s116 = sphi 0, %s100
    $region4: #{discriminator_forward.2} parent=1 // loop_header_branch
      %16 = sbr.rel (%p14) target = $region8
    $region5: #{discriminator_forward.2} parent=1 // loop_body
      %s18 = ssub.s32 %s13, 1
      %s19 = ssub.s32 %s13, 2
      %s20 = sadd.s32 %s13, 1
      %s22 = sadd.s32 %s21, 1
      %p25 = scmp.eq.s32.totalorder %s13, 3
      %p26 = scmp.ne.s32.totalorder %s21, %s23
      %p27 = scmp.eq.s32.totalorder %s13, 0
      %p28 = por %p26, %p27
      %p29 = scmp.ne.s32.totalorder %s21, %s23
      %p30 = scmp.eq.s32.totalorder %s18, 3
      %p31 = por %p29, %p30
      %p32 = scmp.ne.s32.totalorder %s23, %s24
      %p33 = scmp.eq.s32.totalorder %s18, 0
      %p34 = por %p32, %p33
      %p35 = scmp.ne.s32.totalorder %s23, %s24
      %p36 = scmp.eq.s32.totalorder %s19, 3
      %p37 = por %p35, %p36
      %p39 = scmp.ne.s32.totalorder %s24, %s38
      %p40 = scmp.eq.s32.totalorder %s19, 0
      %p41 = por %p39, %p40
      %s42 = ssub.s32 %s13, %s20
      %p43 = scmp.eq.s32.totalorder %s42, 0
      %s45 = sadd.s32 %s44, 1
      %s46 = scalar_select %p43, %s44, %s45
      %p49 = pneg %p43
      %p50 = scmp.eq.s32.totalorder %s13, 3
      %p51 = por %p49, %p50
      %p52 = scmp.ne.s32.totalorder %s44, %s47
      %p53 = scmp.eq.s32.totalorder %s13, 0
      %p54 = por %p52, %p53
      %p55 = scmp.ne.s32.totalorder %s44, %s47
      %p56 = scmp.eq.s32.totalorder %s18, 3
      %p57 = por %p55, %p56
      %p58 = scmp.ne.s32.totalorder %s47, %s48
      %p59 = scmp.eq.s32.totalorder %s18, 0
      %p60 = por %p58, %p59
      %p61 = scmp.ne.s32.totalorder %s47, %s48
      %p62 = scmp.eq.s32.totalorder %s19, 3
      %p63 = por %p61, %p62
      %p65 = scmp.ne.s32.totalorder %s48, %s64
      %p66 = scmp.eq.s32.totalorder %s19, 0
      %p67 = por %p65, %p66
      %s68 = ssub.s32 %s13, %s20
      %p69 = scmp.eq.s32.totalorder %s68, 0
      %s71 = sadd.s32 %s70, 1
      %s72 = scalar_select %p69, %s70, %s71
      %p75 = pneg %p69
      %p76 = scmp.eq.s32.totalorder %s13, 3
      %p77 = por %p75, %p76
      %p78 = scmp.ne.s32.totalorder %s70, %s73
      %p79 = scmp.eq.s32.totalorder %s13, 0
      %p80 = por %p78, %p79
      %p81 = scmp.ne.s32.totalorder %s70, %s73
      %p82 = scmp.eq.s32.totalorder %s18, 3
      %p83 = por %p81, %p82
      %p84 = scmp.ne.s32.totalorder %s73, %s74
      %p85 = scmp.eq.s32.totalorder %s18, 0
      %p86 = por %p84, %p85
      %p87 = scmp.ne.s32.totalorder %s73, %s74
      %p88 = scmp.eq.s32.totalorder %s19, 3
      %p89 = por %p87, %p88
      %p91 = scmp.ne.s32.totalorder %s74, %s90
      %p92 = scmp.eq.s32.totalorder %s19, 0
      %p93 = por %p91, %p92
      %s94 = ssub.s32 %s13, %s20
      %p95 = scmp.eq.s32.totalorder %s94, 0
      %s97 = sadd.s32 %s96, 1
      %s98 = scalar_select %p95, %s96, %s97
      %p101 = pneg %p95
      %p102 = scmp.eq.s32.totalorder %s13, 3
      %p103 = por %p101, %p102
      %p104 = scmp.ne.s32.totalorder %s96, %s99
      %p105 = scmp.eq.s32.totalorder %s13, 0
      %p106 = por %p104, %p105
      %p107 = scmp.ne.s32.totalorder %s96, %s99
      %p108 = scmp.eq.s32.totalorder %s18, 3
      %p109 = por %p107, %p108
      %p110 = scmp.ne.s32.totalorder %s99, %s100
      %p111 = scmp.eq.s32.totalorder %s18, 0
      %p112 = por %p110, %p111
      %p113 = scmp.ne.s32.totalorder %s99, %s100
      %p114 = scmp.eq.s32.totalorder %s19, 3
      %p115 = por %p113, %p114
      %p117 = scmp.ne.s32.totalorder %s100, %s116
      %p118 = scmp.eq.s32.totalorder %s19, 0
      %p119 = por %p117, %p118
      %p120 = scmp.le.s32.totalorder 1, %s13
      %p121 = scmp.lt.s32.totalorder %s13, 5
      %p122 = pnand %p120, %p121
      %p123 = pneg %p122
      // Predicated region
      $region9: #{discriminator_forward.2} parent=5 // pred_check
        _
      $region10: #{discriminator_forward.2} parent=5 // pred_check_branch
        %125 = sbr.rel (%p122) target = $region12
      $region11: #{discriminator_forward.2} parent=5 // pred_region
        %s126 = ssub.s32 %s13, 1
        // Predicated region
        $region13: #{discriminator_forward.2} parent=11 // pred_check
          %p127 = pneg %p34
        $region14: #{discriminator_forward.2} parent=11 // pred_check_branch
          %129 = sbr.rel (%p127) target = $region16
        $region15: #{discriminator_forward.2} parent=11 // pred_region
          %131 = vsyncadd [#allocation3], 0
          %s133 = sshll.u32 %s0, 4
          %s134 = int_to_ptr.hbm [resolvable:$true] %s133
          %s135 = sshll.u32 [#allocation2], 4
          %s136 = int_to_ptr.vmem [resolvable:$true] %s135
          %138 = dma.hbm_to_vmem [thread:$0]  %s134, 2048, %s136, [#allocation3]
        $region16: #{discriminator_forward.2} parent=11 // pred_fallthru
          _
      $region12: #{discriminator_forward.2} parent=5 // pred_fallthru
        _
      %p139 = scmp.lt.s32.totalorder %s13, 4
      // Predicated region
      $region17: #{discriminator_forward.2} parent=5 // pred_check
        %p140 = pneg %p139
      $region18: #{discriminator_forward.2} parent=5 // pred_check_branch
        %142 = sbr.rel (%p140) target = $region20
      $region19: #{discriminator_forward.2} parent=5 // pred_region
        // Predicated region
        $region21: #{discriminator_forward.2} parent=19 // pred_check
          %p143 = pneg %p54
        $region22: #{discriminator_forward.2} parent=19 // pred_check_branch
          %145 = sbr.rel (%p143) target = $region24
        $region23: #{discriminator_forward.2} parent=19 // pred_region
          %s146 = sand.u32 %s13, 1
          %s147 = scalar_lea.sflag [#allocation5], %s146
          %s148 = sand.u32 %s44, 1
          %s149 = smul.addr %s148, 4096
          %s150 = scalar_lea.vmem [#allocation4], %s149
          %s151 = smul.u32 4, %s13
          %153 = vsyncadd %s147, 0
          %s154 = smul.addr %s151, 4
          %s155 = scalar_lea.hbm %s1, %s154
          %s156 = sshll.u32 %s155, 4
          %s157 = int_to_ptr.hbm [resolvable:$true] %s156
          %s158 = sshll.u32 %s150, 4
          %s159 = int_to_ptr.vmem [resolvable:$true] %s158
          %164 = dma.hbm_to_vmem [thread:$0]  %s157, 65536, %s159, %s147, 1024, 256, 16
        $region24: #{discriminator_forward.2} parent=19 // pred_fallthru
          _
        // Predicated region
        $region25: #{discriminator_forward.2} parent=19 // pred_check
          %p165 = pneg %p80
        $region26: #{discriminator_forward.2} parent=19 // pred_check_branch
          %167 = sbr.rel (%p165) target = $region28
        $region27: #{discriminator_forward.2} parent=19 // pred_region
          %s168 = sand.u32 %s13, 1
          %s169 = scalar_lea.sflag [#allocation5], %s168
          %s170 = sand.u32 %s70, 1
          %s171 = smul.addr %s170, 4
          %s172 = scalar_lea.vmem [#allocation6], %s171
          %s173 = smul.u32 4, %s13
          %175 = vsyncadd %s169, 0
          %s176 = scalar_lea.hbm %s2, %s173
          %s178 = sshll.u32 %s176, 4
          %s179 = int_to_ptr.hbm [resolvable:$true] %s178
          %s180 = sshll.u32 %s172, 4
          %s181 = int_to_ptr.vmem [resolvable:$true] %s180
          %183 = dma.hbm_to_vmem [thread:$0]  %s179, 64, %s181, %s169
        $region28: #{discriminator_forward.2} parent=19 // pred_fallthru
          _
      $region20: #{discriminator_forward.2} parent=5 // pred_fallthru
        _
      %p184 = scmp.le.s32.totalorder 1, %s13
      %p185 = scmp.lt.s32.totalorder %s13, 5
      %p186 = pnand %p184, %p185
      %p187 = pneg %p186
      // Predicated region
      $region29: #{discriminator_forward.2} parent=5 // pred_check
        _
      $region30: #{discriminator_forward.2} parent=5 // pred_check_branch
        %189 = sbr.rel (%p186) target = $region32
      $region31: #{discriminator_forward.2} parent=5 // pred_region
        %s190 = ssub.s32 %s13, 1
        // Predicated region
        $region33: #{discriminator_forward.2} parent=31 // pred_check
          %p191 = pneg %p34
        $region34: #{discriminator_forward.2} parent=31 // pred_check_branch
          %193 = sbr.rel (%p191) target = $region36
        $region35: #{discriminator_forward.2} parent=31 // pred_region
          %195 = dma.done [#allocation3], 2048
        $region36: #{discriminator_forward.2} parent=31 // pred_fallthru
          _
        %s196 = sand.u32 %s18, 1
        %s197 = scalar_lea.sflag [#allocation5], %s196
        %s198 = sand.u32 %s47, 1
        %s199 = smul.addr %s198, 4096
        %s200 = scalar_lea.vmem [#allocation4], %s199
        // Predicated region
        $region37: #{discriminator_forward.2} parent=31 // pred_check
          %p201 = pneg %p60
        $region38: #{discriminator_forward.2} parent=31 // pred_check_branch
          %203 = sbr.rel (%p201) target = $region40
        $region39: #{discriminator_forward.2} parent=31 // pred_region
          %205 = dma.done %s197, 65536
        $region40: #{discriminator_forward.2} parent=31 // pred_fallthru
          _
        %s206 = sand.u32 %s18, 1
        %s207 = scalar_lea.sflag [#allocation5], %s206
        %s208 = sand.u32 %s73, 1
        %s209 = smul.addr %s208, 4
        %s210 = scalar_lea.vmem [#allocation6], %s209
        // Predicated region
        $region41: #{discriminator_forward.2} parent=31 // pred_check
          %p211 = pneg %p86
        $region42: #{discriminator_forward.2} parent=31 // pred_check_branch
          %213 = sbr.rel (%p211) target = $region44
        $region43: #{discriminator_forward.2} parent=31 // pred_region
          %215 = dma.done %s207, 64
        $region44: #{discriminator_forward.2} parent=31 // pred_fallthru
          _
        %p216 = pneg %p34
        %p217 = pneg %p31
        %s218 = sand.u32 %s18, 1
        %s219 = scalar_lea.sflag [#allocation5], %s218
        %s220 = sand.u32 %s47, 1
        %s221 = smul.addr %s220, 4096
        %s222 = scalar_lea.vmem [#allocation4], %s221
        %p223 = pneg %p60
        %p224 = pneg %p57
        %s225 = sand.u32 %s18, 1
        %s226 = scalar_lea.sflag [#allocation5], %s225
        %s227 = sand.u32 %s73, 1
        %s228 = smul.addr %s227, 4
        %s229 = scalar_lea.vmem [#allocation6], %s228
        %p230 = pneg %p86
        %p231 = pneg %p83
        %p232 = pneg %p112
        %p233 = pneg %p109
        %s234 = smul.u32 4, %s18
        %p235 = scmp.lt.s32.totalorder %s234, 15
        %s236 = scalar_select %p235, %s234, 15
        %s237 = smul.addr %s236, 8
        %s238 = scalar_lea.vmem %s3, %s237
        %s239 = smul.u32 4, %s18
        %s240 = smul.u32 4, %s18
        %s241 = smul.u32 4, %s18
        %p242 = scmp.lt.s32.totalorder %s241, 15
        %s243 = scalar_select %p242, %s241, 15
        %s244 = smul.addr %s243, 8
        %s245 = scalar_lea.vmem %s3, %s244
        %s246 = smul.u32 4, %s18
        %v247 = vld [vmem:[#allocation2] sm:$0xff]
        %v248 = vld [vmem:[#allocation2 + $0x8] sm:$0xff]
        %v249 = vld [vmem:[#allocation2 + $0x10] sm:$0xff]
        %v250 = vld [vmem:[#allocation2 + $0x18] sm:$0xff]
        %v251 = vld [vmem:[#allocation2 + $0x20] sm:$0xff]
        %v252 = vld [vmem:[#allocation2 + $0x28] sm:$0xff]
        %v253 = vld [vmem:[#allocation2 + $0x30] sm:$0xff]
        %v254 = vld [vmem:[#allocation2 + $0x38] sm:$0xff]
        %v255 = vld [vmem:[#allocation2 + $0x40] sm:$0xff]
        %v256 = vld [vmem:[#allocation2 + $0x48] sm:$0xff]
        %v257 = vld [vmem:[#allocation2 + $0x50] sm:$0xff]
        %v258 = vld [vmem:[#allocation2 + $0x58] sm:$0xff]
        %v259 = vld [vmem:[#allocation2 + $0x60] sm:$0xff]
        %v260 = vld [vmem:[#allocation2 + $0x68] sm:$0xff]
        %v261 = vld [vmem:[#allocation2 + $0x70] sm:$0xff]
        %v262 = vld [vmem:[#allocation2 + $0x78] sm:$0xff]
        %v263 = vpack.c.bf16 %v247, %v247
        %v264 = vpack.c.bf16 %v248, %v248
        %v265 = vpack.c.bf16 %v249, %v249
        %v266 = vpack.c.bf16 %v250, %v250
        %v267 = vpack.c.bf16 %v251, %v251
        %v268 = vpack.c.bf16 %v252, %v252
        %v269 = vpack.c.bf16 %v253, %v253
        %v270 = vpack.c.bf16 %v254, %v254
        %v271 = vpack.c.bf16 %v255, %v255
        %v272 = vpack.c.bf16 %v256, %v256
        %v273 = vpack.c.bf16 %v257, %v257
        %v274 = vpack.c.bf16 %v258, %v258
        %v275 = vpack.c.bf16 %v259, %v259
        %v276 = vpack.c.bf16 %v260, %v260
        %v277 = vpack.c.bf16 %v261, %v261
        %v278 = vpack.c.bf16 %v262, %v262
        %v279 = vld [vmem:[%s200] sm:$0xff]
        %v280 = vld [vmem:[%s200 + $0x8] sm:$0xff]
        %v281 = vld [vmem:[%s200 + $0x10] sm:$0xff]
        %v282 = vld [vmem:[%s200 + $0x18] sm:$0xff]
        %v283 = vld [vmem:[%s200 + $0x20] sm:$0xff]
        %v284 = vld [vmem:[%s200 + $0x28] sm:$0xff]
        %v285 = vld [vmem:[%s200 + $0x30] sm:$0xff]
        %v286 = vld [vmem:[%s200 + $0x38] sm:$0xff]
        %v287 = vld [vmem:[%s200 + $0x40] sm:$0xff]
        %v288 = vld [vmem:[%s200 + $0x48] sm:$0xff]
        %v289 = vld [vmem:[%s200 + $0x50] sm:$0xff]
        %v290 = vld [vmem:[%s200 + $0x58] sm:$0xff]
        %v291 = vld [vmem:[%s200 + $0x60] sm:$0xff]
        %v292 = vld [vmem:[%s200 + $0x68] sm:$0xff]
        %v293 = vld [vmem:[%s200 + $0x70] sm:$0xff]
        %v294 = vld [vmem:[%s200 + $0x78] sm:$0xff]
        %v295 = vld [vmem:[%s200 + $0x80] sm:$0xff]
        %v296 = vld [vmem:[%s200 + $0x88] sm:$0xff]
        %v297 = vld [vmem:[%s200 + $0x90] sm:$0xff]
        %v298 = vld [vmem:[%s200 + $0x98] sm:$0xff]
        %v299 = vld [vmem:[%s200 + $0xa0] sm:$0xff]
        %v300 = vld [vmem:[%s200 + $0xa8] sm:$0xff]
        %v301 = vld [vmem:[%s200 + $0xb0] sm:$0xff]
        %v302 = vld [vmem:[%s200 + $0xb8] sm:$0xff]
        %v303 = vld [vmem:[%s200 + $0xc0] sm:$0xff]
        %v304 = vld [vmem:[%s200 + $0xc8] sm:$0xff]
        %v305 = vld [vmem:[%s200 + $0xd0] sm:$0xff]
        %v306 = vld [vmem:[%s200 + $0xd8] sm:$0xff]
        %v307 = vld [vmem:[%s200 + $0xe0] sm:$0xff]
        %v308 = vld [vmem:[%s200 + $0xe8] sm:$0xff]
        %v309 = vld [vmem:[%s200 + $0xf0] sm:$0xff]
        %v310 = vld [vmem:[%s200 + $0xf8] sm:$0xff]
        %v311 = vld [vmem:[%s200 + $0x100] sm:$0xff]
        %v312 = vld [vmem:[%s200 + $0x108] sm:$0xff]
        %v313 = vld [vmem:[%s200 + $0x110] sm:$0xff]
        %v314 = vld [vmem:[%s200 + $0x118] sm:$0xff]
        %v315 = vld [vmem:[%s200 + $0x120] sm:$0xff]
        %v316 = vld [vmem:[%s200 + $0x128] sm:$0xff]
        %v317 = vld [vmem:[%s200 + $0x130] sm:$0xff]
        %v318 = vld [vmem:[%s200 + $0x138] sm:$0xff]
        %v319 = vld [vmem:[%s200 + $0x140] sm:$0xff]
        %v320 = vld [vmem:[%s200 + $0x148] sm:$0xff]
        %v321 = vld [vmem:[%s200 + $0x150] sm:$0xff]
        %v322 = vld [vmem:[%s200 + $0x158] sm:$0xff]
        %v323 = vld [vmem:[%s200 + $0x160] sm:$0xff]
        %v324 = vld [vmem:[%s200 + $0x168] sm:$0xff]
        %v325 = vld [vmem:[%s200 + $0x170] sm:$0xff]
        %v326 = vld [vmem:[%s200 + $0x178] sm:$0xff]
        %v327 = vld [vmem:[%s200 + $0x180] sm:$0xff]
        %v328 = vld [vmem:[%s200 + $0x188] sm:$0xff]
        %v329 = vld [vmem:[%s200 + $0x190] sm:$0xff]
        %v330 = vld [vmem:[%s200 + $0x198] sm:$0xff]
        %v331 = vld [vmem:[%s200 + $0x1a0] sm:$0xff]
        %v332 = vld [vmem:[%s200 + $0x1a8] sm:$0xff]
        %v333 = vld [vmem:[%s200 + $0x1b0] sm:$0xff]
        %v334 = vld [vmem:[%s200 + $0x1b8] sm:$0xff]
        %v335 = vld [vmem:[%s200 + $0x1c0] sm:$0xff]
        %v336 = vld [vmem:[%s200 + $0x1c8] sm:$0xff]
        %v337 = vld [vmem:[%s200 + $0x1d0] sm:$0xff]
        %v338 = vld [vmem:[%s200 + $0x1d8] sm:$0xff]
        %v339 = vld [vmem:[%s200 + $0x1e0] sm:$0xff]
        %v340 = vld [vmem:[%s200 + $0x1e8] sm:$0xff]
        %v341 = vld [vmem:[%s200 + $0x1f0] sm:$0xff]
        %v342 = vld [vmem:[%s200 + $0x1f8] sm:$0xff]
        %v343 = vld [vmem:[%s200 + $0x200] sm:$0xff]
        %v344 = vld [vmem:[%s200 + $0x208] sm:$0xff]
        %v345 = vld [vmem:[%s200 + $0x210] sm:$0xff]
        %v346 = vld [vmem:[%s200 + $0x218] sm:$0xff]
        %v347 = vld [vmem:[%s200 + $0x220] sm:$0xff]
        %v348 = vld [vmem:[%s200 + $0x228] sm:$0xff]
        %v349 = vld [vmem:[%s200 + $0x230] sm:$0xff]
        %v350 = vld [vmem:[%s200 + $0x238] sm:$0xff]
        %v351 = vld [vmem:[%s200 + $0x240] sm:$0xff]
        %v352 = vld [vmem:[%s200 + $0x248] sm:$0xff]
        %v353 = vld [vmem:[%s200 + $0x250] sm:$0xff]
        %v354 = vld [vmem:[%s200 + $0x258] sm:$0xff]
        %v355 = vld [vmem:[%s200 + $0x260] sm:$0xff]
        %v356 = vld [vmem:[%s200 + $0x268] sm:$0xff]
        %v357 = vld [vmem:[%s200 + $0x270] sm:$0xff]
        %v358 = vld [vmem:[%s200 + $0x278] sm:$0xff]
        %v359 = vld [vmem:[%s200 + $0x280] sm:$0xff]
        %v360 = vld [vmem:[%s200 + $0x288] sm:$0xff]
        %v361 = vld [vmem:[%s200 + $0x290] sm:$0xff]
        %v362 = vld [vmem:[%s200 + $0x298] sm:$0xff]
        %v363 = vld [vmem:[%s200 + $0x2a0] sm:$0xff]
        %v364 = vld [vmem:[%s200 + $0x2a8] sm:$0xff]
        %v365 = vld [vmem:[%s200 + $0x2b0] sm:$0xff]
        %v366 = vld [vmem:[%s200 + $0x2b8] sm:$0xff]
        %v367 = vld [vmem:[%s200 + $0x2c0] sm:$0xff]
        %v368 = vld [vmem:[%s200 + $0x2c8] sm:$0xff]
        %v369 = vld [vmem:[%s200 + $0x2d0] sm:$0xff]
        %v370 = vld [vmem:[%s200 + $0x2d8] sm:$0xff]
        %v371 = vld [vmem:[%s200 + $0x2e0] sm:$0xff]
        %v372 = vld [vmem:[%s200 + $0x2e8] sm:$0xff]
        %v373 = vld [vmem:[%s200 + $0x2f0] sm:$0xff]
        %v374 = vld [vmem:[%s200 + $0x2f8] sm:$0xff]
        %v375 = vld [vmem:[%s200 + $0x300] sm:$0xff]
        %v376 = vld [vmem:[%s200 + $0x308] sm:$0xff]
        %v377 = vld [vmem:[%s200 + $0x310] sm:$0xff]
        %v378 = vld [vmem:[%s200 + $0x318] sm:$0xff]
        %v379 = vld [vmem:[%s200 + $0x320] sm:$0xff]
        %v380 = vld [vmem:[%s200 + $0x328] sm:$0xff]
        %v381 = vld [vmem:[%s200 + $0x330] sm:$0xff]
        %v382 = vld [vmem:[%s200 + $0x338] sm:$0xff]
        %v383 = vld [vmem:[%s200 + $0x340] sm:$0xff]
        %v384 = vld [vmem:[%s200 + $0x348] sm:$0xff]
        %v385 = vld [vmem:[%s200 + $0x350] sm:$0xff]
        %v386 = vld [vmem:[%s200 + $0x358] sm:$0xff]
        %v387 = vld [vmem:[%s200 + $0x360] sm:$0xff]
        %v388 = vld [vmem:[%s200 + $0x368] sm:$0xff]
        %v389 = vld [vmem:[%s200 + $0x370] sm:$0xff]
        %v390 = vld [vmem:[%s200 + $0x378] sm:$0xff]
        %v391 = vld [vmem:[%s200 + $0x380] sm:$0xff]
        %v392 = vld [vmem:[%s200 + $0x388] sm:$0xff]
        %v393 = vld [vmem:[%s200 + $0x390] sm:$0xff]
        %v394 = vld [vmem:[%s200 + $0x398] sm:$0xff]
        %v395 = vld [vmem:[%s200 + $0x3a0] sm:$0xff]
        %v396 = vld [vmem:[%s200 + $0x3a8] sm:$0xff]
        %v397 = vld [vmem:[%s200 + $0x3b0] sm:$0xff]
        %v398 = vld [vmem:[%s200 + $0x3b8] sm:$0xff]
        %v399 = vld [vmem:[%s200 + $0x3c0] sm:$0xff]
        %v400 = vld [vmem:[%s200 + $0x3c8] sm:$0xff]
        %v401 = vld [vmem:[%s200 + $0x3d0] sm:$0xff]
        %v402 = vld [vmem:[%s200 + $0x3d8] sm:$0xff]
        %v403 = vld [vmem:[%s200 + $0x3e0] sm:$0xff]
        %v404 = vld [vmem:[%s200 + $0x3e8] sm:$0xff]
        %v405 = vld [vmem:[%s200 + $0x3f0] sm:$0xff]
        %v406 = vld [vmem:[%s200 + $0x3f8] sm:$0xff]
        %v407 = vld [vmem:[%s200 + $0x400] sm:$0xff]
        %v408 = vld [vmem:[%s200 + $0x408] sm:$0xff]
        %v409 = vld [vmem:[%s200 + $0x410] sm:$0xff]
        %v410 = vld [vmem:[%s200 + $0x418] sm:$0xff]
        %v411 = vld [vmem:[%s200 + $0x420] sm:$0xff]
        %v412 = vld [vmem:[%s200 + $0x428] sm:$0xff]
        %v413 = vld [vmem:[%s200 + $0x430] sm:$0xff]
        %v414 = vld [vmem:[%s200 + $0x438] sm:$0xff]
        %v415 = vld [vmem:[%s200 + $0x440] sm:$0xff]
        %v416 = vld [vmem:[%s200 + $0x448] sm:$0xff]
        %v417 = vld [vmem:[%s200 + $0x450] sm:$0xff]
        %v418 = vld [vmem:[%s200 + $0x458] sm:$0xff]
        %v419 = vld [vmem:[%s200 + $0x460] sm:$0xff]
        %v420 = vld [vmem:[%s200 + $0x468] sm:$0xff]
        %v421 = vld [vmem:[%s200 + $0x470] sm:$0xff]
        %v422 = vld [vmem:[%s200 + $0x478] sm:$0xff]
        %v423 = vld [vmem:[%s200 + $0x480] sm:$0xff]
        %v424 = vld [vmem:[%s200 + $0x488] sm:$0xff]
        %v425 = vld [vmem:[%s200 + $0x490] sm:$0xff]
        %v426 = vld [vmem:[%s200 + $0x498] sm:$0xff]
        %v427 = vld [vmem:[%s200 + $0x4a0] sm:$0xff]
        %v428 = vld [vmem:[%s200 + $0x4a8] sm:$0xff]
        %v429 = vld [vmem:[%s200 + $0x4b0] sm:$0xff]
        %v430 = vld [vmem:[%s200 + $0x4b8] sm:$0xff]
        %v431 = vld [vmem:[%s200 + $0x4c0] sm:$0xff]
        %v432 = vld [vmem:[%s200 + $0x4c8] sm:$0xff]
        %v433 = vld [vmem:[%s200 + $0x4d0] sm:$0xff]
        %v434 = vld [vmem:[%s200 + $0x4d8] sm:$0xff]
        %v435 = vld [vmem:[%s200 + $0x4e0] sm:$0xff]
        %v436 = vld [vmem:[%s200 + $0x4e8] sm:$0xff]
        %v437 = vld [vmem:[%s200 + $0x4f0] sm:$0xff]
        %v438 = vld [vmem:[%s200 + $0x4f8] sm:$0xff]
        %v439 = vld [vmem:[%s200 + $0x500] sm:$0xff]
        %v440 = vld [vmem:[%s200 + $0x508] sm:$0xff]
        %v441 = vld [vmem:[%s200 + $0x510] sm:$0xff]
        %v442 = vld [vmem:[%s200 + $0x518] sm:$0xff]
        %v443 = vld [vmem:[%s200 + $0x520] sm:$0xff]
        %v444 = vld [vmem:[%s200 + $0x528] sm:$0xff]
        %v445 = vld [vmem:[%s200 + $0x530] sm:$0xff]
        %v446 = vld [vmem:[%s200 + $0x538] sm:$0xff]
        %v447 = vld [vmem:[%s200 + $0x540] sm:$0xff]
        %v448 = vld [vmem:[%s200 + $0x548] sm:$0xff]
        %v449 = vld [vmem:[%s200 + $0x550] sm:$0xff]
        %v450 = vld [vmem:[%s200 + $0x558] sm:$0xff]
        %v451 = vld [vmem:[%s200 + $0x560] sm:$0xff]
        %v452 = vld [vmem:[%s200 + $0x568] sm:$0xff]
        %v453 = vld [vmem:[%s200 + $0x570] sm:$0xff]
        %v454 = vld [vmem:[%s200 + $0x578] sm:$0xff]
        %v455 = vld [vmem:[%s200 + $0x580] sm:$0xff]
        %v456 = vld [vmem:[%s200 + $0x588] sm:$0xff]
        %v457 = vld [vmem:[%s200 + $0x590] sm:$0xff]
        %v458 = vld [vmem:[%s200 + $0x598] sm:$0xff]
        %v459 = vld [vmem:[%s200 + $0x5a0] sm:$0xff]
        %v460 = vld [vmem:[%s200 + $0x5a8] sm:$0xff]
        %v461 = vld [vmem:[%s200 + $0x5b0] sm:$0xff]
        %v462 = vld [vmem:[%s200 + $0x5b8] sm:$0xff]
        %v463 = vld [vmem:[%s200 + $0x5c0] sm:$0xff]
        %v464 = vld [vmem:[%s200 + $0x5c8] sm:$0xff]
        %v465 = vld [vmem:[%s200 + $0x5d0] sm:$0xff]
        %v466 = vld [vmem:[%s200 + $0x5d8] sm:$0xff]
        %v467 = vld [vmem:[%s200 + $0x5e0] sm:$0xff]
        %v468 = vld [vmem:[%s200 + $0x5e8] sm:$0xff]
        %v469 = vld [vmem:[%s200 + $0x5f0] sm:$0xff]
        %v470 = vld [vmem:[%s200 + $0x5f8] sm:$0xff]
        %v471 = vld [vmem:[%s200 + $0x600] sm:$0xff]
        %v472 = vld [vmem:[%s200 + $0x608] sm:$0xff]
        %v473 = vld [vmem:[%s200 + $0x610] sm:$0xff]
        %v474 = vld [vmem:[%s200 + $0x618] sm:$0xff]
        %v475 = vld [vmem:[%s200 + $0x620] sm:$0xff]
        %v476 = vld [vmem:[%s200 + $0x628] sm:$0xff]
        %v477 = vld [vmem:[%s200 + $0x630] sm:$0xff]
        %v478 = vld [vmem:[%s200 + $0x638] sm:$0xff]
        %v479 = vld [vmem:[%s200 + $0x640] sm:$0xff]
        %v480 = vld [vmem:[%s200 + $0x648] sm:$0xff]
        %v481 = vld [vmem:[%s200 + $0x650] sm:$0xff]
        %v482 = vld [vmem:[%s200 + $0x658] sm:$0xff]
        %v483 = vld [vmem:[%s200 + $0x660] sm:$0xff]
        %v484 = vld [vmem:[%s200 + $0x668] sm:$0xff]
        %v485 = vld [vmem:[%s200 + $0x670] sm:$0xff]
        %v486 = vld [vmem:[%s200 + $0x678] sm:$0xff]
        %v487 = vld [vmem:[%s200 + $0x680] sm:$0xff]
        %v488 = vld [vmem:[%s200 + $0x688] sm:$0xff]
        %v489 = vld [vmem:[%s200 + $0x690] sm:$0xff]
        %v490 = vld [vmem:[%s200 + $0x698] sm:$0xff]
        %v491 = vld [vmem:[%s200 + $0x6a0] sm:$0xff]
        %v492 = vld [vmem:[%s200 + $0x6a8] sm:$0xff]
        %v493 = vld [vmem:[%s200 + $0x6b0] sm:$0xff]
        %v494 = vld [vmem:[%s200 + $0x6b8] sm:$0xff]
        %v495 = vld [vmem:[%s200 + $0x6c0] sm:$0xff]
        %v496 = vld [vmem:[%s200 + $0x6c8] sm:$0xff]
        %v497 = vld [vmem:[%s200 + $0x6d0] sm:$0xff]
        %v498 = vld [vmem:[%s200 + $0x6d8] sm:$0xff]
        %v499 = vld [vmem:[%s200 + $0x6e0] sm:$0xff]
        %v500 = vld [vmem:[%s200 + $0x6e8] sm:$0xff]
        %v501 = vld [vmem:[%s200 + $0x6f0] sm:$0xff]
        %v502 = vld [vmem:[%s200 + $0x6f8] sm:$0xff]
        %v503 = vld [vmem:[%s200 + $0x700] sm:$0xff]
        %v504 = vld [vmem:[%s200 + $0x708] sm:$0xff]
        %v505 = vld [vmem:[%s200 + $0x710] sm:$0xff]
        %v506 = vld [vmem:[%s200 + $0x718] sm:$0xff]
        %v507 = vld [vmem:[%s200 + $0x720] sm:$0xff]
        %v508 = vld [vmem:[%s200 + $0x728] sm:$0xff]
        %v509 = vld [vmem:[%s200 + $0x730] sm:$0xff]
        %v510 = vld [vmem:[%s200 + $0x738] sm:$0xff]
        %v511 = vld [vmem:[%s200 + $0x740] sm:$0xff]
        %v512 = vld [vmem:[%s200 + $0x748] sm:$0xff]
        %v513 = vld [vmem:[%s200 + $0x750] sm:$0xff]
        %v514 = vld [vmem:[%s200 + $0x758] sm:$0xff]
        %v515 = vld [vmem:[%s200 + $0x760] sm:$0xff]
        %v516 = vld [vmem:[%s200 + $0x768] sm:$0xff]
        %v517 = vld [vmem:[%s200 + $0x770] sm:$0xff]
        %v518 = vld [vmem:[%s200 + $0x778] sm:$0xff]
        %v519 = vld [vmem:[%s200 + $0x780] sm:$0xff]
        %v520 = vld [vmem:[%s200 + $0x788] sm:$0xff]
        %v521 = vld [vmem:[%s200 + $0x790] sm:$0xff]
        %v522 = vld [vmem:[%s200 + $0x798] sm:$0xff]
        %v523 = vld [vmem:[%s200 + $0x7a0] sm:$0xff]
        %v524 = vld [vmem:[%s200 + $0x7a8] sm:$0xff]
        %v525 = vld [vmem:[%s200 + $0x7b0] sm:$0xff]
        %v526 = vld [vmem:[%s200 + $0x7b8] sm:$0xff]
        %v527 = vld [vmem:[%s200 + $0x7c0] sm:$0xff]
        %v528 = vld [vmem:[%s200 + $0x7c8] sm:$0xff]
        %v529 = vld [vmem:[%s200 + $0x7d0] sm:$0xff]
        %v530 = vld [vmem:[%s200 + $0x7d8] sm:$0xff]
        %v531 = vld [vmem:[%s200 + $0x7e0] sm:$0xff]
        %v532 = vld [vmem:[%s200 + $0x7e8] sm:$0xff]
        %v533 = vld [vmem:[%s200 + $0x7f0] sm:$0xff]
        %v534 = vld [vmem:[%s200 + $0x7f8] sm:$0xff]
        %v535 = vld [vmem:[%s200 + $0x800] sm:$0xff]
        %v536 = vld [vmem:[%s200 + $0x808] sm:$0xff]
        %v537 = vld [vmem:[%s200 + $0x810] sm:$0xff]
        %v538 = vld [vmem:[%s200 + $0x818] sm:$0xff]
        %v539 = vld [vmem:[%s200 + $0x820] sm:$0xff]
        %v540 = vld [vmem:[%s200 + $0x828] sm:$0xff]
        %v541 = vld [vmem:[%s200 + $0x830] sm:$0xff]
        %v542 = vld [vmem:[%s200 + $0x838] sm:$0xff]
        %v543 = vld [vmem:[%s200 + $0x840] sm:$0xff]
        %v544 = vld [vmem:[%s200 + $0x848] sm:$0xff]
        %v545 = vld [vmem:[%s200 + $0x850] sm:$0xff]
        %v546 = vld [vmem:[%s200 + $0x858] sm:$0xff]
        %v547 = vld [vmem:[%s200 + $0x860] sm:$0xff]
        %v548 = vld [vmem:[%s200 + $0x868] sm:$0xff]
        %v549 = vld [vmem:[%s200 + $0x870] sm:$0xff]
        %v550 = vld [vmem:[%s200 + $0x878] sm:$0xff]
        %v551 = vld [vmem:[%s200 + $0x880] sm:$0xff]
        %v552 = vld [vmem:[%s200 + $0x888] sm:$0xff]
        %v553 = vld [vmem:[%s200 + $0x890] sm:$0xff]
        %v554 = vld [vmem:[%s200 + $0x898] sm:$0xff]
        %v555 = vld [vmem:[%s200 + $0x8a0] sm:$0xff]
        %v556 = vld [vmem:[%s200 + $0x8a8] sm:$0xff]
        %v557 = vld [vmem:[%s200 + $0x8b0] sm:$0xff]
        %v558 = vld [vmem:[%s200 + $0x8b8] sm:$0xff]
        %v559 = vld [vmem:[%s200 + $0x8c0] sm:$0xff]
        %v560 = vld [vmem:[%s200 + $0x8c8] sm:$0xff]
        %v561 = vld [vmem:[%s200 + $0x8d0] sm:$0xff]
        %v562 = vld [vmem:[%s200 + $0x8d8] sm:$0xff]
        %v563 = vld [vmem:[%s200 + $0x8e0] sm:$0xff]
        %v564 = vld [vmem:[%s200 + $0x8e8] sm:$0xff]
        %v565 = vld [vmem:[%s200 + $0x8f0] sm:$0xff]
        %v566 = vld [vmem:[%s200 + $0x8f8] sm:$0xff]
        %v567 = vld [vmem:[%s200 + $0x900] sm:$0xff]
        %v568 = vld [vmem:[%s200 + $0x908] sm:$0xff]
        %v569 = vld [vmem:[%s200 + $0x910] sm:$0xff]
        %v570 = vld [vmem:[%s200 + $0x918] sm:$0xff]
        %v571 = vld [vmem:[%s200 + $0x920] sm:$0xff]
        %v572 = vld [vmem:[%s200 + $0x928] sm:$0xff]
        %v573 = vld [vmem:[%s200 + $0x930] sm:$0xff]
        %v574 = vld [vmem:[%s200 + $0x938] sm:$0xff]
        %v575 = vld [vmem:[%s200 + $0x940] sm:$0xff]
        %v576 = vld [vmem:[%s200 + $0x948] sm:$0xff]
        %v577 = vld [vmem:[%s200 + $0x950] sm:$0xff]
        %v578 = vld [vmem:[%s200 + $0x958] sm:$0xff]
        %v579 = vld [vmem:[%s200 + $0x960] sm:$0xff]
        %v580 = vld [vmem:[%s200 + $0x968] sm:$0xff]
        %v581 = vld [vmem:[%s200 + $0x970] sm:$0xff]
        %v582 = vld [vmem:[%s200 + $0x978] sm:$0xff]
        %v583 = vld [vmem:[%s200 + $0x980] sm:$0xff]
        %v584 = vld [vmem:[%s200 + $0x988] sm:$0xff]
        %v585 = vld [vmem:[%s200 + $0x990] sm:$0xff]
        %v586 = vld [vmem:[%s200 + $0x998] sm:$0xff]
        %v587 = vld [vmem:[%s200 + $0x9a0] sm:$0xff]
        %v588 = vld [vmem:[%s200 + $0x9a8] sm:$0xff]
        %v589 = vld [vmem:[%s200 + $0x9b0] sm:$0xff]
        %v590 = vld [vmem:[%s200 + $0x9b8] sm:$0xff]
        %v591 = vld [vmem:[%s200 + $0x9c0] sm:$0xff]
        %v592 = vld [vmem:[%s200 + $0x9c8] sm:$0xff]
        %v593 = vld [vmem:[%s200 + $0x9d0] sm:$0xff]
        %v594 = vld [vmem:[%s200 + $0x9d8] sm:$0xff]
        %v595 = vld [vmem:[%s200 + $0x9e0] sm:$0xff]
        %v596 = vld [vmem:[%s200 + $0x9e8] sm:$0xff]
        %v597 = vld [vmem:[%s200 + $0x9f0] sm:$0xff]
        %v598 = vld [vmem:[%s200 + $0x9f8] sm:$0xff]
        %v599 = vld [vmem:[%s200 + $0xa00] sm:$0xff]
        %v600 = vld [vmem:[%s200 + $0xa08] sm:$0xff]
        %v601 = vld [vmem:[%s200 + $0xa10] sm:$0xff]
        %v602 = vld [vmem:[%s200 + $0xa18] sm:$0xff]
        %v603 = vld [vmem:[%s200 + $0xa20] sm:$0xff]
        %v604 = vld [vmem:[%s200 + $0xa28] sm:$0xff]
        %v605 = vld [vmem:[%s200 + $0xa30] sm:$0xff]
        %v606 = vld [vmem:[%s200 + $0xa38] sm:$0xff]
        %v607 = vld [vmem:[%s200 + $0xa40] sm:$0xff]
        %v608 = vld [vmem:[%s200 + $0xa48] sm:$0xff]
        %v609 = vld [vmem:[%s200 + $0xa50] sm:$0xff]
        %v610 = vld [vmem:[%s200 + $0xa58] sm:$0xff]
        %v611 = vld [vmem:[%s200 + $0xa60] sm:$0xff]
        %v612 = vld [vmem:[%s200 + $0xa68] sm:$0xff]
        %v613 = vld [vmem:[%s200 + $0xa70] sm:$0xff]
        %v614 = vld [vmem:[%s200 + $0xa78] sm:$0xff]
        %v615 = vld [vmem:[%s200 + $0xa80] sm:$0xff]
        %v616 = vld [vmem:[%s200 + $0xa88] sm:$0xff]
        %v617 = vld [vmem:[%s200 + $0xa90] sm:$0xff]
        %v618 = vld [vmem:[%s200 + $0xa98] sm:$0xff]
        %v619 = vld [vmem:[%s200 + $0xaa0] sm:$0xff]
        %v620 = vld [vmem:[%s200 + $0xaa8] sm:$0xff]
        %v621 = vld [vmem:[%s200 + $0xab0] sm:$0xff]
        %v622 = vld [vmem:[%s200 + $0xab8] sm:$0xff]
        %v623 = vld [vmem:[%s200 + $0xac0] sm:$0xff]
        %v624 = vld [vmem:[%s200 + $0xac8] sm:$0xff]
        %v625 = vld [vmem:[%s200 + $0xad0] sm:$0xff]
        %v626 = vld [vmem:[%s200 + $0xad8] sm:$0xff]
        %v627 = vld [vmem:[%s200 + $0xae0] sm:$0xff]
        %v628 = vld [vmem:[%s200 + $0xae8] sm:$0xff]
        %v629 = vld [vmem:[%s200 + $0xaf0] sm:$0xff]
        %v630 = vld [vmem:[%s200 + $0xaf8] sm:$0xff]
        %v631 = vld [vmem:[%s200 + $0xb00] sm:$0xff]
        %v632 = vld [vmem:[%s200 + $0xb08] sm:$0xff]
        %v633 = vld [vmem:[%s200 + $0xb10] sm:$0xff]
        %v634 = vld [vmem:[%s200 + $0xb18] sm:$0xff]
        %v635 = vld [vmem:[%s200 + $0xb20] sm:$0xff]
        %v636 = vld [vmem:[%s200 + $0xb28] sm:$0xff]
        %v637 = vld [vmem:[%s200 + $0xb30] sm:$0xff]
        %v638 = vld [vmem:[%s200 + $0xb38] sm:$0xff]
        %v639 = vld [vmem:[%s200 + $0xb40] sm:$0xff]
        %v640 = vld [vmem:[%s200 + $0xb48] sm:$0xff]
        %v641 = vld [vmem:[%s200 + $0xb50] sm:$0xff]
        %v642 = vld [vmem:[%s200 + $0xb58] sm:$0xff]
        %v643 = vld [vmem:[%s200 + $0xb60] sm:$0xff]
        %v644 = vld [vmem:[%s200 + $0xb68] sm:$0xff]
        %v645 = vld [vmem:[%s200 + $0xb70] sm:$0xff]
        %v646 = vld [vmem:[%s200 + $0xb78] sm:$0xff]
        %v647 = vld [vmem:[%s200 + $0xb80] sm:$0xff]
        %v648 = vld [vmem:[%s200 + $0xb88] sm:$0xff]
        %v649 = vld [vmem:[%s200 + $0xb90] sm:$0xff]
        %v650 = vld [vmem:[%s200 + $0xb98] sm:$0xff]
        %v651 = vld [vmem:[%s200 + $0xba0] sm:$0xff]
        %v652 = vld [vmem:[%s200 + $0xba8] sm:$0xff]
        %v653 = vld [vmem:[%s200 + $0xbb0] sm:$0xff]
        %v654 = vld [vmem:[%s200 + $0xbb8] sm:$0xff]
        %v655 = vld [vmem:[%s200 + $0xbc0] sm:$0xff]
        %v656 = vld [vmem:[%s200 + $0xbc8] sm:$0xff]
        %v657 = vld [vmem:[%s200 + $0xbd0] sm:$0xff]
        %v658 = vld [vmem:[%s200 + $0xbd8] sm:$0xff]
        %v659 = vld [vmem:[%s200 + $0xbe0] sm:$0xff]
        %v660 = vld [vmem:[%s200 + $0xbe8] sm:$0xff]
        %v661 = vld [vmem:[%s200 + $0xbf0] sm:$0xff]
        %v662 = vld [vmem:[%s200 + $0xbf8] sm:$0xff]
        %v663 = vld [vmem:[%s200 + $0xc00] sm:$0xff]
        %v664 = vld [vmem:[%s200 + $0xc08] sm:$0xff]
        %v665 = vld [vmem:[%s200 + $0xc10] sm:$0xff]
        %v666 = vld [vmem:[%s200 + $0xc18] sm:$0xff]
        %v667 = vld [vmem:[%s200 + $0xc20] sm:$0xff]
        %v668 = vld [vmem:[%s200 + $0xc28] sm:$0xff]
        %v669 = vld [vmem:[%s200 + $0xc30] sm:$0xff]
        %v670 = vld [vmem:[%s200 + $0xc38] sm:$0xff]
        %v671 = vld [vmem:[%s200 + $0xc40] sm:$0xff]
        %v672 = vld [vmem:[%s200 + $0xc48] sm:$0xff]
        %v673 = vld [vmem:[%s200 + $0xc50] sm:$0xff]
        %v674 = vld [vmem:[%s200 + $0xc58] sm:$0xff]
        %v675 = vld [vmem:[%s200 + $0xc60] sm:$0xff]
        %v676 = vld [vmem:[%s200 + $0xc68] sm:$0xff]
        %v677 = vld [vmem:[%s200 + $0xc70] sm:$0xff]
        %v678 = vld [vmem:[%s200 + $0xc78] sm:$0xff]
        %v679 = vld [vmem:[%s200 + $0xc80] sm:$0xff]
        %v680 = vld [vmem:[%s200 + $0xc88] sm:$0xff]
        %v681 = vld [vmem:[%s200 + $0xc90] sm:$0xff]
        %v682 = vld [vmem:[%s200 + $0xc98] sm:$0xff]
        %v683 = vld [vmem:[%s200 + $0xca0] sm:$0xff]
        %v684 = vld [vmem:[%s200 + $0xca8] sm:$0xff]
        %v685 = vld [vmem:[%s200 + $0xcb0] sm:$0xff]
        %v686 = vld [vmem:[%s200 + $0xcb8] sm:$0xff]
        %v687 = vld [vmem:[%s200 + $0xcc0] sm:$0xff]
        %v688 = vld [vmem:[%s200 + $0xcc8] sm:$0xff]
        %v689 = vld [vmem:[%s200 + $0xcd0] sm:$0xff]
        %v690 = vld [vmem:[%s200 + $0xcd8] sm:$0xff]
        %v691 = vld [vmem:[%s200 + $0xce0] sm:$0xff]
        %v692 = vld [vmem:[%s200 + $0xce8] sm:$0xff]
        %v693 = vld [vmem:[%s200 + $0xcf0] sm:$0xff]
        %v694 = vld [vmem:[%s200 + $0xcf8] sm:$0xff]
        %v695 = vld [vmem:[%s200 + $0xd00] sm:$0xff]
        %v696 = vld [vmem:[%s200 + $0xd08] sm:$0xff]
        %v697 = vld [vmem:[%s200 + $0xd10] sm:$0xff]
        %v698 = vld [vmem:[%s200 + $0xd18] sm:$0xff]
        %v699 = vld [vmem:[%s200 + $0xd20] sm:$0xff]
        %v700 = vld [vmem:[%s200 + $0xd28] sm:$0xff]
        %v701 = vld [vmem:[%s200 + $0xd30] sm:$0xff]
        %v702 = vld [vmem:[%s200 + $0xd38] sm:$0xff]
        %v703 = vld [vmem:[%s200 + $0xd40] sm:$0xff]
        %v704 = vld [vmem:[%s200 + $0xd48] sm:$0xff]
        %v705 = vld [vmem:[%s200 + $0xd50] sm:$0xff]
        %v706 = vld [vmem:[%s200 + $0xd58] sm:$0xff]
        %v707 = vld [vmem:[%s200 + $0xd60] sm:$0xff]
        %v708 = vld [vmem:[%s200 + $0xd68] sm:$0xff]
        %v709 = vld [vmem:[%s200 + $0xd70] sm:$0xff]
        %v710 = vld [vmem:[%s200 + $0xd78] sm:$0xff]
        %v711 = vld [vmem:[%s200 + $0xd80] sm:$0xff]
        %v712 = vld [vmem:[%s200 + $0xd88] sm:$0xff]
        %v713 = vld [vmem:[%s200 + $0xd90] sm:$0xff]
        %v714 = vld [vmem:[%s200 + $0xd98] sm:$0xff]
        %v715 = vld [vmem:[%s200 + $0xda0] sm:$0xff]
        %v716 = vld [vmem:[%s200 + $0xda8] sm:$0xff]
        %v717 = vld [vmem:[%s200 + $0xdb0] sm:$0xff]
        %v718 = vld [vmem:[%s200 + $0xdb8] sm:$0xff]
        %v719 = vld [vmem:[%s200 + $0xdc0] sm:$0xff]
        %v720 = vld [vmem:[%s200 + $0xdc8] sm:$0xff]
        %v721 = vld [vmem:[%s200 + $0xdd0] sm:$0xff]
        %v722 = vld [vmem:[%s200 + $0xdd8] sm:$0xff]
        %v723 = vld [vmem:[%s200 + $0xde0] sm:$0xff]
        %v724 = vld [vmem:[%s200 + $0xde8] sm:$0xff]
        %v725 = vld [vmem:[%s200 + $0xdf0] sm:$0xff]
        %v726 = vld [vmem:[%s200 + $0xdf8] sm:$0xff]
        %v727 = vld [vmem:[%s200 + $0xe00] sm:$0xff]
        %v728 = vld [vmem:[%s200 + $0xe08] sm:$0xff]
        %v729 = vld [vmem:[%s200 + $0xe10] sm:$0xff]
        %v730 = vld [vmem:[%s200 + $0xe18] sm:$0xff]
        %v731 = vld [vmem:[%s200 + $0xe20] sm:$0xff]
        %v732 = vld [vmem:[%s200 + $0xe28] sm:$0xff]
        %v733 = vld [vmem:[%s200 + $0xe30] sm:$0xff]
        %v734 = vld [vmem:[%s200 + $0xe38] sm:$0xff]
        %v735 = vld [vmem:[%s200 + $0xe40] sm:$0xff]
        %v736 = vld [vmem:[%s200 + $0xe48] sm:$0xff]
        %v737 = vld [vmem:[%s200 + $0xe50] sm:$0xff]
        %v738 = vld [vmem:[%s200 + $0xe58] sm:$0xff]
        %v739 = vld [vmem:[%s200 + $0xe60] sm:$0xff]
        %v740 = vld [vmem:[%s200 + $0xe68] sm:$0xff]
        %v741 = vld [vmem:[%s200 + $0xe70] sm:$0xff]
        %v742 = vld [vmem:[%s200 + $0xe78] sm:$0xff]
        %v743 = vld [vmem:[%s200 + $0xe80] sm:$0xff]
        %v744 = vld [vmem:[%s200 + $0xe88] sm:$0xff]
        %v745 = vld [vmem:[%s200 + $0xe90] sm:$0xff]
        %v746 = vld [vmem:[%s200 + $0xe98] sm:$0xff]
        %v747 = vld [vmem:[%s200 + $0xea0] sm:$0xff]
        %v748 = vld [vmem:[%s200 + $0xea8] sm:$0xff]
        %v749 = vld [vmem:[%s200 + $0xeb0] sm:$0xff]
        %v750 = vld [vmem:[%s200 + $0xeb8] sm:$0xff]
        %v751 = vld [vmem:[%s200 + $0xec0] sm:$0xff]
        %v752 = vld [vmem:[%s200 + $0xec8] sm:$0xff]
        %v753 = vld [vmem:[%s200 + $0xed0] sm:$0xff]
        %v754 = vld [vmem:[%s200 + $0xed8] sm:$0xff]
        %v755 = vld [vmem:[%s200 + $0xee0] sm:$0xff]
        %v756 = vld [vmem:[%s200 + $0xee8] sm:$0xff]
        %v757 = vld [vmem:[%s200 + $0xef0] sm:$0xff]
        %v758 = vld [vmem:[%s200 + $0xef8] sm:$0xff]
        %v759 = vld [vmem:[%s200 + $0xf00] sm:$0xff]
        %v760 = vld [vmem:[%s200 + $0xf08] sm:$0xff]
        %v761 = vld [vmem:[%s200 + $0xf10] sm:$0xff]
        %v762 = vld [vmem:[%s200 + $0xf18] sm:$0xff]
        %v763 = vld [vmem:[%s200 + $0xf20] sm:$0xff]
        %v764 = vld [vmem:[%s200 + $0xf28] sm:$0xff]
        %v765 = vld [vmem:[%s200 + $0xf30] sm:$0xff]
        %v766 = vld [vmem:[%s200 + $0xf38] sm:$0xff]
        %v767 = vld [vmem:[%s200 + $0xf40] sm:$0xff]
        %v768 = vld [vmem:[%s200 + $0xf48] sm:$0xff]
        %v769 = vld [vmem:[%s200 + $0xf50] sm:$0xff]
        %v770 = vld [vmem:[%s200 + $0xf58] sm:$0xff]
        %v771 = vld [vmem:[%s200 + $0xf60] sm:$0xff]
        %v772 = vld [vmem:[%s200 + $0xf68] sm:$0xff]
        %v773 = vld [vmem:[%s200 + $0xf70] sm:$0xff]
        %v774 = vld [vmem:[%s200 + $0xf78] sm:$0xff]
        %v775 = vld [vmem:[%s200 + $0xf80] sm:$0xff]
        %v776 = vld [vmem:[%s200 + $0xf88] sm:$0xff]
        %v777 = vld [vmem:[%s200 + $0xf90] sm:$0xff]
        %v778 = vld [vmem:[%s200 + $0xf98] sm:$0xff]
        %v779 = vld [vmem:[%s200 + $0xfa0] sm:$0xff]
        %v780 = vld [vmem:[%s200 + $0xfa8] sm:$0xff]
        %v781 = vld [vmem:[%s200 + $0xfb0] sm:$0xff]
        %v782 = vld [vmem:[%s200 + $0xfb8] sm:$0xff]
        %v783 = vld [vmem:[%s200 + $0xfc0] sm:$0xff]
        %v784 = vld [vmem:[%s200 + $0xfc8] sm:$0xff]
        %v785 = vld [vmem:[%s200 + $0xfd0] sm:$0xff]
        %v786 = vld [vmem:[%s200 + $0xfd8] sm:$0xff]
        %v787 = vld [vmem:[%s200 + $0xfe0] sm:$0xff]
        %v788 = vld [vmem:[%s200 + $0xfe8] sm:$0xff]
        %v789 = vld [vmem:[%s200 + $0xff0] sm:$0xff]
        %v790 = vld [vmem:[%s200 + $0xff8] sm:$0xff]
        %v791 = vld [vmem:[%s210] sm:$0xf]
        %v793 = vperm.slane %v791, 0
        %v794 = vperm.slane %v791, 1
        %v795 = vperm.slane %v791, 2
        %v796 = vperm.slane %v791, 3
        %v1313 = vunpack.c.l.b16 %v279
        %v1314 = vunpack.c.h.b16 %v279
        %v1315 = vunpack.c.l.b16 %v280
        %v1316 = vunpack.c.h.b16 %v280
        %v1317 = vunpack.c.l.b16 %v281
        %v1318 = vunpack.c.h.b16 %v281
        %v1319 = vunpack.c.l.b16 %v282
        %v1320 = vunpack.c.h.b16 %v282
        %v1321 = vunpack.c.l.b16 %v283
        %v1322 = vunpack.c.h.b16 %v283
        %v1323 = vunpack.c.l.b16 %v284
        %v1324 = vunpack.c.h.b16 %v284
        %v1325 = vunpack.c.l.b16 %v285
        %v1326 = vunpack.c.h.b16 %v285
        %v1327 = vunpack.c.l.b16 %v286
        %v1328 = vunpack.c.h.b16 %v286
        %v1329 = vunpack.c.l.b16 %v287
        %v1330 = vunpack.c.h.b16 %v287
        %v1331 = vunpack.c.l.b16 %v288
        %v1332 = vunpack.c.h.b16 %v288
        %v1333 = vunpack.c.l.b16 %v289
        %v1334 = vunpack.c.h.b16 %v289
        %v1335 = vunpack.c.l.b16 %v290
        %v1336 = vunpack.c.h.b16 %v290
        %v1337 = vunpack.c.l.b16 %v291
        %v1338 = vunpack.c.h.b16 %v291
        %v1339 = vunpack.c.l.b16 %v292
        %v1340 = vunpack.c.h.b16 %v292
        %v1341 = vunpack.c.l.b16 %v293
        %v1342 = vunpack.c.h.b16 %v293
        %v1343 = vunpack.c.l.b16 %v294
        %v1344 = vunpack.c.h.b16 %v294
        %v1345 = vunpack.c.l.b16 %v295
        %v1346 = vunpack.c.h.b16 %v295
        %v1347 = vunpack.c.l.b16 %v296
        %v1348 = vunpack.c.h.b16 %v296
        %v1349 = vunpack.c.l.b16 %v297
        %v1350 = vunpack.c.h.b16 %v297
        %v1351 = vunpack.c.l.b16 %v298
        %v1352 = vunpack.c.h.b16 %v298
        %v1353 = vunpack.c.l.b16 %v299
        %v1354 = vunpack.c.h.b16 %v299
        %v1355 = vunpack.c.l.b16 %v300
        %v1356 = vunpack.c.h.b16 %v300
        %v1357 = vunpack.c.l.b16 %v301
        %v1358 = vunpack.c.h.b16 %v301
        %v1359 = vunpack.c.l.b16 %v302
        %v1360 = vunpack.c.h.b16 %v302
        %v1361 = vunpack.c.l.b16 %v303
        %v1362 = vunpack.c.h.b16 %v303
        %v1363 = vunpack.c.l.b16 %v304
        %v1364 = vunpack.c.h.b16 %v304
        %v1365 = vunpack.c.l.b16 %v305
        %v1366 = vunpack.c.h.b16 %v305
        %v1367 = vunpack.c.l.b16 %v306
        %v1368 = vunpack.c.h.b16 %v306
        %v1369 = vunpack.c.l.b16 %v307
        %v1370 = vunpack.c.h.b16 %v307
        %v1371 = vunpack.c.l.b16 %v308
        %v1372 = vunpack.c.h.b16 %v308
        %v1373 = vunpack.c.l.b16 %v309
        %v1374 = vunpack.c.h.b16 %v309
        %v1375 = vunpack.c.l.b16 %v310
        %v1376 = vunpack.c.h.b16 %v310
        %v1377 = vunpack.c.l.b16 %v311
        %v1378 = vunpack.c.h.b16 %v311
        %v1379 = vunpack.c.l.b16 %v312
        %v1380 = vunpack.c.h.b16 %v312
        %v1381 = vunpack.c.l.b16 %v313
        %v1382 = vunpack.c.h.b16 %v313
        %v1383 = vunpack.c.l.b16 %v314
        %v1384 = vunpack.c.h.b16 %v314
        %v1385 = vunpack.c.l.b16 %v315
        %v1386 = vunpack.c.h.b16 %v315
        %v1387 = vunpack.c.l.b16 %v316
        %v1388 = vunpack.c.h.b16 %v316
        %v1389 = vunpack.c.l.b16 %v317
        %v1390 = vunpack.c.h.b16 %v317
        %v1391 = vunpack.c.l.b16 %v318
        %v1392 = vunpack.c.h.b16 %v318
        %v1393 = vunpack.c.l.b16 %v319
        %v1394 = vunpack.c.h.b16 %v319
        %v1395 = vunpack.c.l.b16 %v320
        %v1396 = vunpack.c.h.b16 %v320
        %v1397 = vunpack.c.l.b16 %v321
        %v1398 = vunpack.c.h.b16 %v321
        %v1399 = vunpack.c.l.b16 %v322
        %v1400 = vunpack.c.h.b16 %v322
        %v1401 = vunpack.c.l.b16 %v323
        %v1402 = vunpack.c.h.b16 %v323
        %v1403 = vunpack.c.l.b16 %v324
        %v1404 = vunpack.c.h.b16 %v324
        %v1405 = vunpack.c.l.b16 %v325
        %v1406 = vunpack.c.h.b16 %v325
        %v1407 = vunpack.c.l.b16 %v326
        %v1408 = vunpack.c.h.b16 %v326
        %v1409 = vunpack.c.l.b16 %v327
        %v1410 = vunpack.c.h.b16 %v327
        %v1411 = vunpack.c.l.b16 %v328
        %v1412 = vunpack.c.h.b16 %v328
        %v1413 = vunpack.c.l.b16 %v329
        %v1414 = vunpack.c.h.b16 %v329
        %v1415 = vunpack.c.l.b16 %v330
        %v1416 = vunpack.c.h.b16 %v330
        %v1417 = vunpack.c.l.b16 %v331
        %v1418 = vunpack.c.h.b16 %v331
        %v1419 = vunpack.c.l.b16 %v332
        %v1420 = vunpack.c.h.b16 %v332
        %v1421 = vunpack.c.l.b16 %v333
        %v1422 = vunpack.c.h.b16 %v333
        %v1423 = vunpack.c.l.b16 %v334
        %v1424 = vunpack.c.h.b16 %v334
        %v1425 = vunpack.c.l.b16 %v335
        %v1426 = vunpack.c.h.b16 %v335
        %v1427 = vunpack.c.l.b16 %v336
        %v1428 = vunpack.c.h.b16 %v336
        %v1429 = vunpack.c.l.b16 %v337
        %v1430 = vunpack.c.h.b16 %v337
        %v1431 = vunpack.c.l.b16 %v338
        %v1432 = vunpack.c.h.b16 %v338
        %v1433 = vunpack.c.l.b16 %v339
        %v1434 = vunpack.c.h.b16 %v339
        %v1435 = vunpack.c.l.b16 %v340
        %v1436 = vunpack.c.h.b16 %v340
        %v1437 = vunpack.c.l.b16 %v341
        %v1438 = vunpack.c.h.b16 %v341
        %v1439 = vunpack.c.l.b16 %v342
        %v1440 = vunpack.c.h.b16 %v342
        %v1441 = vunpack.c.l.b16 %v343
        %v1442 = vunpack.c.h.b16 %v343
        %v1443 = vunpack.c.l.b16 %v344
        %v1444 = vunpack.c.h.b16 %v344
        %v1445 = vunpack.c.l.b16 %v345
        %v1446 = vunpack.c.h.b16 %v345
        %v1447 = vunpack.c.l.b16 %v346
        %v1448 = vunpack.c.h.b16 %v346
        %v1449 = vunpack.c.l.b16 %v347
        %v1450 = vunpack.c.h.b16 %v347
        %v1451 = vunpack.c.l.b16 %v348
        %v1452 = vunpack.c.h.b16 %v348
        %v1453 = vunpack.c.l.b16 %v349
        %v1454 = vunpack.c.h.b16 %v349
        %v1455 = vunpack.c.l.b16 %v350
        %v1456 = vunpack.c.h.b16 %v350
        %v1457 = vunpack.c.l.b16 %v351
        %v1458 = vunpack.c.h.b16 %v351
        %v1459 = vunpack.c.l.b16 %v352
        %v1460 = vunpack.c.h.b16 %v352
        %v1461 = vunpack.c.l.b16 %v353
        %v1462 = vunpack.c.h.b16 %v353
        %v1463 = vunpack.c.l.b16 %v354
        %v1464 = vunpack.c.h.b16 %v354
        %v1465 = vunpack.c.l.b16 %v355
        %v1466 = vunpack.c.h.b16 %v355
        %v1467 = vunpack.c.l.b16 %v356
        %v1468 = vunpack.c.h.b16 %v356
        %v1469 = vunpack.c.l.b16 %v357
        %v1470 = vunpack.c.h.b16 %v357
        %v1471 = vunpack.c.l.b16 %v358
        %v1472 = vunpack.c.h.b16 %v358
        %v1473 = vunpack.c.l.b16 %v359
        %v1474 = vunpack.c.h.b16 %v359
        %v1475 = vunpack.c.l.b16 %v360
        %v1476 = vunpack.c.h.b16 %v360
        %v1477 = vunpack.c.l.b16 %v361
        %v1478 = vunpack.c.h.b16 %v361
        %v1479 = vunpack.c.l.b16 %v362
        %v1480 = vunpack.c.h.b16 %v362
        %v1481 = vunpack.c.l.b16 %v363
        %v1482 = vunpack.c.h.b16 %v363
        %v1483 = vunpack.c.l.b16 %v364
        %v1484 = vunpack.c.h.b16 %v364
        %v1485 = vunpack.c.l.b16 %v365
        %v1486 = vunpack.c.h.b16 %v365
        %v1487 = vunpack.c.l.b16 %v366
        %v1488 = vunpack.c.h.b16 %v366
        %v1489 = vunpack.c.l.b16 %v367
        %v1490 = vunpack.c.h.b16 %v367
        %v1491 = vunpack.c.l.b16 %v368
        %v1492 = vunpack.c.h.b16 %v368
        %v1493 = vunpack.c.l.b16 %v369
        %v1494 = vunpack.c.h.b16 %v369
        %v1495 = vunpack.c.l.b16 %v370
        %v1496 = vunpack.c.h.b16 %v370
        %v1497 = vunpack.c.l.b16 %v371
        %v1498 = vunpack.c.h.b16 %v371
        %v1499 = vunpack.c.l.b16 %v372
        %v1500 = vunpack.c.h.b16 %v372
        %v1501 = vunpack.c.l.b16 %v373
        %v1502 = vunpack.c.h.b16 %v373
        %v1503 = vunpack.c.l.b16 %v374
        %v1504 = vunpack.c.h.b16 %v374
        %v1505 = vunpack.c.l.b16 %v375
        %v1506 = vunpack.c.h.b16 %v375
        %v1507 = vunpack.c.l.b16 %v376
        %v1508 = vunpack.c.h.b16 %v376
        %v1509 = vunpack.c.l.b16 %v377
        %v1510 = vunpack.c.h.b16 %v377
        %v1511 = vunpack.c.l.b16 %v378
        %v1512 = vunpack.c.h.b16 %v378
        %v1513 = vunpack.c.l.b16 %v379
        %v1514 = vunpack.c.h.b16 %v379
        %v1515 = vunpack.c.l.b16 %v380
        %v1516 = vunpack.c.h.b16 %v380
        %v1517 = vunpack.c.l.b16 %v381
        %v1518 = vunpack.c.h.b16 %v381
        %v1519 = vunpack.c.l.b16 %v382
        %v1520 = vunpack.c.h.b16 %v382
        %v1521 = vunpack.c.l.b16 %v383
        %v1522 = vunpack.c.h.b16 %v383
        %v1523 = vunpack.c.l.b16 %v384
        %v1524 = vunpack.c.h.b16 %v384
        %v1525 = vunpack.c.l.b16 %v385
        %v1526 = vunpack.c.h.b16 %v385
        %v1527 = vunpack.c.l.b16 %v386
        %v1528 = vunpack.c.h.b16 %v386
        %v1529 = vunpack.c.l.b16 %v387
        %v1530 = vunpack.c.h.b16 %v387
        %v1531 = vunpack.c.l.b16 %v388
        %v1532 = vunpack.c.h.b16 %v388
        %v1533 = vunpack.c.l.b16 %v389
        %v1534 = vunpack.c.h.b16 %v389
        %v1535 = vunpack.c.l.b16 %v390
        %v1536 = vunpack.c.h.b16 %v390
        %v1537 = vunpack.c.l.b16 %v391
        %v1538 = vunpack.c.h.b16 %v391
        %v1539 = vunpack.c.l.b16 %v392
        %v1540 = vunpack.c.h.b16 %v392
        %v1541 = vunpack.c.l.b16 %v393
        %v1542 = vunpack.c.h.b16 %v393
        %v1543 = vunpack.c.l.b16 %v394
        %v1544 = vunpack.c.h.b16 %v394
        %v1545 = vunpack.c.l.b16 %v395
        %v1546 = vunpack.c.h.b16 %v395
        %v1547 = vunpack.c.l.b16 %v396
        %v1548 = vunpack.c.h.b16 %v396
        %v1549 = vunpack.c.l.b16 %v397
        %v1550 = vunpack.c.h.b16 %v397
        %v1551 = vunpack.c.l.b16 %v398
        %v1552 = vunpack.c.h.b16 %v398
        %v1553 = vunpack.c.l.b16 %v399
        %v1554 = vunpack.c.h.b16 %v399
        %v1555 = vunpack.c.l.b16 %v400
        %v1556 = vunpack.c.h.b16 %v400
        %v1557 = vunpack.c.l.b16 %v401
        %v1558 = vunpack.c.h.b16 %v401
        %v1559 = vunpack.c.l.b16 %v402
        %v1560 = vunpack.c.h.b16 %v402
        %v1561 = vunpack.c.l.b16 %v403
        %v1562 = vunpack.c.h.b16 %v403
        %v1563 = vunpack.c.l.b16 %v404
        %v1564 = vunpack.c.h.b16 %v404
        %v1565 = vunpack.c.l.b16 %v405
        %v1566 = vunpack.c.h.b16 %v405
        %v1567 = vunpack.c.l.b16 %v406
        %v1568 = vunpack.c.h.b16 %v406
        %v1569 = vunpack.c.l.b16 %v407
        %v1570 = vunpack.c.h.b16 %v407
        %v1571 = vunpack.c.l.b16 %v408
        %v1572 = vunpack.c.h.b16 %v408
        %v1573 = vunpack.c.l.b16 %v409
        %v1574 = vunpack.c.h.b16 %v409
        %v1575 = vunpack.c.l.b16 %v410
        %v1576 = vunpack.c.h.b16 %v410
        %v1577 = vunpack.c.l.b16 %v411
        %v1578 = vunpack.c.h.b16 %v411
        %v1579 = vunpack.c.l.b16 %v412
        %v1580 = vunpack.c.h.b16 %v412
        %v1581 = vunpack.c.l.b16 %v413
        %v1582 = vunpack.c.h.b16 %v413
        %v1583 = vunpack.c.l.b16 %v414
        %v1584 = vunpack.c.h.b16 %v414
        %v1585 = vunpack.c.l.b16 %v415
        %v1586 = vunpack.c.h.b16 %v415
        %v1587 = vunpack.c.l.b16 %v416
        %v1588 = vunpack.c.h.b16 %v416
        %v1589 = vunpack.c.l.b16 %v417
        %v1590 = vunpack.c.h.b16 %v417
        %v1591 = vunpack.c.l.b16 %v418
        %v1592 = vunpack.c.h.b16 %v418
        %v1593 = vunpack.c.l.b16 %v419
        %v1594 = vunpack.c.h.b16 %v419
        %v1595 = vunpack.c.l.b16 %v420
        %v1596 = vunpack.c.h.b16 %v420
        %v1597 = vunpack.c.l.b16 %v421
        %v1598 = vunpack.c.h.b16 %v421
        %v1599 = vunpack.c.l.b16 %v422
        %v1600 = vunpack.c.h.b16 %v422
        %v1601 = vunpack.c.l.b16 %v423
        %v1602 = vunpack.c.h.b16 %v423
        %v1603 = vunpack.c.l.b16 %v424
        %v1604 = vunpack.c.h.b16 %v424
        %v1605 = vunpack.c.l.b16 %v425
        %v1606 = vunpack.c.h.b16 %v425
        %v1607 = vunpack.c.l.b16 %v426
        %v1608 = vunpack.c.h.b16 %v426
        %v1609 = vunpack.c.l.b16 %v427
        %v1610 = vunpack.c.h.b16 %v427
        %v1611 = vunpack.c.l.b16 %v428
        %v1612 = vunpack.c.h.b16 %v428
        %v1613 = vunpack.c.l.b16 %v429
        %v1614 = vunpack.c.h.b16 %v429
        %v1615 = vunpack.c.l.b16 %v430
        %v1616 = vunpack.c.h.b16 %v430
        %v1617 = vunpack.c.l.b16 %v431
        %v1618 = vunpack.c.h.b16 %v431
        %v1619 = vunpack.c.l.b16 %v432
        %v1620 = vunpack.c.h.b16 %v432
        %v1621 = vunpack.c.l.b16 %v433
        %v1622 = vunpack.c.h.b16 %v433
        %v1623 = vunpack.c.l.b16 %v434
        %v1624 = vunpack.c.h.b16 %v434
        %v1625 = vunpack.c.l.b16 %v435
        %v1626 = vunpack.c.h.b16 %v435
        %v1627 = vunpack.c.l.b16 %v436
        %v1628 = vunpack.c.h.b16 %v436
        %v1629 = vunpack.c.l.b16 %v437
        %v1630 = vunpack.c.h.b16 %v437
        %v1631 = vunpack.c.l.b16 %v438
        %v1632 = vunpack.c.h.b16 %v438
        %v1633 = vunpack.c.l.b16 %v439
        %v1634 = vunpack.c.h.b16 %v439
        %v1635 = vunpack.c.l.b16 %v440
        %v1636 = vunpack.c.h.b16 %v440
        %v1637 = vunpack.c.l.b16 %v441
        %v1638 = vunpack.c.h.b16 %v441
        %v1639 = vunpack.c.l.b16 %v442
        %v1640 = vunpack.c.h.b16 %v442
        %v1641 = vunpack.c.l.b16 %v443
        %v1642 = vunpack.c.h.b16 %v443
        %v1643 = vunpack.c.l.b16 %v444
        %v1644 = vunpack.c.h.b16 %v444
        %v1645 = vunpack.c.l.b16 %v445
        %v1646 = vunpack.c.h.b16 %v445
        %v1647 = vunpack.c.l.b16 %v446
        %v1648 = vunpack.c.h.b16 %v446
        %v1649 = vunpack.c.l.b16 %v447
        %v1650 = vunpack.c.h.b16 %v447
        %v1651 = vunpack.c.l.b16 %v448
        %v1652 = vunpack.c.h.b16 %v448
        %v1653 = vunpack.c.l.b16 %v449
        %v1654 = vunpack.c.h.b16 %v449
        %v1655 = vunpack.c.l.b16 %v450
        %v1656 = vunpack.c.h.b16 %v450
        %v1657 = vunpack.c.l.b16 %v451
        %v1658 = vunpack.c.h.b16 %v451
        %v1659 = vunpack.c.l.b16 %v452
        %v1660 = vunpack.c.h.b16 %v452
        %v1661 = vunpack.c.l.b16 %v453
        %v1662 = vunpack.c.h.b16 %v453
        %v1663 = vunpack.c.l.b16 %v454
        %v1664 = vunpack.c.h.b16 %v454
        %v1665 = vunpack.c.l.b16 %v455
        %v1666 = vunpack.c.h.b16 %v455
        %v1667 = vunpack.c.l.b16 %v456
        %v1668 = vunpack.c.h.b16 %v456
        %v1669 = vunpack.c.l.b16 %v457
        %v1670 = vunpack.c.h.b16 %v457
        %v1671 = vunpack.c.l.b16 %v458
        %v1672 = vunpack.c.h.b16 %v458
        %v1673 = vunpack.c.l.b16 %v459
        %v1674 = vunpack.c.h.b16 %v459
        %v1675 = vunpack.c.l.b16 %v460
        %v1676 = vunpack.c.h.b16 %v460
        %v1677 = vunpack.c.l.b16 %v461
        %v1678 = vunpack.c.h.b16 %v461
        %v1679 = vunpack.c.l.b16 %v462
        %v1680 = vunpack.c.h.b16 %v462
        %v1681 = vunpack.c.l.b16 %v463
        %v1682 = vunpack.c.h.b16 %v463
        %v1683 = vunpack.c.l.b16 %v464
        %v1684 = vunpack.c.h.b16 %v464
        %v1685 = vunpack.c.l.b16 %v465
        %v1686 = vunpack.c.h.b16 %v465
        %v1687 = vunpack.c.l.b16 %v466
        %v1688 = vunpack.c.h.b16 %v466
        %v1689 = vunpack.c.l.b16 %v467
        %v1690 = vunpack.c.h.b16 %v467
        %v1691 = vunpack.c.l.b16 %v468
        %v1692 = vunpack.c.h.b16 %v468
        %v1693 = vunpack.c.l.b16 %v469
        %v1694 = vunpack.c.h.b16 %v469
        %v1695 = vunpack.c.l.b16 %v470
        %v1696 = vunpack.c.h.b16 %v470
        %v1697 = vunpack.c.l.b16 %v471
        %v1698 = vunpack.c.h.b16 %v471
        %v1699 = vunpack.c.l.b16 %v472
        %v1700 = vunpack.c.h.b16 %v472
        %v1701 = vunpack.c.l.b16 %v473
        %v1702 = vunpack.c.h.b16 %v473
        %v1703 = vunpack.c.l.b16 %v474
        %v1704 = vunpack.c.h.b16 %v474
        %v1705 = vunpack.c.l.b16 %v475
        %v1706 = vunpack.c.h.b16 %v475
        %v1707 = vunpack.c.l.b16 %v476
        %v1708 = vunpack.c.h.b16 %v476
        %v1709 = vunpack.c.l.b16 %v477
        %v1710 = vunpack.c.h.b16 %v477
        %v1711 = vunpack.c.l.b16 %v478
        %v1712 = vunpack.c.h.b16 %v478
        %v1713 = vunpack.c.l.b16 %v479
        %v1714 = vunpack.c.h.b16 %v479
        %v1715 = vunpack.c.l.b16 %v480
        %v1716 = vunpack.c.h.b16 %v480
        %v1717 = vunpack.c.l.b16 %v481
        %v1718 = vunpack.c.h.b16 %v481
        %v1719 = vunpack.c.l.b16 %v482
        %v1720 = vunpack.c.h.b16 %v482
        %v1721 = vunpack.c.l.b16 %v483
        %v1722 = vunpack.c.h.b16 %v483
        %v1723 = vunpack.c.l.b16 %v484
        %v1724 = vunpack.c.h.b16 %v484
        %v1725 = vunpack.c.l.b16 %v485
        %v1726 = vunpack.c.h.b16 %v485
        %v1727 = vunpack.c.l.b16 %v486
        %v1728 = vunpack.c.h.b16 %v486
        %v1729 = vunpack.c.l.b16 %v487
        %v1730 = vunpack.c.h.b16 %v487
        %v1731 = vunpack.c.l.b16 %v488
        %v1732 = vunpack.c.h.b16 %v488
        %v1733 = vunpack.c.l.b16 %v489
        %v1734 = vunpack.c.h.b16 %v489
        %v1735 = vunpack.c.l.b16 %v490
        %v1736 = vunpack.c.h.b16 %v490
        %v1737 = vunpack.c.l.b16 %v491
        %v1738 = vunpack.c.h.b16 %v491
        %v1739 = vunpack.c.l.b16 %v492
        %v1740 = vunpack.c.h.b16 %v492
        %v1741 = vunpack.c.l.b16 %v493
        %v1742 = vunpack.c.h.b16 %v493
        %v1743 = vunpack.c.l.b16 %v494
        %v1744 = vunpack.c.h.b16 %v494
        %v1745 = vunpack.c.l.b16 %v495
        %v1746 = vunpack.c.h.b16 %v495
        %v1747 = vunpack.c.l.b16 %v496
        %v1748 = vunpack.c.h.b16 %v496
        %v1749 = vunpack.c.l.b16 %v497
        %v1750 = vunpack.c.h.b16 %v497
        %v1751 = vunpack.c.l.b16 %v498
        %v1752 = vunpack.c.h.b16 %v498
        %v1753 = vunpack.c.l.b16 %v499
        %v1754 = vunpack.c.h.b16 %v499
        %v1755 = vunpack.c.l.b16 %v500
        %v1756 = vunpack.c.h.b16 %v500
        %v1757 = vunpack.c.l.b16 %v501
        %v1758 = vunpack.c.h.b16 %v501
        %v1759 = vunpack.c.l.b16 %v502
        %v1760 = vunpack.c.h.b16 %v502
        %v1761 = vunpack.c.l.b16 %v503
        %v1762 = vunpack.c.h.b16 %v503
        %v1763 = vunpack.c.l.b16 %v504
        %v1764 = vunpack.c.h.b16 %v504
        %v1765 = vunpack.c.l.b16 %v505
        %v1766 = vunpack.c.h.b16 %v505
        %v1767 = vunpack.c.l.b16 %v506
        %v1768 = vunpack.c.h.b16 %v506
        %v1769 = vunpack.c.l.b16 %v507
        %v1770 = vunpack.c.h.b16 %v507
        %v1771 = vunpack.c.l.b16 %v508
        %v1772 = vunpack.c.h.b16 %v508
        %v1773 = vunpack.c.l.b16 %v509
        %v1774 = vunpack.c.h.b16 %v509
        %v1775 = vunpack.c.l.b16 %v510
        %v1776 = vunpack.c.h.b16 %v510
        %v1777 = vunpack.c.l.b16 %v511
        %v1778 = vunpack.c.h.b16 %v511
        %v1779 = vunpack.c.l.b16 %v512
        %v1780 = vunpack.c.h.b16 %v512
        %v1781 = vunpack.c.l.b16 %v513
        %v1782 = vunpack.c.h.b16 %v513
        %v1783 = vunpack.c.l.b16 %v514
        %v1784 = vunpack.c.h.b16 %v514
        %v1785 = vunpack.c.l.b16 %v515
        %v1786 = vunpack.c.h.b16 %v515
        %v1787 = vunpack.c.l.b16 %v516
        %v1788 = vunpack.c.h.b16 %v516
        %v1789 = vunpack.c.l.b16 %v517
        %v1790 = vunpack.c.h.b16 %v517
        %v1791 = vunpack.c.l.b16 %v518
        %v1792 = vunpack.c.h.b16 %v518
        %v1793 = vunpack.c.l.b16 %v519
        %v1794 = vunpack.c.h.b16 %v519
        %v1795 = vunpack.c.l.b16 %v520
        %v1796 = vunpack.c.h.b16 %v520
        %v1797 = vunpack.c.l.b16 %v521
        %v1798 = vunpack.c.h.b16 %v521
        %v1799 = vunpack.c.l.b16 %v522
        %v1800 = vunpack.c.h.b16 %v522
        %v1801 = vunpack.c.l.b16 %v523
        %v1802 = vunpack.c.h.b16 %v523
        %v1803 = vunpack.c.l.b16 %v524
        %v1804 = vunpack.c.h.b16 %v524
        %v1805 = vunpack.c.l.b16 %v525
        %v1806 = vunpack.c.h.b16 %v525
        %v1807 = vunpack.c.l.b16 %v526
        %v1808 = vunpack.c.h.b16 %v526
        %v1809 = vunpack.c.l.b16 %v527
        %v1810 = vunpack.c.h.b16 %v527
        %v1811 = vunpack.c.l.b16 %v528
        %v1812 = vunpack.c.h.b16 %v528
        %v1813 = vunpack.c.l.b16 %v529
        %v1814 = vunpack.c.h.b16 %v529
        %v1815 = vunpack.c.l.b16 %v530
        %v1816 = vunpack.c.h.b16 %v530
        %v1817 = vunpack.c.l.b16 %v531
        %v1818 = vunpack.c.h.b16 %v531
        %v1819 = vunpack.c.l.b16 %v532
        %v1820 = vunpack.c.h.b16 %v532
        %v1821 = vunpack.c.l.b16 %v533
        %v1822 = vunpack.c.h.b16 %v533
        %v1823 = vunpack.c.l.b16 %v534
        %v1824 = vunpack.c.h.b16 %v534
        %v1825 = vunpack.c.l.b16 %v535
        %v1826 = vunpack.c.h.b16 %v535
        %v1827 = vunpack.c.l.b16 %v536
        %v1828 = vunpack.c.h.b16 %v536
        %v1829 = vunpack.c.l.b16 %v537
        %v1830 = vunpack.c.h.b16 %v537
        %v1831 = vunpack.c.l.b16 %v538
        %v1832 = vunpack.c.h.b16 %v538
        %v1833 = vunpack.c.l.b16 %v539
        %v1834 = vunpack.c.h.b16 %v539
        %v1835 = vunpack.c.l.b16 %v540
        %v1836 = vunpack.c.h.b16 %v540
        %v1837 = vunpack.c.l.b16 %v541
        %v1838 = vunpack.c.h.b16 %v541
        %v1839 = vunpack.c.l.b16 %v542
        %v1840 = vunpack.c.h.b16 %v542
        %v1841 = vunpack.c.l.b16 %v543
        %v1842 = vunpack.c.h.b16 %v543
        %v1843 = vunpack.c.l.b16 %v544
        %v1844 = vunpack.c.h.b16 %v544
        %v1845 = vunpack.c.l.b16 %v545
        %v1846 = vunpack.c.h.b16 %v545
        %v1847 = vunpack.c.l.b16 %v546
        %v1848 = vunpack.c.h.b16 %v546
        %v1849 = vunpack.c.l.b16 %v547
        %v1850 = vunpack.c.h.b16 %v547
        %v1851 = vunpack.c.l.b16 %v548
        %v1852 = vunpack.c.h.b16 %v548
        %v1853 = vunpack.c.l.b16 %v549
        %v1854 = vunpack.c.h.b16 %v549
        %v1855 = vunpack.c.l.b16 %v550
        %v1856 = vunpack.c.h.b16 %v550
        %v1857 = vunpack.c.l.b16 %v551
        %v1858 = vunpack.c.h.b16 %v551
        %v1859 = vunpack.c.l.b16 %v552
        %v1860 = vunpack.c.h.b16 %v552
        %v1861 = vunpack.c.l.b16 %v553
        %v1862 = vunpack.c.h.b16 %v553
        %v1863 = vunpack.c.l.b16 %v554
        %v1864 = vunpack.c.h.b16 %v554
        %v1865 = vunpack.c.l.b16 %v555
        %v1866 = vunpack.c.h.b16 %v555
        %v1867 = vunpack.c.l.b16 %v556
        %v1868 = vunpack.c.h.b16 %v556
        %v1869 = vunpack.c.l.b16 %v557
        %v1870 = vunpack.c.h.b16 %v557
        %v1871 = vunpack.c.l.b16 %v558
        %v1872 = vunpack.c.h.b16 %v558
        %v1873 = vunpack.c.l.b16 %v559
        %v1874 = vunpack.c.h.b16 %v559
        %v1875 = vunpack.c.l.b16 %v560
        %v1876 = vunpack.c.h.b16 %v560
        %v1877 = vunpack.c.l.b16 %v561
        %v1878 = vunpack.c.h.b16 %v561
        %v1879 = vunpack.c.l.b16 %v562
        %v1880 = vunpack.c.h.b16 %v562
        %v1881 = vunpack.c.l.b16 %v563
        %v1882 = vunpack.c.h.b16 %v563
        %v1883 = vunpack.c.l.b16 %v564
        %v1884 = vunpack.c.h.b16 %v564
        %v1885 = vunpack.c.l.b16 %v565
        %v1886 = vunpack.c.h.b16 %v565
        %v1887 = vunpack.c.l.b16 %v566
        %v1888 = vunpack.c.h.b16 %v566
        %v1889 = vunpack.c.l.b16 %v567
        %v1890 = vunpack.c.h.b16 %v567
        %v1891 = vunpack.c.l.b16 %v568
        %v1892 = vunpack.c.h.b16 %v568
        %v1893 = vunpack.c.l.b16 %v569
        %v1894 = vunpack.c.h.b16 %v569
        %v1895 = vunpack.c.l.b16 %v570
        %v1896 = vunpack.c.h.b16 %v570
        %v1897 = vunpack.c.l.b16 %v571
        %v1898 = vunpack.c.h.b16 %v571
        %v1899 = vunpack.c.l.b16 %v572
        %v1900 = vunpack.c.h.b16 %v572
        %v1901 = vunpack.c.l.b16 %v573
        %v1902 = vunpack.c.h.b16 %v573
        %v1903 = vunpack.c.l.b16 %v574
        %v1904 = vunpack.c.h.b16 %v574
        %v1905 = vunpack.c.l.b16 %v575
        %v1906 = vunpack.c.h.b16 %v575
        %v1907 = vunpack.c.l.b16 %v576
        %v1908 = vunpack.c.h.b16 %v576
        %v1909 = vunpack.c.l.b16 %v577
        %v1910 = vunpack.c.h.b16 %v577
        %v1911 = vunpack.c.l.b16 %v578
        %v1912 = vunpack.c.h.b16 %v578
        %v1913 = vunpack.c.l.b16 %v579
        %v1914 = vunpack.c.h.b16 %v579
        %v1915 = vunpack.c.l.b16 %v580
        %v1916 = vunpack.c.h.b16 %v580
        %v1917 = vunpack.c.l.b16 %v581
        %v1918 = vunpack.c.h.b16 %v581
        %v1919 = vunpack.c.l.b16 %v582
        %v1920 = vunpack.c.h.b16 %v582
        %v1921 = vunpack.c.l.b16 %v583
        %v1922 = vunpack.c.h.b16 %v583
        %v1923 = vunpack.c.l.b16 %v584
        %v1924 = vunpack.c.h.b16 %v584
        %v1925 = vunpack.c.l.b16 %v585
        %v1926 = vunpack.c.h.b16 %v585
        %v1927 = vunpack.c.l.b16 %v586
        %v1928 = vunpack.c.h.b16 %v586
        %v1929 = vunpack.c.l.b16 %v587
        %v1930 = vunpack.c.h.b16 %v587
        %v1931 = vunpack.c.l.b16 %v588
        %v1932 = vunpack.c.h.b16 %v588
        %v1933 = vunpack.c.l.b16 %v589
        %v1934 = vunpack.c.h.b16 %v589
        %v1935 = vunpack.c.l.b16 %v590
        %v1936 = vunpack.c.h.b16 %v590
        %v1937 = vunpack.c.l.b16 %v591
        %v1938 = vunpack.c.h.b16 %v591
        %v1939 = vunpack.c.l.b16 %v592
        %v1940 = vunpack.c.h.b16 %v592
        %v1941 = vunpack.c.l.b16 %v593
        %v1942 = vunpack.c.h.b16 %v593
        %v1943 = vunpack.c.l.b16 %v594
        %v1944 = vunpack.c.h.b16 %v594
        %v1945 = vunpack.c.l.b16 %v595
        %v1946 = vunpack.c.h.b16 %v595
        %v1947 = vunpack.c.l.b16 %v596
        %v1948 = vunpack.c.h.b16 %v596
        %v1949 = vunpack.c.l.b16 %v597
        %v1950 = vunpack.c.h.b16 %v597
        %v1951 = vunpack.c.l.b16 %v598
        %v1952 = vunpack.c.h.b16 %v598
        %v1953 = vunpack.c.l.b16 %v599
        %v1954 = vunpack.c.h.b16 %v599
        %v1955 = vunpack.c.l.b16 %v600
        %v1956 = vunpack.c.h.b16 %v600
        %v1957 = vunpack.c.l.b16 %v601
        %v1958 = vunpack.c.h.b16 %v601
        %v1959 = vunpack.c.l.b16 %v602
        %v1960 = vunpack.c.h.b16 %v602
        %v1961 = vunpack.c.l.b16 %v603
        %v1962 = vunpack.c.h.b16 %v603
        %v1963 = vunpack.c.l.b16 %v604
        %v1964 = vunpack.c.h.b16 %v604
        %v1965 = vunpack.c.l.b16 %v605
        %v1966 = vunpack.c.h.b16 %v605
        %v1967 = vunpack.c.l.b16 %v606
        %v1968 = vunpack.c.h.b16 %v606
        %v1969 = vunpack.c.l.b16 %v607
        %v1970 = vunpack.c.h.b16 %v607
        %v1971 = vunpack.c.l.b16 %v608
        %v1972 = vunpack.c.h.b16 %v608
        %v1973 = vunpack.c.l.b16 %v609
        %v1974 = vunpack.c.h.b16 %v609
        %v1975 = vunpack.c.l.b16 %v610
        %v1976 = vunpack.c.h.b16 %v610
        %v1977 = vunpack.c.l.b16 %v611
        %v1978 = vunpack.c.h.b16 %v611
        %v1979 = vunpack.c.l.b16 %v612
        %v1980 = vunpack.c.h.b16 %v612
        %v1981 = vunpack.c.l.b16 %v613
        %v1982 = vunpack.c.h.b16 %v613
        %v1983 = vunpack.c.l.b16 %v614
        %v1984 = vunpack.c.h.b16 %v614
        %v1985 = vunpack.c.l.b16 %v615
        %v1986 = vunpack.c.h.b16 %v615
        %v1987 = vunpack.c.l.b16 %v616
        %v1988 = vunpack.c.h.b16 %v616
        %v1989 = vunpack.c.l.b16 %v617
        %v1990 = vunpack.c.h.b16 %v617
        %v1991 = vunpack.c.l.b16 %v618
        %v1992 = vunpack.c.h.b16 %v618
        %v1993 = vunpack.c.l.b16 %v619
        %v1994 = vunpack.c.h.b16 %v619
        %v1995 = vunpack.c.l.b16 %v620
        %v1996 = vunpack.c.h.b16 %v620
        %v1997 = vunpack.c.l.b16 %v621
        %v1998 = vunpack.c.h.b16 %v621
        %v1999 = vunpack.c.l.b16 %v622
        %v2000 = vunpack.c.h.b16 %v622
        %v2001 = vunpack.c.l.b16 %v623
        %v2002 = vunpack.c.h.b16 %v623
        %v2003 = vunpack.c.l.b16 %v624
        %v2004 = vunpack.c.h.b16 %v624
        %v2005 = vunpack.c.l.b16 %v625
        %v2006 = vunpack.c.h.b16 %v625
        %v2007 = vunpack.c.l.b16 %v626
        %v2008 = vunpack.c.h.b16 %v626
        %v2009 = vunpack.c.l.b16 %v627
        %v2010 = vunpack.c.h.b16 %v627
        %v2011 = vunpack.c.l.b16 %v628
        %v2012 = vunpack.c.h.b16 %v628
        %v2013 = vunpack.c.l.b16 %v629
        %v2014 = vunpack.c.h.b16 %v629
        %v2015 = vunpack.c.l.b16 %v630
        %v2016 = vunpack.c.h.b16 %v630
        %v2017 = vunpack.c.l.b16 %v631
        %v2018 = vunpack.c.h.b16 %v631
        %v2019 = vunpack.c.l.b16 %v632
        %v2020 = vunpack.c.h.b16 %v632
        %v2021 = vunpack.c.l.b16 %v633
        %v2022 = vunpack.c.h.b16 %v633
        %v2023 = vunpack.c.l.b16 %v634
        %v2024 = vunpack.c.h.b16 %v634
        %v2025 = vunpack.c.l.b16 %v635
        %v2026 = vunpack.c.h.b16 %v635
        %v2027 = vunpack.c.l.b16 %v636
        %v2028 = vunpack.c.h.b16 %v636
        %v2029 = vunpack.c.l.b16 %v637
        %v2030 = vunpack.c.h.b16 %v637
        %v2031 = vunpack.c.l.b16 %v638
        %v2032 = vunpack.c.h.b16 %v638
        %v2033 = vunpack.c.l.b16 %v639
        %v2034 = vunpack.c.h.b16 %v639
        %v2035 = vunpack.c.l.b16 %v640
        %v2036 = vunpack.c.h.b16 %v640
        %v2037 = vunpack.c.l.b16 %v641
        %v2038 = vunpack.c.h.b16 %v641
        %v2039 = vunpack.c.l.b16 %v642
        %v2040 = vunpack.c.h.b16 %v642
        %v2041 = vunpack.c.l.b16 %v643
        %v2042 = vunpack.c.h.b16 %v643
        %v2043 = vunpack.c.l.b16 %v644
        %v2044 = vunpack.c.h.b16 %v644
        %v2045 = vunpack.c.l.b16 %v645
        %v2046 = vunpack.c.h.b16 %v645
        %v2047 = vunpack.c.l.b16 %v646
        %v2048 = vunpack.c.h.b16 %v646
        %v2049 = vunpack.c.l.b16 %v647
        %v2050 = vunpack.c.h.b16 %v647
        %v2051 = vunpack.c.l.b16 %v648
        %v2052 = vunpack.c.h.b16 %v648
        %v2053 = vunpack.c.l.b16 %v649
        %v2054 = vunpack.c.h.b16 %v649
        %v2055 = vunpack.c.l.b16 %v650
        %v2056 = vunpack.c.h.b16 %v650
        %v2057 = vunpack.c.l.b16 %v651
        %v2058 = vunpack.c.h.b16 %v651
        %v2059 = vunpack.c.l.b16 %v652
        %v2060 = vunpack.c.h.b16 %v652
        %v2061 = vunpack.c.l.b16 %v653
        %v2062 = vunpack.c.h.b16 %v653
        %v2063 = vunpack.c.l.b16 %v654
        %v2064 = vunpack.c.h.b16 %v654
        %v2065 = vunpack.c.l.b16 %v655
        %v2066 = vunpack.c.h.b16 %v655
        %v2067 = vunpack.c.l.b16 %v656
        %v2068 = vunpack.c.h.b16 %v656
        %v2069 = vunpack.c.l.b16 %v657
        %v2070 = vunpack.c.h.b16 %v657
        %v2071 = vunpack.c.l.b16 %v658
        %v2072 = vunpack.c.h.b16 %v658
        %v2073 = vunpack.c.l.b16 %v659
        %v2074 = vunpack.c.h.b16 %v659
        %v2075 = vunpack.c.l.b16 %v660
        %v2076 = vunpack.c.h.b16 %v660
        %v2077 = vunpack.c.l.b16 %v661
        %v2078 = vunpack.c.h.b16 %v661
        %v2079 = vunpack.c.l.b16 %v662
        %v2080 = vunpack.c.h.b16 %v662
        %v2081 = vunpack.c.l.b16 %v663
        %v2082 = vunpack.c.h.b16 %v663
        %v2083 = vunpack.c.l.b16 %v664
        %v2084 = vunpack.c.h.b16 %v664
        %v2085 = vunpack.c.l.b16 %v665
        %v2086 = vunpack.c.h.b16 %v665
        %v2087 = vunpack.c.l.b16 %v666
        %v2088 = vunpack.c.h.b16 %v666
        %v2089 = vunpack.c.l.b16 %v667
        %v2090 = vunpack.c.h.b16 %v667
        %v2091 = vunpack.c.l.b16 %v668
        %v2092 = vunpack.c.h.b16 %v668
        %v2093 = vunpack.c.l.b16 %v669
        %v2094 = vunpack.c.h.b16 %v669
        %v2095 = vunpack.c.l.b16 %v670
        %v2096 = vunpack.c.h.b16 %v670
        %v2097 = vunpack.c.l.b16 %v671
        %v2098 = vunpack.c.h.b16 %v671
        %v2099 = vunpack.c.l.b16 %v672
        %v2100 = vunpack.c.h.b16 %v672
        %v2101 = vunpack.c.l.b16 %v673
        %v2102 = vunpack.c.h.b16 %v673
        %v2103 = vunpack.c.l.b16 %v674
        %v2104 = vunpack.c.h.b16 %v674
        %v2105 = vunpack.c.l.b16 %v675
        %v2106 = vunpack.c.h.b16 %v675
        %v2107 = vunpack.c.l.b16 %v676
        %v2108 = vunpack.c.h.b16 %v676
        %v2109 = vunpack.c.l.b16 %v677
        %v2110 = vunpack.c.h.b16 %v677
        %v2111 = vunpack.c.l.b16 %v678
        %v2112 = vunpack.c.h.b16 %v678
        %v2113 = vunpack.c.l.b16 %v679
        %v2114 = vunpack.c.h.b16 %v679
        %v2115 = vunpack.c.l.b16 %v680
        %v2116 = vunpack.c.h.b16 %v680
        %v2117 = vunpack.c.l.b16 %v681
        %v2118 = vunpack.c.h.b16 %v681
        %v2119 = vunpack.c.l.b16 %v682
        %v2120 = vunpack.c.h.b16 %v682
        %v2121 = vunpack.c.l.b16 %v683
        %v2122 = vunpack.c.h.b16 %v683
        %v2123 = vunpack.c.l.b16 %v684
        %v2124 = vunpack.c.h.b16 %v684
        %v2125 = vunpack.c.l.b16 %v685
        %v2126 = vunpack.c.h.b16 %v685
        %v2127 = vunpack.c.l.b16 %v686
        %v2128 = vunpack.c.h.b16 %v686
        %v2129 = vunpack.c.l.b16 %v687
        %v2130 = vunpack.c.h.b16 %v687
        %v2131 = vunpack.c.l.b16 %v688
        %v2132 = vunpack.c.h.b16 %v688
        %v2133 = vunpack.c.l.b16 %v689
        %v2134 = vunpack.c.h.b16 %v689
        %v2135 = vunpack.c.l.b16 %v690
        %v2136 = vunpack.c.h.b16 %v690
        %v2137 = vunpack.c.l.b16 %v691
        %v2138 = vunpack.c.h.b16 %v691
        %v2139 = vunpack.c.l.b16 %v692
        %v2140 = vunpack.c.h.b16 %v692
        %v2141 = vunpack.c.l.b16 %v693
        %v2142 = vunpack.c.h.b16 %v693
        %v2143 = vunpack.c.l.b16 %v694
        %v2144 = vunpack.c.h.b16 %v694
        %v2145 = vunpack.c.l.b16 %v695
        %v2146 = vunpack.c.h.b16 %v695
        %v2147 = vunpack.c.l.b16 %v696
        %v2148 = vunpack.c.h.b16 %v696
        %v2149 = vunpack.c.l.b16 %v697
        %v2150 = vunpack.c.h.b16 %v697
        %v2151 = vunpack.c.l.b16 %v698
        %v2152 = vunpack.c.h.b16 %v698
        %v2153 = vunpack.c.l.b16 %v699
        %v2154 = vunpack.c.h.b16 %v699
        %v2155 = vunpack.c.l.b16 %v700
        %v2156 = vunpack.c.h.b16 %v700
        %v2157 = vunpack.c.l.b16 %v701
        %v2158 = vunpack.c.h.b16 %v701
        %v2159 = vunpack.c.l.b16 %v702
        %v2160 = vunpack.c.h.b16 %v702
        %v2161 = vunpack.c.l.b16 %v703
        %v2162 = vunpack.c.h.b16 %v703
        %v2163 = vunpack.c.l.b16 %v704
        %v2164 = vunpack.c.h.b16 %v704
        %v2165 = vunpack.c.l.b16 %v705
        %v2166 = vunpack.c.h.b16 %v705
        %v2167 = vunpack.c.l.b16 %v706
        %v2168 = vunpack.c.h.b16 %v706
        %v2169 = vunpack.c.l.b16 %v707
        %v2170 = vunpack.c.h.b16 %v707
        %v2171 = vunpack.c.l.b16 %v708
        %v2172 = vunpack.c.h.b16 %v708
        %v2173 = vunpack.c.l.b16 %v709
        %v2174 = vunpack.c.h.b16 %v709
        %v2175 = vunpack.c.l.b16 %v710
        %v2176 = vunpack.c.h.b16 %v710
        %v2177 = vunpack.c.l.b16 %v711
        %v2178 = vunpack.c.h.b16 %v711
        %v2179 = vunpack.c.l.b16 %v712
        %v2180 = vunpack.c.h.b16 %v712
        %v2181 = vunpack.c.l.b16 %v713
        %v2182 = vunpack.c.h.b16 %v713
        %v2183 = vunpack.c.l.b16 %v714
        %v2184 = vunpack.c.h.b16 %v714
        %v2185 = vunpack.c.l.b16 %v715
        %v2186 = vunpack.c.h.b16 %v715
        %v2187 = vunpack.c.l.b16 %v716
        %v2188 = vunpack.c.h.b16 %v716
        %v2189 = vunpack.c.l.b16 %v717
        %v2190 = vunpack.c.h.b16 %v717
        %v2191 = vunpack.c.l.b16 %v718
        %v2192 = vunpack.c.h.b16 %v718
        %v2193 = vunpack.c.l.b16 %v719
        %v2194 = vunpack.c.h.b16 %v719
        %v2195 = vunpack.c.l.b16 %v720
        %v2196 = vunpack.c.h.b16 %v720
        %v2197 = vunpack.c.l.b16 %v721
        %v2198 = vunpack.c.h.b16 %v721
        %v2199 = vunpack.c.l.b16 %v722
        %v2200 = vunpack.c.h.b16 %v722
        %v2201 = vunpack.c.l.b16 %v723
        %v2202 = vunpack.c.h.b16 %v723
        %v2203 = vunpack.c.l.b16 %v724
        %v2204 = vunpack.c.h.b16 %v724
        %v2205 = vunpack.c.l.b16 %v725
        %v2206 = vunpack.c.h.b16 %v725
        %v2207 = vunpack.c.l.b16 %v726
        %v2208 = vunpack.c.h.b16 %v726
        %v2209 = vunpack.c.l.b16 %v727
        %v2210 = vunpack.c.h.b16 %v727
        %v2211 = vunpack.c.l.b16 %v728
        %v2212 = vunpack.c.h.b16 %v728
        %v2213 = vunpack.c.l.b16 %v729
        %v2214 = vunpack.c.h.b16 %v729
        %v2215 = vunpack.c.l.b16 %v730
        %v2216 = vunpack.c.h.b16 %v730
        %v2217 = vunpack.c.l.b16 %v731
        %v2218 = vunpack.c.h.b16 %v731
        %v2219 = vunpack.c.l.b16 %v732
        %v2220 = vunpack.c.h.b16 %v732
        %v2221 = vunpack.c.l.b16 %v733
        %v2222 = vunpack.c.h.b16 %v733
        %v2223 = vunpack.c.l.b16 %v734
        %v2224 = vunpack.c.h.b16 %v734
        %v2225 = vunpack.c.l.b16 %v735
        %v2226 = vunpack.c.h.b16 %v735
        %v2227 = vunpack.c.l.b16 %v736
        %v2228 = vunpack.c.h.b16 %v736
        %v2229 = vunpack.c.l.b16 %v737
        %v2230 = vunpack.c.h.b16 %v737
        %v2231 = vunpack.c.l.b16 %v738
        %v2232 = vunpack.c.h.b16 %v738
        %v2233 = vunpack.c.l.b16 %v739
        %v2234 = vunpack.c.h.b16 %v739
        %v2235 = vunpack.c.l.b16 %v740
        %v2236 = vunpack.c.h.b16 %v740
        %v2237 = vunpack.c.l.b16 %v741
        %v2238 = vunpack.c.h.b16 %v741
        %v2239 = vunpack.c.l.b16 %v742
        %v2240 = vunpack.c.h.b16 %v742
        %v2241 = vunpack.c.l.b16 %v743
        %v2242 = vunpack.c.h.b16 %v743
        %v2243 = vunpack.c.l.b16 %v744
        %v2244 = vunpack.c.h.b16 %v744
        %v2245 = vunpack.c.l.b16 %v745
        %v2246 = vunpack.c.h.b16 %v745
        %v2247 = vunpack.c.l.b16 %v746
        %v2248 = vunpack.c.h.b16 %v746
        %v2249 = vunpack.c.l.b16 %v747
        %v2250 = vunpack.c.h.b16 %v747
        %v2251 = vunpack.c.l.b16 %v748
        %v2252 = vunpack.c.h.b16 %v748
        %v2253 = vunpack.c.l.b16 %v749
        %v2254 = vunpack.c.h.b16 %v749
        %v2255 = vunpack.c.l.b16 %v750
        %v2256 = vunpack.c.h.b16 %v750
        %v2257 = vunpack.c.l.b16 %v751
        %v2258 = vunpack.c.h.b16 %v751
        %v2259 = vunpack.c.l.b16 %v752
        %v2260 = vunpack.c.h.b16 %v752
        %v2261 = vunpack.c.l.b16 %v753
        %v2262 = vunpack.c.h.b16 %v753
        %v2263 = vunpack.c.l.b16 %v754
        %v2264 = vunpack.c.h.b16 %v754
        %v2265 = vunpack.c.l.b16 %v755
        %v2266 = vunpack.c.h.b16 %v755
        %v2267 = vunpack.c.l.b16 %v756
        %v2268 = vunpack.c.h.b16 %v756
        %v2269 = vunpack.c.l.b16 %v757
        %v2270 = vunpack.c.h.b16 %v757
        %v2271 = vunpack.c.l.b16 %v758
        %v2272 = vunpack.c.h.b16 %v758
        %v2273 = vunpack.c.l.b16 %v759
        %v2274 = vunpack.c.h.b16 %v759
        %v2275 = vunpack.c.l.b16 %v760
        %v2276 = vunpack.c.h.b16 %v760
        %v2277 = vunpack.c.l.b16 %v761
        %v2278 = vunpack.c.h.b16 %v761
        %v2279 = vunpack.c.l.b16 %v762
        %v2280 = vunpack.c.h.b16 %v762
        %v2281 = vunpack.c.l.b16 %v763
        %v2282 = vunpack.c.h.b16 %v763
        %v2283 = vunpack.c.l.b16 %v764
        %v2284 = vunpack.c.h.b16 %v764
        %v2285 = vunpack.c.l.b16 %v765
        %v2286 = vunpack.c.h.b16 %v765
        %v2287 = vunpack.c.l.b16 %v766
        %v2288 = vunpack.c.h.b16 %v766
        %v2289 = vunpack.c.l.b16 %v767
        %v2290 = vunpack.c.h.b16 %v767
        %v2291 = vunpack.c.l.b16 %v768
        %v2292 = vunpack.c.h.b16 %v768
        %v2293 = vunpack.c.l.b16 %v769
        %v2294 = vunpack.c.h.b16 %v769
        %v2295 = vunpack.c.l.b16 %v770
        %v2296 = vunpack.c.h.b16 %v770
        %v2297 = vunpack.c.l.b16 %v771
        %v2298 = vunpack.c.h.b16 %v771
        %v2299 = vunpack.c.l.b16 %v772
        %v2300 = vunpack.c.h.b16 %v772
        %v2301 = vunpack.c.l.b16 %v773
        %v2302 = vunpack.c.h.b16 %v773
        %v2303 = vunpack.c.l.b16 %v774
        %v2304 = vunpack.c.h.b16 %v774
        %v2305 = vunpack.c.l.b16 %v775
        %v2306 = vunpack.c.h.b16 %v775
        %v2307 = vunpack.c.l.b16 %v776
        %v2308 = vunpack.c.h.b16 %v776
        %v2309 = vunpack.c.l.b16 %v777
        %v2310 = vunpack.c.h.b16 %v777
        %v2311 = vunpack.c.l.b16 %v778
        %v2312 = vunpack.c.h.b16 %v778
        %v2313 = vunpack.c.l.b16 %v779
        %v2314 = vunpack.c.h.b16 %v779
        %v2315 = vunpack.c.l.b16 %v780
        %v2316 = vunpack.c.h.b16 %v780
        %v2317 = vunpack.c.l.b16 %v781
        %v2318 = vunpack.c.h.b16 %v781
        %v2319 = vunpack.c.l.b16 %v782
        %v2320 = vunpack.c.h.b16 %v782
        %v2321 = vunpack.c.l.b16 %v783
        %v2322 = vunpack.c.h.b16 %v783
        %v2323 = vunpack.c.l.b16 %v784
        %v2324 = vunpack.c.h.b16 %v784
        %v2325 = vunpack.c.l.b16 %v785
        %v2326 = vunpack.c.h.b16 %v785
        %v2327 = vunpack.c.l.b16 %v786
        %v2328 = vunpack.c.h.b16 %v786
        %v2329 = vunpack.c.l.b16 %v787
        %v2330 = vunpack.c.h.b16 %v787
        %v2331 = vunpack.c.l.b16 %v788
        %v2332 = vunpack.c.h.b16 %v788
        %v2333 = vunpack.c.l.b16 %v789
        %v2334 = vunpack.c.h.b16 %v789
        %v2335 = vunpack.c.l.b16 %v790
        %v2336 = vunpack.c.h.b16 %v790
        %v2337 = vpack.c.b16 %v1317, %v1313
        %v2338 = vpack.c.b16 %v1318, %v1314
        %v2339 = vpack.c.b16 %v1319, %v1315
        %v2340 = vpack.c.b16 %v1320, %v1316
        %v2341 = vpack.c.b16 %v1325, %v1321
        %v2342 = vpack.c.b16 %v1326, %v1322
        %v2343 = vpack.c.b16 %v1327, %v1323
        %v2344 = vpack.c.b16 %v1328, %v1324
        %v2345 = vpack.c.b16 %v1333, %v1329
        %v2346 = vpack.c.b16 %v1334, %v1330
        %v2347 = vpack.c.b16 %v1335, %v1331
        %v2348 = vpack.c.b16 %v1336, %v1332
        %v2349 = vpack.c.b16 %v1341, %v1337
        %v2350 = vpack.c.b16 %v1342, %v1338
        %v2351 = vpack.c.b16 %v1343, %v1339
        %v2352 = vpack.c.b16 %v1344, %v1340
        %v2353 = vpack.c.b16 %v1349, %v1345
        %v2354 = vpack.c.b16 %v1350, %v1346
        %v2355 = vpack.c.b16 %v1351, %v1347
        %v2356 = vpack.c.b16 %v1352, %v1348
        %v2357 = vpack.c.b16 %v1357, %v1353
        %v2358 = vpack.c.b16 %v1358, %v1354
        %v2359 = vpack.c.b16 %v1359, %v1355
        %v2360 = vpack.c.b16 %v1360, %v1356
        %v2361 = vpack.c.b16 %v1365, %v1361
        %v2362 = vpack.c.b16 %v1366, %v1362
        %v2363 = vpack.c.b16 %v1367, %v1363
        %v2364 = vpack.c.b16 %v1368, %v1364
        %v2365 = vpack.c.b16 %v1373, %v1369
        %v2366 = vpack.c.b16 %v1374, %v1370
        %v2367 = vpack.c.b16 %v1375, %v1371
        %v2368 = vpack.c.b16 %v1376, %v1372
        %v2369 = vpack.c.b16 %v1381, %v1377
        %v2370 = vpack.c.b16 %v1382, %v1378
        %v2371 = vpack.c.b16 %v1383, %v1379
        %v2372 = vpack.c.b16 %v1384, %v1380
        %v2373 = vpack.c.b16 %v1389, %v1385
        %v2374 = vpack.c.b16 %v1390, %v1386
        %v2375 = vpack.c.b16 %v1391, %v1387
        %v2376 = vpack.c.b16 %v1392, %v1388
        %v2377 = vpack.c.b16 %v1397, %v1393
        %v2378 = vpack.c.b16 %v1398, %v1394
        %v2379 = vpack.c.b16 %v1399, %v1395
        %v2380 = vpack.c.b16 %v1400, %v1396
        %v2381 = vpack.c.b16 %v1405, %v1401
        %v2382 = vpack.c.b16 %v1406, %v1402
        %v2383 = vpack.c.b16 %v1407, %v1403
        %v2384 = vpack.c.b16 %v1408, %v1404
        %v2385 = vpack.c.b16 %v1413, %v1409
        %v2386 = vpack.c.b16 %v1414, %v1410
        %v2387 = vpack.c.b16 %v1415, %v1411
        %v2388 = vpack.c.b16 %v1416, %v1412
        %v2389 = vpack.c.b16 %v1421, %v1417
        %v2390 = vpack.c.b16 %v1422, %v1418
        %v2391 = vpack.c.b16 %v1423, %v1419
        %v2392 = vpack.c.b16 %v1424, %v1420
        %v2393 = vpack.c.b16 %v1429, %v1425
        %v2394 = vpack.c.b16 %v1430, %v1426
        %v2395 = vpack.c.b16 %v1431, %v1427
        %v2396 = vpack.c.b16 %v1432, %v1428
        %v2397 = vpack.c.b16 %v1437, %v1433
        %v2398 = vpack.c.b16 %v1438, %v1434
        %v2399 = vpack.c.b16 %v1439, %v1435
        %v2400 = vpack.c.b16 %v1440, %v1436
        %v2401 = vpack.c.b16 %v1445, %v1441
        %v2402 = vpack.c.b16 %v1446, %v1442
        %v2403 = vpack.c.b16 %v1447, %v1443
        %v2404 = vpack.c.b16 %v1448, %v1444
        %v2405 = vpack.c.b16 %v1453, %v1449
        %v2406 = vpack.c.b16 %v1454, %v1450
        %v2407 = vpack.c.b16 %v1455, %v1451
        %v2408 = vpack.c.b16 %v1456, %v1452
        %v2409 = vpack.c.b16 %v1461, %v1457
        %v2410 = vpack.c.b16 %v1462, %v1458
        %v2411 = vpack.c.b16 %v1463, %v1459
        %v2412 = vpack.c.b16 %v1464, %v1460
        %v2413 = vpack.c.b16 %v1469, %v1465
        %v2414 = vpack.c.b16 %v1470, %v1466
        %v2415 = vpack.c.b16 %v1471, %v1467
        %v2416 = vpack.c.b16 %v1472, %v1468
        %v2417 = vpack.c.b16 %v1477, %v1473
        %v2418 = vpack.c.b16 %v1478, %v1474
        %v2419 = vpack.c.b16 %v1479, %v1475
        %v2420 = vpack.c.b16 %v1480, %v1476
        %v2421 = vpack.c.b16 %v1485, %v1481
        %v2422 = vpack.c.b16 %v1486, %v1482
        %v2423 = vpack.c.b16 %v1487, %v1483
        %v2424 = vpack.c.b16 %v1488, %v1484
        %v2425 = vpack.c.b16 %v1493, %v1489
        %v2426 = vpack.c.b16 %v1494, %v1490
        %v2427 = vpack.c.b16 %v1495, %v1491
        %v2428 = vpack.c.b16 %v1496, %v1492
        %v2429 = vpack.c.b16 %v1501, %v1497
        %v2430 = vpack.c.b16 %v1502, %v1498
        %v2431 = vpack.c.b16 %v1503, %v1499
        %v2432 = vpack.c.b16 %v1504, %v1500
        %v2433 = vpack.c.b16 %v1509, %v1505
        %v2434 = vpack.c.b16 %v1510, %v1506
        %v2435 = vpack.c.b16 %v1511, %v1507
        %v2436 = vpack.c.b16 %v1512, %v1508
        %v2437 = vpack.c.b16 %v1517, %v1513
        %v2438 = vpack.c.b16 %v1518, %v1514
        %v2439 = vpack.c.b16 %v1519, %v1515
        %v2440 = vpack.c.b16 %v1520, %v1516
        %v2441 = vpack.c.b16 %v1525, %v1521
        %v2442 = vpack.c.b16 %v1526, %v1522
        %v2443 = vpack.c.b16 %v1527, %v1523
        %v2444 = vpack.c.b16 %v1528, %v1524
        %v2445 = vpack.c.b16 %v1533, %v1529
        %v2446 = vpack.c.b16 %v1534, %v1530
        %v2447 = vpack.c.b16 %v1535, %v1531
        %v2448 = vpack.c.b16 %v1536, %v1532
        %v2449 = vpack.c.b16 %v1541, %v1537
        %v2450 = vpack.c.b16 %v1542, %v1538
        %v2451 = vpack.c.b16 %v1543, %v1539
        %v2452 = vpack.c.b16 %v1544, %v1540
        %v2453 = vpack.c.b16 %v1549, %v1545
        %v2454 = vpack.c.b16 %v1550, %v1546
        %v2455 = vpack.c.b16 %v1551, %v1547
        %v2456 = vpack.c.b16 %v1552, %v1548
        %v2457 = vpack.c.b16 %v1557, %v1553
        %v2458 = vpack.c.b16 %v1558, %v1554
        %v2459 = vpack.c.b16 %v1559, %v1555
        %v2460 = vpack.c.b16 %v1560, %v1556
        %v2461 = vpack.c.b16 %v1565, %v1561
        %v2462 = vpack.c.b16 %v1566, %v1562
        %v2463 = vpack.c.b16 %v1567, %v1563
        %v2464 = vpack.c.b16 %v1568, %v1564
        %v2465 = vpack.c.b16 %v1573, %v1569
        %v2466 = vpack.c.b16 %v1574, %v1570
        %v2467 = vpack.c.b16 %v1575, %v1571
        %v2468 = vpack.c.b16 %v1576, %v1572
        %v2469 = vpack.c.b16 %v1581, %v1577
        %v2470 = vpack.c.b16 %v1582, %v1578
        %v2471 = vpack.c.b16 %v1583, %v1579
        %v2472 = vpack.c.b16 %v1584, %v1580
        %v2473 = vpack.c.b16 %v1589, %v1585
        %v2474 = vpack.c.b16 %v1590, %v1586
        %v2475 = vpack.c.b16 %v1591, %v1587
        %v2476 = vpack.c.b16 %v1592, %v1588
        %v2477 = vpack.c.b16 %v1597, %v1593
        %v2478 = vpack.c.b16 %v1598, %v1594
        %v2479 = vpack.c.b16 %v1599, %v1595
        %v2480 = vpack.c.b16 %v1600, %v1596
        %v2481 = vpack.c.b16 %v1605, %v1601
        %v2482 = vpack.c.b16 %v1606, %v1602
        %v2483 = vpack.c.b16 %v1607, %v1603
        %v2484 = vpack.c.b16 %v1608, %v1604
        %v2485 = vpack.c.b16 %v1613, %v1609
        %v2486 = vpack.c.b16 %v1614, %v1610
        %v2487 = vpack.c.b16 %v1615, %v1611
        %v2488 = vpack.c.b16 %v1616, %v1612
        %v2489 = vpack.c.b16 %v1621, %v1617
        %v2490 = vpack.c.b16 %v1622, %v1618
        %v2491 = vpack.c.b16 %v1623, %v1619
        %v2492 = vpack.c.b16 %v1624, %v1620
        %v2493 = vpack.c.b16 %v1629, %v1625
        %v2494 = vpack.c.b16 %v1630, %v1626
        %v2495 = vpack.c.b16 %v1631, %v1627
        %v2496 = vpack.c.b16 %v1632, %v1628
        %v2497 = vpack.c.b16 %v1637, %v1633
        %v2498 = vpack.c.b16 %v1638, %v1634
        %v2499 = vpack.c.b16 %v1639, %v1635
        %v2500 = vpack.c.b16 %v1640, %v1636
        %v2501 = vpack.c.b16 %v1645, %v1641
        %v2502 = vpack.c.b16 %v1646, %v1642
        %v2503 = vpack.c.b16 %v1647, %v1643
        %v2504 = vpack.c.b16 %v1648, %v1644
        %v2505 = vpack.c.b16 %v1653, %v1649
        %v2506 = vpack.c.b16 %v1654, %v1650
        %v2507 = vpack.c.b16 %v1655, %v1651
        %v2508 = vpack.c.b16 %v1656, %v1652
        %v2509 = vpack.c.b16 %v1661, %v1657
        %v2510 = vpack.c.b16 %v1662, %v1658
        %v2511 = vpack.c.b16 %v1663, %v1659
        %v2512 = vpack.c.b16 %v1664, %v1660
        %v2513 = vpack.c.b16 %v1669, %v1665
        %v2514 = vpack.c.b16 %v1670, %v1666
        %v2515 = vpack.c.b16 %v1671, %v1667
        %v2516 = vpack.c.b16 %v1672, %v1668
        %v2517 = vpack.c.b16 %v1677, %v1673
        %v2518 = vpack.c.b16 %v1678, %v1674
        %v2519 = vpack.c.b16 %v1679, %v1675
        %v2520 = vpack.c.b16 %v1680, %v1676
        %v2521 = vpack.c.b16 %v1685, %v1681
        %v2522 = vpack.c.b16 %v1686, %v1682
        %v2523 = vpack.c.b16 %v1687, %v1683
        %v2524 = vpack.c.b16 %v1688, %v1684
        %v2525 = vpack.c.b16 %v1693, %v1689
        %v2526 = vpack.c.b16 %v1694, %v1690
        %v2527 = vpack.c.b16 %v1695, %v1691
        %v2528 = vpack.c.b16 %v1696, %v1692
        %v2529 = vpack.c.b16 %v1701, %v1697
        %v2530 = vpack.c.b16 %v1702, %v1698
        %v2531 = vpack.c.b16 %v1703, %v1699
        %v2532 = vpack.c.b16 %v1704, %v1700
        %v2533 = vpack.c.b16 %v1709, %v1705
        %v2534 = vpack.c.b16 %v1710, %v1706
        %v2535 = vpack.c.b16 %v1711, %v1707
        %v2536 = vpack.c.b16 %v1712, %v1708
        %v2537 = vpack.c.b16 %v1717, %v1713
        %v2538 = vpack.c.b16 %v1718, %v1714
        %v2539 = vpack.c.b16 %v1719, %v1715
        %v2540 = vpack.c.b16 %v1720, %v1716
        %v2541 = vpack.c.b16 %v1725, %v1721
        %v2542 = vpack.c.b16 %v1726, %v1722
        %v2543 = vpack.c.b16 %v1727, %v1723
        %v2544 = vpack.c.b16 %v1728, %v1724
        %v2545 = vpack.c.b16 %v1733, %v1729
        %v2546 = vpack.c.b16 %v1734, %v1730
        %v2547 = vpack.c.b16 %v1735, %v1731
        %v2548 = vpack.c.b16 %v1736, %v1732
        %v2549 = vpack.c.b16 %v1741, %v1737
        %v2550 = vpack.c.b16 %v1742, %v1738
        %v2551 = vpack.c.b16 %v1743, %v1739
        %v2552 = vpack.c.b16 %v1744, %v1740
        %v2553 = vpack.c.b16 %v1749, %v1745
        %v2554 = vpack.c.b16 %v1750, %v1746
        %v2555 = vpack.c.b16 %v1751, %v1747
        %v2556 = vpack.c.b16 %v1752, %v1748
        %v2557 = vpack.c.b16 %v1757, %v1753
        %v2558 = vpack.c.b16 %v1758, %v1754
        %v2559 = vpack.c.b16 %v1759, %v1755
        %v2560 = vpack.c.b16 %v1760, %v1756
        %v2561 = vpack.c.b16 %v1765, %v1761
        %v2562 = vpack.c.b16 %v1766, %v1762
        %v2563 = vpack.c.b16 %v1767, %v1763
        %v2564 = vpack.c.b16 %v1768, %v1764
        %v2565 = vpack.c.b16 %v1773, %v1769
        %v2566 = vpack.c.b16 %v1774, %v1770
        %v2567 = vpack.c.b16 %v1775, %v1771
        %v2568 = vpack.c.b16 %v1776, %v1772
        %v2569 = vpack.c.b16 %v1781, %v1777
        %v2570 = vpack.c.b16 %v1782, %v1778
        %v2571 = vpack.c.b16 %v1783, %v1779
        %v2572 = vpack.c.b16 %v1784, %v1780
        %v2573 = vpack.c.b16 %v1789, %v1785
        %v2574 = vpack.c.b16 %v1790, %v1786
        %v2575 = vpack.c.b16 %v1791, %v1787
        %v2576 = vpack.c.b16 %v1792, %v1788
        %v2577 = vpack.c.b16 %v1797, %v1793
        %v2578 = vpack.c.b16 %v1798, %v1794
        %v2579 = vpack.c.b16 %v1799, %v1795
        %v2580 = vpack.c.b16 %v1800, %v1796
        %v2581 = vpack.c.b16 %v1805, %v1801
        %v2582 = vpack.c.b16 %v1806, %v1802
        %v2583 = vpack.c.b16 %v1807, %v1803
        %v2584 = vpack.c.b16 %v1808, %v1804
        %v2585 = vpack.c.b16 %v1813, %v1809
        %v2586 = vpack.c.b16 %v1814, %v1810
        %v2587 = vpack.c.b16 %v1815, %v1811
        %v2588 = vpack.c.b16 %v1816, %v1812
        %v2589 = vpack.c.b16 %v1821, %v1817
        %v2590 = vpack.c.b16 %v1822, %v1818
        %v2591 = vpack.c.b16 %v1823, %v1819
        %v2592 = vpack.c.b16 %v1824, %v1820
        %v2593 = vpack.c.b16 %v1829, %v1825
        %v2594 = vpack.c.b16 %v1830, %v1826
        %v2595 = vpack.c.b16 %v1831, %v1827
        %v2596 = vpack.c.b16 %v1832, %v1828
        %v2597 = vpack.c.b16 %v1837, %v1833
        %v2598 = vpack.c.b16 %v1838, %v1834
        %v2599 = vpack.c.b16 %v1839, %v1835
        %v2600 = vpack.c.b16 %v1840, %v1836
        %v2601 = vpack.c.b16 %v1845, %v1841
        %v2602 = vpack.c.b16 %v1846, %v1842
        %v2603 = vpack.c.b16 %v1847, %v1843
        %v2604 = vpack.c.b16 %v1848, %v1844
        %v2605 = vpack.c.b16 %v1853, %v1849
        %v2606 = vpack.c.b16 %v1854, %v1850
        %v2607 = vpack.c.b16 %v1855, %v1851
        %v2608 = vpack.c.b16 %v1856, %v1852
        %v2609 = vpack.c.b16 %v1861, %v1857
        %v2610 = vpack.c.b16 %v1862, %v1858
        %v2611 = vpack.c.b16 %v1863, %v1859
        %v2612 = vpack.c.b16 %v1864, %v1860
        %v2613 = vpack.c.b16 %v1869, %v1865
        %v2614 = vpack.c.b16 %v1870, %v1866
        %v2615 = vpack.c.b16 %v1871, %v1867
        %v2616 = vpack.c.b16 %v1872, %v1868
        %v2617 = vpack.c.b16 %v1877, %v1873
        %v2618 = vpack.c.b16 %v1878, %v1874
        %v2619 = vpack.c.b16 %v1879, %v1875
        %v2620 = vpack.c.b16 %v1880, %v1876
        %v2621 = vpack.c.b16 %v1885, %v1881
        %v2622 = vpack.c.b16 %v1886, %v1882
        %v2623 = vpack.c.b16 %v1887, %v1883
        %v2624 = vpack.c.b16 %v1888, %v1884
        %v2625 = vpack.c.b16 %v1893, %v1889
        %v2626 = vpack.c.b16 %v1894, %v1890
        %v2627 = vpack.c.b16 %v1895, %v1891
        %v2628 = vpack.c.b16 %v1896, %v1892
        %v2629 = vpack.c.b16 %v1901, %v1897
        %v2630 = vpack.c.b16 %v1902, %v1898
        %v2631 = vpack.c.b16 %v1903, %v1899
        %v2632 = vpack.c.b16 %v1904, %v1900
        %v2633 = vpack.c.b16 %v1909, %v1905
        %v2634 = vpack.c.b16 %v1910, %v1906
        %v2635 = vpack.c.b16 %v1911, %v1907
        %v2636 = vpack.c.b16 %v1912, %v1908
        %v2637 = vpack.c.b16 %v1917, %v1913
        %v2638 = vpack.c.b16 %v1918, %v1914
        %v2639 = vpack.c.b16 %v1919, %v1915
        %v2640 = vpack.c.b16 %v1920, %v1916
        %v2641 = vpack.c.b16 %v1925, %v1921
        %v2642 = vpack.c.b16 %v1926, %v1922
        %v2643 = vpack.c.b16 %v1927, %v1923
        %v2644 = vpack.c.b16 %v1928, %v1924
        %v2645 = vpack.c.b16 %v1933, %v1929
        %v2646 = vpack.c.b16 %v1934, %v1930
        %v2647 = vpack.c.b16 %v1935, %v1931
        %v2648 = vpack.c.b16 %v1936, %v1932
        %v2649 = vpack.c.b16 %v1941, %v1937
        %v2650 = vpack.c.b16 %v1942, %v1938
        %v2651 = vpack.c.b16 %v1943, %v1939
        %v2652 = vpack.c.b16 %v1944, %v1940
        %v2653 = vpack.c.b16 %v1949, %v1945
        %v2654 = vpack.c.b16 %v1950, %v1946
        %v2655 = vpack.c.b16 %v1951, %v1947
        %v2656 = vpack.c.b16 %v1952, %v1948
        %v2657 = vpack.c.b16 %v1957, %v1953
        %v2658 = vpack.c.b16 %v1958, %v1954
        %v2659 = vpack.c.b16 %v1959, %v1955
        %v2660 = vpack.c.b16 %v1960, %v1956
        %v2661 = vpack.c.b16 %v1965, %v1961
        %v2662 = vpack.c.b16 %v1966, %v1962
        %v2663 = vpack.c.b16 %v1967, %v1963
        %v2664 = vpack.c.b16 %v1968, %v1964
        %v2665 = vpack.c.b16 %v1973, %v1969
        %v2666 = vpack.c.b16 %v1974, %v1970
        %v2667 = vpack.c.b16 %v1975, %v1971
        %v2668 = vpack.c.b16 %v1976, %v1972
        %v2669 = vpack.c.b16 %v1981, %v1977
        %v2670 = vpack.c.b16 %v1982, %v1978
        %v2671 = vpack.c.b16 %v1983, %v1979
        %v2672 = vpack.c.b16 %v1984, %v1980
        %v2673 = vpack.c.b16 %v1989, %v1985
        %v2674 = vpack.c.b16 %v1990, %v1986
        %v2675 = vpack.c.b16 %v1991, %v1987
        %v2676 = vpack.c.b16 %v1992, %v1988
        %v2677 = vpack.c.b16 %v1997, %v1993
        %v2678 = vpack.c.b16 %v1998, %v1994
        %v2679 = vpack.c.b16 %v1999, %v1995
        %v2680 = vpack.c.b16 %v2000, %v1996
        %v2681 = vpack.c.b16 %v2005, %v2001
        %v2682 = vpack.c.b16 %v2006, %v2002
        %v2683 = vpack.c.b16 %v2007, %v2003
        %v2684 = vpack.c.b16 %v2008, %v2004
        %v2685 = vpack.c.b16 %v2013, %v2009
        %v2686 = vpack.c.b16 %v2014, %v2010
        %v2687 = vpack.c.b16 %v2015, %v2011
        %v2688 = vpack.c.b16 %v2016, %v2012
        %v2689 = vpack.c.b16 %v2021, %v2017
        %v2690 = vpack.c.b16 %v2022, %v2018
        %v2691 = vpack.c.b16 %v2023, %v2019
        %v2692 = vpack.c.b16 %v2024, %v2020
        %v2693 = vpack.c.b16 %v2029, %v2025
        %v2694 = vpack.c.b16 %v2030, %v2026
        %v2695 = vpack.c.b16 %v2031, %v2027
        %v2696 = vpack.c.b16 %v2032, %v2028
        %v2697 = vpack.c.b16 %v2037, %v2033
        %v2698 = vpack.c.b16 %v2038, %v2034
        %v2699 = vpack.c.b16 %v2039, %v2035
        %v2700 = vpack.c.b16 %v2040, %v2036
        %v2701 = vpack.c.b16 %v2045, %v2041
        %v2702 = vpack.c.b16 %v2046, %v2042
        %v2703 = vpack.c.b16 %v2047, %v2043
        %v2704 = vpack.c.b16 %v2048, %v2044
        %v2705 = vpack.c.b16 %v2053, %v2049
        %v2706 = vpack.c.b16 %v2054, %v2050
        %v2707 = vpack.c.b16 %v2055, %v2051
        %v2708 = vpack.c.b16 %v2056, %v2052
        %v2709 = vpack.c.b16 %v2061, %v2057
        %v2710 = vpack.c.b16 %v2062, %v2058
        %v2711 = vpack.c.b16 %v2063, %v2059
        %v2712 = vpack.c.b16 %v2064, %v2060
        %v2713 = vpack.c.b16 %v2069, %v2065
        %v2714 = vpack.c.b16 %v2070, %v2066
        %v2715 = vpack.c.b16 %v2071, %v2067
        %v2716 = vpack.c.b16 %v2072, %v2068
        %v2717 = vpack.c.b16 %v2077, %v2073
        %v2718 = vpack.c.b16 %v2078, %v2074
        %v2719 = vpack.c.b16 %v2079, %v2075
        %v2720 = vpack.c.b16 %v2080, %v2076
        %v2721 = vpack.c.b16 %v2085, %v2081
        %v2722 = vpack.c.b16 %v2086, %v2082
        %v2723 = vpack.c.b16 %v2087, %v2083
        %v2724 = vpack.c.b16 %v2088, %v2084
        %v2725 = vpack.c.b16 %v2093, %v2089
        %v2726 = vpack.c.b16 %v2094, %v2090
        %v2727 = vpack.c.b16 %v2095, %v2091
        %v2728 = vpack.c.b16 %v2096, %v2092
        %v2729 = vpack.c.b16 %v2101, %v2097
        %v2730 = vpack.c.b16 %v2102, %v2098
        %v2731 = vpack.c.b16 %v2103, %v2099
        %v2732 = vpack.c.b16 %v2104, %v2100
        %v2733 = vpack.c.b16 %v2109, %v2105
        %v2734 = vpack.c.b16 %v2110, %v2106
        %v2735 = vpack.c.b16 %v2111, %v2107
        %v2736 = vpack.c.b16 %v2112, %v2108
        %v2737 = vpack.c.b16 %v2117, %v2113
        %v2738 = vpack.c.b16 %v2118, %v2114
        %v2739 = vpack.c.b16 %v2119, %v2115
        %v2740 = vpack.c.b16 %v2120, %v2116
        %v2741 = vpack.c.b16 %v2125, %v2121
        %v2742 = vpack.c.b16 %v2126, %v2122
        %v2743 = vpack.c.b16 %v2127, %v2123
        %v2744 = vpack.c.b16 %v2128, %v2124
        %v2745 = vpack.c.b16 %v2133, %v2129
        %v2746 = vpack.c.b16 %v2134, %v2130
        %v2747 = vpack.c.b16 %v2135, %v2131
        %v2748 = vpack.c.b16 %v2136, %v2132
        %v2749 = vpack.c.b16 %v2141, %v2137
        %v2750 = vpack.c.b16 %v2142, %v2138
        %v2751 = vpack.c.b16 %v2143, %v2139
        %v2752 = vpack.c.b16 %v2144, %v2140
        %v2753 = vpack.c.b16 %v2149, %v2145
        %v2754 = vpack.c.b16 %v2150, %v2146
        %v2755 = vpack.c.b16 %v2151, %v2147
        %v2756 = vpack.c.b16 %v2152, %v2148
        %v2757 = vpack.c.b16 %v2157, %v2153
        %v2758 = vpack.c.b16 %v2158, %v2154
        %v2759 = vpack.c.b16 %v2159, %v2155
        %v2760 = vpack.c.b16 %v2160, %v2156
        %v2761 = vpack.c.b16 %v2165, %v2161
        %v2762 = vpack.c.b16 %v2166, %v2162
        %v2763 = vpack.c.b16 %v2167, %v2163
        %v2764 = vpack.c.b16 %v2168, %v2164
        %v2765 = vpack.c.b16 %v2173, %v2169
        %v2766 = vpack.c.b16 %v2174, %v2170
        %v2767 = vpack.c.b16 %v2175, %v2171
        %v2768 = vpack.c.b16 %v2176, %v2172
        %v2769 = vpack.c.b16 %v2181, %v2177
        %v2770 = vpack.c.b16 %v2182, %v2178
        %v2771 = vpack.c.b16 %v2183, %v2179
        %v2772 = vpack.c.b16 %v2184, %v2180
        %v2773 = vpack.c.b16 %v2189, %v2185
        %v2774 = vpack.c.b16 %v2190, %v2186
        %v2775 = vpack.c.b16 %v2191, %v2187
        %v2776 = vpack.c.b16 %v2192, %v2188
        %v2777 = vpack.c.b16 %v2197, %v2193
        %v2778 = vpack.c.b16 %v2198, %v2194
        %v2779 = vpack.c.b16 %v2199, %v2195
        %v2780 = vpack.c.b16 %v2200, %v2196
        %v2781 = vpack.c.b16 %v2205, %v2201
        %v2782 = vpack.c.b16 %v2206, %v2202
        %v2783 = vpack.c.b16 %v2207, %v2203
        %v2784 = vpack.c.b16 %v2208, %v2204
        %v2785 = vpack.c.b16 %v2213, %v2209
        %v2786 = vpack.c.b16 %v2214, %v2210
        %v2787 = vpack.c.b16 %v2215, %v2211
        %v2788 = vpack.c.b16 %v2216, %v2212
        %v2789 = vpack.c.b16 %v2221, %v2217
        %v2790 = vpack.c.b16 %v2222, %v2218
        %v2791 = vpack.c.b16 %v2223, %v2219
        %v2792 = vpack.c.b16 %v2224, %v2220
        %v2793 = vpack.c.b16 %v2229, %v2225
        %v2794 = vpack.c.b16 %v2230, %v2226
        %v2795 = vpack.c.b16 %v2231, %v2227
        %v2796 = vpack.c.b16 %v2232, %v2228
        %v2797 = vpack.c.b16 %v2237, %v2233
        %v2798 = vpack.c.b16 %v2238, %v2234
        %v2799 = vpack.c.b16 %v2239, %v2235
        %v2800 = vpack.c.b16 %v2240, %v2236
        %v2801 = vpack.c.b16 %v2245, %v2241
        %v2802 = vpack.c.b16 %v2246, %v2242
        %v2803 = vpack.c.b16 %v2247, %v2243
        %v2804 = vpack.c.b16 %v2248, %v2244
        %v2805 = vpack.c.b16 %v2253, %v2249
        %v2806 = vpack.c.b16 %v2254, %v2250
        %v2807 = vpack.c.b16 %v2255, %v2251
        %v2808 = vpack.c.b16 %v2256, %v2252
        %v2809 = vpack.c.b16 %v2261, %v2257
        %v2810 = vpack.c.b16 %v2262, %v2258
        %v2811 = vpack.c.b16 %v2263, %v2259
        %v2812 = vpack.c.b16 %v2264, %v2260
        %v2813 = vpack.c.b16 %v2269, %v2265
        %v2814 = vpack.c.b16 %v2270, %v2266
        %v2815 = vpack.c.b16 %v2271, %v2267
        %v2816 = vpack.c.b16 %v2272, %v2268
        %v2817 = vpack.c.b16 %v2277, %v2273
        %v2818 = vpack.c.b16 %v2278, %v2274
        %v2819 = vpack.c.b16 %v2279, %v2275
        %v2820 = vpack.c.b16 %v2280, %v2276
        %v2821 = vpack.c.b16 %v2285, %v2281
        %v2822 = vpack.c.b16 %v2286, %v2282
        %v2823 = vpack.c.b16 %v2287, %v2283
        %v2824 = vpack.c.b16 %v2288, %v2284
        %v2825 = vpack.c.b16 %v2293, %v2289
        %v2826 = vpack.c.b16 %v2294, %v2290
        %v2827 = vpack.c.b16 %v2295, %v2291
        %v2828 = vpack.c.b16 %v2296, %v2292
        %v2829 = vpack.c.b16 %v2301, %v2297
        %v2830 = vpack.c.b16 %v2302, %v2298
        %v2831 = vpack.c.b16 %v2303, %v2299
        %v2832 = vpack.c.b16 %v2304, %v2300
        %v2833 = vpack.c.b16 %v2309, %v2305
        %v2834 = vpack.c.b16 %v2310, %v2306
        %v2835 = vpack.c.b16 %v2311, %v2307
        %v2836 = vpack.c.b16 %v2312, %v2308
        %v2837 = vpack.c.b16 %v2317, %v2313
        %v2838 = vpack.c.b16 %v2318, %v2314
        %v2839 = vpack.c.b16 %v2319, %v2315
        %v2840 = vpack.c.b16 %v2320, %v2316
        %v2841 = vpack.c.b16 %v2325, %v2321
        %v2842 = vpack.c.b16 %v2326, %v2322
        %v2843 = vpack.c.b16 %v2327, %v2323
        %v2844 = vpack.c.b16 %v2328, %v2324
        %v2845 = vpack.c.b16 %v2333, %v2329
        %v2846 = vpack.c.b16 %v2334, %v2330
        %v2847 = vpack.c.b16 %v2335, %v2331
        %v2848 = vpack.c.b16 %v2336, %v2332
        %3361 = vmatpush.bf16.msra.mxu0 %v2365
        %3362 = vmatpush.bf16.msra.mxu0 %v2361
        %3363 = vmatpush.bf16.msra.mxu0 %v2357
        %3364 = vmatpush.bf16.msra.mxu0 %v2353
        %3365 = vmatpush.bf16.msra.mxu0 %v2349
        %3366 = vmatpush.bf16.msra.mxu0 %v2345
        %3367 = vmatpush.bf16.msra.mxu0 %v2341
        %3368 = vmatpush.bf16.msra.mxu0 %v2337
        %3369 = vmatmul.bf16.gmra.mxu0 %v263
        %v3370 = vpop.f32.mrf.mxu0
        %v3371 = vadd.f32 %v793, %v3370
        %v3372 = vpop.f32.mrf.mxu0
        %3373 = vdwg.mxu0
        %3374 = vmatpush.bf16.msra.mxu0 %v2397
        %3375 = vmatpush.bf16.msra.mxu0 %v2393
        %3376 = vmatpush.bf16.msra.mxu0 %v2389
        %3377 = vmatpush.bf16.msra.mxu0 %v2385
        %3378 = vmatpush.bf16.msra.mxu0 %v2381
        %3379 = vmatpush.bf16.msra.mxu0 %v2377
        %3380 = vmatpush.bf16.msra.mxu0 %v2373
        %3381 = vmatpush.bf16.msra.mxu0 %v2369
        %3382 = vmatmul.bf16.gmra.mxu0 %v264
        %v3383 = vpop.f32.mrf.mxu0
        %v3384 = vadd.f32 %v3371, %v3383
        %v3385 = vpop.f32.mrf.mxu0
        %3386 = vdwg.mxu0
        %3387 = vmatpush.bf16.msra.mxu0 %v2429
        %3388 = vmatpush.bf16.msra.mxu0 %v2425
        %3389 = vmatpush.bf16.msra.mxu0 %v2421
        %3390 = vmatpush.bf16.msra.mxu0 %v2417
        %3391 = vmatpush.bf16.msra.mxu0 %v2413
        %3392 = vmatpush.bf16.msra.mxu0 %v2409
        %3393 = vmatpush.bf16.msra.mxu0 %v2405
        %3394 = vmatpush.bf16.msra.mxu0 %v2401
        %3395 = vmatmul.bf16.gmra.mxu0 %v265
        %v3396 = vpop.f32.mrf.mxu0
        %v3397 = vadd.f32 %v3384, %v3396
        %v3398 = vpop.f32.mrf.mxu0
        %3399 = vdwg.mxu0
        %3400 = vmatpush.bf16.msra.mxu0 %v2461
        %3401 = vmatpush.bf16.msra.mxu0 %v2457
        %3402 = vmatpush.bf16.msra.mxu0 %v2453
        %3403 = vmatpush.bf16.msra.mxu0 %v2449
        %3404 = vmatpush.bf16.msra.mxu0 %v2445
        %3405 = vmatpush.bf16.msra.mxu0 %v2441
        %3406 = vmatpush.bf16.msra.mxu0 %v2437
        %3407 = vmatpush.bf16.msra.mxu0 %v2433
        %3408 = vmatmul.bf16.gmra.mxu0 %v266
        %v3409 = vpop.f32.mrf.mxu0
        %v3410 = vadd.f32 %v3397, %v3409
        %v3411 = vpop.f32.mrf.mxu0
        %3412 = vdwg.mxu0
        %3413 = vmatpush.bf16.msra.mxu0 %v2493
        %3414 = vmatpush.bf16.msra.mxu0 %v2489
        %3415 = vmatpush.bf16.msra.mxu0 %v2485
        %3416 = vmatpush.bf16.msra.mxu0 %v2481
        %3417 = vmatpush.bf16.msra.mxu0 %v2477
        %3418 = vmatpush.bf16.msra.mxu0 %v2473
        %3419 = vmatpush.bf16.msra.mxu0 %v2469
        %3420 = vmatpush.bf16.msra.mxu0 %v2465
        %3421 = vmatmul.bf16.gmra.mxu0 %v267
        %v3422 = vpop.f32.mrf.mxu0
        %v3423 = vadd.f32 %v3410, %v3422
        %v3424 = vpop.f32.mrf.mxu0
        %3425 = vdwg.mxu0
        %3426 = vmatpush.bf16.msra.mxu0 %v2525
        %3427 = vmatpush.bf16.msra.mxu0 %v2521
        %3428 = vmatpush.bf16.msra.mxu0 %v2517
        %3429 = vmatpush.bf16.msra.mxu0 %v2513
        %3430 = vmatpush.bf16.msra.mxu0 %v2509
        %3431 = vmatpush.bf16.msra.mxu0 %v2505
        %3432 = vmatpush.bf16.msra.mxu0 %v2501
        %3433 = vmatpush.bf16.msra.mxu0 %v2497
        %3434 = vmatmul.bf16.gmra.mxu0 %v268
        %v3435 = vpop.f32.mrf.mxu0
        %v3436 = vadd.f32 %v3423, %v3435
        %v3437 = vpop.f32.mrf.mxu0
        %3438 = vdwg.mxu0
        %3439 = vmatpush.bf16.msra.mxu0 %v2557
        %3440 = vmatpush.bf16.msra.mxu0 %v2553
        %3441 = vmatpush.bf16.msra.mxu0 %v2549
        %3442 = vmatpush.bf16.msra.mxu0 %v2545
        %3443 = vmatpush.bf16.msra.mxu0 %v2541
        %3444 = vmatpush.bf16.msra.mxu0 %v2537
        %3445 = vmatpush.bf16.msra.mxu0 %v2533
        %3446 = vmatpush.bf16.msra.mxu0 %v2529
        %3447 = vmatmul.bf16.gmra.mxu0 %v269
        %v3448 = vpop.f32.mrf.mxu0
        %v3449 = vadd.f32 %v3436, %v3448
        %v3450 = vpop.f32.mrf.mxu0
        %3451 = vdwg.mxu0
        %3452 = vmatpush.bf16.msra.mxu0 %v2589
        %3453 = vmatpush.bf16.msra.mxu0 %v2585
        %3454 = vmatpush.bf16.msra.mxu0 %v2581
        %3455 = vmatpush.bf16.msra.mxu0 %v2577
        %3456 = vmatpush.bf16.msra.mxu0 %v2573
        %3457 = vmatpush.bf16.msra.mxu0 %v2569
        %3458 = vmatpush.bf16.msra.mxu0 %v2565
        %3459 = vmatpush.bf16.msra.mxu0 %v2561
        %3460 = vmatmul.bf16.gmra.mxu0 %v270
        %v3461 = vpop.f32.mrf.mxu0
        %v3462 = vadd.f32 %v3449, %v3461
        %v3463 = vpop.f32.mrf.mxu0
        %3464 = vdwg.mxu0
        %3465 = vmatpush.bf16.msra.mxu0 %v2621
        %3466 = vmatpush.bf16.msra.mxu0 %v2617
        %3467 = vmatpush.bf16.msra.mxu0 %v2613
        %3468 = vmatpush.bf16.msra.mxu0 %v2609
        %3469 = vmatpush.bf16.msra.mxu0 %v2605
        %3470 = vmatpush.bf16.msra.mxu0 %v2601
        %3471 = vmatpush.bf16.msra.mxu0 %v2597
        %3472 = vmatpush.bf16.msra.mxu0 %v2593
        %3473 = vmatmul.bf16.gmra.mxu0 %v271
        %v3474 = vpop.f32.mrf.mxu0
        %v3475 = vadd.f32 %v3462, %v3474
        %v3476 = vpop.f32.mrf.mxu0
        %3477 = vdwg.mxu0
        %3478 = vmatpush.bf16.msra.mxu0 %v2653
        %3479 = vmatpush.bf16.msra.mxu0 %v2649
        %3480 = vmatpush.bf16.msra.mxu0 %v2645
        %3481 = vmatpush.bf16.msra.mxu0 %v2641
        %3482 = vmatpush.bf16.msra.mxu0 %v2637
        %3483 = vmatpush.bf16.msra.mxu0 %v2633
        %3484 = vmatpush.bf16.msra.mxu0 %v2629
        %3485 = vmatpush.bf16.msra.mxu0 %v2625
        %3486 = vmatmul.bf16.gmra.mxu0 %v272
        %v3487 = vpop.f32.mrf.mxu0
        %v3488 = vadd.f32 %v3475, %v3487
        %v3489 = vpop.f32.mrf.mxu0
        %3490 = vdwg.mxu0
        %3491 = vmatpush.bf16.msra.mxu0 %v2685
        %3492 = vmatpush.bf16.msra.mxu0 %v2681
        %3493 = vmatpush.bf16.msra.mxu0 %v2677
        %3494 = vmatpush.bf16.msra.mxu0 %v2673
        %3495 = vmatpush.bf16.msra.mxu0 %v2669
        %3496 = vmatpush.bf16.msra.mxu0 %v2665
        %3497 = vmatpush.bf16.msra.mxu0 %v2661
        %3498 = vmatpush.bf16.msra.mxu0 %v2657
        %3499 = vmatmul.bf16.gmra.mxu0 %v273
        %v3500 = vpop.f32.mrf.mxu0
        %v3501 = vadd.f32 %v3488, %v3500
        %v3502 = vpop.f32.mrf.mxu0
        %3503 = vdwg.mxu0
        %3504 = vmatpush.bf16.msra.mxu0 %v2717
        %3505 = vmatpush.bf16.msra.mxu0 %v2713
        %3506 = vmatpush.bf16.msra.mxu0 %v2709
        %3507 = vmatpush.bf16.msra.mxu0 %v2705
        %3508 = vmatpush.bf16.msra.mxu0 %v2701
        %3509 = vmatpush.bf16.msra.mxu0 %v2697
        %3510 = vmatpush.bf16.msra.mxu0 %v2693
        %3511 = vmatpush.bf16.msra.mxu0 %v2689
        %3512 = vmatmul.bf16.gmra.mxu0 %v274
        %v3513 = vpop.f32.mrf.mxu0
        %v3514 = vadd.f32 %v3501, %v3513
        %v3515 = vpop.f32.mrf.mxu0
        %3516 = vdwg.mxu0
        %3517 = vmatpush.bf16.msra.mxu0 %v2749
        %3518 = vmatpush.bf16.msra.mxu0 %v2745
        %3519 = vmatpush.bf16.msra.mxu0 %v2741
        %3520 = vmatpush.bf16.msra.mxu0 %v2737
        %3521 = vmatpush.bf16.msra.mxu0 %v2733
        %3522 = vmatpush.bf16.msra.mxu0 %v2729
        %3523 = vmatpush.bf16.msra.mxu0 %v2725
        %3524 = vmatpush.bf16.msra.mxu0 %v2721
        %3525 = vmatmul.bf16.gmra.mxu0 %v275
        %v3526 = vpop.f32.mrf.mxu0
        %v3527 = vadd.f32 %v3514, %v3526
        %v3528 = vpop.f32.mrf.mxu0
        %3529 = vdwg.mxu0
        %3530 = vmatpush.bf16.msra.mxu0 %v2781
        %3531 = vmatpush.bf16.msra.mxu0 %v2777
        %3532 = vmatpush.bf16.msra.mxu0 %v2773
        %3533 = vmatpush.bf16.msra.mxu0 %v2769
        %3534 = vmatpush.bf16.msra.mxu0 %v2765
        %3535 = vmatpush.bf16.msra.mxu0 %v2761
        %3536 = vmatpush.bf16.msra.mxu0 %v2757
        %3537 = vmatpush.bf16.msra.mxu0 %v2753
        %3538 = vmatmul.bf16.gmra.mxu0 %v276
        %v3539 = vpop.f32.mrf.mxu0
        %v3540 = vadd.f32 %v3527, %v3539
        %v3541 = vpop.f32.mrf.mxu0
        %3542 = vdwg.mxu0
        %3543 = vmatpush.bf16.msra.mxu0 %v2813
        %3544 = vmatpush.bf16.msra.mxu0 %v2809
        %3545 = vmatpush.bf16.msra.mxu0 %v2805
        %3546 = vmatpush.bf16.msra.mxu0 %v2801
        %3547 = vmatpush.bf16.msra.mxu0 %v2797
        %3548 = vmatpush.bf16.msra.mxu0 %v2793
        %3549 = vmatpush.bf16.msra.mxu0 %v2789
        %3550 = vmatpush.bf16.msra.mxu0 %v2785
        %3551 = vmatmul.bf16.gmra.mxu0 %v277
        %v3552 = vpop.f32.mrf.mxu0
        %v3553 = vadd.f32 %v3540, %v3552
        %v3554 = vpop.f32.mrf.mxu0
        %3555 = vdwg.mxu0
        %3556 = vmatpush.bf16.msra.mxu0 %v2845
        %3557 = vmatpush.bf16.msra.mxu0 %v2841
        %3558 = vmatpush.bf16.msra.mxu0 %v2837
        %3559 = vmatpush.bf16.msra.mxu0 %v2833
        %3560 = vmatpush.bf16.msra.mxu0 %v2829
        %3561 = vmatpush.bf16.msra.mxu0 %v2825
        %3562 = vmatpush.bf16.msra.mxu0 %v2821
        %3563 = vmatpush.bf16.msra.mxu0 %v2817
        %3564 = vmatmul.bf16.gmra.mxu0 %v278
        %v3565 = vpop.f32.mrf.mxu0
        %v3566 = vadd.f32 %v3553, %v3565
        %v3567 = vpop.f32.mrf.mxu0
        %3568 = vdwg.mxu0
        %3569 = vmatpush.bf16.msra.mxu0 %v2366
        %3570 = vmatpush.bf16.msra.mxu0 %v2362
        %3571 = vmatpush.bf16.msra.mxu0 %v2358
        %3572 = vmatpush.bf16.msra.mxu0 %v2354
        %3573 = vmatpush.bf16.msra.mxu0 %v2350
        %3574 = vmatpush.bf16.msra.mxu0 %v2346
        %3575 = vmatpush.bf16.msra.mxu0 %v2342
        %3576 = vmatpush.bf16.msra.mxu0 %v2338
        %3577 = vmatmul.bf16.gmra.mxu0 %v263
        %v3578 = vpop.f32.mrf.mxu0
        %v3579 = vadd.f32 %v794, %v3578
        %v3580 = vpop.f32.mrf.mxu0
        %3581 = vdwg.mxu0
        %3582 = vmatpush.bf16.msra.mxu0 %v2398
        %3583 = vmatpush.bf16.msra.mxu0 %v2394
        %3584 = vmatpush.bf16.msra.mxu0 %v2390
        %3585 = vmatpush.bf16.msra.mxu0 %v2386
        %3586 = vmatpush.bf16.msra.mxu0 %v2382
        %3587 = vmatpush.bf16.msra.mxu0 %v2378
        %3588 = vmatpush.bf16.msra.mxu0 %v2374
        %3589 = vmatpush.bf16.msra.mxu0 %v2370
        %3590 = vmatmul.bf16.gmra.mxu0 %v264
        %v3591 = vpop.f32.mrf.mxu0
        %v3592 = vadd.f32 %v3579, %v3591
        %v3593 = vpop.f32.mrf.mxu0
        %3594 = vdwg.mxu0
        %3595 = vmatpush.bf16.msra.mxu0 %v2430
        %3596 = vmatpush.bf16.msra.mxu0 %v2426
        %3597 = vmatpush.bf16.msra.mxu0 %v2422
        %3598 = vmatpush.bf16.msra.mxu0 %v2418
        %3599 = vmatpush.bf16.msra.mxu0 %v2414
        %3600 = vmatpush.bf16.msra.mxu0 %v2410
        %3601 = vmatpush.bf16.msra.mxu0 %v2406
        %3602 = vmatpush.bf16.msra.mxu0 %v2402
        %3603 = vmatmul.bf16.gmra.mxu0 %v265
        %v3604 = vpop.f32.mrf.mxu0
        %v3605 = vadd.f32 %v3592, %v3604
        %v3606 = vpop.f32.mrf.mxu0
        %3607 = vdwg.mxu0
        %3608 = vmatpush.bf16.msra.mxu0 %v2462
        %3609 = vmatpush.bf16.msra.mxu0 %v2458
        %3610 = vmatpush.bf16.msra.mxu0 %v2454
        %3611 = vmatpush.bf16.msra.mxu0 %v2450
        %3612 = vmatpush.bf16.msra.mxu0 %v2446
        %3613 = vmatpush.bf16.msra.mxu0 %v2442
        %3614 = vmatpush.bf16.msra.mxu0 %v2438
        %3615 = vmatpush.bf16.msra.mxu0 %v2434
        %3616 = vmatmul.bf16.gmra.mxu0 %v266
        %v3617 = vpop.f32.mrf.mxu0
        %v3618 = vadd.f32 %v3605, %v3617
        %v3619 = vpop.f32.mrf.mxu0
        %3620 = vdwg.mxu0
        %3621 = vmatpush.bf16.msra.mxu0 %v2494
        %3622 = vmatpush.bf16.msra.mxu0 %v2490
        %3623 = vmatpush.bf16.msra.mxu0 %v2486
        %3624 = vmatpush.bf16.msra.mxu0 %v2482
        %3625 = vmatpush.bf16.msra.mxu0 %v2478
        %3626 = vmatpush.bf16.msra.mxu0 %v2474
        %3627 = vmatpush.bf16.msra.mxu0 %v2470
        %3628 = vmatpush.bf16.msra.mxu0 %v2466
        %3629 = vmatmul.bf16.gmra.mxu0 %v267
        %v3630 = vpop.f32.mrf.mxu0
        %v3631 = vadd.f32 %v3618, %v3630
        %v3632 = vpop.f32.mrf.mxu0
        %3633 = vdwg.mxu0
        %3634 = vmatpush.bf16.msra.mxu0 %v2526
        %3635 = vmatpush.bf16.msra.mxu0 %v2522
        %3636 = vmatpush.bf16.msra.mxu0 %v2518
        %3637 = vmatpush.bf16.msra.mxu0 %v2514
        %3638 = vmatpush.bf16.msra.mxu0 %v2510
        %3639 = vmatpush.bf16.msra.mxu0 %v2506
        %3640 = vmatpush.bf16.msra.mxu0 %v2502
        %3641 = vmatpush.bf16.msra.mxu0 %v2498
        %3642 = vmatmul.bf16.gmra.mxu0 %v268
        %v3643 = vpop.f32.mrf.mxu0
        %v3644 = vadd.f32 %v3631, %v3643
        %v3645 = vpop.f32.mrf.mxu0
        %3646 = vdwg.mxu0
        %3647 = vmatpush.bf16.msra.mxu0 %v2558
        %3648 = vmatpush.bf16.msra.mxu0 %v2554
        %3649 = vmatpush.bf16.msra.mxu0 %v2550
        %3650 = vmatpush.bf16.msra.mxu0 %v2546
        %3651 = vmatpush.bf16.msra.mxu0 %v2542
        %3652 = vmatpush.bf16.msra.mxu0 %v2538
        %3653 = vmatpush.bf16.msra.mxu0 %v2534
        %3654 = vmatpush.bf16.msra.mxu0 %v2530
        %3655 = vmatmul.bf16.gmra.mxu0 %v269
        %v3656 = vpop.f32.mrf.mxu0
        %v3657 = vadd.f32 %v3644, %v3656
        %v3658 = vpop.f32.mrf.mxu0
        %3659 = vdwg.mxu0
        %3660 = vmatpush.bf16.msra.mxu0 %v2590
        %3661 = vmatpush.bf16.msra.mxu0 %v2586
        %3662 = vmatpush.bf16.msra.mxu0 %v2582
        %3663 = vmatpush.bf16.msra.mxu0 %v2578
        %3664 = vmatpush.bf16.msra.mxu0 %v2574
        %3665 = vmatpush.bf16.msra.mxu0 %v2570
        %3666 = vmatpush.bf16.msra.mxu0 %v2566
        %3667 = vmatpush.bf16.msra.mxu0 %v2562
        %3668 = vmatmul.bf16.gmra.mxu0 %v270
        %v3669 = vpop.f32.mrf.mxu0
        %v3670 = vadd.f32 %v3657, %v3669
        %v3671 = vpop.f32.mrf.mxu0
        %3672 = vdwg.mxu0
        %3673 = vmatpush.bf16.msra.mxu0 %v2622
        %3674 = vmatpush.bf16.msra.mxu0 %v2618
        %3675 = vmatpush.bf16.msra.mxu0 %v2614
        %3676 = vmatpush.bf16.msra.mxu0 %v2610
        %3677 = vmatpush.bf16.msra.mxu0 %v2606
        %3678 = vmatpush.bf16.msra.mxu0 %v2602
        %3679 = vmatpush.bf16.msra.mxu0 %v2598
        %3680 = vmatpush.bf16.msra.mxu0 %v2594
        %3681 = vmatmul.bf16.gmra.mxu0 %v271
        %v3682 = vpop.f32.mrf.mxu0
        %v3683 = vadd.f32 %v3670, %v3682
        %v3684 = vpop.f32.mrf.mxu0
        %3685 = vdwg.mxu0
        %3686 = vmatpush.bf16.msra.mxu0 %v2654
        %3687 = vmatpush.bf16.msra.mxu0 %v2650
        %3688 = vmatpush.bf16.msra.mxu0 %v2646
        %3689 = vmatpush.bf16.msra.mxu0 %v2642
        %3690 = vmatpush.bf16.msra.mxu0 %v2638
        %3691 = vmatpush.bf16.msra.mxu0 %v2634
        %3692 = vmatpush.bf16.msra.mxu0 %v2630
        %3693 = vmatpush.bf16.msra.mxu0 %v2626
        %3694 = vmatmul.bf16.gmra.mxu0 %v272
        %v3695 = vpop.f32.mrf.mxu0
        %v3696 = vadd.f32 %v3683, %v3695
        %v3697 = vpop.f32.mrf.mxu0
        %3698 = vdwg.mxu0
        %3699 = vmatpush.bf16.msra.mxu0 %v2686
        %3700 = vmatpush.bf16.msra.mxu0 %v2682
        %3701 = vmatpush.bf16.msra.mxu0 %v2678
        %3702 = vmatpush.bf16.msra.mxu0 %v2674
        %3703 = vmatpush.bf16.msra.mxu0 %v2670
        %3704 = vmatpush.bf16.msra.mxu0 %v2666
        %3705 = vmatpush.bf16.msra.mxu0 %v2662
        %3706 = vmatpush.bf16.msra.mxu0 %v2658
        %3707 = vmatmul.bf16.gmra.mxu0 %v273
        %v3708 = vpop.f32.mrf.mxu0
        %v3709 = vadd.f32 %v3696, %v3708
        %v3710 = vpop.f32.mrf.mxu0
        %3711 = vdwg.mxu0
        %3712 = vmatpush.bf16.msra.mxu0 %v2718
        %3713 = vmatpush.bf16.msra.mxu0 %v2714
        %3714 = vmatpush.bf16.msra.mxu0 %v2710
        %3715 = vmatpush.bf16.msra.mxu0 %v2706
        %3716 = vmatpush.bf16.msra.mxu0 %v2702
        %3717 = vmatpush.bf16.msra.mxu0 %v2698
        %3718 = vmatpush.bf16.msra.mxu0 %v2694
        %3719 = vmatpush.bf16.msra.mxu0 %v2690
        %3720 = vmatmul.bf16.gmra.mxu0 %v274
        %v3721 = vpop.f32.mrf.mxu0
        %v3722 = vadd.f32 %v3709, %v3721
        %v3723 = vpop.f32.mrf.mxu0
        %3724 = vdwg.mxu0
        %3725 = vmatpush.bf16.msra.mxu0 %v2750
        %3726 = vmatpush.bf16.msra.mxu0 %v2746
        %3727 = vmatpush.bf16.msra.mxu0 %v2742
        %3728 = vmatpush.bf16.msra.mxu0 %v2738
        %3729 = vmatpush.bf16.msra.mxu0 %v2734
        %3730 = vmatpush.bf16.msra.mxu0 %v2730
        %3731 = vmatpush.bf16.msra.mxu0 %v2726
        %3732 = vmatpush.bf16.msra.mxu0 %v2722
        %3733 = vmatmul.bf16.gmra.mxu0 %v275
        %v3734 = vpop.f32.mrf.mxu0
        %v3735 = vadd.f32 %v3722, %v3734
        %v3736 = vpop.f32.mrf.mxu0
        %3737 = vdwg.mxu0
        %3738 = vmatpush.bf16.msra.mxu0 %v2782
        %3739 = vmatpush.bf16.msra.mxu0 %v2778
        %3740 = vmatpush.bf16.msra.mxu0 %v2774
        %3741 = vmatpush.bf16.msra.mxu0 %v2770
        %3742 = vmatpush.bf16.msra.mxu0 %v2766
        %3743 = vmatpush.bf16.msra.mxu0 %v2762
        %3744 = vmatpush.bf16.msra.mxu0 %v2758
        %3745 = vmatpush.bf16.msra.mxu0 %v2754
        %3746 = vmatmul.bf16.gmra.mxu0 %v276
        %v3747 = vpop.f32.mrf.mxu0
        %v3748 = vadd.f32 %v3735, %v3747
        %v3749 = vpop.f32.mrf.mxu0
        %3750 = vdwg.mxu0
        %3751 = vmatpush.bf16.msra.mxu0 %v2814
        %3752 = vmatpush.bf16.msra.mxu0 %v2810
        %3753 = vmatpush.bf16.msra.mxu0 %v2806
        %3754 = vmatpush.bf16.msra.mxu0 %v2802
        %3755 = vmatpush.bf16.msra.mxu0 %v2798
        %3756 = vmatpush.bf16.msra.mxu0 %v2794
        %3757 = vmatpush.bf16.msra.mxu0 %v2790
        %3758 = vmatpush.bf16.msra.mxu0 %v2786
        %3759 = vmatmul.bf16.gmra.mxu0 %v277
        %v3760 = vpop.f32.mrf.mxu0
        %v3761 = vadd.f32 %v3748, %v3760
        %v3762 = vpop.f32.mrf.mxu0
        %3763 = vdwg.mxu0
        %3764 = vmatpush.bf16.msra.mxu0 %v2846
        %3765 = vmatpush.bf16.msra.mxu0 %v2842
        %3766 = vmatpush.bf16.msra.mxu0 %v2838
        %3767 = vmatpush.bf16.msra.mxu0 %v2834
        %3768 = vmatpush.bf16.msra.mxu0 %v2830
        %3769 = vmatpush.bf16.msra.mxu0 %v2826
        %3770 = vmatpush.bf16.msra.mxu0 %v2822
        %3771 = vmatpush.bf16.msra.mxu0 %v2818
        %3772 = vmatmul.bf16.gmra.mxu0 %v278
        %v3773 = vpop.f32.mrf.mxu0
        %v3774 = vadd.f32 %v3761, %v3773
        %v3775 = vpop.f32.mrf.mxu0
        %3776 = vdwg.mxu0
        %3777 = vmatpush.bf16.msra.mxu0 %v2367
        %3778 = vmatpush.bf16.msra.mxu0 %v2363
        %3779 = vmatpush.bf16.msra.mxu0 %v2359
        %3780 = vmatpush.bf16.msra.mxu0 %v2355
        %3781 = vmatpush.bf16.msra.mxu0 %v2351
        %3782 = vmatpush.bf16.msra.mxu0 %v2347
        %3783 = vmatpush.bf16.msra.mxu0 %v2343
        %3784 = vmatpush.bf16.msra.mxu0 %v2339
        %3785 = vmatmul.bf16.gmra.mxu0 %v263
        %v3786 = vpop.f32.mrf.mxu0
        %v3787 = vadd.f32 %v795, %v3786
        %v3788 = vpop.f32.mrf.mxu0
        %3789 = vdwg.mxu0
        %3790 = vmatpush.bf16.msra.mxu0 %v2399
        %3791 = vmatpush.bf16.msra.mxu0 %v2395
        %3792 = vmatpush.bf16.msra.mxu0 %v2391
        %3793 = vmatpush.bf16.msra.mxu0 %v2387
        %3794 = vmatpush.bf16.msra.mxu0 %v2383
        %3795 = vmatpush.bf16.msra.mxu0 %v2379
        %3796 = vmatpush.bf16.msra.mxu0 %v2375
        %3797 = vmatpush.bf16.msra.mxu0 %v2371
        %3798 = vmatmul.bf16.gmra.mxu0 %v264
        %v3799 = vpop.f32.mrf.mxu0
        %v3800 = vadd.f32 %v3787, %v3799
        %v3801 = vpop.f32.mrf.mxu0
        %3802 = vdwg.mxu0
        %3803 = vmatpush.bf16.msra.mxu0 %v2431
        %3804 = vmatpush.bf16.msra.mxu0 %v2427
        %3805 = vmatpush.bf16.msra.mxu0 %v2423
        %3806 = vmatpush.bf16.msra.mxu0 %v2419
        %3807 = vmatpush.bf16.msra.mxu0 %v2415
        %3808 = vmatpush.bf16.msra.mxu0 %v2411
        %3809 = vmatpush.bf16.msra.mxu0 %v2407
        %3810 = vmatpush.bf16.msra.mxu0 %v2403
        %3811 = vmatmul.bf16.gmra.mxu0 %v265
        %v3812 = vpop.f32.mrf.mxu0
        %v3813 = vadd.f32 %v3800, %v3812
        %v3814 = vpop.f32.mrf.mxu0
        %3815 = vdwg.mxu0
        %3816 = vmatpush.bf16.msra.mxu0 %v2463
        %3817 = vmatpush.bf16.msra.mxu0 %v2459
        %3818 = vmatpush.bf16.msra.mxu0 %v2455
        %3819 = vmatpush.bf16.msra.mxu0 %v2451
        %3820 = vmatpush.bf16.msra.mxu0 %v2447
        %3821 = vmatpush.bf16.msra.mxu0 %v2443
        %3822 = vmatpush.bf16.msra.mxu0 %v2439
        %3823 = vmatpush.bf16.msra.mxu0 %v2435
        %3824 = vmatmul.bf16.gmra.mxu0 %v266
        %v3825 = vpop.f32.mrf.mxu0
        %v3826 = vadd.f32 %v3813, %v3825
        %v3827 = vpop.f32.mrf.mxu0
        %3828 = vdwg.mxu0
        %3829 = vmatpush.bf16.msra.mxu0 %v2495
        %3830 = vmatpush.bf16.msra.mxu0 %v2491
        %3831 = vmatpush.bf16.msra.mxu0 %v2487
        %3832 = vmatpush.bf16.msra.mxu0 %v2483
        %3833 = vmatpush.bf16.msra.mxu0 %v2479
        %3834 = vmatpush.bf16.msra.mxu0 %v2475
        %3835 = vmatpush.bf16.msra.mxu0 %v2471
        %3836 = vmatpush.bf16.msra.mxu0 %v2467
        %3837 = vmatmul.bf16.gmra.mxu0 %v267
        %v3838 = vpop.f32.mrf.mxu0
        %v3839 = vadd.f32 %v3826, %v3838
        %v3840 = vpop.f32.mrf.mxu0
        %3841 = vdwg.mxu0
        %3842 = vmatpush.bf16.msra.mxu0 %v2527
        %3843 = vmatpush.bf16.msra.mxu0 %v2523
        %3844 = vmatpush.bf16.msra.mxu0 %v2519
        %3845 = vmatpush.bf16.msra.mxu0 %v2515
        %3846 = vmatpush.bf16.msra.mxu0 %v2511
        %3847 = vmatpush.bf16.msra.mxu0 %v2507
        %3848 = vmatpush.bf16.msra.mxu0 %v2503
        %3849 = vmatpush.bf16.msra.mxu0 %v2499
        %3850 = vmatmul.bf16.gmra.mxu0 %v268
        %v3851 = vpop.f32.mrf.mxu0
        %v3852 = vadd.f32 %v3839, %v3851
        %v3853 = vpop.f32.mrf.mxu0
        %3854 = vdwg.mxu0
        %3855 = vmatpush.bf16.msra.mxu0 %v2559
        %3856 = vmatpush.bf16.msra.mxu0 %v2555
        %3857 = vmatpush.bf16.msra.mxu0 %v2551
        %3858 = vmatpush.bf16.msra.mxu0 %v2547
        %3859 = vmatpush.bf16.msra.mxu0 %v2543
        %3860 = vmatpush.bf16.msra.mxu0 %v2539
        %3861 = vmatpush.bf16.msra.mxu0 %v2535
        %3862 = vmatpush.bf16.msra.mxu0 %v2531
        %3863 = vmatmul.bf16.gmra.mxu0 %v269
        %v3864 = vpop.f32.mrf.mxu0
        %v3865 = vadd.f32 %v3852, %v3864
        %v3866 = vpop.f32.mrf.mxu0
        %3867 = vdwg.mxu0
        %3868 = vmatpush.bf16.msra.mxu0 %v2591
        %3869 = vmatpush.bf16.msra.mxu0 %v2587
        %3870 = vmatpush.bf16.msra.mxu0 %v2583
        %3871 = vmatpush.bf16.msra.mxu0 %v2579
        %3872 = vmatpush.bf16.msra.mxu0 %v2575
        %3873 = vmatpush.bf16.msra.mxu0 %v2571
        %3874 = vmatpush.bf16.msra.mxu0 %v2567
        %3875 = vmatpush.bf16.msra.mxu0 %v2563
        %3876 = vmatmul.bf16.gmra.mxu0 %v270
        %v3877 = vpop.f32.mrf.mxu0
        %v3878 = vadd.f32 %v3865, %v3877
        %v3879 = vpop.f32.mrf.mxu0
        %3880 = vdwg.mxu0
        %3881 = vmatpush.bf16.msra.mxu0 %v2623
        %3882 = vmatpush.bf16.msra.mxu0 %v2619
        %3883 = vmatpush.bf16.msra.mxu0 %v2615
        %3884 = vmatpush.bf16.msra.mxu0 %v2611
        %3885 = vmatpush.bf16.msra.mxu0 %v2607
        %3886 = vmatpush.bf16.msra.mxu0 %v2603
        %3887 = vmatpush.bf16.msra.mxu0 %v2599
        %3888 = vmatpush.bf16.msra.mxu0 %v2595
        %3889 = vmatmul.bf16.gmra.mxu0 %v271
        %v3890 = vpop.f32.mrf.mxu0
        %v3891 = vadd.f32 %v3878, %v3890
        %v3892 = vpop.f32.mrf.mxu0
        %3893 = vdwg.mxu0
        %3894 = vmatpush.bf16.msra.mxu0 %v2655
        %3895 = vmatpush.bf16.msra.mxu0 %v2651
        %3896 = vmatpush.bf16.msra.mxu0 %v2647
        %3897 = vmatpush.bf16.msra.mxu0 %v2643
        %3898 = vmatpush.bf16.msra.mxu0 %v2639
        %3899 = vmatpush.bf16.msra.mxu0 %v2635
        %3900 = vmatpush.bf16.msra.mxu0 %v2631
        %3901 = vmatpush.bf16.msra.mxu0 %v2627
        %3902 = vmatmul.bf16.gmra.mxu0 %v272
        %v3903 = vpop.f32.mrf.mxu0
        %v3904 = vadd.f32 %v3891, %v3903
        %v3905 = vpop.f32.mrf.mxu0
        %3906 = vdwg.mxu0
        %3907 = vmatpush.bf16.msra.mxu0 %v2687
        %3908 = vmatpush.bf16.msra.mxu0 %v2683
        %3909 = vmatpush.bf16.msra.mxu0 %v2679
        %3910 = vmatpush.bf16.msra.mxu0 %v2675
        %3911 = vmatpush.bf16.msra.mxu0 %v2671
        %3912 = vmatpush.bf16.msra.mxu0 %v2667
        %3913 = vmatpush.bf16.msra.mxu0 %v2663
        %3914 = vmatpush.bf16.msra.mxu0 %v2659
        %3915 = vmatmul.bf16.gmra.mxu0 %v273
        %v3916 = vpop.f32.mrf.mxu0
        %v3917 = vadd.f32 %v3904, %v3916
        %v3918 = vpop.f32.mrf.mxu0
        %3919 = vdwg.mxu0
        %3920 = vmatpush.bf16.msra.mxu0 %v2719
        %3921 = vmatpush.bf16.msra.mxu0 %v2715
        %3922 = vmatpush.bf16.msra.mxu0 %v2711
        %3923 = vmatpush.bf16.msra.mxu0 %v2707
        %3924 = vmatpush.bf16.msra.mxu0 %v2703
        %3925 = vmatpush.bf16.msra.mxu0 %v2699
        %3926 = vmatpush.bf16.msra.mxu0 %v2695
        %3927 = vmatpush.bf16.msra.mxu0 %v2691
        %3928 = vmatmul.bf16.gmra.mxu0 %v274
        %v3929 = vpop.f32.mrf.mxu0
        %v3930 = vadd.f32 %v3917, %v3929
        %v3931 = vpop.f32.mrf.mxu0
        %3932 = vdwg.mxu0
        %3933 = vmatpush.bf16.msra.mxu0 %v2751
        %3934 = vmatpush.bf16.msra.mxu0 %v2747
        %3935 = vmatpush.bf16.msra.mxu0 %v2743
        %3936 = vmatpush.bf16.msra.mxu0 %v2739
        %3937 = vmatpush.bf16.msra.mxu0 %v2735
        %3938 = vmatpush.bf16.msra.mxu0 %v2731
        %3939 = vmatpush.bf16.msra.mxu0 %v2727
        %3940 = vmatpush.bf16.msra.mxu0 %v2723
        %3941 = vmatmul.bf16.gmra.mxu0 %v275
        %v3942 = vpop.f32.mrf.mxu0
        %v3943 = vadd.f32 %v3930, %v3942
        %v3944 = vpop.f32.mrf.mxu0
        %3945 = vdwg.mxu0
        %3946 = vmatpush.bf16.msra.mxu0 %v2783
        %3947 = vmatpush.bf16.msra.mxu0 %v2779
        %3948 = vmatpush.bf16.msra.mxu0 %v2775
        %3949 = vmatpush.bf16.msra.mxu0 %v2771
        %3950 = vmatpush.bf16.msra.mxu0 %v2767
        %3951 = vmatpush.bf16.msra.mxu0 %v2763
        %3952 = vmatpush.bf16.msra.mxu0 %v2759
        %3953 = vmatpush.bf16.msra.mxu0 %v2755
        %3954 = vmatmul.bf16.gmra.mxu0 %v276
        %v3955 = vpop.f32.mrf.mxu0
        %v3956 = vadd.f32 %v3943, %v3955
        %v3957 = vpop.f32.mrf.mxu0
        %3958 = vdwg.mxu0
        %3959 = vmatpush.bf16.msra.mxu0 %v2815
        %3960 = vmatpush.bf16.msra.mxu0 %v2811
        %3961 = vmatpush.bf16.msra.mxu0 %v2807
        %3962 = vmatpush.bf16.msra.mxu0 %v2803
        %3963 = vmatpush.bf16.msra.mxu0 %v2799
        %3964 = vmatpush.bf16.msra.mxu0 %v2795
        %3965 = vmatpush.bf16.msra.mxu0 %v2791
        %3966 = vmatpush.bf16.msra.mxu0 %v2787
        %3967 = vmatmul.bf16.gmra.mxu0 %v277
        %v3968 = vpop.f32.mrf.mxu0
        %v3969 = vadd.f32 %v3956, %v3968
        %v3970 = vpop.f32.mrf.mxu0
        %3971 = vdwg.mxu0
        %3972 = vmatpush.bf16.msra.mxu0 %v2847
        %3973 = vmatpush.bf16.msra.mxu0 %v2843
        %3974 = vmatpush.bf16.msra.mxu0 %v2839
        %3975 = vmatpush.bf16.msra.mxu0 %v2835
        %3976 = vmatpush.bf16.msra.mxu0 %v2831
        %3977 = vmatpush.bf16.msra.mxu0 %v2827
        %3978 = vmatpush.bf16.msra.mxu0 %v2823
        %3979 = vmatpush.bf16.msra.mxu0 %v2819
        %3980 = vmatmul.bf16.gmra.mxu0 %v278
        %v3981 = vpop.f32.mrf.mxu0
        %v3982 = vadd.f32 %v3969, %v3981
        %v3983 = vpop.f32.mrf.mxu0
        %3984 = vdwg.mxu0
        %3985 = vmatpush.bf16.msra.mxu0 %v2368
        %3986 = vmatpush.bf16.msra.mxu0 %v2364
        %3987 = vmatpush.bf16.msra.mxu0 %v2360
        %3988 = vmatpush.bf16.msra.mxu0 %v2356
        %3989 = vmatpush.bf16.msra.mxu0 %v2352
        %3990 = vmatpush.bf16.msra.mxu0 %v2348
        %3991 = vmatpush.bf16.msra.mxu0 %v2344
        %3992 = vmatpush.bf16.msra.mxu0 %v2340
        %3993 = vmatmul.bf16.gmra.mxu0 %v263
        %v3994 = vpop.f32.mrf.mxu0
        %v3995 = vadd.f32 %v796, %v3994
        %v3996 = vpop.f32.mrf.mxu0
        %3997 = vdwg.mxu0
        %3998 = vmatpush.bf16.msra.mxu0 %v2400
        %3999 = vmatpush.bf16.msra.mxu0 %v2396
        %4000 = vmatpush.bf16.msra.mxu0 %v2392
        %4001 = vmatpush.bf16.msra.mxu0 %v2388
        %4002 = vmatpush.bf16.msra.mxu0 %v2384
        %4003 = vmatpush.bf16.msra.mxu0 %v2380
        %4004 = vmatpush.bf16.msra.mxu0 %v2376
        %4005 = vmatpush.bf16.msra.mxu0 %v2372
        %4006 = vmatmul.bf16.gmra.mxu0 %v264
        %v4007 = vpop.f32.mrf.mxu0
        %v4008 = vadd.f32 %v3995, %v4007
        %v4009 = vpop.f32.mrf.mxu0
        %4010 = vdwg.mxu0
        %4011 = vmatpush.bf16.msra.mxu0 %v2432
        %4012 = vmatpush.bf16.msra.mxu0 %v2428
        %4013 = vmatpush.bf16.msra.mxu0 %v2424
        %4014 = vmatpush.bf16.msra.mxu0 %v2420
        %4015 = vmatpush.bf16.msra.mxu0 %v2416
        %4016 = vmatpush.bf16.msra.mxu0 %v2412
        %4017 = vmatpush.bf16.msra.mxu0 %v2408
        %4018 = vmatpush.bf16.msra.mxu0 %v2404
        %4019 = vmatmul.bf16.gmra.mxu0 %v265
        %v4020 = vpop.f32.mrf.mxu0
        %v4021 = vadd.f32 %v4008, %v4020
        %v4022 = vpop.f32.mrf.mxu0
        %4023 = vdwg.mxu0
        %4024 = vmatpush.bf16.msra.mxu0 %v2464
        %4025 = vmatpush.bf16.msra.mxu0 %v2460
        %4026 = vmatpush.bf16.msra.mxu0 %v2456
        %4027 = vmatpush.bf16.msra.mxu0 %v2452
        %4028 = vmatpush.bf16.msra.mxu0 %v2448
        %4029 = vmatpush.bf16.msra.mxu0 %v2444
        %4030 = vmatpush.bf16.msra.mxu0 %v2440
        %4031 = vmatpush.bf16.msra.mxu0 %v2436
        %4032 = vmatmul.bf16.gmra.mxu0 %v266
        %v4033 = vpop.f32.mrf.mxu0
        %v4034 = vadd.f32 %v4021, %v4033
        %v4035 = vpop.f32.mrf.mxu0
        %4036 = vdwg.mxu0
        %4037 = vmatpush.bf16.msra.mxu0 %v2496
        %4038 = vmatpush.bf16.msra.mxu0 %v2492
        %4039 = vmatpush.bf16.msra.mxu0 %v2488
        %4040 = vmatpush.bf16.msra.mxu0 %v2484
        %4041 = vmatpush.bf16.msra.mxu0 %v2480
        %4042 = vmatpush.bf16.msra.mxu0 %v2476
        %4043 = vmatpush.bf16.msra.mxu0 %v2472
        %4044 = vmatpush.bf16.msra.mxu0 %v2468
        %4045 = vmatmul.bf16.gmra.mxu0 %v267
        %v4046 = vpop.f32.mrf.mxu0
        %v4047 = vadd.f32 %v4034, %v4046
        %v4048 = vpop.f32.mrf.mxu0
        %4049 = vdwg.mxu0
        %4050 = vmatpush.bf16.msra.mxu0 %v2528
        %4051 = vmatpush.bf16.msra.mxu0 %v2524
        %4052 = vmatpush.bf16.msra.mxu0 %v2520
        %4053 = vmatpush.bf16.msra.mxu0 %v2516
        %4054 = vmatpush.bf16.msra.mxu0 %v2512
        %4055 = vmatpush.bf16.msra.mxu0 %v2508
        %4056 = vmatpush.bf16.msra.mxu0 %v2504
        %4057 = vmatpush.bf16.msra.mxu0 %v2500
        %4058 = vmatmul.bf16.gmra.mxu0 %v268
        %v4059 = vpop.f32.mrf.mxu0
        %v4060 = vadd.f32 %v4047, %v4059
        %v4061 = vpop.f32.mrf.mxu0
        %4062 = vdwg.mxu0
        %4063 = vmatpush.bf16.msra.mxu0 %v2560
        %4064 = vmatpush.bf16.msra.mxu0 %v2556
        %4065 = vmatpush.bf16.msra.mxu0 %v2552
        %4066 = vmatpush.bf16.msra.mxu0 %v2548
        %4067 = vmatpush.bf16.msra.mxu0 %v2544
        %4068 = vmatpush.bf16.msra.mxu0 %v2540
        %4069 = vmatpush.bf16.msra.mxu0 %v2536
        %4070 = vmatpush.bf16.msra.mxu0 %v2532
        %4071 = vmatmul.bf16.gmra.mxu0 %v269
        %v4072 = vpop.f32.mrf.mxu0
        %v4073 = vadd.f32 %v4060, %v4072
        %v4074 = vpop.f32.mrf.mxu0
        %4075 = vdwg.mxu0
        %4076 = vmatpush.bf16.msra.mxu0 %v2592
        %4077 = vmatpush.bf16.msra.mxu0 %v2588
        %4078 = vmatpush.bf16.msra.mxu0 %v2584
        %4079 = vmatpush.bf16.msra.mxu0 %v2580
        %4080 = vmatpush.bf16.msra.mxu0 %v2576
        %4081 = vmatpush.bf16.msra.mxu0 %v2572
        %4082 = vmatpush.bf16.msra.mxu0 %v2568
        %4083 = vmatpush.bf16.msra.mxu0 %v2564
        %4084 = vmatmul.bf16.gmra.mxu0 %v270
        %v4085 = vpop.f32.mrf.mxu0
        %v4086 = vadd.f32 %v4073, %v4085
        %v4087 = vpop.f32.mrf.mxu0
        %4088 = vdwg.mxu0
        %4089 = vmatpush.bf16.msra.mxu0 %v2624
        %4090 = vmatpush.bf16.msra.mxu0 %v2620
        %4091 = vmatpush.bf16.msra.mxu0 %v2616
        %4092 = vmatpush.bf16.msra.mxu0 %v2612
        %4093 = vmatpush.bf16.msra.mxu0 %v2608
        %4094 = vmatpush.bf16.msra.mxu0 %v2604
        %4095 = vmatpush.bf16.msra.mxu0 %v2600
        %4096 = vmatpush.bf16.msra.mxu0 %v2596
        %4097 = vmatmul.bf16.gmra.mxu0 %v271
        %v4098 = vpop.f32.mrf.mxu0
        %v4099 = vadd.f32 %v4086, %v4098
        %v4100 = vpop.f32.mrf.mxu0
        %4101 = vdwg.mxu0
        %4102 = vmatpush.bf16.msra.mxu0 %v2656
        %4103 = vmatpush.bf16.msra.mxu0 %v2652
        %4104 = vmatpush.bf16.msra.mxu0 %v2648
        %4105 = vmatpush.bf16.msra.mxu0 %v2644
        %4106 = vmatpush.bf16.msra.mxu0 %v2640
        %4107 = vmatpush.bf16.msra.mxu0 %v2636
        %4108 = vmatpush.bf16.msra.mxu0 %v2632
        %4109 = vmatpush.bf16.msra.mxu0 %v2628
        %4110 = vmatmul.bf16.gmra.mxu0 %v272
        %v4111 = vpop.f32.mrf.mxu0
        %v4112 = vadd.f32 %v4099, %v4111
        %v4113 = vpop.f32.mrf.mxu0
        %4114 = vdwg.mxu0
        %4115 = vmatpush.bf16.msra.mxu0 %v2688
        %4116 = vmatpush.bf16.msra.mxu0 %v2684
        %4117 = vmatpush.bf16.msra.mxu0 %v2680
        %4118 = vmatpush.bf16.msra.mxu0 %v2676
        %4119 = vmatpush.bf16.msra.mxu0 %v2672
        %4120 = vmatpush.bf16.msra.mxu0 %v2668
        %4121 = vmatpush.bf16.msra.mxu0 %v2664
        %4122 = vmatpush.bf16.msra.mxu0 %v2660
        %4123 = vmatmul.bf16.gmra.mxu0 %v273
        %v4124 = vpop.f32.mrf.mxu0
        %v4125 = vadd.f32 %v4112, %v4124
        %v4126 = vpop.f32.mrf.mxu0
        %4127 = vdwg.mxu0
        %4128 = vmatpush.bf16.msra.mxu0 %v2720
        %4129 = vmatpush.bf16.msra.mxu0 %v2716
        %4130 = vmatpush.bf16.msra.mxu0 %v2712
        %4131 = vmatpush.bf16.msra.mxu0 %v2708
        %4132 = vmatpush.bf16.msra.mxu0 %v2704
        %4133 = vmatpush.bf16.msra.mxu0 %v2700
        %4134 = vmatpush.bf16.msra.mxu0 %v2696
        %4135 = vmatpush.bf16.msra.mxu0 %v2692
        %4136 = vmatmul.bf16.gmra.mxu0 %v274
        %v4137 = vpop.f32.mrf.mxu0
        %v4138 = vadd.f32 %v4125, %v4137
        %v4139 = vpop.f32.mrf.mxu0
        %4140 = vdwg.mxu0
        %4141 = vmatpush.bf16.msra.mxu0 %v2752
        %4142 = vmatpush.bf16.msra.mxu0 %v2748
        %4143 = vmatpush.bf16.msra.mxu0 %v2744
        %4144 = vmatpush.bf16.msra.mxu0 %v2740
        %4145 = vmatpush.bf16.msra.mxu0 %v2736
        %4146 = vmatpush.bf16.msra.mxu0 %v2732
        %4147 = vmatpush.bf16.msra.mxu0 %v2728
        %4148 = vmatpush.bf16.msra.mxu0 %v2724
        %4149 = vmatmul.bf16.gmra.mxu0 %v275
        %v4150 = vpop.f32.mrf.mxu0
        %v4151 = vadd.f32 %v4138, %v4150
        %v4152 = vpop.f32.mrf.mxu0
        %4153 = vdwg.mxu0
        %4154 = vmatpush.bf16.msra.mxu0 %v2784
        %4155 = vmatpush.bf16.msra.mxu0 %v2780
        %4156 = vmatpush.bf16.msra.mxu0 %v2776
        %4157 = vmatpush.bf16.msra.mxu0 %v2772
        %4158 = vmatpush.bf16.msra.mxu0 %v2768
        %4159 = vmatpush.bf16.msra.mxu0 %v2764
        %4160 = vmatpush.bf16.msra.mxu0 %v2760
        %4161 = vmatpush.bf16.msra.mxu0 %v2756
        %4162 = vmatmul.bf16.gmra.mxu0 %v276
        %v4163 = vpop.f32.mrf.mxu0
        %v4164 = vadd.f32 %v4151, %v4163
        %v4165 = vpop.f32.mrf.mxu0
        %4166 = vdwg.mxu0
        %4167 = vmatpush.bf16.msra.mxu0 %v2816
        %4168 = vmatpush.bf16.msra.mxu0 %v2812
        %4169 = vmatpush.bf16.msra.mxu0 %v2808
        %4170 = vmatpush.bf16.msra.mxu0 %v2804
        %4171 = vmatpush.bf16.msra.mxu0 %v2800
        %4172 = vmatpush.bf16.msra.mxu0 %v2796
        %4173 = vmatpush.bf16.msra.mxu0 %v2792
        %4174 = vmatpush.bf16.msra.mxu0 %v2788
        %4175 = vmatmul.bf16.gmra.mxu0 %v277
        %v4176 = vpop.f32.mrf.mxu0
        %v4177 = vadd.f32 %v4164, %v4176
        %v4178 = vpop.f32.mrf.mxu0
        %4179 = vdwg.mxu0
        %4180 = vmatpush.bf16.msra.mxu0 %v2848
        %4181 = vmatpush.bf16.msra.mxu0 %v2844
        %4182 = vmatpush.bf16.msra.mxu0 %v2840
        %4183 = vmatpush.bf16.msra.mxu0 %v2836
        %4184 = vmatpush.bf16.msra.mxu0 %v2832
        %4185 = vmatpush.bf16.msra.mxu0 %v2828
        %4186 = vmatpush.bf16.msra.mxu0 %v2824
        %4187 = vmatpush.bf16.msra.mxu0 %v2820
        %4188 = vmatmul.bf16.gmra.mxu0 %v278
        %v4189 = vpop.f32.mrf.mxu0
        %v4190 = vadd.f32 %v4177, %v4189
        %v4191 = vpop.f32.mrf.mxu0
        %4192 = vdwg.mxu0
        %4193 = vst [vmem:[%s245] sm:$0xff] %v3566
        %4194 = vst [vmem:[%s245 + $0x8] sm:$0xff] %v3774
        %4195 = vst [vmem:[%s245 + $0x10] sm:$0xff] %v3982
        %4196 = vst [vmem:[%s245 + $0x18] sm:$0xff] %v4190
        %s4197 = smul.u32 4, %s18
        %p4198 = scmp.lt.s32.totalorder %s4197, 15
        %s4199 = scalar_select %p4198, %s4197, 15
        %s4200 = smul.addr %s4199, 8
        %s4201 = scalar_lea.vmem %s3, %s4200
        // Predicated region
        $region45: #{discriminator_forward.2} parent=31 // pred_check
          %p4202 = pneg %p109
        $region46: #{discriminator_forward.2} parent=31 // pred_check_branch
          %4204 = sbr.rel (%p4202) target = $region48
        $region47: #{discriminator_forward.2} parent=31 // pred_region
          %s4205 = smul.u32 4, %s18
        $region48: #{discriminator_forward.2} parent=31 // pred_fallthru
          _
      $region32: #{discriminator_forward.2} parent=5 // pred_fallthru
        _
      %p4206 = scmp.le.s32.totalorder 2, %s13
      // Predicated region
      $region49: #{discriminator_forward.2} parent=5 // pred_check
        %p4207 = pneg %p4206
      $region50: #{discriminator_forward.2} parent=5 // pred_check_branch
        %4209 = sbr.rel (%p4207) target = $region52
      $region51: #{discriminator_forward.2} parent=5 // pred_region
        %s4210 = ssub.s32 %s13, 2
        // Predicated region
        $region53: #{discriminator_forward.2} parent=51 // pred_check
          %p4211 = pneg %p115
        $region54: #{discriminator_forward.2} parent=51 // pred_check_branch
          %4213 = sbr.rel (%p4211) target = $region56
        $region55: #{discriminator_forward.2} parent=51 // pred_region
          %s4214 = smul.u32 4, %s19
          %p4215 = scmp.lt.s32.totalorder %s4214, 15
          %s4216 = scalar_select %p4215, %s4214, 15
          %s4217 = smul.addr %s4216, 8
          %s4218 = scalar_lea.vmem %s3, %s4217
        $region56: #{discriminator_forward.2} parent=51 // pred_fallthru
          _
      $region52: #{discriminator_forward.2} parent=5 // pred_fallthru
        _
    $region6: #{discriminator_forward.2} parent=1 // loop_footer
      %s17 = sadd.s32 1, %s13
    $region7: #{discriminator_forward.2} parent=1 // loop_footer_branch
      %12 = sbr.rel target = $region3
    $region8: #{discriminator_forward.2} parent=1 // loop_exit
      _
    %4219 = vsyncpa [#allocation3], 1
    %s4220 = scalar_lea.sflag [#allocation3], 1
    %4221 = vsyncpa %s4220, 1
    %4222 = vsyncpa [#allocation5], 1
    %s4223 = scalar_lea.sflag [#allocation5], 1
    %4224 = vsyncpa %s4223, 1

// kernel: discriminator_forward.3
$region0: #{discriminator_forward.3}
  #allocation0 [shape = 'u32[]', space=smem, size = 0x4, offset = 0x4, fixed_abs, tag = 'smem constant byte address 0x4 - core index']
  #allocation1 [shape = 'u32[72,128]{1,0:T(1,128)}', space=vmem, size = 0x9000, scoped, tag = 'internal scratch']
  %s0 = inlined_call_operand.vmem [shape: f32[8,2048], index: 0, kind: input, shape index: {}]
  %s1 = inlined_call_operand.hbm [shape: bf16[2048,2048], index: 1, kind: input, shape index: {}]
  %s2 = inlined_call_operand.hbm [shape: f32[1,2048], index: 2, kind: input, shape index: {}]
  %s3 = inlined_call_operand.hbm [shape: f32[1,2048], index: 3, kind: input, shape index: {}]
  %s4 = inlined_call_operand.hbm [shape: f32[8,2048], index: 4, kind: output, shape index: {0}]
  %s5 = inlined_call_operand.vmem [shape: f32[8,512], index: 5, kind: output, shape index: {1}]
  %6 = xla_tuple %s4, %s5
  %s7 = sld [smem:[#allocation0]]
  $region69: #{discriminator_forward.3} parent=0
    _
  %s9 = ssub.s32 1, %s7
  %s10 = scalar_select 0, %s9, %s7
  $region1: #{discriminator_forward.3} parent=0
    #allocation2 [shape = 'u8[4194304]{0}', space=vmem, size = 0x400000, scoped, tag = 'input window, operand 1']
    #allocation3 [shape = 's32[2]{0}', space=sflag, size = 0x8, scoped, tag = 'scoped memory for discriminator_forward.3']
    #allocation4 [shape = 's32[2]{0}', space=sflag, size = 0x8, scoped, tag = 'scoped memory for discriminator_forward.3']
    #allocation5 [shape = 'u8[4096]{0}', space=vmem, size = 0x1000, scoped, tag = 'input window, operand 2']
    #allocation6 [shape = 's32[2]{0}', space=sflag, size = 0x8, scoped, tag = 'scoped memory for discriminator_forward.3']
    #allocation7 [shape = 'u8[4096]{0}', space=vmem, size = 0x1000, scoped, tag = 'input window, operand 3']
    #allocation8 [shape = 'u8[32768]{0}', space=vmem, size = 0x8000, scoped, tag = 'output window, operand 0']
    %11 = vsyncpa [#allocation3], 0
    %s12 = scalar_lea.sflag [#allocation3], 1
    %13 = vsyncpa %s12, 0
    %14 = vsyncpa [#allocation6], 0
    %s15 = scalar_lea.sflag [#allocation6], 1
    %16 = vsyncpa %s15, 0
    %17 = vsyncpa [#allocation4], 0
    %s18 = scalar_lea.sflag [#allocation4], 1
    %19 = vsyncpa %s18, 0
    loop: start=0, step=1, limit=6
    $region2: #{discriminator_forward.3} parent=1 // loop_pre_header
      _
    $region3: #{discriminator_forward.3} parent=1 // loop_header
      %s21 = sphi 0, %s25
      %p22 = scmp.ge.s32.totalorder %s21, 6
      %s29 = sphi 0, %s29
      %s31 = sphi 0, %s29
      %s32 = sphi 0, %s31
      %s46 = sphi 0, %s32
      %s52 = sphi 0, %s54
      %s55 = sphi 0, %s52
      %s56 = sphi 0, %s55
      %s72 = sphi 0, %s56
      %s78 = sphi 0, %s80
      %s81 = sphi 0, %s78
      %s82 = sphi 0, %s81
      %s98 = sphi 0, %s82
      %s104 = sphi 0, %s106
      %s107 = sphi 0, %s104
      %s108 = sphi 0, %s107
      %s124 = sphi 0, %s108
      %s130 = sphi 0, %s132
      %s133 = sphi 0, %s130
      %s134 = sphi 0, %s133
      %s150 = sphi 0, %s134
      %s156 = sphi 0, %s158
      %s159 = sphi 0, %s156
      %s160 = sphi 0, %s159
      %s176 = sphi 0, %s160
    $region4: #{discriminator_forward.3} parent=1 // loop_header_branch
      %24 = sbr.rel (%p22) target = $region8
    $region5: #{discriminator_forward.3} parent=1 // loop_body
      %s26 = ssub.s32 %s21, 1
      %s27 = ssub.s32 %s21, 2
      %s28 = sadd.s32 %s21, 1
      %s30 = sadd.s32 %s29, 1
      %p33 = scmp.eq.s32.totalorder %s21, 3
      %p34 = scmp.ne.s32.totalorder %s29, %s31
      %p35 = scmp.eq.s32.totalorder %s21, 0
      %p36 = por %p34, %p35
      %p37 = scmp.ne.s32.totalorder %s29, %s31
      %p38 = scmp.eq.s32.totalorder %s26, 3
      %p39 = por %p37, %p38
      %p40 = scmp.ne.s32.totalorder %s31, %s32
      %p41 = scmp.eq.s32.totalorder %s26, 0
      %p42 = por %p40, %p41
      %p43 = scmp.ne.s32.totalorder %s31, %s32
      %p44 = scmp.eq.s32.totalorder %s27, 3
      %p45 = por %p43, %p44
      %p47 = scmp.ne.s32.totalorder %s32, %s46
      %p48 = scmp.eq.s32.totalorder %s27, 0
      %p49 = por %p47, %p48
      %s50 = ssub.s32 %s21, %s28
      %p51 = scmp.eq.s32.totalorder %s50, 0
      %s53 = sadd.s32 %s52, 1
      %s54 = scalar_select %p51, %s52, %s53
      %p57 = pneg %p51
      %p58 = scmp.eq.s32.totalorder %s21, 3
      %p59 = por %p57, %p58
      %p60 = scmp.ne.s32.totalorder %s52, %s55
      %p61 = scmp.eq.s32.totalorder %s21, 0
      %p62 = por %p60, %p61
      %p63 = scmp.ne.s32.totalorder %s52, %s55
      %p64 = scmp.eq.s32.totalorder %s26, 3
      %p65 = por %p63, %p64
      %p66 = scmp.ne.s32.totalorder %s55, %s56
      %p67 = scmp.eq.s32.totalorder %s26, 0
      %p68 = por %p66, %p67
      %p69 = scmp.ne.s32.totalorder %s55, %s56
      %p70 = scmp.eq.s32.totalorder %s27, 3
      %p71 = por %p69, %p70
      %p73 = scmp.ne.s32.totalorder %s56, %s72
      %p74 = scmp.eq.s32.totalorder %s27, 0
      %p75 = por %p73, %p74
      %s76 = ssub.s32 %s21, %s28
      %p77 = scmp.eq.s32.totalorder %s76, 0
      %s79 = sadd.s32 %s78, 1
      %s80 = scalar_select %p77, %s78, %s79
      %p83 = pneg %p77
      %p84 = scmp.eq.s32.totalorder %s21, 3
      %p85 = por %p83, %p84
      %p86 = scmp.ne.s32.totalorder %s78, %s81
      %p87 = scmp.eq.s32.totalorder %s21, 0
      %p88 = por %p86, %p87
      %p89 = scmp.ne.s32.totalorder %s78, %s81
      %p90 = scmp.eq.s32.totalorder %s26, 3
      %p91 = por %p89, %p90
      %p92 = scmp.ne.s32.totalorder %s81, %s82
      %p93 = scmp.eq.s32.totalorder %s26, 0
      %p94 = por %p92, %p93
      %p95 = scmp.ne.s32.totalorder %s81, %s82
      %p96 = scmp.eq.s32.totalorder %s27, 3
      %p97 = por %p95, %p96
      %p99 = scmp.ne.s32.totalorder %s82, %s98
      %p100 = scmp.eq.s32.totalorder %s27, 0
      %p101 = por %p99, %p100
      %s102 = ssub.s32 %s21, %s28
      %p103 = scmp.eq.s32.totalorder %s102, 0
      %s105 = sadd.s32 %s104, 1
      %s106 = scalar_select %p103, %s104, %s105
      %p109 = pneg %p103
      %p110 = scmp.eq.s32.totalorder %s21, 3
      %p111 = por %p109, %p110
      %p112 = scmp.ne.s32.totalorder %s104, %s107
      %p113 = scmp.eq.s32.totalorder %s21, 0
      %p114 = por %p112, %p113
      %p115 = scmp.ne.s32.totalorder %s104, %s107
      %p116 = scmp.eq.s32.totalorder %s26, 3
      %p117 = por %p115, %p116
      %p118 = scmp.ne.s32.totalorder %s107, %s108
      %p119 = scmp.eq.s32.totalorder %s26, 0
      %p120 = por %p118, %p119
      %p121 = scmp.ne.s32.totalorder %s107, %s108
      %p122 = scmp.eq.s32.totalorder %s27, 3
      %p123 = por %p121, %p122
      %p125 = scmp.ne.s32.totalorder %s108, %s124
      %p126 = scmp.eq.s32.totalorder %s27, 0
      %p127 = por %p125, %p126
      %s128 = ssub.s32 %s21, %s28
      %p129 = scmp.eq.s32.totalorder %s128, 0
      %s131 = sadd.s32 %s130, 1
      %s132 = scalar_select %p129, %s130, %s131
      %p135 = pneg %p129
      %p136 = scmp.eq.s32.totalorder %s21, 3
      %p137 = por %p135, %p136
      %p138 = scmp.ne.s32.totalorder %s130, %s133
      %p139 = scmp.eq.s32.totalorder %s21, 0
      %p140 = por %p138, %p139
      %p141 = scmp.ne.s32.totalorder %s130, %s133
      %p142 = scmp.eq.s32.totalorder %s26, 3
      %p143 = por %p141, %p142
      %p144 = scmp.ne.s32.totalorder %s133, %s134
      %p145 = scmp.eq.s32.totalorder %s26, 0
      %p146 = por %p144, %p145
      %p147 = scmp.ne.s32.totalorder %s133, %s134
      %p148 = scmp.eq.s32.totalorder %s27, 3
      %p149 = por %p147, %p148
      %p151 = scmp.ne.s32.totalorder %s134, %s150
      %p152 = scmp.eq.s32.totalorder %s27, 0
      %p153 = por %p151, %p152
      %s154 = ssub.s32 %s21, %s28
      %p155 = scmp.eq.s32.totalorder %s154, 0
      %s157 = sadd.s32 %s156, 1
      %s158 = scalar_select %p155, %s156, %s157
      %p161 = pneg %p155
      %p162 = scmp.eq.s32.totalorder %s21, 3
      %p163 = por %p161, %p162
      %p164 = scmp.ne.s32.totalorder %s156, %s159
      %p165 = scmp.eq.s32.totalorder %s21, 0
      %p166 = por %p164, %p165
      %p167 = scmp.ne.s32.totalorder %s156, %s159
      %p168 = scmp.eq.s32.totalorder %s26, 3
      %p169 = por %p167, %p168
      %p170 = scmp.ne.s32.totalorder %s159, %s160
      %p171 = scmp.eq.s32.totalorder %s26, 0
      %p172 = por %p170, %p171
      %p173 = scmp.ne.s32.totalorder %s159, %s160
      %p174 = scmp.eq.s32.totalorder %s27, 3
      %p175 = por %p173, %p174
      %p177 = scmp.ne.s32.totalorder %s160, %s176
      %p178 = scmp.eq.s32.totalorder %s27, 0
      %p179 = por %p177, %p178
      %p180 = scmp.le.s32.totalorder 1, %s21
      %p181 = scmp.lt.s32.totalorder %s21, 5
      %p182 = pnand %p180, %p181
      %p183 = pneg %p182
      // Predicated region
      $region9: #{discriminator_forward.3} parent=5 // pred_check
        _
      $region10: #{discriminator_forward.3} parent=5 // pred_check_branch
        %185 = sbr.rel (%p182) target = $region12
      $region11: #{discriminator_forward.3} parent=5 // pred_region
        %s186 = ssub.s32 %s21, 1
        // Predicated region
        $region13: #{discriminator_forward.3} parent=11 // pred_check
          %p187 = pneg %p42
        $region14: #{discriminator_forward.3} parent=11 // pred_check_branch
          %189 = sbr.rel (%p187) target = $region16
        $region15: #{discriminator_forward.3} parent=11 // pred_region
          _
        $region16: #{discriminator_forward.3} parent=11 // pred_fallthru
          _
      $region12: #{discriminator_forward.3} parent=5 // pred_fallthru
        _
      %p190 = scmp.lt.s32.totalorder %s21, 4
      // Predicated region
      $region17: #{discriminator_forward.3} parent=5 // pred_check
        %p191 = pneg %p190
      $region18: #{discriminator_forward.3} parent=5 // pred_check_branch
        %193 = sbr.rel (%p191) target = $region20
      $region19: #{discriminator_forward.3} parent=5 // pred_region
        // Predicated region
        $region21: #{discriminator_forward.3} parent=19 // pred_check
          %p194 = pneg %p62
        $region22: #{discriminator_forward.3} parent=19 // pred_check_branch
          %196 = sbr.rel (%p194) target = $region24
        $region23: #{discriminator_forward.3} parent=19 // pred_region
          %s197 = sand.u32 %s52, 1
          %s198 = scalar_lea.sflag [#allocation3], %s197
          %s199 = sand.u32 %s52, 1
          %s200 = smul.addr %s199, 4096
          %s201 = scalar_lea.vmem [#allocation2], %s200
          %s202 = smul.u32 4, %s21
          %204 = vsyncadd %s198, 0
          %s205 = smul.addr %s202, 4
          %s206 = scalar_lea.hbm %s1, %s205
          %s207 = sshll.u32 %s206, 4
          %s208 = int_to_ptr.hbm [resolvable:$true] %s207
          %s209 = sshll.u32 %s201, 4
          %s210 = int_to_ptr.vmem [resolvable:$true] %s209
          %215 = dma.hbm_to_vmem [thread:$0]  %s208, 65536, %s210, %s198, 1024, 256, 16
        $region24: #{discriminator_forward.3} parent=19 // pred_fallthru
          _
        // Predicated region
        $region25: #{discriminator_forward.3} parent=19 // pred_check
          %p216 = pneg %p88
        $region26: #{discriminator_forward.3} parent=19 // pred_check_branch
          %218 = sbr.rel (%p216) target = $region28
        $region27: #{discriminator_forward.3} parent=19 // pred_region
          %s219 = sand.u32 %s21, 1
          %s220 = scalar_lea.sflag [#allocation6], %s219
          %s221 = sand.u32 %s78, 1
          %s222 = smul.addr %s221, 4
          %s223 = scalar_lea.vmem [#allocation5], %s222
          %s224 = smul.u32 4, %s21
          %226 = vsyncadd %s220, 0
          %s227 = scalar_lea.hbm %s2, %s224
          %s229 = sshll.u32 %s227, 4
          %s230 = int_to_ptr.hbm [resolvable:$true] %s229
          %s231 = sshll.u32 %s223, 4
          %s232 = int_to_ptr.vmem [resolvable:$true] %s231
          %234 = dma.hbm_to_vmem [thread:$0]  %s230, 64, %s232, %s220
        $region28: #{discriminator_forward.3} parent=19 // pred_fallthru
          _
        // Predicated region
        $region29: #{discriminator_forward.3} parent=19 // pred_check
          %p235 = pneg %p114
        $region30: #{discriminator_forward.3} parent=19 // pred_check_branch
          %237 = sbr.rel (%p235) target = $region32
        $region31: #{discriminator_forward.3} parent=19 // pred_region
          %s238 = sand.u32 %s21, 1
          %s239 = scalar_lea.sflag [#allocation6], %s238
          %s240 = sand.u32 %s104, 1
          %s241 = smul.addr %s240, 4
          %s242 = scalar_lea.vmem [#allocation7], %s241
          %s243 = smul.u32 4, %s21
          %245 = vsyncadd %s239, 0
          %s246 = scalar_lea.hbm %s3, %s243
          %s248 = sshll.u32 %s246, 4
          %s249 = int_to_ptr.hbm [resolvable:$true] %s248
          %s250 = sshll.u32 %s242, 4
          %s251 = int_to_ptr.vmem [resolvable:$true] %s250
          %253 = dma.hbm_to_vmem [thread:$0]  %s249, 64, %s251, %s239
        $region32: #{discriminator_forward.3} parent=19 // pred_fallthru
          _
      $region20: #{discriminator_forward.3} parent=5 // pred_fallthru
        _
      %p254 = scmp.le.s32.totalorder 1, %s21
      %p255 = scmp.lt.s32.totalorder %s21, 5
      %p256 = pnand %p254, %p255
      %p257 = pneg %p256
      // Predicated region
      $region33: #{discriminator_forward.3} parent=5 // pred_check
        _
      $region34: #{discriminator_forward.3} parent=5 // pred_check_branch
        %259 = sbr.rel (%p256) target = $region36
      $region35: #{discriminator_forward.3} parent=5 // pred_region
        %s260 = ssub.s32 %s21, 1
        %s261 = sand.u32 %s55, 1
        %s262 = scalar_lea.sflag [#allocation3], %s261
        %s263 = sand.u32 %s55, 1
        %s264 = smul.addr %s263, 4096
        %s265 = scalar_lea.vmem [#allocation2], %s264
        // Predicated region
        $region37: #{discriminator_forward.3} parent=35 // pred_check
          %p266 = pneg %p68
        $region38: #{discriminator_forward.3} parent=35 // pred_check_branch
          %268 = sbr.rel (%p266) target = $region40
        $region39: #{discriminator_forward.3} parent=35 // pred_region
          %270 = dma.done %s262, 65536
        $region40: #{discriminator_forward.3} parent=35 // pred_fallthru
          _
        %s271 = sand.u32 %s26, 1
        %s272 = scalar_lea.sflag [#allocation6], %s271
        %s273 = sand.u32 %s81, 1
        %s274 = smul.addr %s273, 4
        %s275 = scalar_lea.vmem [#allocation5], %s274
        // Predicated region
        $region41: #{discriminator_forward.3} parent=35 // pred_check
          %p276 = pneg %p94
        $region42: #{discriminator_forward.3} parent=35 // pred_check_branch
          %278 = sbr.rel (%p276) target = $region44
        $region43: #{discriminator_forward.3} parent=35 // pred_region
          %280 = dma.done %s272, 64
        $region44: #{discriminator_forward.3} parent=35 // pred_fallthru
          _
        %s281 = sand.u32 %s26, 1
        %s282 = scalar_lea.sflag [#allocation6], %s281
        %s283 = sand.u32 %s107, 1
        %s284 = smul.addr %s283, 4
        %s285 = scalar_lea.vmem [#allocation7], %s284
        // Predicated region
        $region45: #{discriminator_forward.3} parent=35 // pred_check
          %p286 = pneg %p120
        $region46: #{discriminator_forward.3} parent=35 // pred_check_branch
          %288 = sbr.rel (%p286) target = $region48
        $region47: #{discriminator_forward.3} parent=35 // pred_region
          %290 = dma.done %s282, 64
        $region48: #{discriminator_forward.3} parent=35 // pred_fallthru
          _
        %p291 = pneg %p42
        %p292 = pneg %p39
        %s293 = sand.u32 %s55, 1
        %s294 = scalar_lea.sflag [#allocation3], %s293
        %s295 = sand.u32 %s55, 1
        %s296 = smul.addr %s295, 4096
        %s297 = scalar_lea.vmem [#allocation2], %s296
        %p298 = pneg %p68
        %p299 = pneg %p65
        %s300 = sand.u32 %s26, 1
        %s301 = scalar_lea.sflag [#allocation6], %s300
        %s302 = sand.u32 %s81, 1
        %s303 = smul.addr %s302, 4
        %s304 = scalar_lea.vmem [#allocation5], %s303
        %p305 = pneg %p94
        %p306 = pneg %p91
        %s307 = sand.u32 %s26, 1
        %s308 = scalar_lea.sflag [#allocation6], %s307
        %s309 = sand.u32 %s107, 1
        %s310 = smul.addr %s309, 4
        %s311 = scalar_lea.vmem [#allocation7], %s310
        %p312 = pneg %p120
        %p313 = pneg %p117
        %p314 = pneg %p146
        %p315 = pneg %p143
        %s316 = sand.u32 %s133, 1
        %s317 = scalar_lea.sflag [#allocation4], %s316
        %s318 = sand.u32 %s133, 1
        %s319 = smul.addr %s318, 32
        %s320 = scalar_lea.vmem [#allocation8], %s319
        %p321 = pneg %p172
        %p322 = pneg %p169
        %p323 = scmp.lt.s32.totalorder %s26, 3
        %s324 = scalar_select %p323, %s26, 3
        %s325 = smul.addr %s324, 8
        %s326 = scalar_lea.vmem %s5, %s325
        %s327 = smul.u32 4, %s26
        %s328 = smul.u32 4, %s26
        %s329 = smul.u32 4, %s26
        %s330 = smul.u32 4, %s26
        %p331 = scmp.lt.s32.totalorder %s26, 3
        %s332 = scalar_select %p331, %s26, 3
        %s333 = smul.addr %s332, 8
        %s334 = scalar_lea.vmem %s5, %s333
        %v335 = vld [vmem:[%s0] sm:$0xff]
        %v336 = vld [vmem:[%s0 + $0x8] sm:$0xff]
        %v337 = vld [vmem:[%s0 + $0x10] sm:$0xff]
        %v338 = vld [vmem:[%s0 + $0x18] sm:$0xff]
        %v339 = vld [vmem:[%s0 + $0x20] sm:$0xff]
        %v340 = vld [vmem:[%s0 + $0x28] sm:$0xff]
        %v341 = vld [vmem:[%s0 + $0x30] sm:$0xff]
        %v342 = vld [vmem:[%s0 + $0x38] sm:$0xff]
        %v343 = vld [vmem:[%s0 + $0x40] sm:$0xff]
        %v344 = vld [vmem:[%s0 + $0x48] sm:$0xff]
        %v345 = vld [vmem:[%s0 + $0x50] sm:$0xff]
        %v346 = vld [vmem:[%s0 + $0x58] sm:$0xff]
        %v347 = vld [vmem:[%s0 + $0x60] sm:$0xff]
        %v348 = vld [vmem:[%s0 + $0x68] sm:$0xff]
        %v349 = vld [vmem:[%s0 + $0x70] sm:$0xff]
        %v350 = vld [vmem:[%s0 + $0x78] sm:$0xff]
        %v351 = vmax.f32 %v335, 0.0
        %v352 = vmax.f32 %v336, 0.0
        %v353 = vmax.f32 %v337, 0.0
        %v354 = vmax.f32 %v338, 0.0
        %v355 = vmax.f32 %v339, 0.0
        %v356 = vmax.f32 %v340, 0.0
        %v357 = vmax.f32 %v341, 0.0
        %v358 = vmax.f32 %v342, 0.0
        %v359 = vmax.f32 %v343, 0.0
        %v360 = vmax.f32 %v344, 0.0
        %v361 = vmax.f32 %v345, 0.0
        %v362 = vmax.f32 %v346, 0.0
        %v363 = vmax.f32 %v347, 0.0
        %v364 = vmax.f32 %v348, 0.0
        %v365 = vmax.f32 %v349, 0.0
        %v366 = vmax.f32 %v350, 0.0
        %v367 = vpack.c.bf16 %v351, %v351
        %v368 = vpack.c.bf16 %v352, %v352
        %v369 = vpack.c.bf16 %v353, %v353
        %v370 = vpack.c.bf16 %v354, %v354
        %v371 = vpack.c.bf16 %v355, %v355
        %v372 = vpack.c.bf16 %v356, %v356
        %v373 = vpack.c.bf16 %v357, %v357
        %v374 = vpack.c.bf16 %v358, %v358
        %v375 = vpack.c.bf16 %v359, %v359
        %v376 = vpack.c.bf16 %v360, %v360
        %v377 = vpack.c.bf16 %v361, %v361
        %v378 = vpack.c.bf16 %v362, %v362
        %v379 = vpack.c.bf16 %v363, %v363
        %v380 = vpack.c.bf16 %v364, %v364
        %v381 = vpack.c.bf16 %v365, %v365
        %v382 = vpack.c.bf16 %v366, %v366
        %v383 = vld [vmem:[%s265] sm:$0xff]
        %v384 = vld [vmem:[%s265 + $0x8] sm:$0xff]
        %v385 = vld [vmem:[%s265 + $0x10] sm:$0xff]
        %v386 = vld [vmem:[%s265 + $0x18] sm:$0xff]
        %v387 = vld [vmem:[%s265 + $0x20] sm:$0xff]
        %v388 = vld [vmem:[%s265 + $0x28] sm:$0xff]
        %v389 = vld [vmem:[%s265 + $0x30] sm:$0xff]
        %v390 = vld [vmem:[%s265 + $0x38] sm:$0xff]
        %v391 = vld [vmem:[%s265 + $0x40] sm:$0xff]
        %v392 = vld [vmem:[%s265 + $0x48] sm:$0xff]
        %v393 = vld [vmem:[%s265 + $0x50] sm:$0xff]
        %v394 = vld [vmem:[%s265 + $0x58] sm:$0xff]
        %v395 = vld [vmem:[%s265 + $0x60] sm:$0xff]
        %v396 = vld [vmem:[%s265 + $0x68] sm:$0xff]
        %v397 = vld [vmem:[%s265 + $0x70] sm:$0xff]
        %v398 = vld [vmem:[%s265 + $0x78] sm:$0xff]
        %v399 = vld [vmem:[%s265 + $0x80] sm:$0xff]
        %v400 = vld [vmem:[%s265 + $0x88] sm:$0xff]
        %v401 = vld [vmem:[%s265 + $0x90] sm:$0xff]
        %v402 = vld [vmem:[%s265 + $0x98] sm:$0xff]
        %v403 = vld [vmem:[%s265 + $0xa0] sm:$0xff]
        %v404 = vld [vmem:[%s265 + $0xa8] sm:$0xff]
        %v405 = vld [vmem:[%s265 + $0xb0] sm:$0xff]
        %v406 = vld [vmem:[%s265 + $0xb8] sm:$0xff]
        %v407 = vld [vmem:[%s265 + $0xc0] sm:$0xff]
        %v408 = vld [vmem:[%s265 + $0xc8] sm:$0xff]
        %v409 = vld [vmem:[%s265 + $0xd0] sm:$0xff]
        %v410 = vld [vmem:[%s265 + $0xd8] sm:$0xff]
        %v411 = vld [vmem:[%s265 + $0xe0] sm:$0xff]
        %v412 = vld [vmem:[%s265 + $0xe8] sm:$0xff]
        %v413 = vld [vmem:[%s265 + $0xf0] sm:$0xff]
        %v414 = vld [vmem:[%s265 + $0xf8] sm:$0xff]
        %v415 = vld [vmem:[%s265 + $0x100] sm:$0xff]
        %v416 = vld [vmem:[%s265 + $0x108] sm:$0xff]
        %v417 = vld [vmem:[%s265 + $0x110] sm:$0xff]
        %v418 = vld [vmem:[%s265 + $0x118] sm:$0xff]
        %v419 = vld [vmem:[%s265 + $0x120] sm:$0xff]
        %v420 = vld [vmem:[%s265 + $0x128] sm:$0xff]
        %v421 = vld [vmem:[%s265 + $0x130] sm:$0xff]
        %v422 = vld [vmem:[%s265 + $0x138] sm:$0xff]
        %v423 = vld [vmem:[%s265 + $0x140] sm:$0xff]
        %v424 = vld [vmem:[%s265 + $0x148] sm:$0xff]
        %v425 = vld [vmem:[%s265 + $0x150] sm:$0xff]
        %v426 = vld [vmem:[%s265 + $0x158] sm:$0xff]
        %v427 = vld [vmem:[%s265 + $0x160] sm:$0xff]
        %v428 = vld [vmem:[%s265 + $0x168] sm:$0xff]
        %v429 = vld [vmem:[%s265 + $0x170] sm:$0xff]
        %v430 = vld [vmem:[%s265 + $0x178] sm:$0xff]
        %v431 = vld [vmem:[%s265 + $0x180] sm:$0xff]
        %v432 = vld [vmem:[%s265 + $0x188] sm:$0xff]
        %v433 = vld [vmem:[%s265 + $0x190] sm:$0xff]
        %v434 = vld [vmem:[%s265 + $0x198] sm:$0xff]
        %v435 = vld [vmem:[%s265 + $0x1a0] sm:$0xff]
        %v436 = vld [vmem:[%s265 + $0x1a8] sm:$0xff]
        %v437 = vld [vmem:[%s265 + $0x1b0] sm:$0xff]
        %v438 = vld [vmem:[%s265 + $0x1b8] sm:$0xff]
        %v439 = vld [vmem:[%s265 + $0x1c0] sm:$0xff]
        %v440 = vld [vmem:[%s265 + $0x1c8] sm:$0xff]
        %v441 = vld [vmem:[%s265 + $0x1d0] sm:$0xff]
        %v442 = vld [vmem:[%s265 + $0x1d8] sm:$0xff]
        %v443 = vld [vmem:[%s265 + $0x1e0] sm:$0xff]
        %v444 = vld [vmem:[%s265 + $0x1e8] sm:$0xff]
        %v445 = vld [vmem:[%s265 + $0x1f0] sm:$0xff]
        %v446 = vld [vmem:[%s265 + $0x1f8] sm:$0xff]
        %v447 = vld [vmem:[%s265 + $0x200] sm:$0xff]
        %v448 = vld [vmem:[%s265 + $0x208] sm:$0xff]
        %v449 = vld [vmem:[%s265 + $0x210] sm:$0xff]
        %v450 = vld [vmem:[%s265 + $0x218] sm:$0xff]
        %v451 = vld [vmem:[%s265 + $0x220] sm:$0xff]
        %v452 = vld [vmem:[%s265 + $0x228] sm:$0xff]
        %v453 = vld [vmem:[%s265 + $0x230] sm:$0xff]
        %v454 = vld [vmem:[%s265 + $0x238] sm:$0xff]
        %v455 = vld [vmem:[%s265 + $0x240] sm:$0xff]
        %v456 = vld [vmem:[%s265 + $0x248] sm:$0xff]
        %v457 = vld [vmem:[%s265 + $0x250] sm:$0xff]
        %v458 = vld [vmem:[%s265 + $0x258] sm:$0xff]
        %v459 = vld [vmem:[%s265 + $0x260] sm:$0xff]
        %v460 = vld [vmem:[%s265 + $0x268] sm:$0xff]
        %v461 = vld [vmem:[%s265 + $0x270] sm:$0xff]
        %v462 = vld [vmem:[%s265 + $0x278] sm:$0xff]
        %v463 = vld [vmem:[%s265 + $0x280] sm:$0xff]
        %v464 = vld [vmem:[%s265 + $0x288] sm:$0xff]
        %v465 = vld [vmem:[%s265 + $0x290] sm:$0xff]
        %v466 = vld [vmem:[%s265 + $0x298] sm:$0xff]
        %v467 = vld [vmem:[%s265 + $0x2a0] sm:$0xff]
        %v468 = vld [vmem:[%s265 + $0x2a8] sm:$0xff]
        %v469 = vld [vmem:[%s265 + $0x2b0] sm:$0xff]
        %v470 = vld [vmem:[%s265 + $0x2b8] sm:$0xff]
        %v471 = vld [vmem:[%s265 + $0x2c0] sm:$0xff]
        %v472 = vld [vmem:[%s265 + $0x2c8] sm:$0xff]
        %v473 = vld [vmem:[%s265 + $0x2d0] sm:$0xff]
        %v474 = vld [vmem:[%s265 + $0x2d8] sm:$0xff]
        %v475 = vld [vmem:[%s265 + $0x2e0] sm:$0xff]
        %v476 = vld [vmem:[%s265 + $0x2e8] sm:$0xff]
        %v477 = vld [vmem:[%s265 + $0x2f0] sm:$0xff]
        %v478 = vld [vmem:[%s265 + $0x2f8] sm:$0xff]
        %v479 = vld [vmem:[%s265 + $0x300] sm:$0xff]
        %v480 = vld [vmem:[%s265 + $0x308] sm:$0xff]
        %v481 = vld [vmem:[%s265 + $0x310] sm:$0xff]
        %v482 = vld [vmem:[%s265 + $0x318] sm:$0xff]
        %v483 = vld [vmem:[%s265 + $0x320] sm:$0xff]
        %v484 = vld [vmem:[%s265 + $0x328] sm:$0xff]
        %v485 = vld [vmem:[%s265 + $0x330] sm:$0xff]
        %v486 = vld [vmem:[%s265 + $0x338] sm:$0xff]
        %v487 = vld [vmem:[%s265 + $0x340] sm:$0xff]
        %v488 = vld [vmem:[%s265 + $0x348] sm:$0xff]
        %v489 = vld [vmem:[%s265 + $0x350] sm:$0xff]
        %v490 = vld [vmem:[%s265 + $0x358] sm:$0xff]
        %v491 = vld [vmem:[%s265 + $0x360] sm:$0xff]
        %v492 = vld [vmem:[%s265 + $0x368] sm:$0xff]
        %v493 = vld [vmem:[%s265 + $0x370] sm:$0xff]
        %v494 = vld [vmem:[%s265 + $0x378] sm:$0xff]
        %v495 = vld [vmem:[%s265 + $0x380] sm:$0xff]
        %v496 = vld [vmem:[%s265 + $0x388] sm:$0xff]
        %v497 = vld [vmem:[%s265 + $0x390] sm:$0xff]
        %v498 = vld [vmem:[%s265 + $0x398] sm:$0xff]
        %v499 = vld [vmem:[%s265 + $0x3a0] sm:$0xff]
        %v500 = vld [vmem:[%s265 + $0x3a8] sm:$0xff]
        %v501 = vld [vmem:[%s265 + $0x3b0] sm:$0xff]
        %v502 = vld [vmem:[%s265 + $0x3b8] sm:$0xff]
        %v503 = vld [vmem:[%s265 + $0x3c0] sm:$0xff]
        %v504 = vld [vmem:[%s265 + $0x3c8] sm:$0xff]
        %v505 = vld [vmem:[%s265 + $0x3d0] sm:$0xff]
        %v506 = vld [vmem:[%s265 + $0x3d8] sm:$0xff]
        %v507 = vld [vmem:[%s265 + $0x3e0] sm:$0xff]
        %v508 = vld [vmem:[%s265 + $0x3e8] sm:$0xff]
        %v509 = vld [vmem:[%s265 + $0x3f0] sm:$0xff]
        %v510 = vld [vmem:[%s265 + $0x3f8] sm:$0xff]
        %v511 = vld [vmem:[%s265 + $0x400] sm:$0xff]
        %v512 = vld [vmem:[%s265 + $0x408] sm:$0xff]
        %v513 = vld [vmem:[%s265 + $0x410] sm:$0xff]
        %v514 = vld [vmem:[%s265 + $0x418] sm:$0xff]
        %v515 = vld [vmem:[%s265 + $0x420] sm:$0xff]
        %v516 = vld [vmem:[%s265 + $0x428] sm:$0xff]
        %v517 = vld [vmem:[%s265 + $0x430] sm:$0xff]
        %v518 = vld [vmem:[%s265 + $0x438] sm:$0xff]
        %v519 = vld [vmem:[%s265 + $0x440] sm:$0xff]
        %v520 = vld [vmem:[%s265 + $0x448] sm:$0xff]
        %v521 = vld [vmem:[%s265 + $0x450] sm:$0xff]
        %v522 = vld [vmem:[%s265 + $0x458] sm:$0xff]
        %v523 = vld [vmem:[%s265 + $0x460] sm:$0xff]
        %v524 = vld [vmem:[%s265 + $0x468] sm:$0xff]
        %v525 = vld [vmem:[%s265 + $0x470] sm:$0xff]
        %v526 = vld [vmem:[%s265 + $0x478] sm:$0xff]
        %v527 = vld [vmem:[%s265 + $0x480] sm:$0xff]
        %v528 = vld [vmem:[%s265 + $0x488] sm:$0xff]
        %v529 = vld [vmem:[%s265 + $0x490] sm:$0xff]
        %v530 = vld [vmem:[%s265 + $0x498] sm:$0xff]
        %v531 = vld [vmem:[%s265 + $0x4a0] sm:$0xff]
        %v532 = vld [vmem:[%s265 + $0x4a8] sm:$0xff]
        %v533 = vld [vmem:[%s265 + $0x4b0] sm:$0xff]
        %v534 = vld [vmem:[%s265 + $0x4b8] sm:$0xff]
        %v535 = vld [vmem:[%s265 + $0x4c0] sm:$0xff]
        %v536 = vld [vmem:[%s265 + $0x4c8] sm:$0xff]
        %v537 = vld [vmem:[%s265 + $0x4d0] sm:$0xff]
        %v538 = vld [vmem:[%s265 + $0x4d8] sm:$0xff]
        %v539 = vld [vmem:[%s265 + $0x4e0] sm:$0xff]
        %v540 = vld [vmem:[%s265 + $0x4e8] sm:$0xff]
        %v541 = vld [vmem:[%s265 + $0x4f0] sm:$0xff]
        %v542 = vld [vmem:[%s265 + $0x4f8] sm:$0xff]
        %v543 = vld [vmem:[%s265 + $0x500] sm:$0xff]
        %v544 = vld [vmem:[%s265 + $0x508] sm:$0xff]
        %v545 = vld [vmem:[%s265 + $0x510] sm:$0xff]
        %v546 = vld [vmem:[%s265 + $0x518] sm:$0xff]
        %v547 = vld [vmem:[%s265 + $0x520] sm:$0xff]
        %v548 = vld [vmem:[%s265 + $0x528] sm:$0xff]
        %v549 = vld [vmem:[%s265 + $0x530] sm:$0xff]
        %v550 = vld [vmem:[%s265 + $0x538] sm:$0xff]
        %v551 = vld [vmem:[%s265 + $0x540] sm:$0xff]
        %v552 = vld [vmem:[%s265 + $0x548] sm:$0xff]
        %v553 = vld [vmem:[%s265 + $0x550] sm:$0xff]
        %v554 = vld [vmem:[%s265 + $0x558] sm:$0xff]
        %v555 = vld [vmem:[%s265 + $0x560] sm:$0xff]
        %v556 = vld [vmem:[%s265 + $0x568] sm:$0xff]
        %v557 = vld [vmem:[%s265 + $0x570] sm:$0xff]
        %v558 = vld [vmem:[%s265 + $0x578] sm:$0xff]
        %v559 = vld [vmem:[%s265 + $0x580] sm:$0xff]
        %v560 = vld [vmem:[%s265 + $0x588] sm:$0xff]
        %v561 = vld [vmem:[%s265 + $0x590] sm:$0xff]
        %v562 = vld [vmem:[%s265 + $0x598] sm:$0xff]
        %v563 = vld [vmem:[%s265 + $0x5a0] sm:$0xff]
        %v564 = vld [vmem:[%s265 + $0x5a8] sm:$0xff]
        %v565 = vld [vmem:[%s265 + $0x5b0] sm:$0xff]
        %v566 = vld [vmem:[%s265 + $0x5b8] sm:$0xff]
        %v567 = vld [vmem:[%s265 + $0x5c0] sm:$0xff]
        %v568 = vld [vmem:[%s265 + $0x5c8] sm:$0xff]
        %v569 = vld [vmem:[%s265 + $0x5d0] sm:$0xff]
        %v570 = vld [vmem:[%s265 + $0x5d8] sm:$0xff]
        %v571 = vld [vmem:[%s265 + $0x5e0] sm:$0xff]
        %v572 = vld [vmem:[%s265 + $0x5e8] sm:$0xff]
        %v573 = vld [vmem:[%s265 + $0x5f0] sm:$0xff]
        %v574 = vld [vmem:[%s265 + $0x5f8] sm:$0xff]
        %v575 = vld [vmem:[%s265 + $0x600] sm:$0xff]
        %v576 = vld [vmem:[%s265 + $0x608] sm:$0xff]
        %v577 = vld [vmem:[%s265 + $0x610] sm:$0xff]
        %v578 = vld [vmem:[%s265 + $0x618] sm:$0xff]
        %v579 = vld [vmem:[%s265 + $0x620] sm:$0xff]
        %v580 = vld [vmem:[%s265 + $0x628] sm:$0xff]
        %v581 = vld [vmem:[%s265 + $0x630] sm:$0xff]
        %v582 = vld [vmem:[%s265 + $0x638] sm:$0xff]
        %v583 = vld [vmem:[%s265 + $0x640] sm:$0xff]
        %v584 = vld [vmem:[%s265 + $0x648] sm:$0xff]
        %v585 = vld [vmem:[%s265 + $0x650] sm:$0xff]
        %v586 = vld [vmem:[%s265 + $0x658] sm:$0xff]
        %v587 = vld [vmem:[%s265 + $0x660] sm:$0xff]
        %v588 = vld [vmem:[%s265 + $0x668] sm:$0xff]
        %v589 = vld [vmem:[%s265 + $0x670] sm:$0xff]
        %v590 = vld [vmem:[%s265 + $0x678] sm:$0xff]
        %v591 = vld [vmem:[%s265 + $0x680] sm:$0xff]
        %v592 = vld [vmem:[%s265 + $0x688] sm:$0xff]
        %v593 = vld [vmem:[%s265 + $0x690] sm:$0xff]
        %v594 = vld [vmem:[%s265 + $0x698] sm:$0xff]
        %v595 = vld [vmem:[%s265 + $0x6a0] sm:$0xff]
        %v596 = vld [vmem:[%s265 + $0x6a8] sm:$0xff]
        %v597 = vld [vmem:[%s265 + $0x6b0] sm:$0xff]
        %v598 = vld [vmem:[%s265 + $0x6b8] sm:$0xff]
        %v599 = vld [vmem:[%s265 + $0x6c0] sm:$0xff]
        %v600 = vld [vmem:[%s265 + $0x6c8] sm:$0xff]
        %v601 = vld [vmem:[%s265 + $0x6d0] sm:$0xff]
        %v602 = vld [vmem:[%s265 + $0x6d8] sm:$0xff]
        %v603 = vld [vmem:[%s265 + $0x6e0] sm:$0xff]
        %v604 = vld [vmem:[%s265 + $0x6e8] sm:$0xff]
        %v605 = vld [vmem:[%s265 + $0x6f0] sm:$0xff]
        %v606 = vld [vmem:[%s265 + $0x6f8] sm:$0xff]
        %v607 = vld [vmem:[%s265 + $0x700] sm:$0xff]
        %v608 = vld [vmem:[%s265 + $0x708] sm:$0xff]
        %v609 = vld [vmem:[%s265 + $0x710] sm:$0xff]
        %v610 = vld [vmem:[%s265 + $0x718] sm:$0xff]
        %v611 = vld [vmem:[%s265 + $0x720] sm:$0xff]
        %v612 = vld [vmem:[%s265 + $0x728] sm:$0xff]
        %v613 = vld [vmem:[%s265 + $0x730] sm:$0xff]
        %v614 = vld [vmem:[%s265 + $0x738] sm:$0xff]
        %v615 = vld [vmem:[%s265 + $0x740] sm:$0xff]
        %v616 = vld [vmem:[%s265 + $0x748] sm:$0xff]
        %v617 = vld [vmem:[%s265 + $0x750] sm:$0xff]
        %v618 = vld [vmem:[%s265 + $0x758] sm:$0xff]
        %v619 = vld [vmem:[%s265 + $0x760] sm:$0xff]
        %v620 = vld [vmem:[%s265 + $0x768] sm:$0xff]
        %v621 = vld [vmem:[%s265 + $0x770] sm:$0xff]
        %v622 = vld [vmem:[%s265 + $0x778] sm:$0xff]
        %v623 = vld [vmem:[%s265 + $0x780] sm:$0xff]
        %v624 = vld [vmem:[%s265 + $0x788] sm:$0xff]
        %v625 = vld [vmem:[%s265 + $0x790] sm:$0xff]
        %v626 = vld [vmem:[%s265 + $0x798] sm:$0xff]
        %v627 = vld [vmem:[%s265 + $0x7a0] sm:$0xff]
        %v628 = vld [vmem:[%s265 + $0x7a8] sm:$0xff]
        %v629 = vld [vmem:[%s265 + $0x7b0] sm:$0xff]
        %v630 = vld [vmem:[%s265 + $0x7b8] sm:$0xff]
        %v631 = vld [vmem:[%s265 + $0x7c0] sm:$0xff]
        %v632 = vld [vmem:[%s265 + $0x7c8] sm:$0xff]
        %v633 = vld [vmem:[%s265 + $0x7d0] sm:$0xff]
        %v634 = vld [vmem:[%s265 + $0x7d8] sm:$0xff]
        %v635 = vld [vmem:[%s265 + $0x7e0] sm:$0xff]
        %v636 = vld [vmem:[%s265 + $0x7e8] sm:$0xff]
        %v637 = vld [vmem:[%s265 + $0x7f0] sm:$0xff]
        %v638 = vld [vmem:[%s265 + $0x7f8] sm:$0xff]
        %v639 = vld [vmem:[%s265 + $0x800] sm:$0xff]
        %v640 = vld [vmem:[%s265 + $0x808] sm:$0xff]
        %v641 = vld [vmem:[%s265 + $0x810] sm:$0xff]
        %v642 = vld [vmem:[%s265 + $0x818] sm:$0xff]
        %v643 = vld [vmem:[%s265 + $0x820] sm:$0xff]
        %v644 = vld [vmem:[%s265 + $0x828] sm:$0xff]
        %v645 = vld [vmem:[%s265 + $0x830] sm:$0xff]
        %v646 = vld [vmem:[%s265 + $0x838] sm:$0xff]
        %v647 = vld [vmem:[%s265 + $0x840] sm:$0xff]
        %v648 = vld [vmem:[%s265 + $0x848] sm:$0xff]
        %v649 = vld [vmem:[%s265 + $0x850] sm:$0xff]
        %v650 = vld [vmem:[%s265 + $0x858] sm:$0xff]
        %v651 = vld [vmem:[%s265 + $0x860] sm:$0xff]
        %v652 = vld [vmem:[%s265 + $0x868] sm:$0xff]
        %v653 = vld [vmem:[%s265 + $0x870] sm:$0xff]
        %v654 = vld [vmem:[%s265 + $0x878] sm:$0xff]
        %v655 = vld [vmem:[%s265 + $0x880] sm:$0xff]
        %v656 = vld [vmem:[%s265 + $0x888] sm:$0xff]
        %v657 = vld [vmem:[%s265 + $0x890] sm:$0xff]
        %v658 = vld [vmem:[%s265 + $0x898] sm:$0xff]
        %v659 = vld [vmem:[%s265 + $0x8a0] sm:$0xff]
        %v660 = vld [vmem:[%s265 + $0x8a8] sm:$0xff]
        %v661 = vld [vmem:[%s265 + $0x8b0] sm:$0xff]
        %v662 = vld [vmem:[%s265 + $0x8b8] sm:$0xff]
        %v663 = vld [vmem:[%s265 + $0x8c0] sm:$0xff]
        %v664 = vld [vmem:[%s265 + $0x8c8] sm:$0xff]
        %v665 = vld [vmem:[%s265 + $0x8d0] sm:$0xff]
        %v666 = vld [vmem:[%s265 + $0x8d8] sm:$0xff]
        %v667 = vld [vmem:[%s265 + $0x8e0] sm:$0xff]
        %v668 = vld [vmem:[%s265 + $0x8e8] sm:$0xff]
        %v669 = vld [vmem:[%s265 + $0x8f0] sm:$0xff]
        %v670 = vld [vmem:[%s265 + $0x8f8] sm:$0xff]
        %v671 = vld [vmem:[%s265 + $0x900] sm:$0xff]
        %v672 = vld [vmem:[%s265 + $0x908] sm:$0xff]
        %v673 = vld [vmem:[%s265 + $0x910] sm:$0xff]
        %v674 = vld [vmem:[%s265 + $0x918] sm:$0xff]
        %v675 = vld [vmem:[%s265 + $0x920] sm:$0xff]
        %v676 = vld [vmem:[%s265 + $0x928] sm:$0xff]
        %v677 = vld [vmem:[%s265 + $0x930] sm:$0xff]
        %v678 = vld [vmem:[%s265 + $0x938] sm:$0xff]
        %v679 = vld [vmem:[%s265 + $0x940] sm:$0xff]
        %v680 = vld [vmem:[%s265 + $0x948] sm:$0xff]
        %v681 = vld [vmem:[%s265 + $0x950] sm:$0xff]
        %v682 = vld [vmem:[%s265 + $0x958] sm:$0xff]
        %v683 = vld [vmem:[%s265 + $0x960] sm:$0xff]
        %v684 = vld [vmem:[%s265 + $0x968] sm:$0xff]
        %v685 = vld [vmem:[%s265 + $0x970] sm:$0xff]
        %v686 = vld [vmem:[%s265 + $0x978] sm:$0xff]
        %v687 = vld [vmem:[%s265 + $0x980] sm:$0xff]
        %v688 = vld [vmem:[%s265 + $0x988] sm:$0xff]
        %v689 = vld [vmem:[%s265 + $0x990] sm:$0xff]
        %v690 = vld [vmem:[%s265 + $0x998] sm:$0xff]
        %v691 = vld [vmem:[%s265 + $0x9a0] sm:$0xff]
        %v692 = vld [vmem:[%s265 + $0x9a8] sm:$0xff]
        %v693 = vld [vmem:[%s265 + $0x9b0] sm:$0xff]
        %v694 = vld [vmem:[%s265 + $0x9b8] sm:$0xff]
        %v695 = vld [vmem:[%s265 + $0x9c0] sm:$0xff]
        %v696 = vld [vmem:[%s265 + $0x9c8] sm:$0xff]
        %v697 = vld [vmem:[%s265 + $0x9d0] sm:$0xff]
        %v698 = vld [vmem:[%s265 + $0x9d8] sm:$0xff]
        %v699 = vld [vmem:[%s265 + $0x9e0] sm:$0xff]
        %v700 = vld [vmem:[%s265 + $0x9e8] sm:$0xff]
        %v701 = vld [vmem:[%s265 + $0x9f0] sm:$0xff]
        %v702 = vld [vmem:[%s265 + $0x9f8] sm:$0xff]
        %v703 = vld [vmem:[%s265 + $0xa00] sm:$0xff]
        %v704 = vld [vmem:[%s265 + $0xa08] sm:$0xff]
        %v705 = vld [vmem:[%s265 + $0xa10] sm:$0xff]
        %v706 = vld [vmem:[%s265 + $0xa18] sm:$0xff]
        %v707 = vld [vmem:[%s265 + $0xa20] sm:$0xff]
        %v708 = vld [vmem:[%s265 + $0xa28] sm:$0xff]
        %v709 = vld [vmem:[%s265 + $0xa30] sm:$0xff]
        %v710 = vld [vmem:[%s265 + $0xa38] sm:$0xff]
        %v711 = vld [vmem:[%s265 + $0xa40] sm:$0xff]
        %v712 = vld [vmem:[%s265 + $0xa48] sm:$0xff]
        %v713 = vld [vmem:[%s265 + $0xa50] sm:$0xff]
        %v714 = vld [vmem:[%s265 + $0xa58] sm:$0xff]
        %v715 = vld [vmem:[%s265 + $0xa60] sm:$0xff]
        %v716 = vld [vmem:[%s265 + $0xa68] sm:$0xff]
        %v717 = vld [vmem:[%s265 + $0xa70] sm:$0xff]
        %v718 = vld [vmem:[%s265 + $0xa78] sm:$0xff]
        %v719 = vld [vmem:[%s265 + $0xa80] sm:$0xff]
        %v720 = vld [vmem:[%s265 + $0xa88] sm:$0xff]
        %v721 = vld [vmem:[%s265 + $0xa90] sm:$0xff]
        %v722 = vld [vmem:[%s265 + $0xa98] sm:$0xff]
        %v723 = vld [vmem:[%s265 + $0xaa0] sm:$0xff]
        %v724 = vld [vmem:[%s265 + $0xaa8] sm:$0xff]
        %v725 = vld [vmem:[%s265 + $0xab0] sm:$0xff]
        %v726 = vld [vmem:[%s265 + $0xab8] sm:$0xff]
        %v727 = vld [vmem:[%s265 + $0xac0] sm:$0xff]
        %v728 = vld [vmem:[%s265 + $0xac8] sm:$0xff]
        %v729 = vld [vmem:[%s265 + $0xad0] sm:$0xff]
        %v730 = vld [vmem:[%s265 + $0xad8] sm:$0xff]
        %v731 = vld [vmem:[%s265 + $0xae0] sm:$0xff]
        %v732 = vld [vmem:[%s265 + $0xae8] sm:$0xff]
        %v733 = vld [vmem:[%s265 + $0xaf0] sm:$0xff]
        %v734 = vld [vmem:[%s265 + $0xaf8] sm:$0xff]
        %v735 = vld [vmem:[%s265 + $0xb00] sm:$0xff]
        %v736 = vld [vmem:[%s265 + $0xb08] sm:$0xff]
        %v737 = vld [vmem:[%s265 + $0xb10] sm:$0xff]
        %v738 = vld [vmem:[%s265 + $0xb18] sm:$0xff]
        %v739 = vld [vmem:[%s265 + $0xb20] sm:$0xff]
        %v740 = vld [vmem:[%s265 + $0xb28] sm:$0xff]
        %v741 = vld [vmem:[%s265 + $0xb30] sm:$0xff]
        %v742 = vld [vmem:[%s265 + $0xb38] sm:$0xff]
        %v743 = vld [vmem:[%s265 + $0xb40] sm:$0xff]
        %v744 = vld [vmem:[%s265 + $0xb48] sm:$0xff]
        %v745 = vld [vmem:[%s265 + $0xb50] sm:$0xff]
        %v746 = vld [vmem:[%s265 + $0xb58] sm:$0xff]
        %v747 = vld [vmem:[%s265 + $0xb60] sm:$0xff]
        %v748 = vld [vmem:[%s265 + $0xb68] sm:$0xff]
        %v749 = vld [vmem:[%s265 + $0xb70] sm:$0xff]
        %v750 = vld [vmem:[%s265 + $0xb78] sm:$0xff]
        %v751 = vld [vmem:[%s265 + $0xb80] sm:$0xff]
        %v752 = vld [vmem:[%s265 + $0xb88] sm:$0xff]
        %v753 = vld [vmem:[%s265 + $0xb90] sm:$0xff]
        %v754 = vld [vmem:[%s265 + $0xb98] sm:$0xff]
        %v755 = vld [vmem:[%s265 + $0xba0] sm:$0xff]
        %v756 = vld [vmem:[%s265 + $0xba8] sm:$0xff]
        %v757 = vld [vmem:[%s265 + $0xbb0] sm:$0xff]
        %v758 = vld [vmem:[%s265 + $0xbb8] sm:$0xff]
        %v759 = vld [vmem:[%s265 + $0xbc0] sm:$0xff]
        %v760 = vld [vmem:[%s265 + $0xbc8] sm:$0xff]
        %v761 = vld [vmem:[%s265 + $0xbd0] sm:$0xff]
        %v762 = vld [vmem:[%s265 + $0xbd8] sm:$0xff]
        %v763 = vld [vmem:[%s265 + $0xbe0] sm:$0xff]
        %v764 = vld [vmem:[%s265 + $0xbe8] sm:$0xff]
        %v765 = vld [vmem:[%s265 + $0xbf0] sm:$0xff]
        %v766 = vld [vmem:[%s265 + $0xbf8] sm:$0xff]
        %v767 = vld [vmem:[%s265 + $0xc00] sm:$0xff]
        %v768 = vld [vmem:[%s265 + $0xc08] sm:$0xff]
        %v769 = vld [vmem:[%s265 + $0xc10] sm:$0xff]
        %v770 = vld [vmem:[%s265 + $0xc18] sm:$0xff]
        %v771 = vld [vmem:[%s265 + $0xc20] sm:$0xff]
        %v772 = vld [vmem:[%s265 + $0xc28] sm:$0xff]
        %v773 = vld [vmem:[%s265 + $0xc30] sm:$0xff]
        %v774 = vld [vmem:[%s265 + $0xc38] sm:$0xff]
        %v775 = vld [vmem:[%s265 + $0xc40] sm:$0xff]
        %v776 = vld [vmem:[%s265 + $0xc48] sm:$0xff]
        %v777 = vld [vmem:[%s265 + $0xc50] sm:$0xff]
        %v778 = vld [vmem:[%s265 + $0xc58] sm:$0xff]
        %v779 = vld [vmem:[%s265 + $0xc60] sm:$0xff]
        %v780 = vld [vmem:[%s265 + $0xc68] sm:$0xff]
        %v781 = vld [vmem:[%s265 + $0xc70] sm:$0xff]
        %v782 = vld [vmem:[%s265 + $0xc78] sm:$0xff]
        %v783 = vld [vmem:[%s265 + $0xc80] sm:$0xff]
        %v784 = vld [vmem:[%s265 + $0xc88] sm:$0xff]
        %v785 = vld [vmem:[%s265 + $0xc90] sm:$0xff]
        %v786 = vld [vmem:[%s265 + $0xc98] sm:$0xff]
        %v787 = vld [vmem:[%s265 + $0xca0] sm:$0xff]
        %v788 = vld [vmem:[%s265 + $0xca8] sm:$0xff]
        %v789 = vld [vmem:[%s265 + $0xcb0] sm:$0xff]
        %v790 = vld [vmem:[%s265 + $0xcb8] sm:$0xff]
        %v791 = vld [vmem:[%s265 + $0xcc0] sm:$0xff]
        %v792 = vld [vmem:[%s265 + $0xcc8] sm:$0xff]
        %v793 = vld [vmem:[%s265 + $0xcd0] sm:$0xff]
        %v794 = vld [vmem:[%s265 + $0xcd8] sm:$0xff]
        %v795 = vld [vmem:[%s265 + $0xce0] sm:$0xff]
        %v796 = vld [vmem:[%s265 + $0xce8] sm:$0xff]
        %v797 = vld [vmem:[%s265 + $0xcf0] sm:$0xff]
        %v798 = vld [vmem:[%s265 + $0xcf8] sm:$0xff]
        %v799 = vld [vmem:[%s265 + $0xd00] sm:$0xff]
        %v800 = vld [vmem:[%s265 + $0xd08] sm:$0xff]
        %v801 = vld [vmem:[%s265 + $0xd10] sm:$0xff]
        %v802 = vld [vmem:[%s265 + $0xd18] sm:$0xff]
        %v803 = vld [vmem:[%s265 + $0xd20] sm:$0xff]
        %v804 = vld [vmem:[%s265 + $0xd28] sm:$0xff]
        %v805 = vld [vmem:[%s265 + $0xd30] sm:$0xff]
        %v806 = vld [vmem:[%s265 + $0xd38] sm:$0xff]
        %v807 = vld [vmem:[%s265 + $0xd40] sm:$0xff]
        %v808 = vld [vmem:[%s265 + $0xd48] sm:$0xff]
        %v809 = vld [vmem:[%s265 + $0xd50] sm:$0xff]
        %v810 = vld [vmem:[%s265 + $0xd58] sm:$0xff]
        %v811 = vld [vmem:[%s265 + $0xd60] sm:$0xff]
        %v812 = vld [vmem:[%s265 + $0xd68] sm:$0xff]
        %v813 = vld [vmem:[%s265 + $0xd70] sm:$0xff]
        %v814 = vld [vmem:[%s265 + $0xd78] sm:$0xff]
        %v815 = vld [vmem:[%s265 + $0xd80] sm:$0xff]
        %v816 = vld [vmem:[%s265 + $0xd88] sm:$0xff]
        %v817 = vld [vmem:[%s265 + $0xd90] sm:$0xff]
        %v818 = vld [vmem:[%s265 + $0xd98] sm:$0xff]
        %v819 = vld [vmem:[%s265 + $0xda0] sm:$0xff]
        %v820 = vld [vmem:[%s265 + $0xda8] sm:$0xff]
        %v821 = vld [vmem:[%s265 + $0xdb0] sm:$0xff]
        %v822 = vld [vmem:[%s265 + $0xdb8] sm:$0xff]
        %v823 = vld [vmem:[%s265 + $0xdc0] sm:$0xff]
        %v824 = vld [vmem:[%s265 + $0xdc8] sm:$0xff]
        %v825 = vld [vmem:[%s265 + $0xdd0] sm:$0xff]
        %v826 = vld [vmem:[%s265 + $0xdd8] sm:$0xff]
        %v827 = vld [vmem:[%s265 + $0xde0] sm:$0xff]
        %v828 = vld [vmem:[%s265 + $0xde8] sm:$0xff]
        %v829 = vld [vmem:[%s265 + $0xdf0] sm:$0xff]
        %v830 = vld [vmem:[%s265 + $0xdf8] sm:$0xff]
        %v831 = vld [vmem:[%s265 + $0xe00] sm:$0xff]
        %v832 = vld [vmem:[%s265 + $0xe08] sm:$0xff]
        %v833 = vld [vmem:[%s265 + $0xe10] sm:$0xff]
        %v834 = vld [vmem:[%s265 + $0xe18] sm:$0xff]
        %v835 = vld [vmem:[%s265 + $0xe20] sm:$0xff]
        %v836 = vld [vmem:[%s265 + $0xe28] sm:$0xff]
        %v837 = vld [vmem:[%s265 + $0xe30] sm:$0xff]
        %v838 = vld [vmem:[%s265 + $0xe38] sm:$0xff]
        %v839 = vld [vmem:[%s265 + $0xe40] sm:$0xff]
        %v840 = vld [vmem:[%s265 + $0xe48] sm:$0xff]
        %v841 = vld [vmem:[%s265 + $0xe50] sm:$0xff]
        %v842 = vld [vmem:[%s265 + $0xe58] sm:$0xff]
        %v843 = vld [vmem:[%s265 + $0xe60] sm:$0xff]
        %v844 = vld [vmem:[%s265 + $0xe68] sm:$0xff]
        %v845 = vld [vmem:[%s265 + $0xe70] sm:$0xff]
        %v846 = vld [vmem:[%s265 + $0xe78] sm:$0xff]
        %v847 = vld [vmem:[%s265 + $0xe80] sm:$0xff]
        %v848 = vld [vmem:[%s265 + $0xe88] sm:$0xff]
        %v849 = vld [vmem:[%s265 + $0xe90] sm:$0xff]
        %v850 = vld [vmem:[%s265 + $0xe98] sm:$0xff]
        %v851 = vld [vmem:[%s265 + $0xea0] sm:$0xff]
        %v852 = vld [vmem:[%s265 + $0xea8] sm:$0xff]
        %v853 = vld [vmem:[%s265 + $0xeb0] sm:$0xff]
        %v854 = vld [vmem:[%s265 + $0xeb8] sm:$0xff]
        %v855 = vld [vmem:[%s265 + $0xec0] sm:$0xff]
        %v856 = vld [vmem:[%s265 + $0xec8] sm:$0xff]
        %v857 = vld [vmem:[%s265 + $0xed0] sm:$0xff]
        %v858 = vld [vmem:[%s265 + $0xed8] sm:$0xff]
        %v859 = vld [vmem:[%s265 + $0xee0] sm:$0xff]
        %v860 = vld [vmem:[%s265 + $0xee8] sm:$0xff]
        %v861 = vld [vmem:[%s265 + $0xef0] sm:$0xff]
        %v862 = vld [vmem:[%s265 + $0xef8] sm:$0xff]
        %v863 = vld [vmem:[%s265 + $0xf00] sm:$0xff]
        %v864 = vld [vmem:[%s265 + $0xf08] sm:$0xff]
        %v865 = vld [vmem:[%s265 + $0xf10] sm:$0xff]
        %v866 = vld [vmem:[%s265 + $0xf18] sm:$0xff]
        %v867 = vld [vmem:[%s265 + $0xf20] sm:$0xff]
        %v868 = vld [vmem:[%s265 + $0xf28] sm:$0xff]
        %v869 = vld [vmem:[%s265 + $0xf30] sm:$0xff]
        %v870 = vld [vmem:[%s265 + $0xf38] sm:$0xff]
        %v871 = vld [vmem:[%s265 + $0xf40] sm:$0xff]
        %v872 = vld [vmem:[%s265 + $0xf48] sm:$0xff]
        %v873 = vld [vmem:[%s265 + $0xf50] sm:$0xff]
        %v874 = vld [vmem:[%s265 + $0xf58] sm:$0xff]
        %v875 = vld [vmem:[%s265 + $0xf60] sm:$0xff]
        %v876 = vld [vmem:[%s265 + $0xf68] sm:$0xff]
        %v877 = vld [vmem:[%s265 + $0xf70] sm:$0xff]
        %v878 = vld [vmem:[%s265 + $0xf78] sm:$0xff]
        %v879 = vld [vmem:[%s265 + $0xf80] sm:$0xff]
        %v880 = vld [vmem:[%s265 + $0xf88] sm:$0xff]
        %v881 = vld [vmem:[%s265 + $0xf90] sm:$0xff]
        %v882 = vld [vmem:[%s265 + $0xf98] sm:$0xff]
        %v883 = vld [vmem:[%s265 + $0xfa0] sm:$0xff]
        %v884 = vld [vmem:[%s265 + $0xfa8] sm:$0xff]
        %v885 = vld [vmem:[%s265 + $0xfb0] sm:$0xff]
        %v886 = vld [vmem:[%s265 + $0xfb8] sm:$0xff]
        %v887 = vld [vmem:[%s265 + $0xfc0] sm:$0xff]
        %v888 = vld [vmem:[%s265 + $0xfc8] sm:$0xff]
        %v889 = vld [vmem:[%s265 + $0xfd0] sm:$0xff]
        %v890 = vld [vmem:[%s265 + $0xfd8] sm:$0xff]
        %v891 = vld [vmem:[%s265 + $0xfe0] sm:$0xff]
        %v892 = vld [vmem:[%s265 + $0xfe8] sm:$0xff]
        %v893 = vld [vmem:[%s265 + $0xff0] sm:$0xff]
        %v894 = vld [vmem:[%s265 + $0xff8] sm:$0xff]
        %v895 = vld [vmem:[%s275] sm:$0xf]
        %v897 = vperm.slane %v895, 0
        %v898 = vperm.slane %v895, 1
        %v899 = vperm.slane %v895, 2
        %v900 = vperm.slane %v895, 3
        %v1417 = vunpack.c.l.b16 %v383
        %v1418 = vunpack.c.h.b16 %v383
        %v1419 = vunpack.c.l.b16 %v384
        %v1420 = vunpack.c.h.b16 %v384
        %v1421 = vunpack.c.l.b16 %v385
        %v1422 = vunpack.c.h.b16 %v385
        %v1423 = vunpack.c.l.b16 %v386
        %v1424 = vunpack.c.h.b16 %v386
        %v1425 = vunpack.c.l.b16 %v387
        %v1426 = vunpack.c.h.b16 %v387
        %v1427 = vunpack.c.l.b16 %v388
        %v1428 = vunpack.c.h.b16 %v388
        %v1429 = vunpack.c.l.b16 %v389
        %v1430 = vunpack.c.h.b16 %v389
        %v1431 = vunpack.c.l.b16 %v390
        %v1432 = vunpack.c.h.b16 %v390
        %v1433 = vunpack.c.l.b16 %v391
        %v1434 = vunpack.c.h.b16 %v391
        %v1435 = vunpack.c.l.b16 %v392
        %v1436 = vunpack.c.h.b16 %v392
        %v1437 = vunpack.c.l.b16 %v393
        %v1438 = vunpack.c.h.b16 %v393
        %v1439 = vunpack.c.l.b16 %v394
        %v1440 = vunpack.c.h.b16 %v394
        %v1441 = vunpack.c.l.b16 %v395
        %v1442 = vunpack.c.h.b16 %v395
        %v1443 = vunpack.c.l.b16 %v396
        %v1444 = vunpack.c.h.b16 %v396
        %v1445 = vunpack.c.l.b16 %v397
        %v1446 = vunpack.c.h.b16 %v397
        %v1447 = vunpack.c.l.b16 %v398
        %v1448 = vunpack.c.h.b16 %v398
        %v1449 = vunpack.c.l.b16 %v399
        %v1450 = vunpack.c.h.b16 %v399
        %v1451 = vunpack.c.l.b16 %v400
        %v1452 = vunpack.c.h.b16 %v400
        %v1453 = vunpack.c.l.b16 %v401
        %v1454 = vunpack.c.h.b16 %v401
        %v1455 = vunpack.c.l.b16 %v402
        %v1456 = vunpack.c.h.b16 %v402
        %v1457 = vunpack.c.l.b16 %v403
        %v1458 = vunpack.c.h.b16 %v403
        %v1459 = vunpack.c.l.b16 %v404
        %v1460 = vunpack.c.h.b16 %v404
        %v1461 = vunpack.c.l.b16 %v405
        %v1462 = vunpack.c.h.b16 %v405
        %v1463 = vunpack.c.l.b16 %v406
        %v1464 = vunpack.c.h.b16 %v406
        %v1465 = vunpack.c.l.b16 %v407
        %v1466 = vunpack.c.h.b16 %v407
        %v1467 = vunpack.c.l.b16 %v408
        %v1468 = vunpack.c.h.b16 %v408
        %v1469 = vunpack.c.l.b16 %v409
        %v1470 = vunpack.c.h.b16 %v409
        %v1471 = vunpack.c.l.b16 %v410
        %v1472 = vunpack.c.h.b16 %v410
        %v1473 = vunpack.c.l.b16 %v411
        %v1474 = vunpack.c.h.b16 %v411
        %v1475 = vunpack.c.l.b16 %v412
        %v1476 = vunpack.c.h.b16 %v412
        %v1477 = vunpack.c.l.b16 %v413
        %v1478 = vunpack.c.h.b16 %v413
        %v1479 = vunpack.c.l.b16 %v414
        %v1480 = vunpack.c.h.b16 %v414
        %v1481 = vunpack.c.l.b16 %v415
        %v1482 = vunpack.c.h.b16 %v415
        %v1483 = vunpack.c.l.b16 %v416
        %v1484 = vunpack.c.h.b16 %v416
        %v1485 = vunpack.c.l.b16 %v417
        %v1486 = vunpack.c.h.b16 %v417
        %v1487 = vunpack.c.l.b16 %v418
        %v1488 = vunpack.c.h.b16 %v418
        %v1489 = vunpack.c.l.b16 %v419
        %v1490 = vunpack.c.h.b16 %v419
        %v1491 = vunpack.c.l.b16 %v420
        %v1492 = vunpack.c.h.b16 %v420
        %v1493 = vunpack.c.l.b16 %v421
        %v1494 = vunpack.c.h.b16 %v421
        %v1495 = vunpack.c.l.b16 %v422
        %v1496 = vunpack.c.h.b16 %v422
        %v1497 = vunpack.c.l.b16 %v423
        %v1498 = vunpack.c.h.b16 %v423
        %v1499 = vunpack.c.l.b16 %v424
        %v1500 = vunpack.c.h.b16 %v424
        %v1501 = vunpack.c.l.b16 %v425
        %v1502 = vunpack.c.h.b16 %v425
        %v1503 = vunpack.c.l.b16 %v426
        %v1504 = vunpack.c.h.b16 %v426
        %v1505 = vunpack.c.l.b16 %v427
        %v1506 = vunpack.c.h.b16 %v427
        %v1507 = vunpack.c.l.b16 %v428
        %v1508 = vunpack.c.h.b16 %v428
        %v1509 = vunpack.c.l.b16 %v429
        %v1510 = vunpack.c.h.b16 %v429
        %v1511 = vunpack.c.l.b16 %v430
        %v1512 = vunpack.c.h.b16 %v430
        %v1513 = vunpack.c.l.b16 %v431
        %v1514 = vunpack.c.h.b16 %v431
        %v1515 = vunpack.c.l.b16 %v432
        %v1516 = vunpack.c.h.b16 %v432
        %v1517 = vunpack.c.l.b16 %v433
        %v1518 = vunpack.c.h.b16 %v433
        %v1519 = vunpack.c.l.b16 %v434
        %v1520 = vunpack.c.h.b16 %v434
        %v1521 = vunpack.c.l.b16 %v435
        %v1522 = vunpack.c.h.b16 %v435
        %v1523 = vunpack.c.l.b16 %v436
        %v1524 = vunpack.c.h.b16 %v436
        %v1525 = vunpack.c.l.b16 %v437
        %v1526 = vunpack.c.h.b16 %v437
        %v1527 = vunpack.c.l.b16 %v438
        %v1528 = vunpack.c.h.b16 %v438
        %v1529 = vunpack.c.l.b16 %v439
        %v1530 = vunpack.c.h.b16 %v439
        %v1531 = vunpack.c.l.b16 %v440
        %v1532 = vunpack.c.h.b16 %v440
        %v1533 = vunpack.c.l.b16 %v441
        %v1534 = vunpack.c.h.b16 %v441
        %v1535 = vunpack.c.l.b16 %v442
        %v1536 = vunpack.c.h.b16 %v442
        %v1537 = vunpack.c.l.b16 %v443
        %v1538 = vunpack.c.h.b16 %v443
        %v1539 = vunpack.c.l.b16 %v444
        %v1540 = vunpack.c.h.b16 %v444
        %v1541 = vunpack.c.l.b16 %v445
        %v1542 = vunpack.c.h.b16 %v445
        %v1543 = vunpack.c.l.b16 %v446
        %v1544 = vunpack.c.h.b16 %v446
        %v1545 = vunpack.c.l.b16 %v447
        %v1546 = vunpack.c.h.b16 %v447
        %v1547 = vunpack.c.l.b16 %v448
        %v1548 = vunpack.c.h.b16 %v448
        %v1549 = vunpack.c.l.b16 %v449
        %v1550 = vunpack.c.h.b16 %v449
        %v1551 = vunpack.c.l.b16 %v450
        %v1552 = vunpack.c.h.b16 %v450
        %v1553 = vunpack.c.l.b16 %v451
        %v1554 = vunpack.c.h.b16 %v451
        %v1555 = vunpack.c.l.b16 %v452
        %v1556 = vunpack.c.h.b16 %v452
        %v1557 = vunpack.c.l.b16 %v453
        %v1558 = vunpack.c.h.b16 %v453
        %v1559 = vunpack.c.l.b16 %v454
        %v1560 = vunpack.c.h.b16 %v454
        %v1561 = vunpack.c.l.b16 %v455
        %v1562 = vunpack.c.h.b16 %v455
        %v1563 = vunpack.c.l.b16 %v456
        %v1564 = vunpack.c.h.b16 %v456
        %v1565 = vunpack.c.l.b16 %v457
        %v1566 = vunpack.c.h.b16 %v457
        %v1567 = vunpack.c.l.b16 %v458
        %v1568 = vunpack.c.h.b16 %v458
        %v1569 = vunpack.c.l.b16 %v459
        %v1570 = vunpack.c.h.b16 %v459
        %v1571 = vunpack.c.l.b16 %v460
        %v1572 = vunpack.c.h.b16 %v460
        %v1573 = vunpack.c.l.b16 %v461
        %v1574 = vunpack.c.h.b16 %v461
        %v1575 = vunpack.c.l.b16 %v462
        %v1576 = vunpack.c.h.b16 %v462
        %v1577 = vunpack.c.l.b16 %v463
        %v1578 = vunpack.c.h.b16 %v463
        %v1579 = vunpack.c.l.b16 %v464
        %v1580 = vunpack.c.h.b16 %v464
        %v1581 = vunpack.c.l.b16 %v465
        %v1582 = vunpack.c.h.b16 %v465
        %v1583 = vunpack.c.l.b16 %v466
        %v1584 = vunpack.c.h.b16 %v466
        %v1585 = vunpack.c.l.b16 %v467
        %v1586 = vunpack.c.h.b16 %v467
        %v1587 = vunpack.c.l.b16 %v468
        %v1588 = vunpack.c.h.b16 %v468
        %v1589 = vunpack.c.l.b16 %v469
        %v1590 = vunpack.c.h.b16 %v469
        %v1591 = vunpack.c.l.b16 %v470
        %v1592 = vunpack.c.h.b16 %v470
        %v1593 = vunpack.c.l.b16 %v471
        %v1594 = vunpack.c.h.b16 %v471
        %v1595 = vunpack.c.l.b16 %v472
        %v1596 = vunpack.c.h.b16 %v472
        %v1597 = vunpack.c.l.b16 %v473
        %v1598 = vunpack.c.h.b16 %v473
        %v1599 = vunpack.c.l.b16 %v474
        %v1600 = vunpack.c.h.b16 %v474
        %v1601 = vunpack.c.l.b16 %v475
        %v1602 = vunpack.c.h.b16 %v475
        %v1603 = vunpack.c.l.b16 %v476
        %v1604 = vunpack.c.h.b16 %v476
        %v1605 = vunpack.c.l.b16 %v477
        %v1606 = vunpack.c.h.b16 %v477
        %v1607 = vunpack.c.l.b16 %v478
        %v1608 = vunpack.c.h.b16 %v478
        %v1609 = vunpack.c.l.b16 %v479
        %v1610 = vunpack.c.h.b16 %v479
        %v1611 = vunpack.c.l.b16 %v480
        %v1612 = vunpack.c.h.b16 %v480
        %v1613 = vunpack.c.l.b16 %v481
        %v1614 = vunpack.c.h.b16 %v481
        %v1615 = vunpack.c.l.b16 %v482
        %v1616 = vunpack.c.h.b16 %v482
        %v1617 = vunpack.c.l.b16 %v483
        %v1618 = vunpack.c.h.b16 %v483
        %v1619 = vunpack.c.l.b16 %v484
        %v1620 = vunpack.c.h.b16 %v484
        %v1621 = vunpack.c.l.b16 %v485
        %v1622 = vunpack.c.h.b16 %v485
        %v1623 = vunpack.c.l.b16 %v486
        %v1624 = vunpack.c.h.b16 %v486
        %v1625 = vunpack.c.l.b16 %v487
        %v1626 = vunpack.c.h.b16 %v487
        %v1627 = vunpack.c.l.b16 %v488
        %v1628 = vunpack.c.h.b16 %v488
        %v1629 = vunpack.c.l.b16 %v489
        %v1630 = vunpack.c.h.b16 %v489
        %v1631 = vunpack.c.l.b16 %v490
        %v1632 = vunpack.c.h.b16 %v490
        %v1633 = vunpack.c.l.b16 %v491
        %v1634 = vunpack.c.h.b16 %v491
        %v1635 = vunpack.c.l.b16 %v492
        %v1636 = vunpack.c.h.b16 %v492
        %v1637 = vunpack.c.l.b16 %v493
        %v1638 = vunpack.c.h.b16 %v493
        %v1639 = vunpack.c.l.b16 %v494
        %v1640 = vunpack.c.h.b16 %v494
        %v1641 = vunpack.c.l.b16 %v495
        %v1642 = vunpack.c.h.b16 %v495
        %v1643 = vunpack.c.l.b16 %v496
        %v1644 = vunpack.c.h.b16 %v496
        %v1645 = vunpack.c.l.b16 %v497
        %v1646 = vunpack.c.h.b16 %v497
        %v1647 = vunpack.c.l.b16 %v498
        %v1648 = vunpack.c.h.b16 %v498
        %v1649 = vunpack.c.l.b16 %v499
        %v1650 = vunpack.c.h.b16 %v499
        %v1651 = vunpack.c.l.b16 %v500
        %v1652 = vunpack.c.h.b16 %v500
        %v1653 = vunpack.c.l.b16 %v501
        %v1654 = vunpack.c.h.b16 %v501
        %v1655 = vunpack.c.l.b16 %v502
        %v1656 = vunpack.c.h.b16 %v502
        %v1657 = vunpack.c.l.b16 %v503
        %v1658 = vunpack.c.h.b16 %v503
        %v1659 = vunpack.c.l.b16 %v504
        %v1660 = vunpack.c.h.b16 %v504
        %v1661 = vunpack.c.l.b16 %v505
        %v1662 = vunpack.c.h.b16 %v505
        %v1663 = vunpack.c.l.b16 %v506
        %v1664 = vunpack.c.h.b16 %v506
        %v1665 = vunpack.c.l.b16 %v507
        %v1666 = vunpack.c.h.b16 %v507
        %v1667 = vunpack.c.l.b16 %v508
        %v1668 = vunpack.c.h.b16 %v508
        %v1669 = vunpack.c.l.b16 %v509
        %v1670 = vunpack.c.h.b16 %v509
        %v1671 = vunpack.c.l.b16 %v510
        %v1672 = vunpack.c.h.b16 %v510
        %v1673 = vunpack.c.l.b16 %v511
        %v1674 = vunpack.c.h.b16 %v511
        %v1675 = vunpack.c.l.b16 %v512
        %v1676 = vunpack.c.h.b16 %v512
        %v1677 = vunpack.c.l.b16 %v513
        %v1678 = vunpack.c.h.b16 %v513
        %v1679 = vunpack.c.l.b16 %v514
        %v1680 = vunpack.c.h.b16 %v514
        %v1681 = vunpack.c.l.b16 %v515
        %v1682 = vunpack.c.h.b16 %v515
        %v1683 = vunpack.c.l.b16 %v516
        %v1684 = vunpack.c.h.b16 %v516
        %v1685 = vunpack.c.l.b16 %v517
        %v1686 = vunpack.c.h.b16 %v517
        %v1687 = vunpack.c.l.b16 %v518
        %v1688 = vunpack.c.h.b16 %v518
        %v1689 = vunpack.c.l.b16 %v519
        %v1690 = vunpack.c.h.b16 %v519
        %v1691 = vunpack.c.l.b16 %v520
        %v1692 = vunpack.c.h.b16 %v520
        %v1693 = vunpack.c.l.b16 %v521
        %v1694 = vunpack.c.h.b16 %v521
        %v1695 = vunpack.c.l.b16 %v522
        %v1696 = vunpack.c.h.b16 %v522
        %v1697 = vunpack.c.l.b16 %v523
        %v1698 = vunpack.c.h.b16 %v523
        %v1699 = vunpack.c.l.b16 %v524
        %v1700 = vunpack.c.h.b16 %v524
        %v1701 = vunpack.c.l.b16 %v525
        %v1702 = vunpack.c.h.b16 %v525
        %v1703 = vunpack.c.l.b16 %v526
        %v1704 = vunpack.c.h.b16 %v526
        %v1705 = vunpack.c.l.b16 %v527
        %v1706 = vunpack.c.h.b16 %v527
        %v1707 = vunpack.c.l.b16 %v528
        %v1708 = vunpack.c.h.b16 %v528
        %v1709 = vunpack.c.l.b16 %v529
        %v1710 = vunpack.c.h.b16 %v529
        %v1711 = vunpack.c.l.b16 %v530
        %v1712 = vunpack.c.h.b16 %v530
        %v1713 = vunpack.c.l.b16 %v531
        %v1714 = vunpack.c.h.b16 %v531
        %v1715 = vunpack.c.l.b16 %v532
        %v1716 = vunpack.c.h.b16 %v532
        %v1717 = vunpack.c.l.b16 %v533
        %v1718 = vunpack.c.h.b16 %v533
        %v1719 = vunpack.c.l.b16 %v534
        %v1720 = vunpack.c.h.b16 %v534
        %v1721 = vunpack.c.l.b16 %v535
        %v1722 = vunpack.c.h.b16 %v535
        %v1723 = vunpack.c.l.b16 %v536
        %v1724 = vunpack.c.h.b16 %v536
        %v1725 = vunpack.c.l.b16 %v537
        %v1726 = vunpack.c.h.b16 %v537
        %v1727 = vunpack.c.l.b16 %v538
        %v1728 = vunpack.c.h.b16 %v538
        %v1729 = vunpack.c.l.b16 %v539
        %v1730 = vunpack.c.h.b16 %v539
        %v1731 = vunpack.c.l.b16 %v540
        %v1732 = vunpack.c.h.b16 %v540
        %v1733 = vunpack.c.l.b16 %v541
        %v1734 = vunpack.c.h.b16 %v541
        %v1735 = vunpack.c.l.b16 %v542
        %v1736 = vunpack.c.h.b16 %v542
        %v1737 = vunpack.c.l.b16 %v543
        %v1738 = vunpack.c.h.b16 %v543
        %v1739 = vunpack.c.l.b16 %v544
        %v1740 = vunpack.c.h.b16 %v544
        %v1741 = vunpack.c.l.b16 %v545
        %v1742 = vunpack.c.h.b16 %v545
        %v1743 = vunpack.c.l.b16 %v546
        %v1744 = vunpack.c.h.b16 %v546
        %v1745 = vunpack.c.l.b16 %v547
        %v1746 = vunpack.c.h.b16 %v547
        %v1747 = vunpack.c.l.b16 %v548
        %v1748 = vunpack.c.h.b16 %v548
        %v1749 = vunpack.c.l.b16 %v549
        %v1750 = vunpack.c.h.b16 %v549
        %v1751 = vunpack.c.l.b16 %v550
        %v1752 = vunpack.c.h.b16 %v550
        %v1753 = vunpack.c.l.b16 %v551
        %v1754 = vunpack.c.h.b16 %v551
        %v1755 = vunpack.c.l.b16 %v552
        %v1756 = vunpack.c.h.b16 %v552
        %v1757 = vunpack.c.l.b16 %v553
        %v1758 = vunpack.c.h.b16 %v553
        %v1759 = vunpack.c.l.b16 %v554
        %v1760 = vunpack.c.h.b16 %v554
        %v1761 = vunpack.c.l.b16 %v555
        %v1762 = vunpack.c.h.b16 %v555
        %v1763 = vunpack.c.l.b16 %v556
        %v1764 = vunpack.c.h.b16 %v556
        %v1765 = vunpack.c.l.b16 %v557
        %v1766 = vunpack.c.h.b16 %v557
        %v1767 = vunpack.c.l.b16 %v558
        %v1768 = vunpack.c.h.b16 %v558
        %v1769 = vunpack.c.l.b16 %v559
        %v1770 = vunpack.c.h.b16 %v559
        %v1771 = vunpack.c.l.b16 %v560
        %v1772 = vunpack.c.h.b16 %v560
        %v1773 = vunpack.c.l.b16 %v561
        %v1774 = vunpack.c.h.b16 %v561
        %v1775 = vunpack.c.l.b16 %v562
        %v1776 = vunpack.c.h.b16 %v562
        %v1777 = vunpack.c.l.b16 %v563
        %v1778 = vunpack.c.h.b16 %v563
        %v1779 = vunpack.c.l.b16 %v564
        %v1780 = vunpack.c.h.b16 %v564
        %v1781 = vunpack.c.l.b16 %v565
        %v1782 = vunpack.c.h.b16 %v565
        %v1783 = vunpack.c.l.b16 %v566
        %v1784 = vunpack.c.h.b16 %v566
        %v1785 = vunpack.c.l.b16 %v567
        %v1786 = vunpack.c.h.b16 %v567
        %v1787 = vunpack.c.l.b16 %v568
        %v1788 = vunpack.c.h.b16 %v568
        %v1789 = vunpack.c.l.b16 %v569
        %v1790 = vunpack.c.h.b16 %v569
        %v1791 = vunpack.c.l.b16 %v570
        %v1792 = vunpack.c.h.b16 %v570
        %v1793 = vunpack.c.l.b16 %v571
        %v1794 = vunpack.c.h.b16 %v571
        %v1795 = vunpack.c.l.b16 %v572
        %v1796 = vunpack.c.h.b16 %v572
        %v1797 = vunpack.c.l.b16 %v573
        %v1798 = vunpack.c.h.b16 %v573
        %v1799 = vunpack.c.l.b16 %v574
        %v1800 = vunpack.c.h.b16 %v574
        %v1801 = vunpack.c.l.b16 %v575
        %v1802 = vunpack.c.h.b16 %v575
        %v1803 = vunpack.c.l.b16 %v576
        %v1804 = vunpack.c.h.b16 %v576
        %v1805 = vunpack.c.l.b16 %v577
        %v1806 = vunpack.c.h.b16 %v577
        %v1807 = vunpack.c.l.b16 %v578
        %v1808 = vunpack.c.h.b16 %v578
        %v1809 = vunpack.c.l.b16 %v579
        %v1810 = vunpack.c.h.b16 %v579
        %v1811 = vunpack.c.l.b16 %v580
        %v1812 = vunpack.c.h.b16 %v580
        %v1813 = vunpack.c.l.b16 %v581
        %v1814 = vunpack.c.h.b16 %v581
        %v1815 = vunpack.c.l.b16 %v582
        %v1816 = vunpack.c.h.b16 %v582
        %v1817 = vunpack.c.l.b16 %v583
        %v1818 = vunpack.c.h.b16 %v583
        %v1819 = vunpack.c.l.b16 %v584
        %v1820 = vunpack.c.h.b16 %v584
        %v1821 = vunpack.c.l.b16 %v585
        %v1822 = vunpack.c.h.b16 %v585
        %v1823 = vunpack.c.l.b16 %v586
        %v1824 = vunpack.c.h.b16 %v586
        %v1825 = vunpack.c.l.b16 %v587
        %v1826 = vunpack.c.h.b16 %v587
        %v1827 = vunpack.c.l.b16 %v588
        %v1828 = vunpack.c.h.b16 %v588
        %v1829 = vunpack.c.l.b16 %v589
        %v1830 = vunpack.c.h.b16 %v589
        %v1831 = vunpack.c.l.b16 %v590
        %v1832 = vunpack.c.h.b16 %v590
        %v1833 = vunpack.c.l.b16 %v591
        %v1834 = vunpack.c.h.b16 %v591
        %v1835 = vunpack.c.l.b16 %v592
        %v1836 = vunpack.c.h.b16 %v592
        %v1837 = vunpack.c.l.b16 %v593
        %v1838 = vunpack.c.h.b16 %v593
        %v1839 = vunpack.c.l.b16 %v594
        %v1840 = vunpack.c.h.b16 %v594
        %v1841 = vunpack.c.l.b16 %v595
        %v1842 = vunpack.c.h.b16 %v595
        %v1843 = vunpack.c.l.b16 %v596
        %v1844 = vunpack.c.h.b16 %v596
        %v1845 = vunpack.c.l.b16 %v597
        %v1846 = vunpack.c.h.b16 %v597
        %v1847 = vunpack.c.l.b16 %v598
        %v1848 = vunpack.c.h.b16 %v598
        %v1849 = vunpack.c.l.b16 %v599
        %v1850 = vunpack.c.h.b16 %v599
        %v1851 = vunpack.c.l.b16 %v600
        %v1852 = vunpack.c.h.b16 %v600
        %v1853 = vunpack.c.l.b16 %v601
        %v1854 = vunpack.c.h.b16 %v601
        %v1855 = vunpack.c.l.b16 %v602
        %v1856 = vunpack.c.h.b16 %v602
        %v1857 = vunpack.c.l.b16 %v603
        %v1858 = vunpack.c.h.b16 %v603
        %v1859 = vunpack.c.l.b16 %v604
        %v1860 = vunpack.c.h.b16 %v604
        %v1861 = vunpack.c.l.b16 %v605
        %v1862 = vunpack.c.h.b16 %v605
        %v1863 = vunpack.c.l.b16 %v606
        %v1864 = vunpack.c.h.b16 %v606
        %v1865 = vunpack.c.l.b16 %v607
        %v1866 = vunpack.c.h.b16 %v607
        %v1867 = vunpack.c.l.b16 %v608
        %v1868 = vunpack.c.h.b16 %v608
        %v1869 = vunpack.c.l.b16 %v609
        %v1870 = vunpack.c.h.b16 %v609
        %v1871 = vunpack.c.l.b16 %v610
        %v1872 = vunpack.c.h.b16 %v610
        %v1873 = vunpack.c.l.b16 %v611
        %v1874 = vunpack.c.h.b16 %v611
        %v1875 = vunpack.c.l.b16 %v612
        %v1876 = vunpack.c.h.b16 %v612
        %v1877 = vunpack.c.l.b16 %v613
        %v1878 = vunpack.c.h.b16 %v613
        %v1879 = vunpack.c.l.b16 %v614
        %v1880 = vunpack.c.h.b16 %v614
        %v1881 = vunpack.c.l.b16 %v615
        %v1882 = vunpack.c.h.b16 %v615
        %v1883 = vunpack.c.l.b16 %v616
        %v1884 = vunpack.c.h.b16 %v616
        %v1885 = vunpack.c.l.b16 %v617
        %v1886 = vunpack.c.h.b16 %v617
        %v1887 = vunpack.c.l.b16 %v618
        %v1888 = vunpack.c.h.b16 %v618
        %v1889 = vunpack.c.l.b16 %v619
        %v1890 = vunpack.c.h.b16 %v619
        %v1891 = vunpack.c.l.b16 %v620
        %v1892 = vunpack.c.h.b16 %v620
        %v1893 = vunpack.c.l.b16 %v621
        %v1894 = vunpack.c.h.b16 %v621
        %v1895 = vunpack.c.l.b16 %v622
        %v1896 = vunpack.c.h.b16 %v622
        %v1897 = vunpack.c.l.b16 %v623
        %v1898 = vunpack.c.h.b16 %v623
        %v1899 = vunpack.c.l.b16 %v624
        %v1900 = vunpack.c.h.b16 %v624
        %v1901 = vunpack.c.l.b16 %v625
        %v1902 = vunpack.c.h.b16 %v625
        %v1903 = vunpack.c.l.b16 %v626
        %v1904 = vunpack.c.h.b16 %v626
        %v1905 = vunpack.c.l.b16 %v627
        %v1906 = vunpack.c.h.b16 %v627
        %v1907 = vunpack.c.l.b16 %v628
        %v1908 = vunpack.c.h.b16 %v628
        %v1909 = vunpack.c.l.b16 %v629
        %v1910 = vunpack.c.h.b16 %v629
        %v1911 = vunpack.c.l.b16 %v630
        %v1912 = vunpack.c.h.b16 %v630
        %v1913 = vunpack.c.l.b16 %v631
        %v1914 = vunpack.c.h.b16 %v631
        %v1915 = vunpack.c.l.b16 %v632
        %v1916 = vunpack.c.h.b16 %v632
        %v1917 = vunpack.c.l.b16 %v633
        %v1918 = vunpack.c.h.b16 %v633
        %v1919 = vunpack.c.l.b16 %v634
        %v1920 = vunpack.c.h.b16 %v634
        %v1921 = vunpack.c.l.b16 %v635
        %v1922 = vunpack.c.h.b16 %v635
        %v1923 = vunpack.c.l.b16 %v636
        %v1924 = vunpack.c.h.b16 %v636
        %v1925 = vunpack.c.l.b16 %v637
        %v1926 = vunpack.c.h.b16 %v637
        %v1927 = vunpack.c.l.b16 %v638
        %v1928 = vunpack.c.h.b16 %v638
        %v1929 = vunpack.c.l.b16 %v639
        %v1930 = vunpack.c.h.b16 %v639
        %v1931 = vunpack.c.l.b16 %v640
        %v1932 = vunpack.c.h.b16 %v640
        %v1933 = vunpack.c.l.b16 %v641
        %v1934 = vunpack.c.h.b16 %v641
        %v1935 = vunpack.c.l.b16 %v642
        %v1936 = vunpack.c.h.b16 %v642
        %v1937 = vunpack.c.l.b16 %v643
        %v1938 = vunpack.c.h.b16 %v643
        %v1939 = vunpack.c.l.b16 %v644
        %v1940 = vunpack.c.h.b16 %v644
        %v1941 = vunpack.c.l.b16 %v645
        %v1942 = vunpack.c.h.b16 %v645
        %v1943 = vunpack.c.l.b16 %v646
        %v1944 = vunpack.c.h.b16 %v646
        %v1945 = vunpack.c.l.b16 %v647
        %v1946 = vunpack.c.h.b16 %v647
        %v1947 = vunpack.c.l.b16 %v648
        %v1948 = vunpack.c.h.b16 %v648
        %v1949 = vunpack.c.l.b16 %v649
        %v1950 = vunpack.c.h.b16 %v649
        %v1951 = vunpack.c.l.b16 %v650
        %v1952 = vunpack.c.h.b16 %v650
        %v1953 = vunpack.c.l.b16 %v651
        %v1954 = vunpack.c.h.b16 %v651
        %v1955 = vunpack.c.l.b16 %v652
        %v1956 = vunpack.c.h.b16 %v652
        %v1957 = vunpack.c.l.b16 %v653
        %v1958 = vunpack.c.h.b16 %v653
        %v1959 = vunpack.c.l.b16 %v654
        %v1960 = vunpack.c.h.b16 %v654
        %v1961 = vunpack.c.l.b16 %v655
        %v1962 = vunpack.c.h.b16 %v655
        %v1963 = vunpack.c.l.b16 %v656
        %v1964 = vunpack.c.h.b16 %v656
        %v1965 = vunpack.c.l.b16 %v657
        %v1966 = vunpack.c.h.b16 %v657
        %v1967 = vunpack.c.l.b16 %v658
        %v1968 = vunpack.c.h.b16 %v658
        %v1969 = vunpack.c.l.b16 %v659
        %v1970 = vunpack.c.h.b16 %v659
        %v1971 = vunpack.c.l.b16 %v660
        %v1972 = vunpack.c.h.b16 %v660
        %v1973 = vunpack.c.l.b16 %v661
        %v1974 = vunpack.c.h.b16 %v661
        %v1975 = vunpack.c.l.b16 %v662
        %v1976 = vunpack.c.h.b16 %v662
        %v1977 = vunpack.c.l.b16 %v663
        %v1978 = vunpack.c.h.b16 %v663
        %v1979 = vunpack.c.l.b16 %v664
        %v1980 = vunpack.c.h.b16 %v664
        %v1981 = vunpack.c.l.b16 %v665
        %v1982 = vunpack.c.h.b16 %v665
        %v1983 = vunpack.c.l.b16 %v666
        %v1984 = vunpack.c.h.b16 %v666
        %v1985 = vunpack.c.l.b16 %v667
        %v1986 = vunpack.c.h.b16 %v667
        %v1987 = vunpack.c.l.b16 %v668
        %v1988 = vunpack.c.h.b16 %v668
        %v1989 = vunpack.c.l.b16 %v669
        %v1990 = vunpack.c.h.b16 %v669
        %v1991 = vunpack.c.l.b16 %v670
        %v1992 = vunpack.c.h.b16 %v670
        %v1993 = vunpack.c.l.b16 %v671
        %v1994 = vunpack.c.h.b16 %v671
        %v1995 = vunpack.c.l.b16 %v672
        %v1996 = vunpack.c.h.b16 %v672
        %v1997 = vunpack.c.l.b16 %v673
        %v1998 = vunpack.c.h.b16 %v673
        %v1999 = vunpack.c.l.b16 %v674
        %v2000 = vunpack.c.h.b16 %v674
        %v2001 = vunpack.c.l.b16 %v675
        %v2002 = vunpack.c.h.b16 %v675
        %v2003 = vunpack.c.l.b16 %v676
        %v2004 = vunpack.c.h.b16 %v676
        %v2005 = vunpack.c.l.b16 %v677
        %v2006 = vunpack.c.h.b16 %v677
        %v2007 = vunpack.c.l.b16 %v678
        %v2008 = vunpack.c.h.b16 %v678
        %v2009 = vunpack.c.l.b16 %v679
        %v2010 = vunpack.c.h.b16 %v679
        %v2011 = vunpack.c.l.b16 %v680
        %v2012 = vunpack.c.h.b16 %v680
        %v2013 = vunpack.c.l.b16 %v681
        %v2014 = vunpack.c.h.b16 %v681
        %v2015 = vunpack.c.l.b16 %v682
        %v2016 = vunpack.c.h.b16 %v682
        %v2017 = vunpack.c.l.b16 %v683
        %v2018 = vunpack.c.h.b16 %v683
        %v2019 = vunpack.c.l.b16 %v684
        %v2020 = vunpack.c.h.b16 %v684
        %v2021 = vunpack.c.l.b16 %v685
        %v2022 = vunpack.c.h.b16 %v685
        %v2023 = vunpack.c.l.b16 %v686
        %v2024 = vunpack.c.h.b16 %v686
        %v2025 = vunpack.c.l.b16 %v687
        %v2026 = vunpack.c.h.b16 %v687
        %v2027 = vunpack.c.l.b16 %v688
        %v2028 = vunpack.c.h.b16 %v688
        %v2029 = vunpack.c.l.b16 %v689
        %v2030 = vunpack.c.h.b16 %v689
        %v2031 = vunpack.c.l.b16 %v690
        %v2032 = vunpack.c.h.b16 %v690
        %v2033 = vunpack.c.l.b16 %v691
        %v2034 = vunpack.c.h.b16 %v691
        %v2035 = vunpack.c.l.b16 %v692
        %v2036 = vunpack.c.h.b16 %v692
        %v2037 = vunpack.c.l.b16 %v693
        %v2038 = vunpack.c.h.b16 %v693
        %v2039 = vunpack.c.l.b16 %v694
        %v2040 = vunpack.c.h.b16 %v694
        %v2041 = vunpack.c.l.b16 %v695
        %v2042 = vunpack.c.h.b16 %v695
        %v2043 = vunpack.c.l.b16 %v696
        %v2044 = vunpack.c.h.b16 %v696
        %v2045 = vunpack.c.l.b16 %v697
        %v2046 = vunpack.c.h.b16 %v697
        %v2047 = vunpack.c.l.b16 %v698
        %v2048 = vunpack.c.h.b16 %v698
        %v2049 = vunpack.c.l.b16 %v699
        %v2050 = vunpack.c.h.b16 %v699
        %v2051 = vunpack.c.l.b16 %v700
        %v2052 = vunpack.c.h.b16 %v700
        %v2053 = vunpack.c.l.b16 %v701
        %v2054 = vunpack.c.h.b16 %v701
        %v2055 = vunpack.c.l.b16 %v702
        %v2056 = vunpack.c.h.b16 %v702
        %v2057 = vunpack.c.l.b16 %v703
        %v2058 = vunpack.c.h.b16 %v703
        %v2059 = vunpack.c.l.b16 %v704
        %v2060 = vunpack.c.h.b16 %v704
        %v2061 = vunpack.c.l.b16 %v705
        %v2062 = vunpack.c.h.b16 %v705
        %v2063 = vunpack.c.l.b16 %v706
        %v2064 = vunpack.c.h.b16 %v706
        %v2065 = vunpack.c.l.b16 %v707
        %v2066 = vunpack.c.h.b16 %v707
        %v2067 = vunpack.c.l.b16 %v708
        %v2068 = vunpack.c.h.b16 %v708
        %v2069 = vunpack.c.l.b16 %v709
        %v2070 = vunpack.c.h.b16 %v709
        %v2071 = vunpack.c.l.b16 %v710
        %v2072 = vunpack.c.h.b16 %v710
        %v2073 = vunpack.c.l.b16 %v711
        %v2074 = vunpack.c.h.b16 %v711
        %v2075 = vunpack.c.l.b16 %v712
        %v2076 = vunpack.c.h.b16 %v712
        %v2077 = vunpack.c.l.b16 %v713
        %v2078 = vunpack.c.h.b16 %v713
        %v2079 = vunpack.c.l.b16 %v714
        %v2080 = vunpack.c.h.b16 %v714
        %v2081 = vunpack.c.l.b16 %v715
        %v2082 = vunpack.c.h.b16 %v715
        %v2083 = vunpack.c.l.b16 %v716
        %v2084 = vunpack.c.h.b16 %v716
        %v2085 = vunpack.c.l.b16 %v717
        %v2086 = vunpack.c.h.b16 %v717
        %v2087 = vunpack.c.l.b16 %v718
        %v2088 = vunpack.c.h.b16 %v718
        %v2089 = vunpack.c.l.b16 %v719
        %v2090 = vunpack.c.h.b16 %v719
        %v2091 = vunpack.c.l.b16 %v720
        %v2092 = vunpack.c.h.b16 %v720
        %v2093 = vunpack.c.l.b16 %v721
        %v2094 = vunpack.c.h.b16 %v721
        %v2095 = vunpack.c.l.b16 %v722
        %v2096 = vunpack.c.h.b16 %v722
        %v2097 = vunpack.c.l.b16 %v723
        %v2098 = vunpack.c.h.b16 %v723
        %v2099 = vunpack.c.l.b16 %v724
        %v2100 = vunpack.c.h.b16 %v724
        %v2101 = vunpack.c.l.b16 %v725
        %v2102 = vunpack.c.h.b16 %v725
        %v2103 = vunpack.c.l.b16 %v726
        %v2104 = vunpack.c.h.b16 %v726
        %v2105 = vunpack.c.l.b16 %v727
        %v2106 = vunpack.c.h.b16 %v727
        %v2107 = vunpack.c.l.b16 %v728
        %v2108 = vunpack.c.h.b16 %v728
        %v2109 = vunpack.c.l.b16 %v729
        %v2110 = vunpack.c.h.b16 %v729
        %v2111 = vunpack.c.l.b16 %v730
        %v2112 = vunpack.c.h.b16 %v730
        %v2113 = vunpack.c.l.b16 %v731
        %v2114 = vunpack.c.h.b16 %v731
        %v2115 = vunpack.c.l.b16 %v732
        %v2116 = vunpack.c.h.b16 %v732
        %v2117 = vunpack.c.l.b16 %v733
        %v2118 = vunpack.c.h.b16 %v733
        %v2119 = vunpack.c.l.b16 %v734
        %v2120 = vunpack.c.h.b16 %v734
        %v2121 = vunpack.c.l.b16 %v735
        %v2122 = vunpack.c.h.b16 %v735
        %v2123 = vunpack.c.l.b16 %v736
        %v2124 = vunpack.c.h.b16 %v736
        %v2125 = vunpack.c.l.b16 %v737
        %v2126 = vunpack.c.h.b16 %v737
        %v2127 = vunpack.c.l.b16 %v738
        %v2128 = vunpack.c.h.b16 %v738
        %v2129 = vunpack.c.l.b16 %v739
        %v2130 = vunpack.c.h.b16 %v739
        %v2131 = vunpack.c.l.b16 %v740
        %v2132 = vunpack.c.h.b16 %v740
        %v2133 = vunpack.c.l.b16 %v741
        %v2134 = vunpack.c.h.b16 %v741
        %v2135 = vunpack.c.l.b16 %v742
        %v2136 = vunpack.c.h.b16 %v742
        %v2137 = vunpack.c.l.b16 %v743
        %v2138 = vunpack.c.h.b16 %v743
        %v2139 = vunpack.c.l.b16 %v744
        %v2140 = vunpack.c.h.b16 %v744
        %v2141 = vunpack.c.l.b16 %v745
        %v2142 = vunpack.c.h.b16 %v745
        %v2143 = vunpack.c.l.b16 %v746
        %v2144 = vunpack.c.h.b16 %v746
        %v2145 = vunpack.c.l.b16 %v747
        %v2146 = vunpack.c.h.b16 %v747
        %v2147 = vunpack.c.l.b16 %v748
        %v2148 = vunpack.c.h.b16 %v748
        %v2149 = vunpack.c.l.b16 %v749
        %v2150 = vunpack.c.h.b16 %v749
        %v2151 = vunpack.c.l.b16 %v750
        %v2152 = vunpack.c.h.b16 %v750
        %v2153 = vunpack.c.l.b16 %v751
        %v2154 = vunpack.c.h.b16 %v751
        %v2155 = vunpack.c.l.b16 %v752
        %v2156 = vunpack.c.h.b16 %v752
        %v2157 = vunpack.c.l.b16 %v753
        %v2158 = vunpack.c.h.b16 %v753
        %v2159 = vunpack.c.l.b16 %v754
        %v2160 = vunpack.c.h.b16 %v754
        %v2161 = vunpack.c.l.b16 %v755
        %v2162 = vunpack.c.h.b16 %v755
        %v2163 = vunpack.c.l.b16 %v756
        %v2164 = vunpack.c.h.b16 %v756
        %v2165 = vunpack.c.l.b16 %v757
        %v2166 = vunpack.c.h.b16 %v757
        %v2167 = vunpack.c.l.b16 %v758
        %v2168 = vunpack.c.h.b16 %v758
        %v2169 = vunpack.c.l.b16 %v759
        %v2170 = vunpack.c.h.b16 %v759
        %v2171 = vunpack.c.l.b16 %v760
        %v2172 = vunpack.c.h.b16 %v760
        %v2173 = vunpack.c.l.b16 %v761
        %v2174 = vunpack.c.h.b16 %v761
        %v2175 = vunpack.c.l.b16 %v762
        %v2176 = vunpack.c.h.b16 %v762
        %v2177 = vunpack.c.l.b16 %v763
        %v2178 = vunpack.c.h.b16 %v763
        %v2179 = vunpack.c.l.b16 %v764
        %v2180 = vunpack.c.h.b16 %v764
        %v2181 = vunpack.c.l.b16 %v765
        %v2182 = vunpack.c.h.b16 %v765
        %v2183 = vunpack.c.l.b16 %v766
        %v2184 = vunpack.c.h.b16 %v766
        %v2185 = vunpack.c.l.b16 %v767
        %v2186 = vunpack.c.h.b16 %v767
        %v2187 = vunpack.c.l.b16 %v768
        %v2188 = vunpack.c.h.b16 %v768
        %v2189 = vunpack.c.l.b16 %v769
        %v2190 = vunpack.c.h.b16 %v769
        %v2191 = vunpack.c.l.b16 %v770
        %v2192 = vunpack.c.h.b16 %v770
        %v2193 = vunpack.c.l.b16 %v771
        %v2194 = vunpack.c.h.b16 %v771
        %v2195 = vunpack.c.l.b16 %v772
        %v2196 = vunpack.c.h.b16 %v772
        %v2197 = vunpack.c.l.b16 %v773
        %v2198 = vunpack.c.h.b16 %v773
        %v2199 = vunpack.c.l.b16 %v774
        %v2200 = vunpack.c.h.b16 %v774
        %v2201 = vunpack.c.l.b16 %v775
        %v2202 = vunpack.c.h.b16 %v775
        %v2203 = vunpack.c.l.b16 %v776
        %v2204 = vunpack.c.h.b16 %v776
        %v2205 = vunpack.c.l.b16 %v777
        %v2206 = vunpack.c.h.b16 %v777
        %v2207 = vunpack.c.l.b16 %v778
        %v2208 = vunpack.c.h.b16 %v778
        %v2209 = vunpack.c.l.b16 %v779
        %v2210 = vunpack.c.h.b16 %v779
        %v2211 = vunpack.c.l.b16 %v780
        %v2212 = vunpack.c.h.b16 %v780
        %v2213 = vunpack.c.l.b16 %v781
        %v2214 = vunpack.c.h.b16 %v781
        %v2215 = vunpack.c.l.b16 %v782
        %v2216 = vunpack.c.h.b16 %v782
        %v2217 = vunpack.c.l.b16 %v783
        %v2218 = vunpack.c.h.b16 %v783
        %v2219 = vunpack.c.l.b16 %v784
        %v2220 = vunpack.c.h.b16 %v784
        %v2221 = vunpack.c.l.b16 %v785
        %v2222 = vunpack.c.h.b16 %v785
        %v2223 = vunpack.c.l.b16 %v786
        %v2224 = vunpack.c.h.b16 %v786
        %v2225 = vunpack.c.l.b16 %v787
        %v2226 = vunpack.c.h.b16 %v787
        %v2227 = vunpack.c.l.b16 %v788
        %v2228 = vunpack.c.h.b16 %v788
        %v2229 = vunpack.c.l.b16 %v789
        %v2230 = vunpack.c.h.b16 %v789
        %v2231 = vunpack.c.l.b16 %v790
        %v2232 = vunpack.c.h.b16 %v790
        %v2233 = vunpack.c.l.b16 %v791
        %v2234 = vunpack.c.h.b16 %v791
        %v2235 = vunpack.c.l.b16 %v792
        %v2236 = vunpack.c.h.b16 %v792
        %v2237 = vunpack.c.l.b16 %v793
        %v2238 = vunpack.c.h.b16 %v793
        %v2239 = vunpack.c.l.b16 %v794
        %v2240 = vunpack.c.h.b16 %v794
        %v2241 = vunpack.c.l.b16 %v795
        %v2242 = vunpack.c.h.b16 %v795
        %v2243 = vunpack.c.l.b16 %v796
        %v2244 = vunpack.c.h.b16 %v796
        %v2245 = vunpack.c.l.b16 %v797
        %v2246 = vunpack.c.h.b16 %v797
        %v2247 = vunpack.c.l.b16 %v798
        %v2248 = vunpack.c.h.b16 %v798
        %v2249 = vunpack.c.l.b16 %v799
        %v2250 = vunpack.c.h.b16 %v799
        %v2251 = vunpack.c.l.b16 %v800
        %v2252 = vunpack.c.h.b16 %v800
        %v2253 = vunpack.c.l.b16 %v801
        %v2254 = vunpack.c.h.b16 %v801
        %v2255 = vunpack.c.l.b16 %v802
        %v2256 = vunpack.c.h.b16 %v802
        %v2257 = vunpack.c.l.b16 %v803
        %v2258 = vunpack.c.h.b16 %v803
        %v2259 = vunpack.c.l.b16 %v804
        %v2260 = vunpack.c.h.b16 %v804
        %v2261 = vunpack.c.l.b16 %v805
        %v2262 = vunpack.c.h.b16 %v805
        %v2263 = vunpack.c.l.b16 %v806
        %v2264 = vunpack.c.h.b16 %v806
        %v2265 = vunpack.c.l.b16 %v807
        %v2266 = vunpack.c.h.b16 %v807
        %v2267 = vunpack.c.l.b16 %v808
        %v2268 = vunpack.c.h.b16 %v808
        %v2269 = vunpack.c.l.b16 %v809
        %v2270 = vunpack.c.h.b16 %v809
        %v2271 = vunpack.c.l.b16 %v810
        %v2272 = vunpack.c.h.b16 %v810
        %v2273 = vunpack.c.l.b16 %v811
        %v2274 = vunpack.c.h.b16 %v811
        %v2275 = vunpack.c.l.b16 %v812
        %v2276 = vunpack.c.h.b16 %v812
        %v2277 = vunpack.c.l.b16 %v813
        %v2278 = vunpack.c.h.b16 %v813
        %v2279 = vunpack.c.l.b16 %v814
        %v2280 = vunpack.c.h.b16 %v814
        %v2281 = vunpack.c.l.b16 %v815
        %v2282 = vunpack.c.h.b16 %v815
        %v2283 = vunpack.c.l.b16 %v816
        %v2284 = vunpack.c.h.b16 %v816
        %v2285 = vunpack.c.l.b16 %v817
        %v2286 = vunpack.c.h.b16 %v817
        %v2287 = vunpack.c.l.b16 %v818
        %v2288 = vunpack.c.h.b16 %v818
        %v2289 = vunpack.c.l.b16 %v819
        %v2290 = vunpack.c.h.b16 %v819
        %v2291 = vunpack.c.l.b16 %v820
        %v2292 = vunpack.c.h.b16 %v820
        %v2293 = vunpack.c.l.b16 %v821
        %v2294 = vunpack.c.h.b16 %v821
        %v2295 = vunpack.c.l.b16 %v822
        %v2296 = vunpack.c.h.b16 %v822
        %v2297 = vunpack.c.l.b16 %v823
        %v2298 = vunpack.c.h.b16 %v823
        %v2299 = vunpack.c.l.b16 %v824
        %v2300 = vunpack.c.h.b16 %v824
        %v2301 = vunpack.c.l.b16 %v825
        %v2302 = vunpack.c.h.b16 %v825
        %v2303 = vunpack.c.l.b16 %v826
        %v2304 = vunpack.c.h.b16 %v826
        %v2305 = vunpack.c.l.b16 %v827
        %v2306 = vunpack.c.h.b16 %v827
        %v2307 = vunpack.c.l.b16 %v828
        %v2308 = vunpack.c.h.b16 %v828
        %v2309 = vunpack.c.l.b16 %v829
        %v2310 = vunpack.c.h.b16 %v829
        %v2311 = vunpack.c.l.b16 %v830
        %v2312 = vunpack.c.h.b16 %v830
        %v2313 = vunpack.c.l.b16 %v831
        %v2314 = vunpack.c.h.b16 %v831
        %v2315 = vunpack.c.l.b16 %v832
        %v2316 = vunpack.c.h.b16 %v832
        %v2317 = vunpack.c.l.b16 %v833
        %v2318 = vunpack.c.h.b16 %v833
        %v2319 = vunpack.c.l.b16 %v834
        %v2320 = vunpack.c.h.b16 %v834
        %v2321 = vunpack.c.l.b16 %v835
        %v2322 = vunpack.c.h.b16 %v835
        %v2323 = vunpack.c.l.b16 %v836
        %v2324 = vunpack.c.h.b16 %v836
        %v2325 = vunpack.c.l.b16 %v837
        %v2326 = vunpack.c.h.b16 %v837
        %v2327 = vunpack.c.l.b16 %v838
        %v2328 = vunpack.c.h.b16 %v838
        %v2329 = vunpack.c.l.b16 %v839
        %v2330 = vunpack.c.h.b16 %v839
        %v2331 = vunpack.c.l.b16 %v840
        %v2332 = vunpack.c.h.b16 %v840
        %v2333 = vunpack.c.l.b16 %v841
        %v2334 = vunpack.c.h.b16 %v841
        %v2335 = vunpack.c.l.b16 %v842
        %v2336 = vunpack.c.h.b16 %v842
        %v2337 = vunpack.c.l.b16 %v843
        %v2338 = vunpack.c.h.b16 %v843
        %v2339 = vunpack.c.l.b16 %v844
        %v2340 = vunpack.c.h.b16 %v844
        %v2341 = vunpack.c.l.b16 %v845
        %v2342 = vunpack.c.h.b16 %v845
        %v2343 = vunpack.c.l.b16 %v846
        %v2344 = vunpack.c.h.b16 %v846
        %v2345 = vunpack.c.l.b16 %v847
        %v2346 = vunpack.c.h.b16 %v847
        %v2347 = vunpack.c.l.b16 %v848
        %v2348 = vunpack.c.h.b16 %v848
        %v2349 = vunpack.c.l.b16 %v849
        %v2350 = vunpack.c.h.b16 %v849
        %v2351 = vunpack.c.l.b16 %v850
        %v2352 = vunpack.c.h.b16 %v850
        %v2353 = vunpack.c.l.b16 %v851
        %v2354 = vunpack.c.h.b16 %v851
        %v2355 = vunpack.c.l.b16 %v852
        %v2356 = vunpack.c.h.b16 %v852
        %v2357 = vunpack.c.l.b16 %v853
        %v2358 = vunpack.c.h.b16 %v853
        %v2359 = vunpack.c.l.b16 %v854
        %v2360 = vunpack.c.h.b16 %v854
        %v2361 = vunpack.c.l.b16 %v855
        %v2362 = vunpack.c.h.b16 %v855
        %v2363 = vunpack.c.l.b16 %v856
        %v2364 = vunpack.c.h.b16 %v856
        %v2365 = vunpack.c.l.b16 %v857
        %v2366 = vunpack.c.h.b16 %v857
        %v2367 = vunpack.c.l.b16 %v858
        %v2368 = vunpack.c.h.b16 %v858
        %v2369 = vunpack.c.l.b16 %v859
        %v2370 = vunpack.c.h.b16 %v859
        %v2371 = vunpack.c.l.b16 %v860
        %v2372 = vunpack.c.h.b16 %v860
        %v2373 = vunpack.c.l.b16 %v861
        %v2374 = vunpack.c.h.b16 %v861
        %v2375 = vunpack.c.l.b16 %v862
        %v2376 = vunpack.c.h.b16 %v862
        %v2377 = vunpack.c.l.b16 %v863
        %v2378 = vunpack.c.h.b16 %v863
        %v2379 = vunpack.c.l.b16 %v864
        %v2380 = vunpack.c.h.b16 %v864
        %v2381 = vunpack.c.l.b16 %v865
        %v2382 = vunpack.c.h.b16 %v865
        %v2383 = vunpack.c.l.b16 %v866
        %v2384 = vunpack.c.h.b16 %v866
        %v2385 = vunpack.c.l.b16 %v867
        %v2386 = vunpack.c.h.b16 %v867
        %v2387 = vunpack.c.l.b16 %v868
        %v2388 = vunpack.c.h.b16 %v868
        %v2389 = vunpack.c.l.b16 %v869
        %v2390 = vunpack.c.h.b16 %v869
        %v2391 = vunpack.c.l.b16 %v870
        %v2392 = vunpack.c.h.b16 %v870
        %v2393 = vunpack.c.l.b16 %v871
        %v2394 = vunpack.c.h.b16 %v871
        %v2395 = vunpack.c.l.b16 %v872
        %v2396 = vunpack.c.h.b16 %v872
        %v2397 = vunpack.c.l.b16 %v873
        %v2398 = vunpack.c.h.b16 %v873
        %v2399 = vunpack.c.l.b16 %v874
        %v2400 = vunpack.c.h.b16 %v874
        %v2401 = vunpack.c.l.b16 %v875
        %v2402 = vunpack.c.h.b16 %v875
        %v2403 = vunpack.c.l.b16 %v876
        %v2404 = vunpack.c.h.b16 %v876
        %v2405 = vunpack.c.l.b16 %v877
        %v2406 = vunpack.c.h.b16 %v877
        %v2407 = vunpack.c.l.b16 %v878
        %v2408 = vunpack.c.h.b16 %v878
        %v2409 = vunpack.c.l.b16 %v879
        %v2410 = vunpack.c.h.b16 %v879
        %v2411 = vunpack.c.l.b16 %v880
        %v2412 = vunpack.c.h.b16 %v880
        %v2413 = vunpack.c.l.b16 %v881
        %v2414 = vunpack.c.h.b16 %v881
        %v2415 = vunpack.c.l.b16 %v882
        %v2416 = vunpack.c.h.b16 %v882
        %v2417 = vunpack.c.l.b16 %v883
        %v2418 = vunpack.c.h.b16 %v883
        %v2419 = vunpack.c.l.b16 %v884
        %v2420 = vunpack.c.h.b16 %v884
        %v2421 = vunpack.c.l.b16 %v885
        %v2422 = vunpack.c.h.b16 %v885
        %v2423 = vunpack.c.l.b16 %v886
        %v2424 = vunpack.c.h.b16 %v886
        %v2425 = vunpack.c.l.b16 %v887
        %v2426 = vunpack.c.h.b16 %v887
        %v2427 = vunpack.c.l.b16 %v888
        %v2428 = vunpack.c.h.b16 %v888
        %v2429 = vunpack.c.l.b16 %v889
        %v2430 = vunpack.c.h.b16 %v889
        %v2431 = vunpack.c.l.b16 %v890
        %v2432 = vunpack.c.h.b16 %v890
        %v2433 = vunpack.c.l.b16 %v891
        %v2434 = vunpack.c.h.b16 %v891
        %v2435 = vunpack.c.l.b16 %v892
        %v2436 = vunpack.c.h.b16 %v892
        %v2437 = vunpack.c.l.b16 %v893
        %v2438 = vunpack.c.h.b16 %v893
        %v2439 = vunpack.c.l.b16 %v894
        %v2440 = vunpack.c.h.b16 %v894
        %v2441 = vpack.c.b16 %v1421, %v1417
        %v2442 = vpack.c.b16 %v1422, %v1418
        %v2443 = vpack.c.b16 %v1423, %v1419
        %v2444 = vpack.c.b16 %v1424, %v1420
        %v2445 = vpack.c.b16 %v1429, %v1425
        %v2446 = vpack.c.b16 %v1430, %v1426
        %v2447 = vpack.c.b16 %v1431, %v1427
        %v2448 = vpack.c.b16 %v1432, %v1428
        %v2449 = vpack.c.b16 %v1437, %v1433
        %v2450 = vpack.c.b16 %v1438, %v1434
        %v2451 = vpack.c.b16 %v1439, %v1435
        %v2452 = vpack.c.b16 %v1440, %v1436
        %v2453 = vpack.c.b16 %v1445, %v1441
        %v2454 = vpack.c.b16 %v1446, %v1442
        %v2455 = vpack.c.b16 %v1447, %v1443
        %v2456 = vpack.c.b16 %v1448, %v1444
        %v2457 = vpack.c.b16 %v1453, %v1449
        %v2458 = vpack.c.b16 %v1454, %v1450
        %v2459 = vpack.c.b16 %v1455, %v1451
        %v2460 = vpack.c.b16 %v1456, %v1452
        %v2461 = vpack.c.b16 %v1461, %v1457
        %v2462 = vpack.c.b16 %v1462, %v1458
        %v2463 = vpack.c.b16 %v1463, %v1459
        %v2464 = vpack.c.b16 %v1464, %v1460
        %v2465 = vpack.c.b16 %v1469, %v1465
        %v2466 = vpack.c.b16 %v1470, %v1466
        %v2467 = vpack.c.b16 %v1471, %v1467
        %v2468 = vpack.c.b16 %v1472, %v1468
        %v2469 = vpack.c.b16 %v1477, %v1473
        %v2470 = vpack.c.b16 %v1478, %v1474
        %v2471 = vpack.c.b16 %v1479, %v1475
        %v2472 = vpack.c.b16 %v1480, %v1476
        %v2473 = vpack.c.b16 %v1485, %v1481
        %v2474 = vpack.c.b16 %v1486, %v1482
        %v2475 = vpack.c.b16 %v1487, %v1483
        %v2476 = vpack.c.b16 %v1488, %v1484
        %v2477 = vpack.c.b16 %v1493, %v1489
        %v2478 = vpack.c.b16 %v1494, %v1490
        %v2479 = vpack.c.b16 %v1495, %v1491
        %v2480 = vpack.c.b16 %v1496, %v1492
        %v2481 = vpack.c.b16 %v1501, %v1497
        %v2482 = vpack.c.b16 %v1502, %v1498
        %v2483 = vpack.c.b16 %v1503, %v1499
        %v2484 = vpack.c.b16 %v1504, %v1500
        %v2485 = vpack.c.b16 %v1509, %v1505
        %v2486 = vpack.c.b16 %v1510, %v1506
        %v2487 = vpack.c.b16 %v1511, %v1507
        %v2488 = vpack.c.b16 %v1512, %v1508
        %v2489 = vpack.c.b16 %v1517, %v1513
        %v2490 = vpack.c.b16 %v1518, %v1514
        %v2491 = vpack.c.b16 %v1519, %v1515
        %v2492 = vpack.c.b16 %v1520, %v1516
        %v2493 = vpack.c.b16 %v1525, %v1521
        %v2494 = vpack.c.b16 %v1526, %v1522
        %v2495 = vpack.c.b16 %v1527, %v1523
        %v2496 = vpack.c.b16 %v1528, %v1524
        %v2497 = vpack.c.b16 %v1533, %v1529
        %v2498 = vpack.c.b16 %v1534, %v1530
        %v2499 = vpack.c.b16 %v1535, %v1531
        %v2500 = vpack.c.b16 %v1536, %v1532
        %v2501 = vpack.c.b16 %v1541, %v1537
        %v2502 = vpack.c.b16 %v1542, %v1538
        %v2503 = vpack.c.b16 %v1543, %v1539
        %v2504 = vpack.c.b16 %v1544, %v1540
        %v2505 = vpack.c.b16 %v1549, %v1545
        %v2506 = vpack.c.b16 %v1550, %v1546
        %v2507 = vpack.c.b16 %v1551, %v1547
        %v2508 = vpack.c.b16 %v1552, %v1548
        %v2509 = vpack.c.b16 %v1557, %v1553
        %v2510 = vpack.c.b16 %v1558, %v1554
        %v2511 = vpack.c.b16 %v1559, %v1555
        %v2512 = vpack.c.b16 %v1560, %v1556
        %v2513 = vpack.c.b16 %v1565, %v1561
        %v2514 = vpack.c.b16 %v1566, %v1562
        %v2515 = vpack.c.b16 %v1567, %v1563
        %v2516 = vpack.c.b16 %v1568, %v1564
        %v2517 = vpack.c.b16 %v1573, %v1569
        %v2518 = vpack.c.b16 %v1574, %v1570
        %v2519 = vpack.c.b16 %v1575, %v1571
        %v2520 = vpack.c.b16 %v1576, %v1572
        %v2521 = vpack.c.b16 %v1581, %v1577
        %v2522 = vpack.c.b16 %v1582, %v1578
        %v2523 = vpack.c.b16 %v1583, %v1579
        %v2524 = vpack.c.b16 %v1584, %v1580
        %v2525 = vpack.c.b16 %v1589, %v1585
        %v2526 = vpack.c.b16 %v1590, %v1586
        %v2527 = vpack.c.b16 %v1591, %v1587
        %v2528 = vpack.c.b16 %v1592, %v1588
        %v2529 = vpack.c.b16 %v1597, %v1593
        %v2530 = vpack.c.b16 %v1598, %v1594
        %v2531 = vpack.c.b16 %v1599, %v1595
        %v2532 = vpack.c.b16 %v1600, %v1596
        %v2533 = vpack.c.b16 %v1605, %v1601
        %v2534 = vpack.c.b16 %v1606, %v1602
        %v2535 = vpack.c.b16 %v1607, %v1603
        %v2536 = vpack.c.b16 %v1608, %v1604
        %v2537 = vpack.c.b16 %v1613, %v1609
        %v2538 = vpack.c.b16 %v1614, %v1610
        %v2539 = vpack.c.b16 %v1615, %v1611
        %v2540 = vpack.c.b16 %v1616, %v1612
        %v2541 = vpack.c.b16 %v1621, %v1617
        %v2542 = vpack.c.b16 %v1622, %v1618
        %v2543 = vpack.c.b16 %v1623, %v1619
        %v2544 = vpack.c.b16 %v1624, %v1620
        %v2545 = vpack.c.b16 %v1629, %v1625
        %v2546 = vpack.c.b16 %v1630, %v1626
        %v2547 = vpack.c.b16 %v1631, %v1627
        %v2548 = vpack.c.b16 %v1632, %v1628
        %v2549 = vpack.c.b16 %v1637, %v1633
        %v2550 = vpack.c.b16 %v1638, %v1634
        %v2551 = vpack.c.b16 %v1639, %v1635
        %v2552 = vpack.c.b16 %v1640, %v1636
        %v2553 = vpack.c.b16 %v1645, %v1641
        %v2554 = vpack.c.b16 %v1646, %v1642
        %v2555 = vpack.c.b16 %v1647, %v1643
        %v2556 = vpack.c.b16 %v1648, %v1644
        %v2557 = vpack.c.b16 %v1653, %v1649
        %v2558 = vpack.c.b16 %v1654, %v1650
        %v2559 = vpack.c.b16 %v1655, %v1651
        %v2560 = vpack.c.b16 %v1656, %v1652
        %v2561 = vpack.c.b16 %v1661, %v1657
        %v2562 = vpack.c.b16 %v1662, %v1658
        %v2563 = vpack.c.b16 %v1663, %v1659
        %v2564 = vpack.c.b16 %v1664, %v1660
        %v2565 = vpack.c.b16 %v1669, %v1665
        %v2566 = vpack.c.b16 %v1670, %v1666
        %v2567 = vpack.c.b16 %v1671, %v1667
        %v2568 = vpack.c.b16 %v1672, %v1668
        %v2569 = vpack.c.b16 %v1677, %v1673
        %v2570 = vpack.c.b16 %v1678, %v1674
        %v2571 = vpack.c.b16 %v1679, %v1675
        %v2572 = vpack.c.b16 %v1680, %v1676
        %v2573 = vpack.c.b16 %v1685, %v1681
        %v2574 = vpack.c.b16 %v1686, %v1682
        %v2575 = vpack.c.b16 %v1687, %v1683
        %v2576 = vpack.c.b16 %v1688, %v1684
        %v2577 = vpack.c.b16 %v1693, %v1689
        %v2578 = vpack.c.b16 %v1694, %v1690
        %v2579 = vpack.c.b16 %v1695, %v1691
        %v2580 = vpack.c.b16 %v1696, %v1692
        %v2581 = vpack.c.b16 %v1701, %v1697
        %v2582 = vpack.c.b16 %v1702, %v1698
        %v2583 = vpack.c.b16 %v1703, %v1699
        %v2584 = vpack.c.b16 %v1704, %v1700
        %v2585 = vpack.c.b16 %v1709, %v1705
        %v2586 = vpack.c.b16 %v1710, %v1706
        %v2587 = vpack.c.b16 %v1711, %v1707
        %v2588 = vpack.c.b16 %v1712, %v1708
        %v2589 = vpack.c.b16 %v1717, %v1713
        %v2590 = vpack.c.b16 %v1718, %v1714
        %v2591 = vpack.c.b16 %v1719, %v1715
        %v2592 = vpack.c.b16 %v1720, %v1716
        %v2593 = vpack.c.b16 %v1725, %v1721
        %v2594 = vpack.c.b16 %v1726, %v1722
        %v2595 = vpack.c.b16 %v1727, %v1723
        %v2596 = vpack.c.b16 %v1728, %v1724
        %v2597 = vpack.c.b16 %v1733, %v1729
        %v2598 = vpack.c.b16 %v1734, %v1730
        %v2599 = vpack.c.b16 %v1735, %v1731
        %v2600 = vpack.c.b16 %v1736, %v1732
        %v2601 = vpack.c.b16 %v1741, %v1737
        %v2602 = vpack.c.b16 %v1742, %v1738
        %v2603 = vpack.c.b16 %v1743, %v1739
        %v2604 = vpack.c.b16 %v1744, %v1740
        %v2605 = vpack.c.b16 %v1749, %v1745
        %v2606 = vpack.c.b16 %v1750, %v1746
        %v2607 = vpack.c.b16 %v1751, %v1747
        %v2608 = vpack.c.b16 %v1752, %v1748
        %v2609 = vpack.c.b16 %v1757, %v1753
        %v2610 = vpack.c.b16 %v1758, %v1754
        %v2611 = vpack.c.b16 %v1759, %v1755
        %v2612 = vpack.c.b16 %v1760, %v1756
        %v2613 = vpack.c.b16 %v1765, %v1761
        %v2614 = vpack.c.b16 %v1766, %v1762
        %v2615 = vpack.c.b16 %v1767, %v1763
        %v2616 = vpack.c.b16 %v1768, %v1764
        %v2617 = vpack.c.b16 %v1773, %v1769
        %v2618 = vpack.c.b16 %v1774, %v1770
        %v2619 = vpack.c.b16 %v1775, %v1771
        %v2620 = vpack.c.b16 %v1776, %v1772
        %v2621 = vpack.c.b16 %v1781, %v1777
        %v2622 = vpack.c.b16 %v1782, %v1778
        %v2623 = vpack.c.b16 %v1783, %v1779
        %v2624 = vpack.c.b16 %v1784, %v1780
        %v2625 = vpack.c.b16 %v1789, %v1785
        %v2626 = vpack.c.b16 %v1790, %v1786
        %v2627 = vpack.c.b16 %v1791, %v1787
        %v2628 = vpack.c.b16 %v1792, %v1788
        %v2629 = vpack.c.b16 %v1797, %v1793
        %v2630 = vpack.c.b16 %v1798, %v1794
        %v2631 = vpack.c.b16 %v1799, %v1795
        %v2632 = vpack.c.b16 %v1800, %v1796
        %v2633 = vpack.c.b16 %v1805, %v1801
        %v2634 = vpack.c.b16 %v1806, %v1802
        %v2635 = vpack.c.b16 %v1807, %v1803
        %v2636 = vpack.c.b16 %v1808, %v1804
        %v2637 = vpack.c.b16 %v1813, %v1809
        %v2638 = vpack.c.b16 %v1814, %v1810
        %v2639 = vpack.c.b16 %v1815, %v1811
        %v2640 = vpack.c.b16 %v1816, %v1812
        %v2641 = vpack.c.b16 %v1821, %v1817
        %v2642 = vpack.c.b16 %v1822, %v1818
        %v2643 = vpack.c.b16 %v1823, %v1819
        %v2644 = vpack.c.b16 %v1824, %v1820
        %v2645 = vpack.c.b16 %v1829, %v1825
        %v2646 = vpack.c.b16 %v1830, %v1826
        %v2647 = vpack.c.b16 %v1831, %v1827
        %v2648 = vpack.c.b16 %v1832, %v1828
        %v2649 = vpack.c.b16 %v1837, %v1833
        %v2650 = vpack.c.b16 %v1838, %v1834
        %v2651 = vpack.c.b16 %v1839, %v1835
        %v2652 = vpack.c.b16 %v1840, %v1836
        %v2653 = vpack.c.b16 %v1845, %v1841
        %v2654 = vpack.c.b16 %v1846, %v1842
        %v2655 = vpack.c.b16 %v1847, %v1843
        %v2656 = vpack.c.b16 %v1848, %v1844
        %v2657 = vpack.c.b16 %v1853, %v1849
        %v2658 = vpack.c.b16 %v1854, %v1850
        %v2659 = vpack.c.b16 %v1855, %v1851
        %v2660 = vpack.c.b16 %v1856, %v1852
        %v2661 = vpack.c.b16 %v1861, %v1857
        %v2662 = vpack.c.b16 %v1862, %v1858
        %v2663 = vpack.c.b16 %v1863, %v1859
        %v2664 = vpack.c.b16 %v1864, %v1860
        %v2665 = vpack.c.b16 %v1869, %v1865
        %v2666 = vpack.c.b16 %v1870, %v1866
        %v2667 = vpack.c.b16 %v1871, %v1867
        %v2668 = vpack.c.b16 %v1872, %v1868
        %v2669 = vpack.c.b16 %v1877, %v1873
        %v2670 = vpack.c.b16 %v1878, %v1874
        %v2671 = vpack.c.b16 %v1879, %v1875
        %v2672 = vpack.c.b16 %v1880, %v1876
        %v2673 = vpack.c.b16 %v1885, %v1881
        %v2674 = vpack.c.b16 %v1886, %v1882
        %v2675 = vpack.c.b16 %v1887, %v1883
        %v2676 = vpack.c.b16 %v1888, %v1884
        %v2677 = vpack.c.b16 %v1893, %v1889
        %v2678 = vpack.c.b16 %v1894, %v1890
        %v2679 = vpack.c.b16 %v1895, %v1891
        %v2680 = vpack.c.b16 %v1896, %v1892
        %v2681 = vpack.c.b16 %v1901, %v1897
        %v2682 = vpack.c.b16 %v1902, %v1898
        %v2683 = vpack.c.b16 %v1903, %v1899
        %v2684 = vpack.c.b16 %v1904, %v1900
        %v2685 = vpack.c.b16 %v1909, %v1905
        %v2686 = vpack.c.b16 %v1910, %v1906
        %v2687 = vpack.c.b16 %v1911, %v1907
        %v2688 = vpack.c.b16 %v1912, %v1908
        %v2689 = vpack.c.b16 %v1917, %v1913
        %v2690 = vpack.c.b16 %v1918, %v1914
        %v2691 = vpack.c.b16 %v1919, %v1915
        %v2692 = vpack.c.b16 %v1920, %v1916
        %v2693 = vpack.c.b16 %v1925, %v1921
        %v2694 = vpack.c.b16 %v1926, %v1922
        %v2695 = vpack.c.b16 %v1927, %v1923
        %v2696 = vpack.c.b16 %v1928, %v1924
        %v2697 = vpack.c.b16 %v1933, %v1929
        %v2698 = vpack.c.b16 %v1934, %v1930
        %v2699 = vpack.c.b16 %v1935, %v1931
        %v2700 = vpack.c.b16 %v1936, %v1932
        %v2701 = vpack.c.b16 %v1941, %v1937
        %v2702 = vpack.c.b16 %v1942, %v1938
        %v2703 = vpack.c.b16 %v1943, %v1939
        %v2704 = vpack.c.b16 %v1944, %v1940
        %v2705 = vpack.c.b16 %v1949, %v1945
        %v2706 = vpack.c.b16 %v1950, %v1946
        %v2707 = vpack.c.b16 %v1951, %v1947
        %v2708 = vpack.c.b16 %v1952, %v1948
        %v2709 = vpack.c.b16 %v1957, %v1953
        %v2710 = vpack.c.b16 %v1958, %v1954
        %v2711 = vpack.c.b16 %v1959, %v1955
        %v2712 = vpack.c.b16 %v1960, %v1956
        %v2713 = vpack.c.b16 %v1965, %v1961
        %v2714 = vpack.c.b16 %v1966, %v1962
        %v2715 = vpack.c.b16 %v1967, %v1963
        %v2716 = vpack.c.b16 %v1968, %v1964
        %v2717 = vpack.c.b16 %v1973, %v1969
        %v2718 = vpack.c.b16 %v1974, %v1970
        %v2719 = vpack.c.b16 %v1975, %v1971
        %v2720 = vpack.c.b16 %v1976, %v1972
        %v2721 = vpack.c.b16 %v1981, %v1977
        %v2722 = vpack.c.b16 %v1982, %v1978
        %v2723 = vpack.c.b16 %v1983, %v1979
        %v2724 = vpack.c.b16 %v1984, %v1980
        %v2725 = vpack.c.b16 %v1989, %v1985
        %v2726 = vpack.c.b16 %v1990, %v1986
        %v2727 = vpack.c.b16 %v1991, %v1987
        %v2728 = vpack.c.b16 %v1992, %v1988
        %v2729 = vpack.c.b16 %v1997, %v1993
        %v2730 = vpack.c.b16 %v1998, %v1994
        %v2731 = vpack.c.b16 %v1999, %v1995
        %v2732 = vpack.c.b16 %v2000, %v1996
        %v2733 = vpack.c.b16 %v2005, %v2001
        %v2734 = vpack.c.b16 %v2006, %v2002
        %v2735 = vpack.c.b16 %v2007, %v2003
        %v2736 = vpack.c.b16 %v2008, %v2004
        %v2737 = vpack.c.b16 %v2013, %v2009
        %v2738 = vpack.c.b16 %v2014, %v2010
        %v2739 = vpack.c.b16 %v2015, %v2011
        %v2740 = vpack.c.b16 %v2016, %v2012
        %v2741 = vpack.c.b16 %v2021, %v2017
        %v2742 = vpack.c.b16 %v2022, %v2018
        %v2743 = vpack.c.b16 %v2023, %v2019
        %v2744 = vpack.c.b16 %v2024, %v2020
        %v2745 = vpack.c.b16 %v2029, %v2025
        %v2746 = vpack.c.b16 %v2030, %v2026
        %v2747 = vpack.c.b16 %v2031, %v2027
        %v2748 = vpack.c.b16 %v2032, %v2028
        %v2749 = vpack.c.b16 %v2037, %v2033
        %v2750 = vpack.c.b16 %v2038, %v2034
        %v2751 = vpack.c.b16 %v2039, %v2035
        %v2752 = vpack.c.b16 %v2040, %v2036
        %v2753 = vpack.c.b16 %v2045, %v2041
        %v2754 = vpack.c.b16 %v2046, %v2042
        %v2755 = vpack.c.b16 %v2047, %v2043
        %v2756 = vpack.c.b16 %v2048, %v2044
        %v2757 = vpack.c.b16 %v2053, %v2049
        %v2758 = vpack.c.b16 %v2054, %v2050
        %v2759 = vpack.c.b16 %v2055, %v2051
        %v2760 = vpack.c.b16 %v2056, %v2052
        %v2761 = vpack.c.b16 %v2061, %v2057
        %v2762 = vpack.c.b16 %v2062, %v2058
        %v2763 = vpack.c.b16 %v2063, %v2059
        %v2764 = vpack.c.b16 %v2064, %v2060
        %v2765 = vpack.c.b16 %v2069, %v2065
        %v2766 = vpack.c.b16 %v2070, %v2066
        %v2767 = vpack.c.b16 %v2071, %v2067
        %v2768 = vpack.c.b16 %v2072, %v2068
        %v2769 = vpack.c.b16 %v2077, %v2073
        %v2770 = vpack.c.b16 %v2078, %v2074
        %v2771 = vpack.c.b16 %v2079, %v2075
        %v2772 = vpack.c.b16 %v2080, %v2076
        %v2773 = vpack.c.b16 %v2085, %v2081
        %v2774 = vpack.c.b16 %v2086, %v2082
        %v2775 = vpack.c.b16 %v2087, %v2083
        %v2776 = vpack.c.b16 %v2088, %v2084
        %v2777 = vpack.c.b16 %v2093, %v2089
        %v2778 = vpack.c.b16 %v2094, %v2090
        %v2779 = vpack.c.b16 %v2095, %v2091
        %v2780 = vpack.c.b16 %v2096, %v2092
        %v2781 = vpack.c.b16 %v2101, %v2097
        %v2782 = vpack.c.b16 %v2102, %v2098
        %v2783 = vpack.c.b16 %v2103, %v2099
        %v2784 = vpack.c.b16 %v2104, %v2100
        %v2785 = vpack.c.b16 %v2109, %v2105
        %v2786 = vpack.c.b16 %v2110, %v2106
        %v2787 = vpack.c.b16 %v2111, %v2107
        %v2788 = vpack.c.b16 %v2112, %v2108
        %v2789 = vpack.c.b16 %v2117, %v2113
        %v2790 = vpack.c.b16 %v2118, %v2114
        %v2791 = vpack.c.b16 %v2119, %v2115
        %v2792 = vpack.c.b16 %v2120, %v2116
        %v2793 = vpack.c.b16 %v2125, %v2121
        %v2794 = vpack.c.b16 %v2126, %v2122
        %v2795 = vpack.c.b16 %v2127, %v2123
        %v2796 = vpack.c.b16 %v2128, %v2124
        %v2797 = vpack.c.b16 %v2133, %v2129
        %v2798 = vpack.c.b16 %v2134, %v2130
        %v2799 = vpack.c.b16 %v2135, %v2131
        %v2800 = vpack.c.b16 %v2136, %v2132
        %v2801 = vpack.c.b16 %v2141, %v2137
        %v2802 = vpack.c.b16 %v2142, %v2138
        %v2803 = vpack.c.b16 %v2143, %v2139
        %v2804 = vpack.c.b16 %v2144, %v2140
        %v2805 = vpack.c.b16 %v2149, %v2145
        %v2806 = vpack.c.b16 %v2150, %v2146
        %v2807 = vpack.c.b16 %v2151, %v2147
        %v2808 = vpack.c.b16 %v2152, %v2148
        %v2809 = vpack.c.b16 %v2157, %v2153
        %v2810 = vpack.c.b16 %v2158, %v2154
        %v2811 = vpack.c.b16 %v2159, %v2155
        %v2812 = vpack.c.b16 %v2160, %v2156
        %v2813 = vpack.c.b16 %v2165, %v2161
        %v2814 = vpack.c.b16 %v2166, %v2162
        %v2815 = vpack.c.b16 %v2167, %v2163
        %v2816 = vpack.c.b16 %v2168, %v2164
        %v2817 = vpack.c.b16 %v2173, %v2169
        %v2818 = vpack.c.b16 %v2174, %v2170
        %v2819 = vpack.c.b16 %v2175, %v2171
        %v2820 = vpack.c.b16 %v2176, %v2172
        %v2821 = vpack.c.b16 %v2181, %v2177
        %v2822 = vpack.c.b16 %v2182, %v2178
        %v2823 = vpack.c.b16 %v2183, %v2179
        %v2824 = vpack.c.b16 %v2184, %v2180
        %v2825 = vpack.c.b16 %v2189, %v2185
        %v2826 = vpack.c.b16 %v2190, %v2186
        %v2827 = vpack.c.b16 %v2191, %v2187
        %v2828 = vpack.c.b16 %v2192, %v2188
        %v2829 = vpack.c.b16 %v2197, %v2193
        %v2830 = vpack.c.b16 %v2198, %v2194
        %v2831 = vpack.c.b16 %v2199, %v2195
        %v2832 = vpack.c.b16 %v2200, %v2196
        %v2833 = vpack.c.b16 %v2205, %v2201
        %v2834 = vpack.c.b16 %v2206, %v2202
        %v2835 = vpack.c.b16 %v2207, %v2203
        %v2836 = vpack.c.b16 %v2208, %v2204
        %v2837 = vpack.c.b16 %v2213, %v2209
        %v2838 = vpack.c.b16 %v2214, %v2210
        %v2839 = vpack.c.b16 %v2215, %v2211
        %v2840 = vpack.c.b16 %v2216, %v2212
        %v2841 = vpack.c.b16 %v2221, %v2217
        %v2842 = vpack.c.b16 %v2222, %v2218
        %v2843 = vpack.c.b16 %v2223, %v2219
        %v2844 = vpack.c.b16 %v2224, %v2220
        %v2845 = vpack.c.b16 %v2229, %v2225
        %v2846 = vpack.c.b16 %v2230, %v2226
        %v2847 = vpack.c.b16 %v2231, %v2227
        %v2848 = vpack.c.b16 %v2232, %v2228
        %v2849 = vpack.c.b16 %v2237, %v2233
        %v2850 = vpack.c.b16 %v2238, %v2234
        %v2851 = vpack.c.b16 %v2239, %v2235
        %v2852 = vpack.c.b16 %v2240, %v2236
        %v2853 = vpack.c.b16 %v2245, %v2241
        %v2854 = vpack.c.b16 %v2246, %v2242
        %v2855 = vpack.c.b16 %v2247, %v2243
        %v2856 = vpack.c.b16 %v2248, %v2244
        %v2857 = vpack.c.b16 %v2253, %v2249
        %v2858 = vpack.c.b16 %v2254, %v2250
        %v2859 = vpack.c.b16 %v2255, %v2251
        %v2860 = vpack.c.b16 %v2256, %v2252
        %v2861 = vpack.c.b16 %v2261, %v2257
        %v2862 = vpack.c.b16 %v2262, %v2258
        %v2863 = vpack.c.b16 %v2263, %v2259
        %v2864 = vpack.c.b16 %v2264, %v2260
        %v2865 = vpack.c.b16 %v2269, %v2265
        %v2866 = vpack.c.b16 %v2270, %v2266
        %v2867 = vpack.c.b16 %v2271, %v2267
        %v2868 = vpack.c.b16 %v2272, %v2268
        %v2869 = vpack.c.b16 %v2277, %v2273
        %v2870 = vpack.c.b16 %v2278, %v2274
        %v2871 = vpack.c.b16 %v2279, %v2275
        %v2872 = vpack.c.b16 %v2280, %v2276
        %v2873 = vpack.c.b16 %v2285, %v2281
        %v2874 = vpack.c.b16 %v2286, %v2282
        %v2875 = vpack.c.b16 %v2287, %v2283
        %v2876 = vpack.c.b16 %v2288, %v2284
        %v2877 = vpack.c.b16 %v2293, %v2289
        %v2878 = vpack.c.b16 %v2294, %v2290
        %v2879 = vpack.c.b16 %v2295, %v2291
        %v2880 = vpack.c.b16 %v2296, %v2292
        %v2881 = vpack.c.b16 %v2301, %v2297
        %v2882 = vpack.c.b16 %v2302, %v2298
        %v2883 = vpack.c.b16 %v2303, %v2299
        %v2884 = vpack.c.b16 %v2304, %v2300
        %v2885 = vpack.c.b16 %v2309, %v2305
        %v2886 = vpack.c.b16 %v2310, %v2306
        %v2887 = vpack.c.b16 %v2311, %v2307
        %v2888 = vpack.c.b16 %v2312, %v2308
        %v2889 = vpack.c.b16 %v2317, %v2313
        %v2890 = vpack.c.b16 %v2318, %v2314
        %v2891 = vpack.c.b16 %v2319, %v2315
        %v2892 = vpack.c.b16 %v2320, %v2316
        %v2893 = vpack.c.b16 %v2325, %v2321
        %v2894 = vpack.c.b16 %v2326, %v2322
        %v2895 = vpack.c.b16 %v2327, %v2323
        %v2896 = vpack.c.b16 %v2328, %v2324
        %v2897 = vpack.c.b16 %v2333, %v2329
        %v2898 = vpack.c.b16 %v2334, %v2330
        %v2899 = vpack.c.b16 %v2335, %v2331
        %v2900 = vpack.c.b16 %v2336, %v2332
        %v2901 = vpack.c.b16 %v2341, %v2337
        %v2902 = vpack.c.b16 %v2342, %v2338
        %v2903 = vpack.c.b16 %v2343, %v2339
        %v2904 = vpack.c.b16 %v2344, %v2340
        %v2905 = vpack.c.b16 %v2349, %v2345
        %v2906 = vpack.c.b16 %v2350, %v2346
        %v2907 = vpack.c.b16 %v2351, %v2347
        %v2908 = vpack.c.b16 %v2352, %v2348
        %v2909 = vpack.c.b16 %v2357, %v2353
        %v2910 = vpack.c.b16 %v2358, %v2354
        %v2911 = vpack.c.b16 %v2359, %v2355
        %v2912 = vpack.c.b16 %v2360, %v2356
        %v2913 = vpack.c.b16 %v2365, %v2361
        %v2914 = vpack.c.b16 %v2366, %v2362
        %v2915 = vpack.c.b16 %v2367, %v2363
        %v2916 = vpack.c.b16 %v2368, %v2364
        %v2917 = vpack.c.b16 %v2373, %v2369
        %v2918 = vpack.c.b16 %v2374, %v2370
        %v2919 = vpack.c.b16 %v2375, %v2371
        %v2920 = vpack.c.b16 %v2376, %v2372
        %v2921 = vpack.c.b16 %v2381, %v2377
        %v2922 = vpack.c.b16 %v2382, %v2378
        %v2923 = vpack.c.b16 %v2383, %v2379
        %v2924 = vpack.c.b16 %v2384, %v2380
        %v2925 = vpack.c.b16 %v2389, %v2385
        %v2926 = vpack.c.b16 %v2390, %v2386
        %v2927 = vpack.c.b16 %v2391, %v2387
        %v2928 = vpack.c.b16 %v2392, %v2388
        %v2929 = vpack.c.b16 %v2397, %v2393
        %v2930 = vpack.c.b16 %v2398, %v2394
        %v2931 = vpack.c.b16 %v2399, %v2395
        %v2932 = vpack.c.b16 %v2400, %v2396
        %v2933 = vpack.c.b16 %v2405, %v2401
        %v2934 = vpack.c.b16 %v2406, %v2402
        %v2935 = vpack.c.b16 %v2407, %v2403
        %v2936 = vpack.c.b16 %v2408, %v2404
        %v2937 = vpack.c.b16 %v2413, %v2409
        %v2938 = vpack.c.b16 %v2414, %v2410
        %v2939 = vpack.c.b16 %v2415, %v2411
        %v2940 = vpack.c.b16 %v2416, %v2412
        %v2941 = vpack.c.b16 %v2421, %v2417
        %v2942 = vpack.c.b16 %v2422, %v2418
        %v2943 = vpack.c.b16 %v2423, %v2419
        %v2944 = vpack.c.b16 %v2424, %v2420
        %v2945 = vpack.c.b16 %v2429, %v2425
        %v2946 = vpack.c.b16 %v2430, %v2426
        %v2947 = vpack.c.b16 %v2431, %v2427
        %v2948 = vpack.c.b16 %v2432, %v2428
        %v2949 = vpack.c.b16 %v2437, %v2433
        %v2950 = vpack.c.b16 %v2438, %v2434
        %v2951 = vpack.c.b16 %v2439, %v2435
        %v2952 = vpack.c.b16 %v2440, %v2436
        %3465 = vmatpush.bf16.msra.mxu0 %v2469
        %3466 = vmatpush.bf16.msra.mxu0 %v2465
        %3467 = vmatpush.bf16.msra.mxu0 %v2461
        %3468 = vmatpush.bf16.msra.mxu0 %v2457
        %3469 = vmatpush.bf16.msra.mxu0 %v2453
        %3470 = vmatpush.bf16.msra.mxu0 %v2449
        %3471 = vmatpush.bf16.msra.mxu0 %v2445
        %3472 = vmatpush.bf16.msra.mxu0 %v2441
        %3473 = vmatmul.bf16.gmra.mxu0 %v367
        %v3474 = vpop.f32.mrf.mxu0
        %v3475 = vadd.f32 %v897, %v3474
        %v3476 = vpop.f32.mrf.mxu0
        %3477 = vdwg.mxu0
        %3478 = vmatpush.bf16.msra.mxu0 %v2501
        %3479 = vmatpush.bf16.msra.mxu0 %v2497
        %3480 = vmatpush.bf16.msra.mxu0 %v2493
        %3481 = vmatpush.bf16.msra.mxu0 %v2489
        %3482 = vmatpush.bf16.msra.mxu0 %v2485
        %3483 = vmatpush.bf16.msra.mxu0 %v2481
        %3484 = vmatpush.bf16.msra.mxu0 %v2477
        %3485 = vmatpush.bf16.msra.mxu0 %v2473
        %3486 = vmatmul.bf16.gmra.mxu0 %v368
        %v3487 = vpop.f32.mrf.mxu0
        %v3488 = vadd.f32 %v3475, %v3487
        %v3489 = vpop.f32.mrf.mxu0
        %3490 = vdwg.mxu0
        %3491 = vmatpush.bf16.msra.mxu0 %v2533
        %3492 = vmatpush.bf16.msra.mxu0 %v2529
        %3493 = vmatpush.bf16.msra.mxu0 %v2525
        %3494 = vmatpush.bf16.msra.mxu0 %v2521
        %3495 = vmatpush.bf16.msra.mxu0 %v2517
        %3496 = vmatpush.bf16.msra.mxu0 %v2513
        %3497 = vmatpush.bf16.msra.mxu0 %v2509
        %3498 = vmatpush.bf16.msra.mxu0 %v2505
        %3499 = vmatmul.bf16.gmra.mxu0 %v369
        %v3500 = vpop.f32.mrf.mxu0
        %v3501 = vadd.f32 %v3488, %v3500
        %v3502 = vpop.f32.mrf.mxu0
        %3503 = vdwg.mxu0
        %3504 = vmatpush.bf16.msra.mxu0 %v2565
        %3505 = vmatpush.bf16.msra.mxu0 %v2561
        %3506 = vmatpush.bf16.msra.mxu0 %v2557
        %3507 = vmatpush.bf16.msra.mxu0 %v2553
        %3508 = vmatpush.bf16.msra.mxu0 %v2549
        %3509 = vmatpush.bf16.msra.mxu0 %v2545
        %3510 = vmatpush.bf16.msra.mxu0 %v2541
        %3511 = vmatpush.bf16.msra.mxu0 %v2537
        %3512 = vmatmul.bf16.gmra.mxu0 %v370
        %v3513 = vpop.f32.mrf.mxu0
        %v3514 = vadd.f32 %v3501, %v3513
        %v3515 = vpop.f32.mrf.mxu0
        %3516 = vdwg.mxu0
        %3517 = vmatpush.bf16.msra.mxu0 %v2597
        %3518 = vmatpush.bf16.msra.mxu0 %v2593
        %3519 = vmatpush.bf16.msra.mxu0 %v2589
        %3520 = vmatpush.bf16.msra.mxu0 %v2585
        %3521 = vmatpush.bf16.msra.mxu0 %v2581
        %3522 = vmatpush.bf16.msra.mxu0 %v2577
        %3523 = vmatpush.bf16.msra.mxu0 %v2573
        %3524 = vmatpush.bf16.msra.mxu0 %v2569
        %3525 = vmatmul.bf16.gmra.mxu0 %v371
        %v3526 = vpop.f32.mrf.mxu0
        %v3527 = vadd.f32 %v3514, %v3526
        %v3528 = vpop.f32.mrf.mxu0
        %3529 = vdwg.mxu0
        %3530 = vmatpush.bf16.msra.mxu0 %v2629
        %3531 = vmatpush.bf16.msra.mxu0 %v2625
        %3532 = vmatpush.bf16.msra.mxu0 %v2621
        %3533 = vmatpush.bf16.msra.mxu0 %v2617
        %3534 = vmatpush.bf16.msra.mxu0 %v2613
        %3535 = vmatpush.bf16.msra.mxu0 %v2609
        %3536 = vmatpush.bf16.msra.mxu0 %v2605
        %3537 = vmatpush.bf16.msra.mxu0 %v2601
        %3538 = vmatmul.bf16.gmra.mxu0 %v372
        %v3539 = vpop.f32.mrf.mxu0
        %v3540 = vadd.f32 %v3527, %v3539
        %v3541 = vpop.f32.mrf.mxu0
        %3542 = vdwg.mxu0
        %3543 = vmatpush.bf16.msra.mxu0 %v2661
        %3544 = vmatpush.bf16.msra.mxu0 %v2657
        %3545 = vmatpush.bf16.msra.mxu0 %v2653
        %3546 = vmatpush.bf16.msra.mxu0 %v2649
        %3547 = vmatpush.bf16.msra.mxu0 %v2645
        %3548 = vmatpush.bf16.msra.mxu0 %v2641
        %3549 = vmatpush.bf16.msra.mxu0 %v2637
        %3550 = vmatpush.bf16.msra.mxu0 %v2633
        %3551 = vmatmul.bf16.gmra.mxu0 %v373
        %v3552 = vpop.f32.mrf.mxu0
        %v3553 = vadd.f32 %v3540, %v3552
        %v3554 = vpop.f32.mrf.mxu0
        %3555 = vdwg.mxu0
        %3556 = vmatpush.bf16.msra.mxu0 %v2693
        %3557 = vmatpush.bf16.msra.mxu0 %v2689
        %3558 = vmatpush.bf16.msra.mxu0 %v2685
        %3559 = vmatpush.bf16.msra.mxu0 %v2681
        %3560 = vmatpush.bf16.msra.mxu0 %v2677
        %3561 = vmatpush.bf16.msra.mxu0 %v2673
        %3562 = vmatpush.bf16.msra.mxu0 %v2669
        %3563 = vmatpush.bf16.msra.mxu0 %v2665
        %3564 = vmatmul.bf16.gmra.mxu0 %v374
        %v3565 = vpop.f32.mrf.mxu0
        %v3566 = vadd.f32 %v3553, %v3565
        %v3567 = vpop.f32.mrf.mxu0
        %3568 = vdwg.mxu0
        %3569 = vmatpush.bf16.msra.mxu0 %v2725
        %3570 = vmatpush.bf16.msra.mxu0 %v2721
        %3571 = vmatpush.bf16.msra.mxu0 %v2717
        %3572 = vmatpush.bf16.msra.mxu0 %v2713
        %3573 = vmatpush.bf16.msra.mxu0 %v2709
        %3574 = vmatpush.bf16.msra.mxu0 %v2705
        %3575 = vmatpush.bf16.msra.mxu0 %v2701
        %3576 = vmatpush.bf16.msra.mxu0 %v2697
        %3577 = vmatmul.bf16.gmra.mxu0 %v375
        %v3578 = vpop.f32.mrf.mxu0
        %v3579 = vadd.f32 %v3566, %v3578
        %v3580 = vpop.f32.mrf.mxu0
        %3581 = vdwg.mxu0
        %3582 = vmatpush.bf16.msra.mxu0 %v2757
        %3583 = vmatpush.bf16.msra.mxu0 %v2753
        %3584 = vmatpush.bf16.msra.mxu0 %v2749
        %3585 = vmatpush.bf16.msra.mxu0 %v2745
        %3586 = vmatpush.bf16.msra.mxu0 %v2741
        %3587 = vmatpush.bf16.msra.mxu0 %v2737
        %3588 = vmatpush.bf16.msra.mxu0 %v2733
        %3589 = vmatpush.bf16.msra.mxu0 %v2729
        %3590 = vmatmul.bf16.gmra.mxu0 %v376
        %v3591 = vpop.f32.mrf.mxu0
        %v3592 = vadd.f32 %v3579, %v3591
        %v3593 = vpop.f32.mrf.mxu0
        %3594 = vdwg.mxu0
        %3595 = vmatpush.bf16.msra.mxu0 %v2789
        %3596 = vmatpush.bf16.msra.mxu0 %v2785
        %3597 = vmatpush.bf16.msra.mxu0 %v2781
        %3598 = vmatpush.bf16.msra.mxu0 %v2777
        %3599 = vmatpush.bf16.msra.mxu0 %v2773
        %3600 = vmatpush.bf16.msra.mxu0 %v2769
        %3601 = vmatpush.bf16.msra.mxu0 %v2765
        %3602 = vmatpush.bf16.msra.mxu0 %v2761
        %3603 = vmatmul.bf16.gmra.mxu0 %v377
        %v3604 = vpop.f32.mrf.mxu0
        %v3605 = vadd.f32 %v3592, %v3604
        %v3606 = vpop.f32.mrf.mxu0
        %3607 = vdwg.mxu0
        %3608 = vmatpush.bf16.msra.mxu0 %v2821
        %3609 = vmatpush.bf16.msra.mxu0 %v2817
        %3610 = vmatpush.bf16.msra.mxu0 %v2813
        %3611 = vmatpush.bf16.msra.mxu0 %v2809
        %3612 = vmatpush.bf16.msra.mxu0 %v2805
        %3613 = vmatpush.bf16.msra.mxu0 %v2801
        %3614 = vmatpush.bf16.msra.mxu0 %v2797
        %3615 = vmatpush.bf16.msra.mxu0 %v2793
        %3616 = vmatmul.bf16.gmra.mxu0 %v378
        %v3617 = vpop.f32.mrf.mxu0
        %v3618 = vadd.f32 %v3605, %v3617
        %v3619 = vpop.f32.mrf.mxu0
        %3620 = vdwg.mxu0
        %3621 = vmatpush.bf16.msra.mxu0 %v2853
        %3622 = vmatpush.bf16.msra.mxu0 %v2849
        %3623 = vmatpush.bf16.msra.mxu0 %v2845
        %3624 = vmatpush.bf16.msra.mxu0 %v2841
        %3625 = vmatpush.bf16.msra.mxu0 %v2837
        %3626 = vmatpush.bf16.msra.mxu0 %v2833
        %3627 = vmatpush.bf16.msra.mxu0 %v2829
        %3628 = vmatpush.bf16.msra.mxu0 %v2825
        %3629 = vmatmul.bf16.gmra.mxu0 %v379
        %v3630 = vpop.f32.mrf.mxu0
        %v3631 = vadd.f32 %v3618, %v3630
        %v3632 = vpop.f32.mrf.mxu0
        %3633 = vdwg.mxu0
        %3634 = vmatpush.bf16.msra.mxu0 %v2885
        %3635 = vmatpush.bf16.msra.mxu0 %v2881
        %3636 = vmatpush.bf16.msra.mxu0 %v2877
        %3637 = vmatpush.bf16.msra.mxu0 %v2873
        %3638 = vmatpush.bf16.msra.mxu0 %v2869
        %3639 = vmatpush.bf16.msra.mxu0 %v2865
        %3640 = vmatpush.bf16.msra.mxu0 %v2861
        %3641 = vmatpush.bf16.msra.mxu0 %v2857
        %3642 = vmatmul.bf16.gmra.mxu0 %v380
        %v3643 = vpop.f32.mrf.mxu0
        %v3644 = vadd.f32 %v3631, %v3643
        %v3645 = vpop.f32.mrf.mxu0
        %3646 = vdwg.mxu0
        %3647 = vmatpush.bf16.msra.mxu0 %v2917
        %3648 = vmatpush.bf16.msra.mxu0 %v2913
        %3649 = vmatpush.bf16.msra.mxu0 %v2909
        %3650 = vmatpush.bf16.msra.mxu0 %v2905
        %3651 = vmatpush.bf16.msra.mxu0 %v2901
        %3652 = vmatpush.bf16.msra.mxu0 %v2897
        %3653 = vmatpush.bf16.msra.mxu0 %v2893
        %3654 = vmatpush.bf16.msra.mxu0 %v2889
        %3655 = vmatmul.bf16.gmra.mxu0 %v381
        %v3656 = vpop.f32.mrf.mxu0
        %v3657 = vadd.f32 %v3644, %v3656
        %v3658 = vpop.f32.mrf.mxu0
        %3659 = vdwg.mxu0
        %3660 = vmatpush.bf16.msra.mxu0 %v2949
        %3661 = vmatpush.bf16.msra.mxu0 %v2945
        %3662 = vmatpush.bf16.msra.mxu0 %v2941
        %3663 = vmatpush.bf16.msra.mxu0 %v2937
        %3664 = vmatpush.bf16.msra.mxu0 %v2933
        %3665 = vmatpush.bf16.msra.mxu0 %v2929
        %3666 = vmatpush.bf16.msra.mxu0 %v2925
        %3667 = vmatpush.bf16.msra.mxu0 %v2921
        %3668 = vmatmul.bf16.gmra.mxu0 %v382
        %v3669 = vpop.f32.mrf.mxu0
        %v3670 = vadd.f32 %v3657, %v3669
        %v3671 = vpop.f32.mrf.mxu0
        %3672 = vdwg.mxu0
        %3673 = vmatpush.bf16.msra.mxu0 %v2470
        %3674 = vmatpush.bf16.msra.mxu0 %v2466
        %3675 = vmatpush.bf16.msra.mxu0 %v2462
        %3676 = vmatpush.bf16.msra.mxu0 %v2458
        %3677 = vmatpush.bf16.msra.mxu0 %v2454
        %3678 = vmatpush.bf16.msra.mxu0 %v2450
        %3679 = vmatpush.bf16.msra.mxu0 %v2446
        %3680 = vmatpush.bf16.msra.mxu0 %v2442
        %3681 = vmatmul.bf16.gmra.mxu0 %v367
        %v3682 = vpop.f32.mrf.mxu0
        %v3683 = vadd.f32 %v898, %v3682
        %v3684 = vpop.f32.mrf.mxu0
        %3685 = vdwg.mxu0
        %3686 = vmatpush.bf16.msra.mxu0 %v2502
        %3687 = vmatpush.bf16.msra.mxu0 %v2498
        %3688 = vmatpush.bf16.msra.mxu0 %v2494
        %3689 = vmatpush.bf16.msra.mxu0 %v2490
        %3690 = vmatpush.bf16.msra.mxu0 %v2486
        %3691 = vmatpush.bf16.msra.mxu0 %v2482
        %3692 = vmatpush.bf16.msra.mxu0 %v2478
        %3693 = vmatpush.bf16.msra.mxu0 %v2474
        %3694 = vmatmul.bf16.gmra.mxu0 %v368
        %v3695 = vpop.f32.mrf.mxu0
        %v3696 = vadd.f32 %v3683, %v3695
        %v3697 = vpop.f32.mrf.mxu0
        %3698 = vdwg.mxu0
        %3699 = vmatpush.bf16.msra.mxu0 %v2534
        %3700 = vmatpush.bf16.msra.mxu0 %v2530
        %3701 = vmatpush.bf16.msra.mxu0 %v2526
        %3702 = vmatpush.bf16.msra.mxu0 %v2522
        %3703 = vmatpush.bf16.msra.mxu0 %v2518
        %3704 = vmatpush.bf16.msra.mxu0 %v2514
        %3705 = vmatpush.bf16.msra.mxu0 %v2510
        %3706 = vmatpush.bf16.msra.mxu0 %v2506
        %3707 = vmatmul.bf16.gmra.mxu0 %v369
        %v3708 = vpop.f32.mrf.mxu0
        %v3709 = vadd.f32 %v3696, %v3708
        %v3710 = vpop.f32.mrf.mxu0
        %3711 = vdwg.mxu0
        %3712 = vmatpush.bf16.msra.mxu0 %v2566
        %3713 = vmatpush.bf16.msra.mxu0 %v2562
        %3714 = vmatpush.bf16.msra.mxu0 %v2558
        %3715 = vmatpush.bf16.msra.mxu0 %v2554
        %3716 = vmatpush.bf16.msra.mxu0 %v2550
        %3717 = vmatpush.bf16.msra.mxu0 %v2546
        %3718 = vmatpush.bf16.msra.mxu0 %v2542
        %3719 = vmatpush.bf16.msra.mxu0 %v2538
        %3720 = vmatmul.bf16.gmra.mxu0 %v370
        %v3721 = vpop.f32.mrf.mxu0
        %v3722 = vadd.f32 %v3709, %v3721
        %v3723 = vpop.f32.mrf.mxu0
        %3724 = vdwg.mxu0
        %3725 = vmatpush.bf16.msra.mxu0 %v2598
        %3726 = vmatpush.bf16.msra.mxu0 %v2594
        %3727 = vmatpush.bf16.msra.mxu0 %v2590
        %3728 = vmatpush.bf16.msra.mxu0 %v2586
        %3729 = vmatpush.bf16.msra.mxu0 %v2582
        %3730 = vmatpush.bf16.msra.mxu0 %v2578
        %3731 = vmatpush.bf16.msra.mxu0 %v2574
        %3732 = vmatpush.bf16.msra.mxu0 %v2570
        %3733 = vmatmul.bf16.gmra.mxu0 %v371
        %v3734 = vpop.f32.mrf.mxu0
        %v3735 = vadd.f32 %v3722, %v3734
        %v3736 = vpop.f32.mrf.mxu0
        %3737 = vdwg.mxu0
        %3738 = vmatpush.bf16.msra.mxu0 %v2630
        %3739 = vmatpush.bf16.msra.mxu0 %v2626
        %3740 = vmatpush.bf16.msra.mxu0 %v2622
        %3741 = vmatpush.bf16.msra.mxu0 %v2618
        %3742 = vmatpush.bf16.msra.mxu0 %v2614
        %3743 = vmatpush.bf16.msra.mxu0 %v2610
        %3744 = vmatpush.bf16.msra.mxu0 %v2606
        %3745 = vmatpush.bf16.msra.mxu0 %v2602
        %3746 = vmatmul.bf16.gmra.mxu0 %v372
        %v3747 = vpop.f32.mrf.mxu0
        %v3748 = vadd.f32 %v3735, %v3747
        %v3749 = vpop.f32.mrf.mxu0
        %3750 = vdwg.mxu0
        %3751 = vmatpush.bf16.msra.mxu0 %v2662
        %3752 = vmatpush.bf16.msra.mxu0 %v2658
        %3753 = vmatpush.bf16.msra.mxu0 %v2654
        %3754 = vmatpush.bf16.msra.mxu0 %v2650
        %3755 = vmatpush.bf16.msra.mxu0 %v2646
        %3756 = vmatpush.bf16.msra.mxu0 %v2642
        %3757 = vmatpush.bf16.msra.mxu0 %v2638
        %3758 = vmatpush.bf16.msra.mxu0 %v2634
        %3759 = vmatmul.bf16.gmra.mxu0 %v373
        %v3760 = vpop.f32.mrf.mxu0
        %v3761 = vadd.f32 %v3748, %v3760
        %v3762 = vpop.f32.mrf.mxu0
        %3763 = vdwg.mxu0
        %3764 = vmatpush.bf16.msra.mxu0 %v2694
        %3765 = vmatpush.bf16.msra.mxu0 %v2690
        %3766 = vmatpush.bf16.msra.mxu0 %v2686
        %3767 = vmatpush.bf16.msra.mxu0 %v2682
        %3768 = vmatpush.bf16.msra.mxu0 %v2678
        %3769 = vmatpush.bf16.msra.mxu0 %v2674
        %3770 = vmatpush.bf16.msra.mxu0 %v2670
        %3771 = vmatpush.bf16.msra.mxu0 %v2666
        %3772 = vmatmul.bf16.gmra.mxu0 %v374
        %v3773 = vpop.f32.mrf.mxu0
        %v3774 = vadd.f32 %v3761, %v3773
        %v3775 = vpop.f32.mrf.mxu0
        %3776 = vdwg.mxu0
        %3777 = vmatpush.bf16.msra.mxu0 %v2726
        %3778 = vmatpush.bf16.msra.mxu0 %v2722
        %3779 = vmatpush.bf16.msra.mxu0 %v2718
        %3780 = vmatpush.bf16.msra.mxu0 %v2714
        %3781 = vmatpush.bf16.msra.mxu0 %v2710
        %3782 = vmatpush.bf16.msra.mxu0 %v2706
        %3783 = vmatpush.bf16.msra.mxu0 %v2702
        %3784 = vmatpush.bf16.msra.mxu0 %v2698
        %3785 = vmatmul.bf16.gmra.mxu0 %v375
        %v3786 = vpop.f32.mrf.mxu0
        %v3787 = vadd.f32 %v3774, %v3786
        %v3788 = vpop.f32.mrf.mxu0
        %3789 = vdwg.mxu0
        %3790 = vmatpush.bf16.msra.mxu0 %v2758
        %3791 = vmatpush.bf16.msra.mxu0 %v2754
        %3792 = vmatpush.bf16.msra.mxu0 %v2750
        %3793 = vmatpush.bf16.msra.mxu0 %v2746
        %3794 = vmatpush.bf16.msra.mxu0 %v2742
        %3795 = vmatpush.bf16.msra.mxu0 %v2738
        %3796 = vmatpush.bf16.msra.mxu0 %v2734
        %3797 = vmatpush.bf16.msra.mxu0 %v2730
        %3798 = vmatmul.bf16.gmra.mxu0 %v376
        %v3799 = vpop.f32.mrf.mxu0
        %v3800 = vadd.f32 %v3787, %v3799
        %v3801 = vpop.f32.mrf.mxu0
        %3802 = vdwg.mxu0
        %3803 = vmatpush.bf16.msra.mxu0 %v2790
        %3804 = vmatpush.bf16.msra.mxu0 %v2786
        %3805 = vmatpush.bf16.msra.mxu0 %v2782
        %3806 = vmatpush.bf16.msra.mxu0 %v2778
        %3807 = vmatpush.bf16.msra.mxu0 %v2774
        %3808 = vmatpush.bf16.msra.mxu0 %v2770
        %3809 = vmatpush.bf16.msra.mxu0 %v2766
        %3810 = vmatpush.bf16.msra.mxu0 %v2762
        %3811 = vmatmul.bf16.gmra.mxu0 %v377
        %v3812 = vpop.f32.mrf.mxu0
        %v3813 = vadd.f32 %v3800, %v3812
        %v3814 = vpop.f32.mrf.mxu0
        %3815 = vdwg.mxu0
        %3816 = vmatpush.bf16.msra.mxu0 %v2822
        %3817 = vmatpush.bf16.msra.mxu0 %v2818
        %3818 = vmatpush.bf16.msra.mxu0 %v2814
        %3819 = vmatpush.bf16.msra.mxu0 %v2810
        %3820 = vmatpush.bf16.msra.mxu0 %v2806
        %3821 = vmatpush.bf16.msra.mxu0 %v2802
        %3822 = vmatpush.bf16.msra.mxu0 %v2798
        %3823 = vmatpush.bf16.msra.mxu0 %v2794
        %3824 = vmatmul.bf16.gmra.mxu0 %v378
        %v3825 = vpop.f32.mrf.mxu0
        %v3826 = vadd.f32 %v3813, %v3825
        %v3827 = vpop.f32.mrf.mxu0
        %3828 = vdwg.mxu0
        %3829 = vmatpush.bf16.msra.mxu0 %v2854
        %3830 = vmatpush.bf16.msra.mxu0 %v2850
        %3831 = vmatpush.bf16.msra.mxu0 %v2846
        %3832 = vmatpush.bf16.msra.mxu0 %v2842
        %3833 = vmatpush.bf16.msra.mxu0 %v2838
        %3834 = vmatpush.bf16.msra.mxu0 %v2834
        %3835 = vmatpush.bf16.msra.mxu0 %v2830
        %3836 = vmatpush.bf16.msra.mxu0 %v2826
        %3837 = vmatmul.bf16.gmra.mxu0 %v379
        %v3838 = vpop.f32.mrf.mxu0
        %v3839 = vadd.f32 %v3826, %v3838
        %v3840 = vpop.f32.mrf.mxu0
        %3841 = vdwg.mxu0
        %3842 = vmatpush.bf16.msra.mxu0 %v2886
        %3843 = vmatpush.bf16.msra.mxu0 %v2882
        %3844 = vmatpush.bf16.msra.mxu0 %v2878
        %3845 = vmatpush.bf16.msra.mxu0 %v2874
        %3846 = vmatpush.bf16.msra.mxu0 %v2870
        %3847 = vmatpush.bf16.msra.mxu0 %v2866
        %3848 = vmatpush.bf16.msra.mxu0 %v2862
        %3849 = vmatpush.bf16.msra.mxu0 %v2858
        %3850 = vmatmul.bf16.gmra.mxu0 %v380
        %v3851 = vpop.f32.mrf.mxu0
        %v3852 = vadd.f32 %v3839, %v3851
        %v3853 = vpop.f32.mrf.mxu0
        %3854 = vdwg.mxu0
        %3855 = vmatpush.bf16.msra.mxu0 %v2918
        %3856 = vmatpush.bf16.msra.mxu0 %v2914
        %3857 = vmatpush.bf16.msra.mxu0 %v2910
        %3858 = vmatpush.bf16.msra.mxu0 %v2906
        %3859 = vmatpush.bf16.msra.mxu0 %v2902
        %3860 = vmatpush.bf16.msra.mxu0 %v2898
        %3861 = vmatpush.bf16.msra.mxu0 %v2894
        %3862 = vmatpush.bf16.msra.mxu0 %v2890
        %3863 = vmatmul.bf16.gmra.mxu0 %v381
        %v3864 = vpop.f32.mrf.mxu0
        %v3865 = vadd.f32 %v3852, %v3864
        %v3866 = vpop.f32.mrf.mxu0
        %3867 = vdwg.mxu0
        %3868 = vmatpush.bf16.msra.mxu0 %v2950
        %3869 = vmatpush.bf16.msra.mxu0 %v2946
        %3870 = vmatpush.bf16.msra.mxu0 %v2942
        %3871 = vmatpush.bf16.msra.mxu0 %v2938
        %3872 = vmatpush.bf16.msra.mxu0 %v2934
        %3873 = vmatpush.bf16.msra.mxu0 %v2930
        %3874 = vmatpush.bf16.msra.mxu0 %v2926
        %3875 = vmatpush.bf16.msra.mxu0 %v2922
        %3876 = vmatmul.bf16.gmra.mxu0 %v382
        %v3877 = vpop.f32.mrf.mxu0
        %v3878 = vadd.f32 %v3865, %v3877
        %v3879 = vpop.f32.mrf.mxu0
        %3880 = vdwg.mxu0
        %3881 = vmatpush.bf16.msra.mxu0 %v2471
        %3882 = vmatpush.bf16.msra.mxu0 %v2467
        %3883 = vmatpush.bf16.msra.mxu0 %v2463
        %3884 = vmatpush.bf16.msra.mxu0 %v2459
        %3885 = vmatpush.bf16.msra.mxu0 %v2455
        %3886 = vmatpush.bf16.msra.mxu0 %v2451
        %3887 = vmatpush.bf16.msra.mxu0 %v2447
        %3888 = vmatpush.bf16.msra.mxu0 %v2443
        %3889 = vmatmul.bf16.gmra.mxu0 %v367
        %v3890 = vpop.f32.mrf.mxu0
        %v3891 = vadd.f32 %v899, %v3890
        %v3892 = vpop.f32.mrf.mxu0
        %3893 = vdwg.mxu0
        %3894 = vmatpush.bf16.msra.mxu0 %v2503
        %3895 = vmatpush.bf16.msra.mxu0 %v2499
        %3896 = vmatpush.bf16.msra.mxu0 %v2495
        %3897 = vmatpush.bf16.msra.mxu0 %v2491
        %3898 = vmatpush.bf16.msra.mxu0 %v2487
        %3899 = vmatpush.bf16.msra.mxu0 %v2483
        %3900 = vmatpush.bf16.msra.mxu0 %v2479
        %3901 = vmatpush.bf16.msra.mxu0 %v2475
        %3902 = vmatmul.bf16.gmra.mxu0 %v368
        %v3903 = vpop.f32.mrf.mxu0
        %v3904 = vadd.f32 %v3891, %v3903
        %v3905 = vpop.f32.mrf.mxu0
        %3906 = vdwg.mxu0
        %3907 = vmatpush.bf16.msra.mxu0 %v2535
        %3908 = vmatpush.bf16.msra.mxu0 %v2531
        %3909 = vmatpush.bf16.msra.mxu0 %v2527
        %3910 = vmatpush.bf16.msra.mxu0 %v2523
        %3911 = vmatpush.bf16.msra.mxu0 %v2519
        %3912 = vmatpush.bf16.msra.mxu0 %v2515
        %3913 = vmatpush.bf16.msra.mxu0 %v2511
        %3914 = vmatpush.bf16.msra.mxu0 %v2507
        %3915 = vmatmul.bf16.gmra.mxu0 %v369
        %v3916 = vpop.f32.mrf.mxu0
        %v3917 = vadd.f32 %v3904, %v3916
        %v3918 = vpop.f32.mrf.mxu0
        %3919 = vdwg.mxu0
        %3920 = vmatpush.bf16.msra.mxu0 %v2567
        %3921 = vmatpush.bf16.msra.mxu0 %v2563
        %3922 = vmatpush.bf16.msra.mxu0 %v2559
        %3923 = vmatpush.bf16.msra.mxu0 %v2555
        %3924 = vmatpush.bf16.msra.mxu0 %v2551
        %3925 = vmatpush.bf16.msra.mxu0 %v2547
        %3926 = vmatpush.bf16.msra.mxu0 %v2543
        %3927 = vmatpush.bf16.msra.mxu0 %v2539
        %3928 = vmatmul.bf16.gmra.mxu0 %v370
        %v3929 = vpop.f32.mrf.mxu0
        %v3930 = vadd.f32 %v3917, %v3929
        %v3931 = vpop.f32.mrf.mxu0
        %3932 = vdwg.mxu0
        %3933 = vmatpush.bf16.msra.mxu0 %v2599
        %3934 = vmatpush.bf16.msra.mxu0 %v2595
        %3935 = vmatpush.bf16.msra.mxu0 %v2591
        %3936 = vmatpush.bf16.msra.mxu0 %v2587
        %3937 = vmatpush.bf16.msra.mxu0 %v2583
        %3938 = vmatpush.bf16.msra.mxu0 %v2579
        %3939 = vmatpush.bf16.msra.mxu0 %v2575
        %3940 = vmatpush.bf16.msra.mxu0 %v2571
        %3941 = vmatmul.bf16.gmra.mxu0 %v371
        %v3942 = vpop.f32.mrf.mxu0
        %v3943 = vadd.f32 %v3930, %v3942
        %v3944 = vpop.f32.mrf.mxu0
        %3945 = vdwg.mxu0
        %3946 = vmatpush.bf16.msra.mxu0 %v2631
        %3947 = vmatpush.bf16.msra.mxu0 %v2627
        %3948 = vmatpush.bf16.msra.mxu0 %v2623
        %3949 = vmatpush.bf16.msra.mxu0 %v2619
        %3950 = vmatpush.bf16.msra.mxu0 %v2615
        %3951 = vmatpush.bf16.msra.mxu0 %v2611
        %3952 = vmatpush.bf16.msra.mxu0 %v2607
        %3953 = vmatpush.bf16.msra.mxu0 %v2603
        %3954 = vmatmul.bf16.gmra.mxu0 %v372
        %v3955 = vpop.f32.mrf.mxu0
        %v3956 = vadd.f32 %v3943, %v3955
        %v3957 = vpop.f32.mrf.mxu0
        %3958 = vdwg.mxu0
        %3959 = vmatpush.bf16.msra.mxu0 %v2663
        %3960 = vmatpush.bf16.msra.mxu0 %v2659
        %3961 = vmatpush.bf16.msra.mxu0 %v2655
        %3962 = vmatpush.bf16.msra.mxu0 %v2651
        %3963 = vmatpush.bf16.msra.mxu0 %v2647
        %3964 = vmatpush.bf16.msra.mxu0 %v2643
        %3965 = vmatpush.bf16.msra.mxu0 %v2639
        %3966 = vmatpush.bf16.msra.mxu0 %v2635
        %3967 = vmatmul.bf16.gmra.mxu0 %v373
        %v3968 = vpop.f32.mrf.mxu0
        %v3969 = vadd.f32 %v3956, %v3968
        %v3970 = vpop.f32.mrf.mxu0
        %3971 = vdwg.mxu0
        %3972 = vmatpush.bf16.msra.mxu0 %v2695
        %3973 = vmatpush.bf16.msra.mxu0 %v2691
        %3974 = vmatpush.bf16.msra.mxu0 %v2687
        %3975 = vmatpush.bf16.msra.mxu0 %v2683
        %3976 = vmatpush.bf16.msra.mxu0 %v2679
        %3977 = vmatpush.bf16.msra.mxu0 %v2675
        %3978 = vmatpush.bf16.msra.mxu0 %v2671
        %3979 = vmatpush.bf16.msra.mxu0 %v2667
        %3980 = vmatmul.bf16.gmra.mxu0 %v374
        %v3981 = vpop.f32.mrf.mxu0
        %v3982 = vadd.f32 %v3969, %v3981
        %v3983 = vpop.f32.mrf.mxu0
        %3984 = vdwg.mxu0
        %3985 = vmatpush.bf16.msra.mxu0 %v2727
        %3986 = vmatpush.bf16.msra.mxu0 %v2723
        %3987 = vmatpush.bf16.msra.mxu0 %v2719
        %3988 = vmatpush.bf16.msra.mxu0 %v2715
        %3989 = vmatpush.bf16.msra.mxu0 %v2711
        %3990 = vmatpush.bf16.msra.mxu0 %v2707
        %3991 = vmatpush.bf16.msra.mxu0 %v2703
        %3992 = vmatpush.bf16.msra.mxu0 %v2699
        %3993 = vmatmul.bf16.gmra.mxu0 %v375
        %v3994 = vpop.f32.mrf.mxu0
        %v3995 = vadd.f32 %v3982, %v3994
        %v3996 = vpop.f32.mrf.mxu0
        %3997 = vdwg.mxu0
        %3998 = vmatpush.bf16.msra.mxu0 %v2759
        %3999 = vmatpush.bf16.msra.mxu0 %v2755
        %4000 = vmatpush.bf16.msra.mxu0 %v2751
        %4001 = vmatpush.bf16.msra.mxu0 %v2747
        %4002 = vmatpush.bf16.msra.mxu0 %v2743
        %4003 = vmatpush.bf16.msra.mxu0 %v2739
        %4004 = vmatpush.bf16.msra.mxu0 %v2735
        %4005 = vmatpush.bf16.msra.mxu0 %v2731
        %4006 = vmatmul.bf16.gmra.mxu0 %v376
        %v4007 = vpop.f32.mrf.mxu0
        %v4008 = vadd.f32 %v3995, %v4007
        %v4009 = vpop.f32.mrf.mxu0
        %4010 = vdwg.mxu0
        %4011 = vmatpush.bf16.msra.mxu0 %v2791
        %4012 = vmatpush.bf16.msra.mxu0 %v2787
        %4013 = vmatpush.bf16.msra.mxu0 %v2783
        %4014 = vmatpush.bf16.msra.mxu0 %v2779
        %4015 = vmatpush.bf16.msra.mxu0 %v2775
        %4016 = vmatpush.bf16.msra.mxu0 %v2771
        %4017 = vmatpush.bf16.msra.mxu0 %v2767
        %4018 = vmatpush.bf16.msra.mxu0 %v2763
        %4019 = vmatmul.bf16.gmra.mxu0 %v377
        %v4020 = vpop.f32.mrf.mxu0
        %v4021 = vadd.f32 %v4008, %v4020
        %v4022 = vpop.f32.mrf.mxu0
        %4023 = vdwg.mxu0
        %4024 = vmatpush.bf16.msra.mxu0 %v2823
        %4025 = vmatpush.bf16.msra.mxu0 %v2819
        %4026 = vmatpush.bf16.msra.mxu0 %v2815
        %4027 = vmatpush.bf16.msra.mxu0 %v2811
        %4028 = vmatpush.bf16.msra.mxu0 %v2807
        %4029 = vmatpush.bf16.msra.mxu0 %v2803
        %4030 = vmatpush.bf16.msra.mxu0 %v2799
        %4031 = vmatpush.bf16.msra.mxu0 %v2795
        %4032 = vmatmul.bf16.gmra.mxu0 %v378
        %v4033 = vpop.f32.mrf.mxu0
        %v4034 = vadd.f32 %v4021, %v4033
        %v4035 = vpop.f32.mrf.mxu0
        %4036 = vdwg.mxu0
        %4037 = vmatpush.bf16.msra.mxu0 %v2855
        %4038 = vmatpush.bf16.msra.mxu0 %v2851
        %4039 = vmatpush.bf16.msra.mxu0 %v2847
        %4040 = vmatpush.bf16.msra.mxu0 %v2843
        %4041 = vmatpush.bf16.msra.mxu0 %v2839
        %4042 = vmatpush.bf16.msra.mxu0 %v2835
        %4043 = vmatpush.bf16.msra.mxu0 %v2831
        %4044 = vmatpush.bf16.msra.mxu0 %v2827
        %4045 = vmatmul.bf16.gmra.mxu0 %v379
        %v4046 = vpop.f32.mrf.mxu0
        %v4047 = vadd.f32 %v4034, %v4046
        %v4048 = vpop.f32.mrf.mxu0
        %4049 = vdwg.mxu0
        %4050 = vmatpush.bf16.msra.mxu0 %v2887
        %4051 = vmatpush.bf16.msra.mxu0 %v2883
        %4052 = vmatpush.bf16.msra.mxu0 %v2879
        %4053 = vmatpush.bf16.msra.mxu0 %v2875
        %4054 = vmatpush.bf16.msra.mxu0 %v2871
        %4055 = vmatpush.bf16.msra.mxu0 %v2867
        %4056 = vmatpush.bf16.msra.mxu0 %v2863
        %4057 = vmatpush.bf16.msra.mxu0 %v2859
        %4058 = vmatmul.bf16.gmra.mxu0 %v380
        %v4059 = vpop.f32.mrf.mxu0
        %v4060 = vadd.f32 %v4047, %v4059
        %v4061 = vpop.f32.mrf.mxu0
        %4062 = vdwg.mxu0
        %4063 = vmatpush.bf16.msra.mxu0 %v2919
        %4064 = vmatpush.bf16.msra.mxu0 %v2915
        %4065 = vmatpush.bf16.msra.mxu0 %v2911
        %4066 = vmatpush.bf16.msra.mxu0 %v2907
        %4067 = vmatpush.bf16.msra.mxu0 %v2903
        %4068 = vmatpush.bf16.msra.mxu0 %v2899
        %4069 = vmatpush.bf16.msra.mxu0 %v2895
        %4070 = vmatpush.bf16.msra.mxu0 %v2891
        %4071 = vmatmul.bf16.gmra.mxu0 %v381
        %v4072 = vpop.f32.mrf.mxu0
        %v4073 = vadd.f32 %v4060, %v4072
        %v4074 = vpop.f32.mrf.mxu0
        %4075 = vdwg.mxu0
        %4076 = vmatpush.bf16.msra.mxu0 %v2951
        %4077 = vmatpush.bf16.msra.mxu0 %v2947
        %4078 = vmatpush.bf16.msra.mxu0 %v2943
        %4079 = vmatpush.bf16.msra.mxu0 %v2939
        %4080 = vmatpush.bf16.msra.mxu0 %v2935
        %4081 = vmatpush.bf16.msra.mxu0 %v2931
        %4082 = vmatpush.bf16.msra.mxu0 %v2927
        %4083 = vmatpush.bf16.msra.mxu0 %v2923
        %4084 = vmatmul.bf16.gmra.mxu0 %v382
        %v4085 = vpop.f32.mrf.mxu0
        %v4086 = vadd.f32 %v4073, %v4085
        %v4087 = vpop.f32.mrf.mxu0
        %4088 = vdwg.mxu0
        %4089 = vmatpush.bf16.msra.mxu0 %v2472
        %4090 = vmatpush.bf16.msra.mxu0 %v2468
        %4091 = vmatpush.bf16.msra.mxu0 %v2464
        %4092 = vmatpush.bf16.msra.mxu0 %v2460
        %4093 = vmatpush.bf16.msra.mxu0 %v2456
        %4094 = vmatpush.bf16.msra.mxu0 %v2452
        %4095 = vmatpush.bf16.msra.mxu0 %v2448
        %4096 = vmatpush.bf16.msra.mxu0 %v2444
        %4097 = vmatmul.bf16.gmra.mxu0 %v367
        %v4098 = vpop.f32.mrf.mxu0
        %v4099 = vadd.f32 %v900, %v4098
        %v4100 = vpop.f32.mrf.mxu0
        %4101 = vdwg.mxu0
        %4102 = vmatpush.bf16.msra.mxu0 %v2504
        %4103 = vmatpush.bf16.msra.mxu0 %v2500
        %4104 = vmatpush.bf16.msra.mxu0 %v2496
        %4105 = vmatpush.bf16.msra.mxu0 %v2492
        %4106 = vmatpush.bf16.msra.mxu0 %v2488
        %4107 = vmatpush.bf16.msra.mxu0 %v2484
        %4108 = vmatpush.bf16.msra.mxu0 %v2480
        %4109 = vmatpush.bf16.msra.mxu0 %v2476
        %4110 = vmatmul.bf16.gmra.mxu0 %v368
        %v4111 = vpop.f32.mrf.mxu0
        %v4112 = vadd.f32 %v4099, %v4111
        %v4113 = vpop.f32.mrf.mxu0
        %4114 = vdwg.mxu0
        %4115 = vmatpush.bf16.msra.mxu0 %v2536
        %4116 = vmatpush.bf16.msra.mxu0 %v2532
        %4117 = vmatpush.bf16.msra.mxu0 %v2528
        %4118 = vmatpush.bf16.msra.mxu0 %v2524
        %4119 = vmatpush.bf16.msra.mxu0 %v2520
        %4120 = vmatpush.bf16.msra.mxu0 %v2516
        %4121 = vmatpush.bf16.msra.mxu0 %v2512
        %4122 = vmatpush.bf16.msra.mxu0 %v2508
        %4123 = vmatmul.bf16.gmra.mxu0 %v369
        %v4124 = vpop.f32.mrf.mxu0
        %v4125 = vadd.f32 %v4112, %v4124
        %v4126 = vpop.f32.mrf.mxu0
        %4127 = vdwg.mxu0
        %4128 = vmatpush.bf16.msra.mxu0 %v2568
        %4129 = vmatpush.bf16.msra.mxu0 %v2564
        %4130 = vmatpush.bf16.msra.mxu0 %v2560
        %4131 = vmatpush.bf16.msra.mxu0 %v2556
        %4132 = vmatpush.bf16.msra.mxu0 %v2552
        %4133 = vmatpush.bf16.msra.mxu0 %v2548
        %4134 = vmatpush.bf16.msra.mxu0 %v2544
        %4135 = vmatpush.bf16.msra.mxu0 %v2540
        %4136 = vmatmul.bf16.gmra.mxu0 %v370
        %v4137 = vpop.f32.mrf.mxu0
        %v4138 = vadd.f32 %v4125, %v4137
        %v4139 = vpop.f32.mrf.mxu0
        %4140 = vdwg.mxu0
        %4141 = vmatpush.bf16.msra.mxu0 %v2600
        %4142 = vmatpush.bf16.msra.mxu0 %v2596
        %4143 = vmatpush.bf16.msra.mxu0 %v2592
        %4144 = vmatpush.bf16.msra.mxu0 %v2588
        %4145 = vmatpush.bf16.msra.mxu0 %v2584
        %4146 = vmatpush.bf16.msra.mxu0 %v2580
        %4147 = vmatpush.bf16.msra.mxu0 %v2576
        %4148 = vmatpush.bf16.msra.mxu0 %v2572
        %4149 = vmatmul.bf16.gmra.mxu0 %v371
        %v4150 = vpop.f32.mrf.mxu0
        %v4151 = vadd.f32 %v4138, %v4150
        %v4152 = vpop.f32.mrf.mxu0
        %4153 = vdwg.mxu0
        %4154 = vmatpush.bf16.msra.mxu0 %v2632
        %4155 = vmatpush.bf16.msra.mxu0 %v2628
        %4156 = vmatpush.bf16.msra.mxu0 %v2624
        %4157 = vmatpush.bf16.msra.mxu0 %v2620
        %4158 = vmatpush.bf16.msra.mxu0 %v2616
        %4159 = vmatpush.bf16.msra.mxu0 %v2612
        %4160 = vmatpush.bf16.msra.mxu0 %v2608
        %4161 = vmatpush.bf16.msra.mxu0 %v2604
        %4162 = vmatmul.bf16.gmra.mxu0 %v372
        %v4163 = vpop.f32.mrf.mxu0
        %v4164 = vadd.f32 %v4151, %v4163
        %v4165 = vpop.f32.mrf.mxu0
        %4166 = vdwg.mxu0
        %4167 = vmatpush.bf16.msra.mxu0 %v2664
        %4168 = vmatpush.bf16.msra.mxu0 %v2660
        %4169 = vmatpush.bf16.msra.mxu0 %v2656
        %4170 = vmatpush.bf16.msra.mxu0 %v2652
        %4171 = vmatpush.bf16.msra.mxu0 %v2648
        %4172 = vmatpush.bf16.msra.mxu0 %v2644
        %4173 = vmatpush.bf16.msra.mxu0 %v2640
        %4174 = vmatpush.bf16.msra.mxu0 %v2636
        %4175 = vmatmul.bf16.gmra.mxu0 %v373
        %v4176 = vpop.f32.mrf.mxu0
        %v4177 = vadd.f32 %v4164, %v4176
        %v4178 = vpop.f32.mrf.mxu0
        %4179 = vdwg.mxu0
        %4180 = vmatpush.bf16.msra.mxu0 %v2696
        %4181 = vmatpush.bf16.msra.mxu0 %v2692
        %4182 = vmatpush.bf16.msra.mxu0 %v2688
        %4183 = vmatpush.bf16.msra.mxu0 %v2684
        %4184 = vmatpush.bf16.msra.mxu0 %v2680
        %4185 = vmatpush.bf16.msra.mxu0 %v2676
        %4186 = vmatpush.bf16.msra.mxu0 %v2672
        %4187 = vmatpush.bf16.msra.mxu0 %v2668
        %4188 = vmatmul.bf16.gmra.mxu0 %v374
        %v4189 = vpop.f32.mrf.mxu0
        %v4190 = vadd.f32 %v4177, %v4189
        %v4191 = vpop.f32.mrf.mxu0
        %4192 = vdwg.mxu0
        %4193 = vmatpush.bf16.msra.mxu0 %v2728
        %4194 = vmatpush.bf16.msra.mxu0 %v2724
        %4195 = vmatpush.bf16.msra.mxu0 %v2720
        %4196 = vmatpush.bf16.msra.mxu0 %v2716
        %4197 = vmatpush.bf16.msra.mxu0 %v2712
        %4198 = vmatpush.bf16.msra.mxu0 %v2708
        %4199 = vmatpush.bf16.msra.mxu0 %v2704
        %4200 = vmatpush.bf16.msra.mxu0 %v2700
        %4201 = vmatmul.bf16.gmra.mxu0 %v375
        %v4202 = vpop.f32.mrf.mxu0
        %v4203 = vadd.f32 %v4190, %v4202
        %v4204 = vpop.f32.mrf.mxu0
        %4205 = vdwg.mxu0
        %4206 = vmatpush.bf16.msra.mxu0 %v2760
        %4207 = vmatpush.bf16.msra.mxu0 %v2756
        %4208 = vmatpush.bf16.msra.mxu0 %v2752
        %4209 = vmatpush.bf16.msra.mxu0 %v2748
        %4210 = vmatpush.bf16.msra.mxu0 %v2744
        %4211 = vmatpush.bf16.msra.mxu0 %v2740
        %4212 = vmatpush.bf16.msra.mxu0 %v2736
        %4213 = vmatpush.bf16.msra.mxu0 %v2732
        %4214 = vmatmul.bf16.gmra.mxu0 %v376
        %v4215 = vpop.f32.mrf.mxu0
        %v4216 = vadd.f32 %v4203, %v4215
        %v4217 = vpop.f32.mrf.mxu0
        %4218 = vdwg.mxu0
        %4219 = vmatpush.bf16.msra.mxu0 %v2792
        %4220 = vmatpush.bf16.msra.mxu0 %v2788
        %4221 = vmatpush.bf16.msra.mxu0 %v2784
        %4222 = vmatpush.bf16.msra.mxu0 %v2780
        %4223 = vmatpush.bf16.msra.mxu0 %v2776
        %4224 = vmatpush.bf16.msra.mxu0 %v2772
        %4225 = vmatpush.bf16.msra.mxu0 %v2768
        %4226 = vmatpush.bf16.msra.mxu0 %v2764
        %4227 = vmatmul.bf16.gmra.mxu0 %v377
        %v4228 = vpop.f32.mrf.mxu0
        %v4229 = vadd.f32 %v4216, %v4228
        %v4230 = vpop.f32.mrf.mxu0
        %4231 = vdwg.mxu0
        %4232 = vmatpush.bf16.msra.mxu0 %v2824
        %4233 = vmatpush.bf16.msra.mxu0 %v2820
        %4234 = vmatpush.bf16.msra.mxu0 %v2816
        %4235 = vmatpush.bf16.msra.mxu0 %v2812
        %4236 = vmatpush.bf16.msra.mxu0 %v2808
        %4237 = vmatpush.bf16.msra.mxu0 %v2804
        %4238 = vmatpush.bf16.msra.mxu0 %v2800
        %4239 = vmatpush.bf16.msra.mxu0 %v2796
        %4240 = vmatmul.bf16.gmra.mxu0 %v378
        %v4241 = vpop.f32.mrf.mxu0
        %v4242 = vadd.f32 %v4229, %v4241
        %v4243 = vpop.f32.mrf.mxu0
        %4244 = vdwg.mxu0
        %4245 = vmatpush.bf16.msra.mxu0 %v2856
        %4246 = vmatpush.bf16.msra.mxu0 %v2852
        %4247 = vmatpush.bf16.msra.mxu0 %v2848
        %4248 = vmatpush.bf16.msra.mxu0 %v2844
        %4249 = vmatpush.bf16.msra.mxu0 %v2840
        %4250 = vmatpush.bf16.msra.mxu0 %v2836
        %4251 = vmatpush.bf16.msra.mxu0 %v2832
        %4252 = vmatpush.bf16.msra.mxu0 %v2828
        %4253 = vmatmul.bf16.gmra.mxu0 %v379
        %v4254 = vpop.f32.mrf.mxu0
        %v4255 = vadd.f32 %v4242, %v4254
        %v4256 = vpop.f32.mrf.mxu0
        %4257 = vdwg.mxu0
        %4258 = vmatpush.bf16.msra.mxu0 %v2888
        %4259 = vmatpush.bf16.msra.mxu0 %v2884
        %4260 = vmatpush.bf16.msra.mxu0 %v2880
        %4261 = vmatpush.bf16.msra.mxu0 %v2876
        %4262 = vmatpush.bf16.msra.mxu0 %v2872
        %4263 = vmatpush.bf16.msra.mxu0 %v2868
        %4264 = vmatpush.bf16.msra.mxu0 %v2864
        %4265 = vmatpush.bf16.msra.mxu0 %v2860
        %4266 = vmatmul.bf16.gmra.mxu0 %v380
        %v4267 = vpop.f32.mrf.mxu0
        %v4268 = vadd.f32 %v4255, %v4267
        %v4269 = vpop.f32.mrf.mxu0
        %4270 = vdwg.mxu0
        %4271 = vmatpush.bf16.msra.mxu0 %v2920
        %4272 = vmatpush.bf16.msra.mxu0 %v2916
        %4273 = vmatpush.bf16.msra.mxu0 %v2912
        %4274 = vmatpush.bf16.msra.mxu0 %v2908
        %4275 = vmatpush.bf16.msra.mxu0 %v2904
        %4276 = vmatpush.bf16.msra.mxu0 %v2900
        %4277 = vmatpush.bf16.msra.mxu0 %v2896
        %4278 = vmatpush.bf16.msra.mxu0 %v2892
        %4279 = vmatmul.bf16.gmra.mxu0 %v381
        %v4280 = vpop.f32.mrf.mxu0
        %v4281 = vadd.f32 %v4268, %v4280
        %v4282 = vpop.f32.mrf.mxu0
        %4283 = vdwg.mxu0
        %4284 = vmatpush.bf16.msra.mxu0 %v2952
        %4285 = vmatpush.bf16.msra.mxu0 %v2948
        %4286 = vmatpush.bf16.msra.mxu0 %v2944
        %4287 = vmatpush.bf16.msra.mxu0 %v2940
        %4288 = vmatpush.bf16.msra.mxu0 %v2936
        %4289 = vmatpush.bf16.msra.mxu0 %v2932
        %4290 = vmatpush.bf16.msra.mxu0 %v2928
        %4291 = vmatpush.bf16.msra.mxu0 %v2924
        %4292 = vmatmul.bf16.gmra.mxu0 %v382
        %v4293 = vpop.f32.mrf.mxu0
        %v4294 = vadd.f32 %v4281, %v4293
        %v4295 = vpop.f32.mrf.mxu0
        %4296 = vdwg.mxu0
        %4297 = vst [vmem:[%s320] sm:$0xff] %v3670
        %4298 = vst [vmem:[%s320 + $0x8] sm:$0xff] %v3878
        %4299 = vst [vmem:[%s320 + $0x10] sm:$0xff] %v4086
        %4300 = vst [vmem:[%s320 + $0x18] sm:$0xff] %v4294
        %v4301 = vmax.f32 %v3670, 0.0
        %v4302 = vmax.f32 %v3878, 0.0
        %v4303 = vmax.f32 %v4086, 0.0
        %v4304 = vmax.f32 %v4294, 0.0
        %v4305 = vld [vmem:[%s285] sm:$0xf]
        %v4307 = vperm.slane %v4305, 0
        %v4308 = vperm.slane %v4305, 1
        %v4309 = vperm.slane %v4305, 2
        %v4310 = vperm.slane %v4305, 3
        %v4315 = vmul.f32 %v4301, %v4307
        %v4316 = vmul.f32 %v4302, %v4308
        %v4317 = vmul.f32 %v4303, %v4309
        %v4318 = vmul.f32 %v4304, %v4310
        %v4319 = vadd.f32 %v4315, %v4316
        %v4320 = vadd.f32 %v4319, %v4317
        %v4321 = vadd.f32 %v4320, %v4318
        %4322 = vadd.xlane.f32.xlu0 %v4321
        %v4323 = vpop.xlane.xlu0 %4322
        %v4324 = vlaneseq
        %v4325 = vand.u32 %v4324, 127
        %vm4326 = vcmp.eq.s32.totalorder %v4325, 0
        %v4327 = vsel %vm4326, %v4323, 0.0
        %4328 = vst [vmem:[%s334] sm:$0xff] %v4327
        %s4329 = sand.u32 %s133, 1
        %s4330 = scalar_lea.sflag [#allocation4], %s4329
        %s4331 = sand.u32 %s133, 1
        %s4332 = smul.addr %s4331, 32
        %s4333 = scalar_lea.vmem [#allocation8], %s4332
        %p4334 = scmp.lt.s32.totalorder %s26, 3
        %s4335 = scalar_select %p4334, %s26, 3
        %s4336 = smul.addr %s4335, 8
        %s4337 = scalar_lea.vmem %s5, %s4336
        // Predicated region
        $region49: #{discriminator_forward.3} parent=35 // pred_check
          %p4338 = pneg %p143
        $region50: #{discriminator_forward.3} parent=35 // pred_check_branch
          %4340 = sbr.rel (%p4338) target = $region52
        $region51: #{discriminator_forward.3} parent=35 // pred_region
          %s4341 = smul.u32 4, %s26
          %4343 = vsyncadd %s4330, 0
          %s4344 = smul.addr %s4341, 8
          %s4345 = scalar_lea.hbm %s4, %s4344
          %s4347 = sshll.u32 %s4333, 4
          %s4348 = int_to_ptr.vmem [resolvable:$true] %s4347
          %s4349 = sshll.u32 %s4345, 4
          %s4350 = int_to_ptr.hbm [resolvable:$true] %s4349
          %4352 = dma.vmem_to_hbm [thread:$0]  %s4348, 512, %s4350, %s4330
        $region52: #{discriminator_forward.3} parent=35 // pred_fallthru
          _
        // Predicated region
        $region53: #{discriminator_forward.3} parent=35 // pred_check
          %p4353 = pneg %p169
        $region54: #{discriminator_forward.3} parent=35 // pred_check_branch
          %4355 = sbr.rel (%p4353) target = $region56
        $region55: #{discriminator_forward.3} parent=35 // pred_region
          _
        $region56: #{discriminator_forward.3} parent=35 // pred_fallthru
          _
      $region36: #{discriminator_forward.3} parent=5 // pred_fallthru
        _
      %p4356 = scmp.le.s32.totalorder 2, %s21
      // Predicated region
      $region57: #{discriminator_forward.3} parent=5 // pred_check
        %p4357 = pneg %p4356
      $region58: #{discriminator_forward.3} parent=5 // pred_check_branch
        %4359 = sbr.rel (%p4357) target = $region60
      $region59: #{discriminator_forward.3} parent=5 // pred_region
        %s4360 = ssub.s32 %s21, 2
        // Predicated region
        $region61: #{discriminator_forward.3} parent=59 // pred_check
          %p4361 = pneg %p149
        $region62: #{discriminator_forward.3} parent=59 // pred_check_branch
          %4363 = sbr.rel (%p4361) target = $region64
        $region63: #{discriminator_forward.3} parent=59 // pred_region
          %s4364 = sand.u32 %s134, 1
          %s4365 = scalar_lea.sflag [#allocation4], %s4364
          %s4366 = sand.u32 %s134, 1
          %s4367 = smul.addr %s4366, 32
          %s4368 = scalar_lea.vmem [#allocation8], %s4367
          %4370 = dma.done %s4365, 512
        $region64: #{discriminator_forward.3} parent=59 // pred_fallthru
          _
        // Predicated region
        $region65: #{discriminator_forward.3} parent=59 // pred_check
          %p4371 = pneg %p175
        $region66: #{discriminator_forward.3} parent=59 // pred_check_branch
          %4373 = sbr.rel (%p4371) target = $region68
        $region67: #{discriminator_forward.3} parent=59 // pred_region
          %p4374 = scmp.lt.s32.totalorder %s27, 3
          %s4375 = scalar_select %p4374, %s27, 3
          %s4376 = smul.addr %s4375, 8
          %s4377 = scalar_lea.vmem %s5, %s4376
        $region68: #{discriminator_forward.3} parent=59 // pred_fallthru
          _
      $region60: #{discriminator_forward.3} parent=5 // pred_fallthru
        _
    $region6: #{discriminator_forward.3} parent=1 // loop_footer
      %s25 = sadd.s32 1, %s21
    $region7: #{discriminator_forward.3} parent=1 // loop_footer_branch
      %20 = sbr.rel target = $region3
    $region8: #{discriminator_forward.3} parent=1 // loop_exit
      _
    %4378 = vsyncpa [#allocation3], 1
    %s4379 = scalar_lea.sflag [#allocation3], 1
    %4380 = vsyncpa %s4379, 1
    %4381 = vsyncpa [#allocation6], 1
    %s4382 = scalar_lea.sflag [#allocation6], 1
    %4383 = vsyncpa %s4382, 1
    %4384 = vsyncpa [#allocation4], 1
    %s4385 = scalar_lea.sflag [#allocation4], 1
    %4386 = vsyncpa %s4385, 1

</llo_original>
